<compile_context>
chip_gen: v7x
topology: tpu7x:2x2x1
jax: 0.10.0
libtpu: 0.0.40
codegen_flags: <defaults>
</compile_context>

<pallas_src>
import functools

import jax
import jax.numpy as jnp
from jax.experimental import pallas as pl
from jax.experimental.pallas import tpu as pltpu


def _round_up(x, m):
    return (x + m - 1) // m * m


def _pick_tm(M):
    """Pick an M tile: prefer >=4 parallel blocks (v7x megacore), else >=2."""
    for tm in (1024, 512, 256):
        if M % tm == 0 and M // tm >= 4:
            return tm
    for tm in (512, 256, 128):
        if M % tm == 0 and M // tm >= 2:
            return tm
    for tm in (512, 256, 128):
        if M % tm == 0:
            return tm
    return 128  # M will be padded up to a multiple of 128


# ---------------------------------------------------------------------------
# Pallas kernel 1: fused C = A @ B + bias (+ ReLU). bf16 operands, f32 acc.
# K and N are full blocks -> single parallel grid axis over M, no K loop.
# ---------------------------------------------------------------------------
def _matmul_bias_kernel(a_ref, b_ref, bias_ref, o_ref, *, apply_relu):
    acc = jnp.dot(a_ref[...], b_ref[...], preferred_element_type=jnp.float32)
    acc = acc + bias_ref[...]                      # bias broadcast over rows
    if apply_relu:
        acc = jnp.maximum(acc, 0.0)
    o_ref[...] = acc.astype(o_ref.dtype)


def matmul_bias(a, b, bias, apply_relu=False):
    """C = a @ b + bias (optionally ReLU) -> f32.

    a: (M, K), b: (K, N), bias: (N,).  Assumes K, N small enough for
    full-block residency (true for this model: K = 9*Cin <= 1152, N <= 128).
    """
    M, K = a.shape
    K2, N = b.shape
    assert K == K2
    assert K <= 4096 and N <= 512, "full-K/full-N tiling assumption violated"

    tm = _pick_tm(M)
    Mp = _round_up(M, tm)
    a_bf = a.astype(jnp.bfloat16)
    if Mp != M:
        a_bf = jnp.pad(a_bf, ((0, Mp - M), (0, 0)))
    b_bf = b.astype(jnp.bfloat16)
    bias2d = bias.reshape(1, N).astype(jnp.float32)

    out = pl.pallas_call(
        functools.partial(_matmul_bias_kernel, apply_relu=apply_relu),
        out_shape=jax.ShapeDtypeStruct((Mp, N), jnp.float32),
        grid_spec=pltpu.PrefetchScalarGridSpec(
            num_scalar_prefetch=0,
            grid=(Mp // tm,),
            in_specs=[
                pl.BlockSpec((tm, K), lambda i: (i, 0)),   # A streams over M
                pl.BlockSpec((K, N), lambda i: (0, 0)),    # weights resident
                pl.BlockSpec((1, N), lambda i: (0, 0)),    # bias resident
            ],
            out_specs=pl.BlockSpec((tm, N), lambda i: (i, 0)),
        ),
        compiler_params=pltpu.CompilerParams(
            dimension_semantics=("parallel",),
            vmem_limit_bytes=32 * 1024 * 1024,   # safe on v5e/v6e/v7x
        ),
    )(a_bf, b_bf, bias2d)
    return out[:M] if Mp != M else out


# ---------------------------------------------------------------------------
# Pallas kernel 2: streaming row-dot for the N=1 Linear (VPU reduction).
# ---------------------------------------------------------------------------
def _pick_reduce_tile(F):
    for tk in (8192, 4096, 2048, 1024, 512, 256, 128):
        if F % tk == 0:
            return tk
    return 128  # F will be zero-padded (benign for the reduction)


def _rowdot_kernel(x_ref, w_ref, b_ref, o_ref):
    k = pl.program_id(0)

    @pl.when(k == 0)
    def _():
        o_ref[...] = jnp.zeros_like(o_ref)

    o_ref[...] += jnp.sum(x_ref[...] * w_ref[...], axis=-1, keepdims=True)

    @pl.when(k == pl.num_programs(0) - 1)
    def _():
        o_ref[...] += b_ref[...]


def linear_rowdot(x, w_row, bias):
    """y = x @ w_row.T + bias with w_row of shape (1, F): streaming VPU dot."""
    Bn, F = x.shape
    assert w_row.shape == (1, F)
    tk = _pick_reduce_tile(F)
    Fp = _round_up(F, tk)
    if Fp != F:
        x = jnp.pad(x, ((0, 0), (0, Fp - F)))
        w_row = jnp.pad(w_row, ((0, 0), (0, Fp - F)))

    return pl.pallas_call(
        _rowdot_kernel,
        out_shape=jax.ShapeDtypeStruct((Bn, 1), jnp.float32),
        grid_spec=pltpu.PrefetchScalarGridSpec(
            num_scalar_prefetch=0,
            grid=(Fp // tk,),
            in_specs=[
                pl.BlockSpec((Bn, tk), lambda k: (0, k)),
                pl.BlockSpec((1, tk), lambda k: (0, k)),
                pl.BlockSpec((1, 1), lambda k: (0, 0)),
            ],
            out_specs=pl.BlockSpec((Bn, 1), lambda k: (0, 0)),
        ),
        compiler_params=pltpu.CompilerParams(
            dimension_semantics=("arbitrary",),
            vmem_limit_bytes=32 * 1024 * 1024,
        ),
    )(x.astype(jnp.float32), w_row.astype(jnp.float32),
      bias.reshape(1, 1).astype(jnp.float32))


# ---------------------------------------------------------------------------
# Conv built on the Pallas matmul kernel (NHWC activations, bf16 im2col)
# ---------------------------------------------------------------------------
def conv2d_3x3_nhwc(x_nhwc, w, b, relu=False):
    """3x3 conv, stride 1, padding 1 ("same"), PyTorch weight layout.

    x_nhwc: (B, H, W, Cin); w: (Cout, Cin, 3, 3); b: (Cout,) -> (B, H, W, Cout)
    """
    B, H, W, Cin = x_nhwc.shape
    Cout = w.shape[0]
    xb = x_nhwc.astype(jnp.bfloat16)
    xp = jnp.pad(xb, ((0, 0), (1, 1), (1, 1), (0, 0)))
    patches = [xp[:, dh:dh + H, dw:dw + W, :] for dh in range(3) for dw in range(3)]
    cols = jnp.concatenate(patches, axis=-1)           # (B,H,W,9*Cin): (kh,kw,cin)
    a = cols.reshape(B * H * W, 9 * Cin)
    # weight reordered to match (kh, kw, cin) patch order above
    wmat = jnp.transpose(w, (2, 3, 1, 0)).reshape(9 * Cin, Cout)
    out = matmul_bias(a, wmat, b, apply_relu=relu)     # (B*H*W, Cout) f32
    return out.reshape(B, H, W, Cout)


# ---------------------------------------------------------------------------
# UDANet modules (NHWC internally; parameters passed as dicts)
# ---------------------------------------------------------------------------
def feature_extractor(params, x):
    x = conv2d_3x3_nhwc(x, params["conv1_w"], params["conv1_b"], relu=True)
    x = conv2d_3x3_nhwc(x, params["conv2_w"], params["conv2_b"], relu=True)
    return x


def noise_reduction(params, x):
    x = conv2d_3x3_nhwc(x, params["conv1_w"], params["conv1_b"], relu=True)
    x = conv2d_3x3_nhwc(x, params["conv2_w"], params["conv2_b"], relu=False)
    return x


def domain_classification(params, x):
    x = conv2d_3x3_nhwc(x, params["conv1_w"], params["conv1_b"], relu=True)
    Bn, H, W, C = x.shape
    x_flat = x.reshape(Bn, H * W * C)                  # NHWC flatten (h,w,c)
    # PyTorch's view(B,-1) flattens NCHW (c,h,w); permute the tiny fc weight
    # instead of transposing the large activation.
    w = params["fc1_w"]                                # (1, C*H*W) in (c,h,w)
    w_perm = w.reshape(1, C, H, W).transpose(0, 2, 3, 1).reshape(1, H * W * C)
    return linear_rowdot(x_flat, w_perm, params["fc1_b"])


def segmentation(params, x):
    # TODO(synk): seg_model is an externally supplied module in the original
    # code; a synthetic 3x3 conv to num_classes is used as a stand-in.
    return conv2d_3x3_nhwc(x, params["conv_w"], params["conv_b"], relu=False)


def udanet_forward(params, source_data, target_data, alpha):
    # NOTE: `alpha` only scales the gradient-reversal backward pass; it is
    # unused in the reference forward computation.
    Bs = source_data.shape[0]
    combined = jnp.concatenate([source_data, target_data], axis=0)   # NCHW
    combined = jnp.transpose(combined, (0, 2, 3, 1))                 # -> NHWC once

    feats = feature_extractor(params["fe"], combined)                # (2B,H,W,128)
    src_feats = feats[:Bs]

    denoised_nhwc = noise_reduction(params["nr"], src_feats)         # (B,H,W,Cin)
    dom_logits = domain_classification(params["dc"], feats)          # (2B,1)
    source_domain_logits = dom_logits[:Bs]
    target_domain_logits = dom_logits[Bs:]
    seg_nhwc = segmentation(params["seg"], denoised_nhwc)

    denoised = jnp.transpose(denoised_nhwc, (0, 3, 1, 2))            # back to NCHW
    seg_out = jnp.transpose(seg_nhwc, (0, 3, 1, 2))
    return denoised, source_domain_logits, target_domain_logits, seg_out


# ---------------------------------------------------------------------------
# Deterministic parameter construction + smoke test
# ---------------------------------------------------------------------------
def init_params(key, input_channels, num_classes, H, W):
    ks = jax.random.split(key, 16)
    s = 0.05

    def conv_p(k, cout, cin):
        kw, kb = jax.random.split(k)
        return (s * jax.random.normal(kw, (cout, cin, 3, 3), jnp.float32),
                s * jax.random.normal(kb, (cout,), jnp.float32))

    fe_c1w, fe_c1b = conv_p(ks[0], 64, input_channels)
    fe_c2w, fe_c2b = conv_p(ks[1], 128, 64)
    nr_c1w, nr_c1b = conv_p(ks[2], 64, 128)
    nr_c2w, nr_c2b = conv_p(ks[3], input_channels, 64)
    dc_c1w, dc_c1b = conv_p(ks[4], 64, 128)
    fc_in = 64 * H * W  # scaled-down analogue of 64*224*224
    dc_fcw = s * jax.random.normal(ks[5], (1, fc_in), jnp.float32)
    dc_fcb = s * jax.random.normal(ks[6], (1,), jnp.float32)
    sg_cw, sg_cb = conv_p(ks[7], num_classes, input_channels)

    return {
        "fe": {"conv1_w": fe_c1w, "conv1_b": fe_c1b,
               "conv2_w": fe_c2w, "conv2_b": fe_c2b},
        "nr": {"conv1_w": nr_c1w, "conv1_b": nr_c1b,
               "conv2_w": nr_c2w, "conv2_b": nr_c2b},
        "dc": {"conv1_w": dc_c1w, "conv1_b": dc_c1b,
               "fc1_w": dc_fcw, "fc1_b": dc_fcb},
        "seg": {"conv_w": sg_cw, "conv_b": sg_cb},
    }


if __name__ == "__main__":
    input_channels = 3
    num_classes = 4
    B, H, W = 2, 16, 16

    key = jax.random.PRNGKey(0)
    k_params, k_src, k_tgt = jax.random.split(key, 3)
    params = init_params(k_params, input_channels, num_classes, H, W)

    source_data = jax.random.normal(k_src, (B, input_channels, H, W), jnp.float32)
    target_data = jax.random.normal(k_tgt, (B, input_channels, H, W), jnp.float32)
    alpha = 0.5

    forward = jax.jit(udanet_forward)
    outs = forward(params, source_data, target_data, alpha)
    outs = jax.block_until_ready(outs)

    denoised, src_logits, tgt_logits, seg_out = outs
    assert denoised.shape == (B, input_channels, H, W)
    assert src_logits.shape == (B, 1)
    assert tgt_logits.shape == (B, 1)
    assert seg_out.shape == (B, num_classes, H, W)
    assert all(bool(jnp.all(jnp.isfinite(o))) for o in
               (denoised, src_logits, tgt_logits, seg_out))
    print("KERNEL_OK")
</pallas_src>

<mosaic_0001>
module attributes {stable_mosaic.version = 11 : i64} {
  func.func @_matmul_bias_kernel(%arg0: i32, %arg1: memref<256x27xbf16, #tpu.memory_space<vmem>>, %arg2: memref<27x64xbf16, #tpu.memory_space<vmem>>, %arg3: memref<1x64xf32, #tpu.memory_space<vmem>>, %arg4: memref<256x64xf32, #tpu.memory_space<vmem>>) attributes {dimension_semantics = [#tpu.dimension_semantics<parallel>], iteration_bounds = array<i64: 4>, scalar_prefetch = 0 : i64, scratch_operands = 0 : i64, tpu.core_type = #tpu.core_type<tc>, window_params = [{transform_indices = @transform_0, window_bounds = array<i64: 256, 27>}, {pipeline_mode = #tpu.pipeline_mode<synchronous>, transform_indices = @transform_1, window_bounds = array<i64: 27, 64>}, {pipeline_mode = #tpu.pipeline_mode<synchronous>, transform_indices = @transform_2, window_bounds = array<i64: 1, 64>}, {transform_indices = @transform_3, window_bounds = array<i64: 256, 64>}]} {
    %c0 = arith.constant 0 : index
    %c0_0 = arith.constant 0 : index
    %0 = vector.load %arg1[%c0, %c0_0] : memref<256x27xbf16, #tpu.memory_space<vmem>>, vector<256x27xbf16>
    %c0_1 = arith.constant 0 : index
    %c0_2 = arith.constant 0 : index
    %1 = vector.load %arg2[%c0_1, %c0_2] : memref<27x64xbf16, #tpu.memory_space<vmem>>, vector<27x64xbf16>
    %cst = arith.constant dense<0.000000e+00> : vector<256x64xf32>
    %2 = tpu.matmul %0, %1, %cst {dimension_numbers = #tpu.dot_dimension_numbers<[1], [0], [0], [1], [0, 0, 1, 1], [], []>} : vector<256x27xbf16>, vector<27x64xbf16>, vector<256x64xf32> -> vector<256x64xf32>
    %c0_3 = arith.constant 0 : index
    %c0_4 = arith.constant 0 : index
    %3 = vector.load %arg3[%c0_3, %c0_4] : memref<1x64xf32, #tpu.memory_space<vmem>>, vector<1x64xf32>
    %4 = vector.broadcast %3 : vector<1x64xf32> to vector<256x64xf32>
    %5 = arith.addf %2, %4 : vector<256x64xf32>
    %cst_5 = arith.constant 0.000000e+00 : f32
    %6 = vector.broadcast %cst_5 : f32 to vector<256x64xf32>
    %7 = arith.maximumf %5, %6 : vector<256x64xf32>
    %c0_6 = arith.constant 0 : index
    %c0_7 = arith.constant 0 : index
    %8 = vector.load %arg4[%c0_6, %c0_7] : memref<256x64xf32, #tpu.memory_space<vmem>>, vector<256x64xf32>
    tpu.vector_store %arg4[%c0_6, %c0_7], %7 {strides = array<i32>} : memref<256x64xf32, #tpu.memory_space<vmem>>, vector<256x64xf32>,
    return
  }
  func.func @transform_0(%arg0: i32) -> (i32, i32) {
    %c0_i32 = arith.constant 0 : i32
    %c0_i32_0 = arith.constant 0 : i32
    return %arg0, %c0_i32 : i32, i32
  }
  func.func @transform_1(%arg0: i32) -> (i32, i32) {
    %c0_i32 = arith.constant 0 : i32
    %c0_i32_0 = arith.constant 0 : i32
    %c0_i32_1 = arith.constant 0 : i32
    return %c0_i32, %c0_i32_0 : i32, i32
  }
  func.func @transform_2(%arg0: i32) -> (i32, i32) {
    %c0_i32 = arith.constant 0 : i32
    %c0_i32_0 = arith.constant 0 : i32
    %c0_i32_1 = arith.constant 0 : i32
    return %c0_i32, %c0_i32_0 : i32, i32
  }
  func.func @transform_3(%arg0: i32) -> (i32, i32) {
    %c0_i32 = arith.constant 0 : i32
    %c0_i32_0 = arith.constant 0 : i32
    return %arg0, %c0_i32 : i32, i32
  }
}

module attributes {stable_mosaic.version = 11 : i64} {
  func.func @_matmul_bias_kernel(%arg0: i32, %arg1: memref<256x576xbf16, #tpu.memory_space<vmem>>, %arg2: memref<576x128xbf16, #tpu.memory_space<vmem>>, %arg3: memref<1x128xf32, #tpu.memory_space<vmem>>, %arg4: memref<256x128xf32, #tpu.memory_space<vmem>>) attributes {dimension_semantics = [#tpu.dimension_semantics<parallel>], iteration_bounds = array<i64: 4>, scalar_prefetch = 0 : i64, scratch_operands = 0 : i64, tpu.core_type = #tpu.core_type<tc>, window_params = [{transform_indices = @transform_0, window_bounds = array<i64: 256, 576>}, {pipeline_mode = #tpu.pipeline_mode<synchronous>, transform_indices = @transform_1, window_bounds = array<i64: 576, 128>}, {pipeline_mode = #tpu.pipeline_mode<synchronous>, transform_indices = @transform_2, window_bounds = array<i64: 1, 128>}, {transform_indices = @transform_3, window_bounds = array<i64: 256, 128>}]} {
    %c0 = arith.constant 0 : index
    %c0_0 = arith.constant 0 : index
    %0 = vector.load %arg1[%c0, %c0_0] : memref<256x576xbf16, #tpu.memory_space<vmem>>, vector<256x576xbf16>
    %c0_1 = arith.constant 0 : index
    %c0_2 = arith.constant 0 : index
    %1 = vector.load %arg2[%c0_1, %c0_2] : memref<576x128xbf16, #tpu.memory_space<vmem>>, vector<576x128xbf16>
    %cst = arith.constant dense<0.000000e+00> : vector<256x128xf32>
    %2 = tpu.matmul %0, %1, %cst {dimension_numbers = #tpu.dot_dimension_numbers<[1], [0], [0], [1], [0, 0, 1, 1], [], []>} : vector<256x576xbf16>, vector<576x128xbf16>, vector<256x128xf32> -> vector<256x128xf32>
    %c0_3 = arith.constant 0 : index
    %c0_4 = arith.constant 0 : index
    %3 = vector.load %arg3[%c0_3, %c0_4] : memref<1x128xf32, #tpu.memory_space<vmem>>, vector<1x128xf32>
    %4 = vector.broadcast %3 : vector<1x128xf32> to vector<256x128xf32>
    %5 = arith.addf %2, %4 : vector<256x128xf32>
    %cst_5 = arith.constant 0.000000e+00 : f32
    %6 = vector.broadcast %cst_5 : f32 to vector<256x128xf32>
    %7 = arith.maximumf %5, %6 : vector<256x128xf32>
    %c0_6 = arith.constant 0 : index
    %c0_7 = arith.constant 0 : index
    %8 = vector.load %arg4[%c0_6, %c0_7] : memref<256x128xf32, #tpu.memory_space<vmem>>, vector<256x128xf32>
    tpu.vector_store %arg4[%c0_6, %c0_7], %7 {strides = array<i32>} : memref<256x128xf32, #tpu.memory_space<vmem>>, vector<256x128xf32>,
    return
  }
  func.func @transform_0(%arg0: i32) -> (i32, i32) {
    %c0_i32 = arith.constant 0 : i32
    %c0_i32_0 = arith.constant 0 : i32
    return %arg0, %c0_i32 : i32, i32
  }
  func.func @transform_1(%arg0: i32) -> (i32, i32) {
    %c0_i32 = arith.constant 0 : i32
    %c0_i32_0 = arith.constant 0 : i32
    %c0_i32_1 = arith.constant 0 : i32
    return %c0_i32, %c0_i32_0 : i32, i32
  }
  func.func @transform_2(%arg0: i32) -> (i32, i32) {
    %c0_i32 = arith.constant 0 : i32
    %c0_i32_0 = arith.constant 0 : i32
    %c0_i32_1 = arith.constant 0 : i32
    return %c0_i32, %c0_i32_0 : i32, i32
  }
  func.func @transform_3(%arg0: i32) -> (i32, i32) {
    %c0_i32 = arith.constant 0 : i32
    %c0_i32_0 = arith.constant 0 : i32
    return %arg0, %c0_i32 : i32, i32
  }
}

module attributes {stable_mosaic.version = 11 : i64} {
  func.func @_matmul_bias_kernel(%arg0: i32, %arg1: memref<256x1152xbf16, #tpu.memory_space<vmem>>, %arg2: memref<1152x64xbf16, #tpu.memory_space<vmem>>, %arg3: memref<1x64xf32, #tpu.memory_space<vmem>>, %arg4: memref<256x64xf32, #tpu.memory_space<vmem>>) attributes {dimension_semantics = [#tpu.dimension_semantics<parallel>], iteration_bounds = array<i64: 2>, scalar_prefetch = 0 : i64, scratch_operands = 0 : i64, tpu.core_type = #tpu.core_type<tc>, window_params = [{transform_indices = @transform_0, window_bounds = array<i64: 256, 1152>}, {pipeline_mode = #tpu.pipeline_mode<synchronous>, transform_indices = @transform_1, window_bounds = array<i64: 1152, 64>}, {pipeline_mode = #tpu.pipeline_mode<synchronous>, transform_indices = @transform_2, window_bounds = array<i64: 1, 64>}, {transform_indices = @transform_3, window_bounds = array<i64: 256, 64>}]} {
    %c0 = arith.constant 0 : index
    %c0_0 = arith.constant 0 : index
    %0 = vector.load %arg1[%c0, %c0_0] : memref<256x1152xbf16, #tpu.memory_space<vmem>>, vector<256x1152xbf16>
    %c0_1 = arith.constant 0 : index
    %c0_2 = arith.constant 0 : index
    %1 = vector.load %arg2[%c0_1, %c0_2] : memref<1152x64xbf16, #tpu.memory_space<vmem>>, vector<1152x64xbf16>
    %cst = arith.constant dense<0.000000e+00> : vector<256x64xf32>
    %2 = tpu.matmul %0, %1, %cst {dimension_numbers = #tpu.dot_dimension_numbers<[1], [0], [0], [1], [0, 0, 1, 1], [], []>} : vector<256x1152xbf16>, vector<1152x64xbf16>, vector<256x64xf32> -> vector<256x64xf32>
    %c0_3 = arith.constant 0 : index
    %c0_4 = arith.constant 0 : index
    %3 = vector.load %arg3[%c0_3, %c0_4] : memref<1x64xf32, #tpu.memory_space<vmem>>, vector<1x64xf32>
    %4 = vector.broadcast %3 : vector<1x64xf32> to vector<256x64xf32>
    %5 = arith.addf %2, %4 : vector<256x64xf32>
    %cst_5 = arith.constant 0.000000e+00 : f32
    %6 = vector.broadcast %cst_5 : f32 to vector<256x64xf32>
    %7 = arith.maximumf %5, %6 : vector<256x64xf32>
    %c0_6 = arith.constant 0 : index
    %c0_7 = arith.constant 0 : index
    %8 = vector.load %arg4[%c0_6, %c0_7] : memref<256x64xf32, #tpu.memory_space<vmem>>, vector<256x64xf32>
    tpu.vector_store %arg4[%c0_6, %c0_7], %7 {strides = array<i32>} : memref<256x64xf32, #tpu.memory_space<vmem>>, vector<256x64xf32>,
    return
  }
  func.func @transform_0(%arg0: i32) -> (i32, i32) {
    %c0_i32 = arith.constant 0 : i32
    %c0_i32_0 = arith.constant 0 : i32
    return %arg0, %c0_i32 : i32, i32
  }
  func.func @transform_1(%arg0: i32) -> (i32, i32) {
    %c0_i32 = arith.constant 0 : i32
    %c0_i32_0 = arith.constant 0 : i32
    %c0_i32_1 = arith.constant 0 : i32
    return %c0_i32, %c0_i32_0 : i32, i32
  }
  func.func @transform_2(%arg0: i32) -> (i32, i32) {
    %c0_i32 = arith.constant 0 : i32
    %c0_i32_0 = arith.constant 0 : i32
    %c0_i32_1 = arith.constant 0 : i32
    return %c0_i32, %c0_i32_0 : i32, i32
  }
  func.func @transform_3(%arg0: i32) -> (i32, i32) {
    %c0_i32 = arith.constant 0 : i32
    %c0_i32_0 = arith.constant 0 : i32
    return %arg0, %c0_i32 : i32, i32
  }
}

module attributes {stable_mosaic.version = 11 : i64} {
  func.func @_matmul_bias_kernel(%arg0: i32, %arg1: memref<256x576xbf16, #tpu.memory_space<vmem>>, %arg2: memref<576x3xbf16, #tpu.memory_space<vmem>>, %arg3: memref<1x3xf32, #tpu.memory_space<vmem>>, %arg4: memref<256x3xf32, #tpu.memory_space<vmem>>) attributes {dimension_semantics = [#tpu.dimension_semantics<parallel>], iteration_bounds = array<i64: 2>, scalar_prefetch = 0 : i64, scratch_operands = 0 : i64, tpu.core_type = #tpu.core_type<tc>, window_params = [{transform_indices = @transform_0, window_bounds = array<i64: 256, 576>}, {pipeline_mode = #tpu.pipeline_mode<synchronous>, transform_indices = @transform_1, window_bounds = array<i64: 576, 3>}, {pipeline_mode = #tpu.pipeline_mode<synchronous>, transform_indices = @transform_2, window_bounds = array<i64: 1, 3>}, {transform_indices = @transform_3, window_bounds = array<i64: 256, 3>}]} {
    %c0 = arith.constant 0 : index
    %c0_0 = arith.constant 0 : index
    %0 = vector.load %arg1[%c0, %c0_0] : memref<256x576xbf16, #tpu.memory_space<vmem>>, vector<256x576xbf16>
    %c0_1 = arith.constant 0 : index
    %c0_2 = arith.constant 0 : index
    %1 = vector.load %arg2[%c0_1, %c0_2] : memref<576x3xbf16, #tpu.memory_space<vmem>>, vector<576x3xbf16>
    %cst = arith.constant dense<0.000000e+00> : vector<256x3xf32>
    %2 = tpu.matmul %0, %1, %cst {dimension_numbers = #tpu.dot_dimension_numbers<[1], [0], [0], [1], [0, 0, 1, 1], [], []>} : vector<256x576xbf16>, vector<576x3xbf16>, vector<256x3xf32> -> vector<256x3xf32>
    %c0_3 = arith.constant 0 : index
    %c0_4 = arith.constant 0 : index
    %3 = vector.load %arg3[%c0_3, %c0_4] : memref<1x3xf32, #tpu.memory_space<vmem>>, vector<1x3xf32>
    %4 = vector.broadcast %3 : vector<1x3xf32> to vector<256x3xf32>
    %5 = arith.addf %2, %4 : vector<256x3xf32>
    %c0_5 = arith.constant 0 : index
    %c0_6 = arith.constant 0 : index
    %6 = vector.load %arg4[%c0_5, %c0_6] : memref<256x3xf32, #tpu.memory_space<vmem>>, vector<256x3xf32>
    tpu.vector_store %arg4[%c0_5, %c0_6], %5 {strides = array<i32>} : memref<256x3xf32, #tpu.memory_space<vmem>>, vector<256x3xf32>,
    return
  }
  func.func @transform_0(%arg0: i32) -> (i32, i32) {
    %c0_i32 = arith.constant 0 : i32
    %c0_i32_0 = arith.constant 0 : i32
    return %arg0, %c0_i32 : i32, i32
  }
  func.func @transform_1(%arg0: i32) -> (i32, i32) {
    %c0_i32 = arith.constant 0 : i32
    %c0_i32_0 = arith.constant 0 : i32
    %c0_i32_1 = arith.constant 0 : i32
    return %c0_i32, %c0_i32_0 : i32, i32
  }
  func.func @transform_2(%arg0: i32) -> (i32, i32) {
    %c0_i32 = arith.constant 0 : i32
    %c0_i32_0 = arith.constant 0 : i32
    %c0_i32_1 = arith.constant 0 : i32
    return %c0_i32, %c0_i32_0 : i32, i32
  }
  func.func @transform_3(%arg0: i32) -> (i32, i32) {
    %c0_i32 = arith.constant 0 : i32
    %c0_i32_0 = arith.constant 0 : i32
    return %arg0, %c0_i32 : i32, i32
  }
}

module attributes {stable_mosaic.version = 11 : i64} {
  func.func @_matmul_bias_kernel(%arg0: i32, %arg1: memref<256x1152xbf16, #tpu.memory_space<vmem>>, %arg2: memref<1152x64xbf16, #tpu.memory_space<vmem>>, %arg3: memref<1x64xf32, #tpu.memory_space<vmem>>, %arg4: memref<256x64xf32, #tpu.memory_space<vmem>>) attributes {dimension_semantics = [#tpu.dimension_semantics<parallel>], iteration_bounds = array<i64: 4>, scalar_prefetch = 0 : i64, scratch_operands = 0 : i64, tpu.core_type = #tpu.core_type<tc>, window_params = [{transform_indices = @transform_0, window_bounds = array<i64: 256, 1152>}, {pipeline_mode = #tpu.pipeline_mode<synchronous>, transform_indices = @transform_1, window_bounds = array<i64: 1152, 64>}, {pipeline_mode = #tpu.pipeline_mode<synchronous>, transform_indices = @transform_2, window_bounds = array<i64: 1, 64>}, {transform_indices = @transform_3, window_bounds = array<i64: 256, 64>}]} {
    %c0 = arith.constant 0 : index
    %c0_0 = arith.constant 0 : index
    %0 = vector.load %arg1[%c0, %c0_0] : memref<256x1152xbf16, #tpu.memory_space<vmem>>, vector<256x1152xbf16>
    %c0_1 = arith.constant 0 : index
    %c0_2 = arith.constant 0 : index
    %1 = vector.load %arg2[%c0_1, %c0_2] : memref<1152x64xbf16, #tpu.memory_space<vmem>>, vector<1152x64xbf16>
    %cst = arith.constant dense<0.000000e+00> : vector<256x64xf32>
    %2 = tpu.matmul %0, %1, %cst {dimension_numbers = #tpu.dot_dimension_numbers<[1], [0], [0], [1], [0, 0, 1, 1], [], []>} : vector<256x1152xbf16>, vector<1152x64xbf16>, vector<256x64xf32> -> vector<256x64xf32>
    %c0_3 = arith.constant 0 : index
    %c0_4 = arith.constant 0 : index
    %3 = vector.load %arg3[%c0_3, %c0_4] : memref<1x64xf32, #tpu.memory_space<vmem>>, vector<1x64xf32>
    %4 = vector.broadcast %3 : vector<1x64xf32> to vector<256x64xf32>
    %5 = arith.addf %2, %4 : vector<256x64xf32>
    %cst_5 = arith.constant 0.000000e+00 : f32
    %6 = vector.broadcast %cst_5 : f32 to vector<256x64xf32>
    %7 = arith.maximumf %5, %6 : vector<256x64xf32>
    %c0_6 = arith.constant 0 : index
    %c0_7 = arith.constant 0 : index
    %8 = vector.load %arg4[%c0_6, %c0_7] : memref<256x64xf32, #tpu.memory_space<vmem>>, vector<256x64xf32>
    tpu.vector_store %arg4[%c0_6, %c0_7], %7 {strides = array<i32>} : memref<256x64xf32, #tpu.memory_space<vmem>>, vector<256x64xf32>,
    return
  }
  func.func @transform_0(%arg0: i32) -> (i32, i32) {
    %c0_i32 = arith.constant 0 : i32
    %c0_i32_0 = arith.constant 0 : i32
    return %arg0, %c0_i32 : i32, i32
  }
  func.func @transform_1(%arg0: i32) -> (i32, i32) {
    %c0_i32 = arith.constant 0 : i32
    %c0_i32_0 = arith.constant 0 : i32
    %c0_i32_1 = arith.constant 0 : i32
    return %c0_i32, %c0_i32_0 : i32, i32
  }
  func.func @transform_2(%arg0: i32) -> (i32, i32) {
    %c0_i32 = arith.constant 0 : i32
    %c0_i32_0 = arith.constant 0 : i32
    %c0_i32_1 = arith.constant 0 : i32
    return %c0_i32, %c0_i32_0 : i32, i32
  }
  func.func @transform_3(%arg0: i32) -> (i32, i32) {
    %c0_i32 = arith.constant 0 : i32
    %c0_i32_0 = arith.constant 0 : i32
    return %arg0, %c0_i32 : i32, i32
  }
}

module attributes {stable_mosaic.version = 11 : i64} {
  func.func @_rowdot_kernel(%arg0: i32, %arg1: memref<4x8192xf32, #tpu.memory_space<vmem>>, %arg2: memref<1x8192xf32, #tpu.memory_space<vmem>>, %arg3: memref<1x1xf32, #tpu.memory_space<vmem>>, %arg4: memref<4x1xf32, #tpu.memory_space<vmem>>) attributes {dimension_semantics = [#tpu.dimension_semantics<arbitrary>], iteration_bounds = array<i64: 2>, scalar_prefetch = 0 : i64, scratch_operands = 0 : i64, tpu.core_type = #tpu.core_type<tc>, window_params = [{transform_indices = @transform_0, window_bounds = array<i64: 4, 8192>}, {transform_indices = @transform_1, window_bounds = array<i64: 1, 8192>}, {pipeline_mode = #tpu.pipeline_mode<synchronous>, transform_indices = @transform_2, window_bounds = array<i64: 1, 1>}, {pipeline_mode = #tpu.pipeline_mode<synchronous>, transform_indices = @transform_3, window_bounds = array<i64: 4, 1>}]} {
    %c0_i32 = arith.constant 0 : i32
    %0 = arith.cmpi eq, %arg0, %c0_i32 : i32
    %1 = arith.extui %0 : i1 to i32
    %c0_i32_0 = arith.constant 0 : i32
    %2 = arith.cmpi ne, %1, %c0_i32_0 : i32
    scf.if %2 {
      %cst_9 = arith.constant 0.000000e+00 : f32
      %15 = vector.broadcast %cst_9 : f32 to vector<4x1xf32>
      %c0_10 = arith.constant 0 : index
      %c0_11 = arith.constant 0 : index
      %16 = vector.load %arg4[%c0_10, %c0_11] : memref<4x1xf32, #tpu.memory_space<vmem>>, vector<4x1xf32>
      tpu.vector_store %arg4[%c0_10, %c0_11], %15 {strides = array<i32>} : memref<4x1xf32, #tpu.memory_space<vmem>>, vector<4x1xf32>,
    } else {
    }
    %c0 = arith.constant 0 : index
    %c0_1 = arith.constant 0 : index
    %3 = vector.load %arg4[%c0, %c0_1] : memref<4x1xf32, #tpu.memory_space<vmem>>, vector<4x1xf32>
    %c0_2 = arith.constant 0 : index
    %c0_3 = arith.constant 0 : index
    %4 = vector.load %arg1[%c0_2, %c0_3] : memref<4x8192xf32, #tpu.memory_space<vmem>>, vector<4x8192xf32>
    %c0_4 = arith.constant 0 : index
    %c0_5 = arith.constant 0 : index
    %5 = vector.load %arg2[%c0_4, %c0_5] : memref<1x8192xf32, #tpu.memory_space<vmem>>, vector<1x8192xf32>
    %6 = vector.broadcast %5 : vector<1x8192xf32> to vector<4x8192xf32>
    %7 = arith.mulf %4, %6 : vector<4x8192xf32>
    %cst = arith.constant dense<0.000000e+00> : vector<4xf32>
    %8 = vector.multi_reduction <add>, %7, %cst [1] : vector<4x8192xf32> to vector<4xf32>
    %9 = vector.shape_cast %8 : vector<4xf32> to vector<4x1xf32>
    %10 = arith.addf %3, %9 : vector<4x1xf32>
    %c0_6 = arith.constant 0 : index
    %c0_7 = arith.constant 0 : index
    %11 = vector.load %arg4[%c0_6, %c0_7] : memref<4x1xf32, #tpu.memory_space<vmem>>, vector<4x1xf32>
    tpu.vector_store %arg4[%c0_6, %c0_7], %10 {strides = array<i32>} : memref<4x1xf32, #tpu.memory_space<vmem>>, vector<4x1xf32>,
    %c1_i32 = arith.constant 1 : i32
    %12 = arith.cmpi eq, %arg0, %c1_i32 : i32
    %13 = arith.extui %12 : i1 to i32
    %c0_i32_8 = arith.constant 0 : i32
    %14 = arith.cmpi ne, %13, %c0_i32_8 : i32
    scf.if %14 {
      %c0_9 = arith.constant 0 : index
      %c0_10 = arith.constant 0 : index
      %15 = vector.load %arg4[%c0_9, %c0_10] : memref<4x1xf32, #tpu.memory_space<vmem>>, vector<4x1xf32>
      %c0_11 = arith.constant 0 : index
      %c0_12 = arith.constant 0 : index
      %16 = vector.load %arg3[%c0_11, %c0_12] : memref<1x1xf32, #tpu.memory_space<vmem>>, vector<1x1xf32>
      %17 = vector.broadcast %16 : vector<1x1xf32> to vector<4x1xf32>
      %18 = arith.addf %15, %17 : vector<4x1xf32>
      %c0_13 = arith.constant 0 : index
      %c0_14 = arith.constant 0 : index
      %19 = vector.load %arg4[%c0_13, %c0_14] : memref<4x1xf32, #tpu.memory_space<vmem>>, vector<4x1xf32>
      tpu.vector_store %arg4[%c0_13, %c0_14], %18 {strides = array<i32>} : memref<4x1xf32, #tpu.memory_space<vmem>>, vector<4x1xf32>,
    } else {
    }
    return
  }
  func.func @transform_0(%arg0: i32) -> (i32, i32) {
    %c0_i32 = arith.constant 0 : i32
    %c0_i32_0 = arith.constant 0 : i32
    return %c0_i32, %arg0 : i32, i32
  }
  func.func @transform_1(%arg0: i32) -> (i32, i32) {
    %c0_i32 = arith.constant 0 : i32
    %c0_i32_0 = arith.constant 0 : i32
    return %c0_i32, %arg0 : i32, i32
  }
  func.func @transform_2(%arg0: i32) -> (i32, i32) {
    %c0_i32 = arith.constant 0 : i32
    %c0_i32_0 = arith.constant 0 : i32
    %c0_i32_1 = arith.constant 0 : i32
    return %c0_i32, %c0_i32_0 : i32, i32
  }
  func.func @transform_3(%arg0: i32) -> (i32, i32) {
    %c0_i32 = arith.constant 0 : i32
    %c0_i32_0 = arith.constant 0 : i32
    %c0_i32_1 = arith.constant 0 : i32
    return %c0_i32, %c0_i32_0 : i32, i32
  }
}

module attributes {stable_mosaic.version = 11 : i64} {
  func.func @_matmul_bias_kernel(%arg0: i32, %arg1: memref<256x27xbf16, #tpu.memory_space<vmem>>, %arg2: memref<27x4xbf16, #tpu.memory_space<vmem>>, %arg3: memref<1x4xf32, #tpu.memory_space<vmem>>, %arg4: memref<256x4xf32, #tpu.memory_space<vmem>>) attributes {dimension_semantics = [#tpu.dimension_semantics<parallel>], iteration_bounds = array<i64: 2>, scalar_prefetch = 0 : i64, scratch_operands = 0 : i64, tpu.core_type = #tpu.core_type<tc>, window_params = [{transform_indices = @transform_0, window_bounds = array<i64: 256, 27>}, {pipeline_mode = #tpu.pipeline_mode<synchronous>, transform_indices = @transform_1, window_bounds = array<i64: 27, 4>}, {pipeline_mode = #tpu.pipeline_mode<synchronous>, transform_indices = @transform_2, window_bounds = array<i64: 1, 4>}, {transform_indices = @transform_3, window_bounds = array<i64: 256, 4>}]} {
    %c0 = arith.constant 0 : index
    %c0_0 = arith.constant 0 : index
    %0 = vector.load %arg1[%c0, %c0_0] : memref<256x27xbf16, #tpu.memory_space<vmem>>, vector<256x27xbf16>
    %c0_1 = arith.constant 0 : index
    %c0_2 = arith.constant 0 : index
    %1 = vector.load %arg2[%c0_1, %c0_2] : memref<27x4xbf16, #tpu.memory_space<vmem>>, vector<27x4xbf16>
    %cst = arith.constant dense<0.000000e+00> : vector<256x4xf32>
    %2 = tpu.matmul %0, %1, %cst {dimension_numbers = #tpu.dot_dimension_numbers<[1], [0], [0], [1], [0, 0, 1, 1], [], []>} : vector<256x27xbf16>, vector<27x4xbf16>, vector<256x4xf32> -> vector<256x4xf32>
    %c0_3 = arith.constant 0 : index
    %c0_4 = arith.constant 0 : index
    %3 = vector.load %arg3[%c0_3, %c0_4] : memref<1x4xf32, #tpu.memory_space<vmem>>, vector<1x4xf32>
    %4 = vector.broadcast %3 : vector<1x4xf32> to vector<256x4xf32>
    %5 = arith.addf %2, %4 : vector<256x4xf32>
    %c0_5 = arith.constant 0 : index
    %c0_6 = arith.constant 0 : index
    %6 = vector.load %arg4[%c0_5, %c0_6] : memref<256x4xf32, #tpu.memory_space<vmem>>, vector<256x4xf32>
    tpu.vector_store %arg4[%c0_5, %c0_6], %5 {strides = array<i32>} : memref<256x4xf32, #tpu.memory_space<vmem>>, vector<256x4xf32>,
    return
  }
  func.func @transform_0(%arg0: i32) -> (i32, i32) {
    %c0_i32 = arith.constant 0 : i32
    %c0_i32_0 = arith.constant 0 : i32
    return %arg0, %c0_i32 : i32, i32
  }
  func.func @transform_1(%arg0: i32) -> (i32, i32) {
    %c0_i32 = arith.constant 0 : i32
    %c0_i32_0 = arith.constant 0 : i32
    %c0_i32_1 = arith.constant 0 : i32
    return %c0_i32, %c0_i32_0 : i32, i32
  }
  func.func @transform_2(%arg0: i32) -> (i32, i32) {
    %c0_i32 = arith.constant 0 : i32
    %c0_i32_0 = arith.constant 0 : i32
    %c0_i32_1 = arith.constant 0 : i32
    return %c0_i32, %c0_i32_0 : i32, i32
  }
  func.func @transform_3(%arg0: i32) -> (i32, i32) {
    %c0_i32 = arith.constant 0 : i32
    %c0_i32_0 = arith.constant 0 : i32
    return %arg0, %c0_i32 : i32, i32
  }
}

</mosaic_0001>

<llo_original>
// kernel: udanet_forward.7
$region0: #{udanet_forward.7}
  #allocation0 [shape = 'u32[]', space=smem, size = 0x4, offset = 0x4, fixed_abs, tag = 'smem constant byte address 0x4 - core index']
  #allocation1 [shape = 'u32[144,128]{1,0:T(1,128)}', space=vmem, size = 0x12000, scoped, tag = 'internal scratch']
  %s0 = inlined_call_operand.vmem [shape: bf16[1024,27], index: 0, kind: input, shape index: {}]
  %s1 = inlined_call_operand.vmem [shape: bf16[27,64], index: 1, kind: input, shape index: {}]
  %s2 = inlined_call_operand.vmem [shape: f32[1,64], index: 2, kind: input, shape index: {}]
  %s3 = inlined_call_operand.vmem [shape: f32[1024,64], index: 3, kind: output, shape index: {}]
  %s4 = sld [smem:[#allocation0]]
  $region45: #{udanet_forward.7} parent=0
    _
  %s6 = ssub.s32 1, %s4
  %s7 = scalar_select 0, %s6, %s4
  loop: start=0, step=1, limit=6
  $region2: #{udanet_forward.7} parent=0 // loop_pre_header
    _
  $region3: #{udanet_forward.7} parent=0 // loop_header
    %s9 = sphi 0, %s13
    %p10 = scmp.ge.s32.totalorder %s9, 6
    %s19 = sphi 0, %s21
    %s22 = sphi 0, %s19
    %s23 = sphi 0, %s22
    %s39 = sphi 0, %s23
    %s43 = sphi 0, %s43
    %s45 = sphi 0, %s43
    %s46 = sphi 0, %s45
    %s60 = sphi 0, %s46
    %s64 = sphi 0, %s64
    %s66 = sphi 0, %s64
    %s67 = sphi 0, %s66
    %s81 = sphi 0, %s67
    %s87 = sphi 0, %s89
    %s90 = sphi 0, %s87
    %s91 = sphi 0, %s90
    %s107 = sphi 0, %s91
  $region4: #{udanet_forward.7} parent=0 // loop_header_branch
    %12 = sbr.rel (%p10) target = $region8
  $region5: #{udanet_forward.7} parent=0 // loop_body
    %s14 = ssub.s32 %s9, 1
    %s15 = ssub.s32 %s9, 2
    %s16 = sadd.s32 %s9, 1
    %s17 = ssub.s32 %s9, %s16
    %p18 = scmp.eq.s32.totalorder %s17, 0
    %s20 = sadd.s32 %s19, 1
    %s21 = scalar_select %p18, %s19, %s20
    %p24 = pneg %p18
    %p25 = scmp.eq.s32.totalorder %s9, 3
    %p26 = por %p24, %p25
    %p27 = scmp.ne.s32.totalorder %s19, %s22
    %p28 = scmp.eq.s32.totalorder %s9, 0
    %p29 = por %p27, %p28
    %p30 = scmp.ne.s32.totalorder %s19, %s22
    %p31 = scmp.eq.s32.totalorder %s14, 3
    %p32 = por %p30, %p31
    %p33 = scmp.ne.s32.totalorder %s22, %s23
    %p34 = scmp.eq.s32.totalorder %s14, 0
    %p35 = por %p33, %p34
    %p36 = scmp.ne.s32.totalorder %s22, %s23
    %p37 = scmp.eq.s32.totalorder %s15, 3
    %p38 = por %p36, %p37
    %p40 = scmp.ne.s32.totalorder %s23, %s39
    %p41 = scmp.eq.s32.totalorder %s15, 0
    %p42 = por %p40, %p41
    %s44 = sadd.s32 %s43, 1
    %p47 = scmp.eq.s32.totalorder %s9, 3
    %p48 = scmp.ne.s32.totalorder %s43, %s45
    %p49 = scmp.eq.s32.totalorder %s9, 0
    %p50 = por %p48, %p49
    %p51 = scmp.ne.s32.totalorder %s43, %s45
    %p52 = scmp.eq.s32.totalorder %s14, 3
    %p53 = por %p51, %p52
    %p54 = scmp.ne.s32.totalorder %s45, %s46
    %p55 = scmp.eq.s32.totalorder %s14, 0
    %p56 = por %p54, %p55
    %p57 = scmp.ne.s32.totalorder %s45, %s46
    %p58 = scmp.eq.s32.totalorder %s15, 3
    %p59 = por %p57, %p58
    %p61 = scmp.ne.s32.totalorder %s46, %s60
    %p62 = scmp.eq.s32.totalorder %s15, 0
    %p63 = por %p61, %p62
    %s65 = sadd.s32 %s64, 1
    %p68 = scmp.eq.s32.totalorder %s9, 3
    %p69 = scmp.ne.s32.totalorder %s64, %s66
    %p70 = scmp.eq.s32.totalorder %s9, 0
    %p71 = por %p69, %p70
    %p72 = scmp.ne.s32.totalorder %s64, %s66
    %p73 = scmp.eq.s32.totalorder %s14, 3
    %p74 = por %p72, %p73
    %p75 = scmp.ne.s32.totalorder %s66, %s67
    %p76 = scmp.eq.s32.totalorder %s14, 0
    %p77 = por %p75, %p76
    %p78 = scmp.ne.s32.totalorder %s66, %s67
    %p79 = scmp.eq.s32.totalorder %s15, 3
    %p80 = por %p78, %p79
    %p82 = scmp.ne.s32.totalorder %s67, %s81
    %p83 = scmp.eq.s32.totalorder %s15, 0
    %p84 = por %p82, %p83
    %s85 = ssub.s32 %s9, %s16
    %p86 = scmp.eq.s32.totalorder %s85, 0
    %s88 = sadd.s32 %s87, 1
    %s89 = scalar_select %p86, %s87, %s88
    %p92 = pneg %p86
    %p93 = scmp.eq.s32.totalorder %s9, 3
    %p94 = por %p92, %p93
    %p95 = scmp.ne.s32.totalorder %s87, %s90
    %p96 = scmp.eq.s32.totalorder %s9, 0
    %p97 = por %p95, %p96
    %p98 = scmp.ne.s32.totalorder %s87, %s90
    %p99 = scmp.eq.s32.totalorder %s14, 3
    %p100 = por %p98, %p99
    %p101 = scmp.ne.s32.totalorder %s90, %s91
    %p102 = scmp.eq.s32.totalorder %s14, 0
    %p103 = por %p101, %p102
    %p104 = scmp.ne.s32.totalorder %s90, %s91
    %p105 = scmp.eq.s32.totalorder %s15, 3
    %p106 = por %p104, %p105
    %p108 = scmp.ne.s32.totalorder %s91, %s107
    %p109 = scmp.eq.s32.totalorder %s15, 0
    %p110 = por %p108, %p109
    %p111 = scmp.le.s32.totalorder 1, %s9
    %p112 = scmp.lt.s32.totalorder %s9, 5
    %p113 = pnand %p111, %p112
    %p114 = pneg %p113
    // Predicated region
    $region9: #{udanet_forward.7} parent=5 // pred_check
      _
    $region10: #{udanet_forward.7} parent=5 // pred_check_branch
      %116 = sbr.rel (%p113) target = $region12
    $region11: #{udanet_forward.7} parent=5 // pred_region
      %s117 = ssub.s32 %s9, 1
      // Predicated region
      $region13: #{udanet_forward.7} parent=11 // pred_check
        %p118 = pneg %p56
      $region14: #{udanet_forward.7} parent=11 // pred_check_branch
        %120 = sbr.rel (%p118) target = $region16
      $region15: #{udanet_forward.7} parent=11 // pred_region
        _
      $region16: #{udanet_forward.7} parent=11 // pred_fallthru
        _
      // Predicated region
      $region17: #{udanet_forward.7} parent=11 // pred_check
        %p121 = pneg %p77
      $region18: #{udanet_forward.7} parent=11 // pred_check_branch
        %123 = sbr.rel (%p121) target = $region20
      $region19: #{udanet_forward.7} parent=11 // pred_region
        _
      $region20: #{udanet_forward.7} parent=11 // pred_fallthru
        _
    $region12: #{udanet_forward.7} parent=5 // pred_fallthru
      _
    %p124 = scmp.lt.s32.totalorder %s9, 4
    // Predicated region
    $region21: #{udanet_forward.7} parent=5 // pred_check
      %p125 = pneg %p124
    $region22: #{udanet_forward.7} parent=5 // pred_check_branch
      %127 = sbr.rel (%p125) target = $region24
    $region23: #{udanet_forward.7} parent=5 // pred_region
      // Predicated region
      $region25: #{udanet_forward.7} parent=23 // pred_check
        %p128 = pneg %p29
      $region26: #{udanet_forward.7} parent=23 // pred_check_branch
        %130 = sbr.rel (%p128) target = $region28
      $region27: #{udanet_forward.7} parent=23 // pred_region
        %s131 = smul.u32 32, %s9
        %p132 = scmp.lt.s32.totalorder %s131, 127
        %s133 = scalar_select %p132, %s131, 127
        %s134 = smul.addr %s133, 4
        %s135 = scalar_lea.vmem %s0, %s134
        %s136 = smul.u32 32, %s9
      $region28: #{udanet_forward.7} parent=23 // pred_fallthru
        _
    $region24: #{udanet_forward.7} parent=5 // pred_fallthru
      _
    %p137 = scmp.le.s32.totalorder 1, %s9
    %p138 = scmp.lt.s32.totalorder %s9, 5
    %p139 = pnand %p137, %p138
    %p140 = pneg %p139
    // Predicated region
    $region29: #{udanet_forward.7} parent=5 // pred_check
      _
    $region30: #{udanet_forward.7} parent=5 // pred_check_branch
      %142 = sbr.rel (%p139) target = $region32
    $region31: #{udanet_forward.7} parent=5 // pred_region
      %s143 = ssub.s32 %s9, 1
      %s144 = smul.u32 32, %s14
      %p145 = scmp.lt.s32.totalorder %s144, 127
      %s146 = scalar_select %p145, %s144, 127
      %s147 = smul.addr %s146, 4
      %s148 = scalar_lea.vmem %s0, %s147
      %p149 = pneg %p35
      %p150 = pneg %p32
      %p151 = pneg %p56
      %p152 = pneg %p53
      %p153 = pneg %p77
      %p154 = pneg %p74
      %p155 = pneg %p103
      %p156 = pneg %p100
      %s157 = smul.u32 32, %s14
      %p158 = scmp.lt.s32.totalorder %s157, 127
      %s159 = scalar_select %p158, %s157, 127
      %s160 = smul.addr %s159, 8
      %s161 = scalar_lea.vmem %s3, %s160
      %s162 = smul.u32 32, %s14
      %p163 = scmp.lt.s32.totalorder %s162, 127
      %s164 = scalar_select %p163, %s162, 127
      %s165 = smul.addr %s164, 4
      %s166 = scalar_lea.vmem %s0, %s165
      %s167 = smul.u32 32, %s14
      %s168 = smul.u32 32, %s14
      %p169 = scmp.lt.s32.totalorder %s168, 127
      %s170 = scalar_select %p169, %s168, 127
      %s171 = smul.addr %s170, 8
      %s172 = scalar_lea.vmem %s3, %s171
      %s173 = smul.u32 32, %s14
      %v175 = vld [vmem:[%s166] sm:$0xf]
      %v176 = vld [vmem:[%s166 + $0x4] sm:$0xf]
      %v177 = vld [vmem:[%s166 + $0x8] sm:$0xf]
      %v178 = vld [vmem:[%s166 + $0xc] sm:$0xf]
      %v179 = vld [vmem:[%s166 + $0x10] sm:$0xf]
      %v180 = vld [vmem:[%s166 + $0x14] sm:$0xf]
      %v181 = vld [vmem:[%s166 + $0x18] sm:$0xf]
      %v182 = vld [vmem:[%s166 + $0x1c] sm:$0xf]
      %v183 = vld [vmem:[%s166 + $0x20] sm:$0xf]
      %v184 = vld [vmem:[%s166 + $0x24] sm:$0xf]
      %v185 = vld [vmem:[%s166 + $0x28] sm:$0xf]
      %v186 = vld [vmem:[%s166 + $0x2c] sm:$0xf]
      %v187 = vld [vmem:[%s166 + $0x30] sm:$0xf]
      %v188 = vld [vmem:[%s166 + $0x34] sm:$0xf]
      %v189 = vld [vmem:[%s166 + $0x38] sm:$0xf]
      %v190 = vld [vmem:[%s166 + $0x3c] sm:$0xf]
      %v191 = vld [vmem:[%s166 + $0x40] sm:$0xf]
      %v192 = vld [vmem:[%s166 + $0x44] sm:$0xf]
      %v193 = vld [vmem:[%s166 + $0x48] sm:$0xf]
      %v194 = vld [vmem:[%s166 + $0x4c] sm:$0xf]
      %v195 = vld [vmem:[%s166 + $0x50] sm:$0xf]
      %v196 = vld [vmem:[%s166 + $0x54] sm:$0xf]
      %v197 = vld [vmem:[%s166 + $0x58] sm:$0xf]
      %v198 = vld [vmem:[%s166 + $0x5c] sm:$0xf]
      %v199 = vld [vmem:[%s166 + $0x60] sm:$0xf]
      %v200 = vld [vmem:[%s166 + $0x64] sm:$0xf]
      %v201 = vld [vmem:[%s166 + $0x68] sm:$0xf]
      %v202 = vld [vmem:[%s166 + $0x6c] sm:$0xf]
      %v203 = vld [vmem:[%s166 + $0x70] sm:$0xf]
      %v204 = vld [vmem:[%s166 + $0x74] sm:$0xf]
      %v205 = vld [vmem:[%s166 + $0x78] sm:$0xf]
      %v206 = vld [vmem:[%s166 + $0x7c] sm:$0xf]
      %v207 = vld [vmem:[%s1] sm:$0xf]
      %v208 = vld [vmem:[%s1 + $0x4] sm:$0xf]
      %v209 = vld [vmem:[%s1 + $0x8] sm:$0xf]
      %v210 = vld [vmem:[%s1 + $0xc] sm:$0x3]
      %v211 = vld [vmem:[%s2] sm:$0x1]
      %v213 = vlaneseq
      %v214 = vshrl.u32 %v213, 7
      %v215 = vsub.s32 0, %v214
      %v216 = vrot.slane %v211, %v215
      %v250 = vunpack.c.l.b16 %v175
      %v251 = vunpack.c.l.b16 %v176
      %v252 = vunpack.c.l.b16 %v177
      %v253 = vunpack.c.l.b16 %v178
      %v254 = vunpack.c.l.b16 %v179
      %v255 = vunpack.c.l.b16 %v180
      %v256 = vunpack.c.l.b16 %v181
      %v257 = vunpack.c.l.b16 %v182
      %v258 = vunpack.c.l.b16 %v183
      %v259 = vunpack.c.l.b16 %v184
      %v260 = vunpack.c.l.b16 %v185
      %v261 = vunpack.c.l.b16 %v186
      %v262 = vunpack.c.l.b16 %v187
      %v263 = vunpack.c.l.b16 %v188
      %v264 = vunpack.c.l.b16 %v189
      %v265 = vunpack.c.l.b16 %v190
      %v266 = vunpack.c.l.b16 %v191
      %v267 = vunpack.c.l.b16 %v192
      %v268 = vunpack.c.l.b16 %v193
      %v269 = vunpack.c.l.b16 %v194
      %v270 = vunpack.c.l.b16 %v195
      %v271 = vunpack.c.l.b16 %v196
      %v272 = vunpack.c.l.b16 %v197
      %v273 = vunpack.c.l.b16 %v198
      %v274 = vunpack.c.l.b16 %v199
      %v275 = vunpack.c.l.b16 %v200
      %v276 = vunpack.c.l.b16 %v201
      %v277 = vunpack.c.l.b16 %v202
      %v278 = vunpack.c.l.b16 %v203
      %v279 = vunpack.c.l.b16 %v204
      %v280 = vunpack.c.l.b16 %v205
      %v281 = vunpack.c.l.b16 %v206
      %v282 = vpack.c.b16 %v251, %v250
      %v283 = vpack.c.b16 %v253, %v252
      %v284 = vpack.c.b16 %v255, %v254
      %v285 = vpack.c.b16 %v257, %v256
      %v286 = vpack.c.b16 %v259, %v258
      %v287 = vpack.c.b16 %v261, %v260
      %v288 = vpack.c.b16 %v263, %v262
      %v289 = vpack.c.b16 %v265, %v264
      %v290 = vpack.c.b16 %v267, %v266
      %v291 = vpack.c.b16 %v269, %v268
      %v292 = vpack.c.b16 %v271, %v270
      %v293 = vpack.c.b16 %v273, %v272
      %v294 = vpack.c.b16 %v275, %v274
      %v295 = vpack.c.b16 %v277, %v276
      %v296 = vpack.c.b16 %v279, %v278
      %v297 = vpack.c.b16 %v281, %v280
      %v302 = vunpack.c.l.b16 %v207
      %v303 = vunpack.c.l.b16 %v208
      %v304 = vunpack.c.l.b16 %v209
      %v305 = vunpack.c.l.b16 %v210
      %v306 = vpack.c.b16 %v303, %v302
      %v307 = vpack.c.b16 %v305, %v304
      %vm309 = vcmask 220160
      %v311 = vsel %vm309, %v282, 0
      %v314 = vsel %vm309, %v283, 0
      %v317 = vsel %vm309, %v284, 0
      %v320 = vsel %vm309, %v285, 0
      %v323 = vsel %vm309, %v286, 0
      %v326 = vsel %vm309, %v287, 0
      %v329 = vsel %vm309, %v288, 0
      %v332 = vsel %vm309, %v289, 0
      %v335 = vsel %vm309, %v290, 0
      %v338 = vsel %vm309, %v291, 0
      %v341 = vsel %vm309, %v292, 0
      %v344 = vsel %vm309, %v293, 0
      %v347 = vsel %vm309, %v294, 0
      %v350 = vsel %vm309, %v295, 0
      %v353 = vsel %vm309, %v296, 0
      %v356 = vsel %vm309, %v297, 0
      %vm358 = vcmask 1044480
      %vm359 = vcmask 1045504
      %v360 = vsel %vm358, 4294967295, 65535
      %v361 = vsel %vm359, %v360, 0
      %v363 = vand.u32 %v307, %v361
      %365 = vmatprep.subr.bf16.mxu0 0
      %366 = vmatpush1.bf16.msra.mxu0 %v306
      %367 = vmatprep.subr.bf16.mxu0 0
      %368 = vmatpush1.bf16.msra.mxu0 %v363
      %369 = vmatprep.subr.bf16.mxu0 0
      %370 = vmatpush1.bf16.msra.mxu0 0
      %371 = vmatprep.subr.bf16.mxu0 0
      %372 = vmatpush1.bf16.msra.mxu0 0
      %373 = vmatprep.subr.bf16.mxu0 0
      %374 = vmatpush1.bf16.msra.mxu0 0
      %375 = vmatprep.subr.bf16.mxu0 0
      %376 = vmatpush1.bf16.msra.mxu0 0
      %377 = vmatprep.subr.bf16.mxu0 0
      %378 = vmatpush1.bf16.msra.mxu0 0
      %379 = vmatprep.subr.bf16.mxu0 0
      %380 = vmatpush1.bf16.msra.mxu0 0
      %381 = vmatprep.subr.bf16.mxu0 0
      %382 = vmatpush1.bf16.msra.mxu0 0
      %383 = vmatprep.subr.bf16.mxu0 0
      %384 = vmatpush1.bf16.msra.mxu0 0
      %385 = vmatprep.subr.bf16.mxu0 0
      %386 = vmatpush1.bf16.msra.mxu0 0
      %387 = vmatprep.subr.bf16.mxu0 0
      %388 = vmatpush1.bf16.msra.mxu0 0
      %389 = vmatprep.subr.bf16.mxu0 0
      %390 = vmatpush1.bf16.msra.mxu0 0
      %391 = vmatprep.subr.bf16.mxu0 0
      %392 = vmatpush1.bf16.msra.mxu0 0
      %393 = vmatprep.subr.bf16.mxu0 0
      %394 = vmatpush1.bf16.msra.mxu0 0
      %395 = vmatprep.subr.bf16.mxu0 0
      %396 = vmatpush1.bf16.msra.mxu0 0
      %397 = vmatprep.mubr.bf16.mxu0 0
      %398 = vmatmul.mubr.bf16.gmra.mrb[0].mxu0 %v311
      %v399 = vpop.f32.mrb[0].mxu0
      %v400 = vadd.f32 %v216, %v399
      %v401 = vpop.f32.mrb[0].mxu0
      %v402 = vpop.f32.mrb[0].mxu0
      %v403 = vadd.f32 %v216, %v402
      %v404 = vpop.f32.mrb[0].mxu0
      %405 = vmatprep.mubr.bf16.mxu0 0
      %406 = vmatmul.mubr.bf16.gmra.mrb[0].mxu0 %v314
      %v407 = vpop.f32.mrb[0].mxu0
      %v408 = vadd.f32 %v216, %v407
      %v409 = vpop.f32.mrb[0].mxu0
      %v410 = vpop.f32.mrb[0].mxu0
      %v411 = vadd.f32 %v216, %v410
      %v412 = vpop.f32.mrb[0].mxu0
      %413 = vmatprep.mubr.bf16.mxu0 0
      %414 = vmatmul.mubr.bf16.gmra.mrb[0].mxu0 %v317
      %v415 = vpop.f32.mrb[0].mxu0
      %v416 = vadd.f32 %v216, %v415
      %v417 = vpop.f32.mrb[0].mxu0
      %v418 = vpop.f32.mrb[0].mxu0
      %v419 = vadd.f32 %v216, %v418
      %v420 = vpop.f32.mrb[0].mxu0
      %421 = vmatprep.mubr.bf16.mxu0 0
      %422 = vmatmul.mubr.bf16.gmra.mrb[0].mxu0 %v320
      %v423 = vpop.f32.mrb[0].mxu0
      %v424 = vadd.f32 %v216, %v423
      %v425 = vpop.f32.mrb[0].mxu0
      %v426 = vpop.f32.mrb[0].mxu0
      %v427 = vadd.f32 %v216, %v426
      %v428 = vpop.f32.mrb[0].mxu0
      %429 = vmatprep.mubr.bf16.mxu0 0
      %430 = vmatmul.mubr.bf16.gmra.mrb[0].mxu0 %v323
      %v431 = vpop.f32.mrb[0].mxu0
      %v432 = vadd.f32 %v216, %v431
      %v433 = vpop.f32.mrb[0].mxu0
      %v434 = vpop.f32.mrb[0].mxu0
      %v435 = vadd.f32 %v216, %v434
      %v436 = vpop.f32.mrb[0].mxu0
      %437 = vmatprep.mubr.bf16.mxu0 0
      %438 = vmatmul.mubr.bf16.gmra.mrb[0].mxu0 %v326
      %v439 = vpop.f32.mrb[0].mxu0
      %v440 = vadd.f32 %v216, %v439
      %v441 = vpop.f32.mrb[0].mxu0
      %v442 = vpop.f32.mrb[0].mxu0
      %v443 = vadd.f32 %v216, %v442
      %v444 = vpop.f32.mrb[0].mxu0
      %445 = vmatprep.mubr.bf16.mxu0 0
      %446 = vmatmul.mubr.bf16.gmra.mrb[0].mxu0 %v329
      %v447 = vpop.f32.mrb[0].mxu0
      %v448 = vadd.f32 %v216, %v447
      %v449 = vpop.f32.mrb[0].mxu0
      %v450 = vpop.f32.mrb[0].mxu0
      %v451 = vadd.f32 %v216, %v450
      %v452 = vpop.f32.mrb[0].mxu0
      %453 = vmatprep.mubr.bf16.mxu0 0
      %454 = vmatmul.mubr.bf16.gmra.mrb[0].mxu0 %v332
      %v455 = vpop.f32.mrb[0].mxu0
      %v456 = vadd.f32 %v216, %v455
      %v457 = vpop.f32.mrb[0].mxu0
      %v458 = vpop.f32.mrb[0].mxu0
      %v459 = vadd.f32 %v216, %v458
      %v460 = vpop.f32.mrb[0].mxu0
      %461 = vmatprep.mubr.bf16.mxu0 0
      %462 = vmatmul.mubr.bf16.gmra.mrb[0].mxu0 %v335
      %v463 = vpop.f32.mrb[0].mxu0
      %v464 = vadd.f32 %v216, %v463
      %v465 = vpop.f32.mrb[0].mxu0
      %v466 = vpop.f32.mrb[0].mxu0
      %v467 = vadd.f32 %v216, %v466
      %v468 = vpop.f32.mrb[0].mxu0
      %469 = vmatprep.mubr.bf16.mxu0 0
      %470 = vmatmul.mubr.bf16.gmra.mrb[0].mxu0 %v338
      %v471 = vpop.f32.mrb[0].mxu0
      %v472 = vadd.f32 %v216, %v471
      %v473 = vpop.f32.mrb[0].mxu0
      %v474 = vpop.f32.mrb[0].mxu0
      %v475 = vadd.f32 %v216, %v474
      %v476 = vpop.f32.mrb[0].mxu0
      %477 = vmatprep.mubr.bf16.mxu0 0
      %478 = vmatmul.mubr.bf16.gmra.mrb[0].mxu0 %v341
      %v479 = vpop.f32.mrb[0].mxu0
      %v480 = vadd.f32 %v216, %v479
      %v481 = vpop.f32.mrb[0].mxu0
      %v482 = vpop.f32.mrb[0].mxu0
      %v483 = vadd.f32 %v216, %v482
      %v484 = vpop.f32.mrb[0].mxu0
      %485 = vmatprep.mubr.bf16.mxu0 0
      %486 = vmatmul.mubr.bf16.gmra.mrb[0].mxu0 %v344
      %v487 = vpop.f32.mrb[0].mxu0
      %v488 = vadd.f32 %v216, %v487
      %v489 = vpop.f32.mrb[0].mxu0
      %v490 = vpop.f32.mrb[0].mxu0
      %v491 = vadd.f32 %v216, %v490
      %v492 = vpop.f32.mrb[0].mxu0
      %493 = vmatprep.mubr.bf16.mxu0 0
      %494 = vmatmul.mubr.bf16.gmra.mrb[0].mxu0 %v347
      %v495 = vpop.f32.mrb[0].mxu0
      %v496 = vadd.f32 %v216, %v495
      %v497 = vpop.f32.mrb[0].mxu0
      %v498 = vpop.f32.mrb[0].mxu0
      %v499 = vadd.f32 %v216, %v498
      %v500 = vpop.f32.mrb[0].mxu0
      %501 = vmatprep.mubr.bf16.mxu0 0
      %502 = vmatmul.mubr.bf16.gmra.mrb[0].mxu0 %v350
      %v503 = vpop.f32.mrb[0].mxu0
      %v504 = vadd.f32 %v216, %v503
      %v505 = vpop.f32.mrb[0].mxu0
      %v506 = vpop.f32.mrb[0].mxu0
      %v507 = vadd.f32 %v216, %v506
      %v508 = vpop.f32.mrb[0].mxu0
      %509 = vmatprep.mubr.bf16.mxu0 0
      %510 = vmatmul.mubr.bf16.gmra.mrb[0].mxu0 %v353
      %v511 = vpop.f32.mrb[0].mxu0
      %v512 = vadd.f32 %v216, %v511
      %v513 = vpop.f32.mrb[0].mxu0
      %v514 = vpop.f32.mrb[0].mxu0
      %v515 = vadd.f32 %v216, %v514
      %v516 = vpop.f32.mrb[0].mxu0
      %517 = vmatprep.mubr.bf16.mxu0 0
      %518 = vmatmul.mubr.bf16.gmra.mrb[0].mxu0 %v356
      %v519 = vpop.f32.mrb[0].mxu0
      %v520 = vadd.f32 %v216, %v519
      %v521 = vpop.f32.mrb[0].mxu0
      %v522 = vpop.f32.mrb[0].mxu0
      %v523 = vadd.f32 %v216, %v522
      %v524 = vpop.f32.mrb[0].mxu0
      %525 = vdwg.mxu0
      %v526 = vmax.f32 %v400, 0.0
      %v527 = vmax.f32 %v403, 0.0
      %v528 = vmax.f32 %v408, 0.0
      %v529 = vmax.f32 %v411, 0.0
      %v530 = vmax.f32 %v416, 0.0
      %v531 = vmax.f32 %v419, 0.0
      %v532 = vmax.f32 %v424, 0.0
      %v533 = vmax.f32 %v427, 0.0
      %v534 = vmax.f32 %v432, 0.0
      %v535 = vmax.f32 %v435, 0.0
      %v536 = vmax.f32 %v440, 0.0
      %v537 = vmax.f32 %v443, 0.0
      %v538 = vmax.f32 %v448, 0.0
      %v539 = vmax.f32 %v451, 0.0
      %v540 = vmax.f32 %v456, 0.0
      %v541 = vmax.f32 %v459, 0.0
      %v542 = vmax.f32 %v464, 0.0
      %v543 = vmax.f32 %v467, 0.0
      %v544 = vmax.f32 %v472, 0.0
      %v545 = vmax.f32 %v475, 0.0
      %v546 = vmax.f32 %v480, 0.0
      %v547 = vmax.f32 %v483, 0.0
      %v548 = vmax.f32 %v488, 0.0
      %v549 = vmax.f32 %v491, 0.0
      %v550 = vmax.f32 %v496, 0.0
      %v551 = vmax.f32 %v499, 0.0
      %v552 = vmax.f32 %v504, 0.0
      %v553 = vmax.f32 %v507, 0.0
      %v554 = vmax.f32 %v512, 0.0
      %v555 = vmax.f32 %v515, 0.0
      %v556 = vmax.f32 %v520, 0.0
      %v557 = vmax.f32 %v523, 0.0
      %vm558 = vcmask 523264
      %559 = vst.msk [vmem:[%s172] sm:$0xff] %vm558, %v526
      %560 = vst.msk [vmem:[%s172 + $0x8] sm:$0xff] %vm558, %v527
      %561 = vst.msk [vmem:[%s172 + $0x10] sm:$0xff] %vm558, %v528
      %562 = vst.msk [vmem:[%s172 + $0x18] sm:$0xff] %vm558, %v529
      %563 = vst.msk [vmem:[%s172 + $0x20] sm:$0xff] %vm558, %v530
      %564 = vst.msk [vmem:[%s172 + $0x28] sm:$0xff] %vm558, %v531
      %565 = vst.msk [vmem:[%s172 + $0x30] sm:$0xff] %vm558, %v532
      %566 = vst.msk [vmem:[%s172 + $0x38] sm:$0xff] %vm558, %v533
      %567 = vst.msk [vmem:[%s172 + $0x40] sm:$0xff] %vm558, %v534
      %568 = vst.msk [vmem:[%s172 + $0x48] sm:$0xff] %vm558, %v535
      %569 = vst.msk [vmem:[%s172 + $0x50] sm:$0xff] %vm558, %v536
      %570 = vst.msk [vmem:[%s172 + $0x58] sm:$0xff] %vm558, %v537
      %571 = vst.msk [vmem:[%s172 + $0x60] sm:$0xff] %vm558, %v538
      %572 = vst.msk [vmem:[%s172 + $0x68] sm:$0xff] %vm558, %v539
      %573 = vst.msk [vmem:[%s172 + $0x70] sm:$0xff] %vm558, %v540
      %574 = vst.msk [vmem:[%s172 + $0x78] sm:$0xff] %vm558, %v541
      %575 = vst.msk [vmem:[%s172 + $0x80] sm:$0xff] %vm558, %v542
      %576 = vst.msk [vmem:[%s172 + $0x88] sm:$0xff] %vm558, %v543
      %577 = vst.msk [vmem:[%s172 + $0x90] sm:$0xff] %vm558, %v544
      %578 = vst.msk [vmem:[%s172 + $0x98] sm:$0xff] %vm558, %v545
      %579 = vst.msk [vmem:[%s172 + $0xa0] sm:$0xff] %vm558, %v546
      %580 = vst.msk [vmem:[%s172 + $0xa8] sm:$0xff] %vm558, %v547
      %581 = vst.msk [vmem:[%s172 + $0xb0] sm:$0xff] %vm558, %v548
      %582 = vst.msk [vmem:[%s172 + $0xb8] sm:$0xff] %vm558, %v549
      %583 = vst.msk [vmem:[%s172 + $0xc0] sm:$0xff] %vm558, %v550
      %584 = vst.msk [vmem:[%s172 + $0xc8] sm:$0xff] %vm558, %v551
      %585 = vst.msk [vmem:[%s172 + $0xd0] sm:$0xff] %vm558, %v552
      %586 = vst.msk [vmem:[%s172 + $0xd8] sm:$0xff] %vm558, %v553
      %587 = vst.msk [vmem:[%s172 + $0xe0] sm:$0xff] %vm558, %v554
      %588 = vst.msk [vmem:[%s172 + $0xe8] sm:$0xff] %vm558, %v555
      %589 = vst.msk [vmem:[%s172 + $0xf0] sm:$0xff] %vm558, %v556
      %590 = vst.msk [vmem:[%s172 + $0xf8] sm:$0xff] %vm558, %v557
      %s591 = smul.u32 32, %s14
      %p592 = scmp.lt.s32.totalorder %s591, 127
      %s593 = scalar_select %p592, %s591, 127
      %s594 = smul.addr %s593, 8
      %s595 = scalar_lea.vmem %s3, %s594
      // Predicated region
      $region33: #{udanet_forward.7} parent=31 // pred_check
        %p596 = pneg %p100
      $region34: #{udanet_forward.7} parent=31 // pred_check_branch
        %598 = sbr.rel (%p596) target = $region36
      $region35: #{udanet_forward.7} parent=31 // pred_region
        %s599 = smul.u32 32, %s14
      $region36: #{udanet_forward.7} parent=31 // pred_fallthru
        _
    $region32: #{udanet_forward.7} parent=5 // pred_fallthru
      _
    %p600 = scmp.le.s32.totalorder 2, %s9
    // Predicated region
    $region37: #{udanet_forward.7} parent=5 // pred_check
      %p601 = pneg %p600
    $region38: #{udanet_forward.7} parent=5 // pred_check_branch
      %603 = sbr.rel (%p601) target = $region40
    $region39: #{udanet_forward.7} parent=5 // pred_region
      %s604 = ssub.s32 %s9, 2
      // Predicated region
      $region41: #{udanet_forward.7} parent=39 // pred_check
        %p605 = pneg %p106
      $region42: #{udanet_forward.7} parent=39 // pred_check_branch
        %607 = sbr.rel (%p605) target = $region44
      $region43: #{udanet_forward.7} parent=39 // pred_region
        %s608 = smul.u32 32, %s15
        %p609 = scmp.lt.s32.totalorder %s608, 127
        %s610 = scalar_select %p609, %s608, 127
        %s611 = smul.addr %s610, 8
        %s612 = scalar_lea.vmem %s3, %s611
      $region44: #{udanet_forward.7} parent=39 // pred_fallthru
        _
    $region40: #{udanet_forward.7} parent=5 // pred_fallthru
      _
  $region6: #{udanet_forward.7} parent=0 // loop_footer
    %s13 = sadd.s32 1, %s9
  $region7: #{udanet_forward.7} parent=0 // loop_footer_branch
    %8 = sbr.rel target = $region3
  $region8: #{udanet_forward.7} parent=0 // loop_exit
    _

// kernel: udanet_forward.8
$region0: #{udanet_forward.8}
  #allocation0 [shape = 'u32[]', space=smem, size = 0x4, offset = 0x4, fixed_abs, tag = 'smem constant byte address 0x4 - core index']
  #allocation1 [shape = 'u32[144,128]{1,0:T(1,128)}', space=vmem, size = 0x12000, scoped, tag = 'internal scratch']
  %s0 = inlined_call_operand.vmem [shape: bf16[1024,576], index: 0, kind: input, shape index: {}]
  %s1 = inlined_call_operand.vmem [shape: bf16[576,128], index: 1, kind: input, shape index: {}]
  %s2 = inlined_call_operand.vmem [shape: f32[1,128], index: 2, kind: input, shape index: {}]
  %s3 = inlined_call_operand.vmem [shape: f32[1024,128], index: 3, kind: output, shape index: {}]
  %s4 = sld [smem:[#allocation0]]
  $region45: #{udanet_forward.8} parent=0
    _
  %s6 = ssub.s32 1, %s4
  %s7 = scalar_select 0, %s6, %s4
  loop: start=0, step=1, limit=6
  $region2: #{udanet_forward.8} parent=0 // loop_pre_header
    _
  $region3: #{udanet_forward.8} parent=0 // loop_header
    %s9 = sphi 0, %s13
    %p10 = scmp.ge.s32.totalorder %s9, 6
    %s19 = sphi 0, %s21
    %s22 = sphi 0, %s19
    %s23 = sphi 0, %s22
    %s39 = sphi 0, %s23
    %s43 = sphi 0, %s43
    %s45 = sphi 0, %s43
    %s46 = sphi 0, %s45
    %s60 = sphi 0, %s46
    %s64 = sphi 0, %s64
    %s66 = sphi 0, %s64
    %s67 = sphi 0, %s66
    %s81 = sphi 0, %s67
    %s87 = sphi 0, %s89
    %s90 = sphi 0, %s87
    %s91 = sphi 0, %s90
    %s107 = sphi 0, %s91
  $region4: #{udanet_forward.8} parent=0 // loop_header_branch
    %12 = sbr.rel (%p10) target = $region8
  $region5: #{udanet_forward.8} parent=0 // loop_body
    %s14 = ssub.s32 %s9, 1
    %s15 = ssub.s32 %s9, 2
    %s16 = sadd.s32 %s9, 1
    %s17 = ssub.s32 %s9, %s16
    %p18 = scmp.eq.s32.totalorder %s17, 0
    %s20 = sadd.s32 %s19, 1
    %s21 = scalar_select %p18, %s19, %s20
    %p24 = pneg %p18
    %p25 = scmp.eq.s32.totalorder %s9, 3
    %p26 = por %p24, %p25
    %p27 = scmp.ne.s32.totalorder %s19, %s22
    %p28 = scmp.eq.s32.totalorder %s9, 0
    %p29 = por %p27, %p28
    %p30 = scmp.ne.s32.totalorder %s19, %s22
    %p31 = scmp.eq.s32.totalorder %s14, 3
    %p32 = por %p30, %p31
    %p33 = scmp.ne.s32.totalorder %s22, %s23
    %p34 = scmp.eq.s32.totalorder %s14, 0
    %p35 = por %p33, %p34
    %p36 = scmp.ne.s32.totalorder %s22, %s23
    %p37 = scmp.eq.s32.totalorder %s15, 3
    %p38 = por %p36, %p37
    %p40 = scmp.ne.s32.totalorder %s23, %s39
    %p41 = scmp.eq.s32.totalorder %s15, 0
    %p42 = por %p40, %p41
    %s44 = sadd.s32 %s43, 1
    %p47 = scmp.eq.s32.totalorder %s9, 3
    %p48 = scmp.ne.s32.totalorder %s43, %s45
    %p49 = scmp.eq.s32.totalorder %s9, 0
    %p50 = por %p48, %p49
    %p51 = scmp.ne.s32.totalorder %s43, %s45
    %p52 = scmp.eq.s32.totalorder %s14, 3
    %p53 = por %p51, %p52
    %p54 = scmp.ne.s32.totalorder %s45, %s46
    %p55 = scmp.eq.s32.totalorder %s14, 0
    %p56 = por %p54, %p55
    %p57 = scmp.ne.s32.totalorder %s45, %s46
    %p58 = scmp.eq.s32.totalorder %s15, 3
    %p59 = por %p57, %p58
    %p61 = scmp.ne.s32.totalorder %s46, %s60
    %p62 = scmp.eq.s32.totalorder %s15, 0
    %p63 = por %p61, %p62
    %s65 = sadd.s32 %s64, 1
    %p68 = scmp.eq.s32.totalorder %s9, 3
    %p69 = scmp.ne.s32.totalorder %s64, %s66
    %p70 = scmp.eq.s32.totalorder %s9, 0
    %p71 = por %p69, %p70
    %p72 = scmp.ne.s32.totalorder %s64, %s66
    %p73 = scmp.eq.s32.totalorder %s14, 3
    %p74 = por %p72, %p73
    %p75 = scmp.ne.s32.totalorder %s66, %s67
    %p76 = scmp.eq.s32.totalorder %s14, 0
    %p77 = por %p75, %p76
    %p78 = scmp.ne.s32.totalorder %s66, %s67
    %p79 = scmp.eq.s32.totalorder %s15, 3
    %p80 = por %p78, %p79
    %p82 = scmp.ne.s32.totalorder %s67, %s81
    %p83 = scmp.eq.s32.totalorder %s15, 0
    %p84 = por %p82, %p83
    %s85 = ssub.s32 %s9, %s16
    %p86 = scmp.eq.s32.totalorder %s85, 0
    %s88 = sadd.s32 %s87, 1
    %s89 = scalar_select %p86, %s87, %s88
    %p92 = pneg %p86
    %p93 = scmp.eq.s32.totalorder %s9, 3
    %p94 = por %p92, %p93
    %p95 = scmp.ne.s32.totalorder %s87, %s90
    %p96 = scmp.eq.s32.totalorder %s9, 0
    %p97 = por %p95, %p96
    %p98 = scmp.ne.s32.totalorder %s87, %s90
    %p99 = scmp.eq.s32.totalorder %s14, 3
    %p100 = por %p98, %p99
    %p101 = scmp.ne.s32.totalorder %s90, %s91
    %p102 = scmp.eq.s32.totalorder %s14, 0
    %p103 = por %p101, %p102
    %p104 = scmp.ne.s32.totalorder %s90, %s91
    %p105 = scmp.eq.s32.totalorder %s15, 3
    %p106 = por %p104, %p105
    %p108 = scmp.ne.s32.totalorder %s91, %s107
    %p109 = scmp.eq.s32.totalorder %s15, 0
    %p110 = por %p108, %p109
    %p111 = scmp.le.s32.totalorder 1, %s9
    %p112 = scmp.lt.s32.totalorder %s9, 5
    %p113 = pnand %p111, %p112
    %p114 = pneg %p113
    // Predicated region
    $region9: #{udanet_forward.8} parent=5 // pred_check
      _
    $region10: #{udanet_forward.8} parent=5 // pred_check_branch
      %116 = sbr.rel (%p113) target = $region12
    $region11: #{udanet_forward.8} parent=5 // pred_region
      %s117 = ssub.s32 %s9, 1
      // Predicated region
      $region13: #{udanet_forward.8} parent=11 // pred_check
        %p118 = pneg %p56
      $region14: #{udanet_forward.8} parent=11 // pred_check_branch
        %120 = sbr.rel (%p118) target = $region16
      $region15: #{udanet_forward.8} parent=11 // pred_region
        _
      $region16: #{udanet_forward.8} parent=11 // pred_fallthru
        _
      // Predicated region
      $region17: #{udanet_forward.8} parent=11 // pred_check
        %p121 = pneg %p77
      $region18: #{udanet_forward.8} parent=11 // pred_check_branch
        %123 = sbr.rel (%p121) target = $region20
      $region19: #{udanet_forward.8} parent=11 // pred_region
        _
      $region20: #{udanet_forward.8} parent=11 // pred_fallthru
        _
    $region12: #{udanet_forward.8} parent=5 // pred_fallthru
      _
    %p124 = scmp.lt.s32.totalorder %s9, 4
    // Predicated region
    $region21: #{udanet_forward.8} parent=5 // pred_check
      %p125 = pneg %p124
    $region22: #{udanet_forward.8} parent=5 // pred_check_branch
      %127 = sbr.rel (%p125) target = $region24
    $region23: #{udanet_forward.8} parent=5 // pred_region
      // Predicated region
      $region25: #{udanet_forward.8} parent=23 // pred_check
        %p128 = pneg %p29
      $region26: #{udanet_forward.8} parent=23 // pred_check_branch
        %130 = sbr.rel (%p128) target = $region28
      $region27: #{udanet_forward.8} parent=23 // pred_region
        %s131 = smul.u32 32, %s9
        %p132 = scmp.lt.s32.totalorder %s131, 127
        %s133 = scalar_select %p132, %s131, 127
        %s134 = smul.addr %s133, 5
        %s135 = smul.addr %s134, 4
        %s136 = scalar_lea.vmem %s0, %s135
        %s137 = smul.u32 32, %s9
      $region28: #{udanet_forward.8} parent=23 // pred_fallthru
        _
    $region24: #{udanet_forward.8} parent=5 // pred_fallthru
      _
    %p138 = scmp.le.s32.totalorder 1, %s9
    %p139 = scmp.lt.s32.totalorder %s9, 5
    %p140 = pnand %p138, %p139
    %p141 = pneg %p140
    // Predicated region
    $region29: #{udanet_forward.8} parent=5 // pred_check
      _
    $region30: #{udanet_forward.8} parent=5 // pred_check_branch
      %143 = sbr.rel (%p140) target = $region32
    $region31: #{udanet_forward.8} parent=5 // pred_region
      %s144 = ssub.s32 %s9, 1
      %s145 = smul.u32 32, %s14
      %p146 = scmp.lt.s32.totalorder %s145, 127
      %s147 = scalar_select %p146, %s145, 127
      %s148 = smul.addr %s147, 5
      %s149 = smul.addr %s148, 4
      %s150 = scalar_lea.vmem %s0, %s149
      %p151 = pneg %p35
      %p152 = pneg %p32
      %p153 = pneg %p56
      %p154 = pneg %p53
      %p155 = pneg %p77
      %p156 = pneg %p74
      %p157 = pneg %p103
      %p158 = pneg %p100
      %s159 = smul.u32 32, %s14
      %p160 = scmp.lt.s32.totalorder %s159, 127
      %s161 = scalar_select %p160, %s159, 127
      %s162 = smul.addr %s161, 8
      %s163 = scalar_lea.vmem %s3, %s162
      %s164 = smul.u32 32, %s14
      %p165 = scmp.lt.s32.totalorder %s164, 127
      %s166 = scalar_select %p165, %s164, 127
      %s167 = smul.addr %s166, 5
      %s168 = smul.addr %s167, 4
      %s169 = scalar_lea.vmem %s0, %s168
      %s170 = smul.u32 32, %s14
      %s171 = smul.u32 32, %s14
      %p172 = scmp.lt.s32.totalorder %s171, 127
      %s173 = scalar_select %p172, %s171, 127
      %s174 = smul.addr %s173, 8
      %s175 = scalar_lea.vmem %s3, %s174
      %s176 = smul.u32 32, %s14
      %v178 = vld [vmem:[%s169] sm:$0xff]
      %v179 = vld [vmem:[%s169 + $0x8] sm:$0xff]
      %v180 = vld [vmem:[%s169 + $0x10] sm:$0xf]
      %v181 = vld [vmem:[%s169 + $0x14] sm:$0xff]
      %v182 = vld [vmem:[%s169 + $0x1c] sm:$0xff]
      %v183 = vld [vmem:[%s169 + $0x24] sm:$0xf]
      %v184 = vld [vmem:[%s169 + $0x28] sm:$0xff]
      %v185 = vld [vmem:[%s169 + $0x30] sm:$0xff]
      %v186 = vld [vmem:[%s169 + $0x38] sm:$0xf]
      %v187 = vld [vmem:[%s169 + $0x3c] sm:$0xff]
      %v188 = vld [vmem:[%s169 + $0x44] sm:$0xff]
      %v189 = vld [vmem:[%s169 + $0x4c] sm:$0xf]
      %v190 = vld [vmem:[%s169 + $0x50] sm:$0xff]
      %v191 = vld [vmem:[%s169 + $0x58] sm:$0xff]
      %v192 = vld [vmem:[%s169 + $0x60] sm:$0xf]
      %v193 = vld [vmem:[%s169 + $0x64] sm:$0xff]
      %v194 = vld [vmem:[%s169 + $0x6c] sm:$0xff]
      %v195 = vld [vmem:[%s169 + $0x74] sm:$0xf]
      %v196 = vld [vmem:[%s169 + $0x78] sm:$0xff]
      %v197 = vld [vmem:[%s169 + $0x80] sm:$0xff]
      %v198 = vld [vmem:[%s169 + $0x88] sm:$0xf]
      %v199 = vld [vmem:[%s169 + $0x8c] sm:$0xff]
      %v200 = vld [vmem:[%s169 + $0x94] sm:$0xff]
      %v201 = vld [vmem:[%s169 + $0x9c] sm:$0xf]
      %v202 = vld [vmem:[%s169 + $0xa0] sm:$0xff]
      %v203 = vld [vmem:[%s169 + $0xa8] sm:$0xff]
      %v204 = vld [vmem:[%s169 + $0xb0] sm:$0xf]
      %v205 = vld [vmem:[%s169 + $0xb4] sm:$0xff]
      %v206 = vld [vmem:[%s169 + $0xbc] sm:$0xff]
      %v207 = vld [vmem:[%s169 + $0xc4] sm:$0xf]
      %v208 = vld [vmem:[%s169 + $0xc8] sm:$0xff]
      %v209 = vld [vmem:[%s169 + $0xd0] sm:$0xff]
      %v210 = vld [vmem:[%s169 + $0xd8] sm:$0xf]
      %v211 = vld [vmem:[%s169 + $0xdc] sm:$0xff]
      %v212 = vld [vmem:[%s169 + $0xe4] sm:$0xff]
      %v213 = vld [vmem:[%s169 + $0xec] sm:$0xf]
      %v214 = vld [vmem:[%s169 + $0xf0] sm:$0xff]
      %v215 = vld [vmem:[%s169 + $0xf8] sm:$0xff]
      %v216 = vld [vmem:[%s169 + $0x100] sm:$0xf]
      %v217 = vld [vmem:[%s169 + $0x104] sm:$0xff]
      %v218 = vld [vmem:[%s169 + $0x10c] sm:$0xff]
      %v219 = vld [vmem:[%s169 + $0x114] sm:$0xf]
      %v220 = vld [vmem:[%s169 + $0x118] sm:$0xff]
      %v221 = vld [vmem:[%s169 + $0x120] sm:$0xff]
      %v222 = vld [vmem:[%s169 + $0x128] sm:$0xf]
      %v223 = vld [vmem:[%s169 + $0x12c] sm:$0xff]
      %v224 = vld [vmem:[%s169 + $0x134] sm:$0xff]
      %v225 = vld [vmem:[%s169 + $0x13c] sm:$0xf]
      %v226 = vld [vmem:[%s169 + $0x140] sm:$0xff]
      %v227 = vld [vmem:[%s169 + $0x148] sm:$0xff]
      %v228 = vld [vmem:[%s169 + $0x150] sm:$0xf]
      %v229 = vld [vmem:[%s169 + $0x154] sm:$0xff]
      %v230 = vld [vmem:[%s169 + $0x15c] sm:$0xff]
      %v231 = vld [vmem:[%s169 + $0x164] sm:$0xf]
      %v232 = vld [vmem:[%s169 + $0x168] sm:$0xff]
      %v233 = vld [vmem:[%s169 + $0x170] sm:$0xff]
      %v234 = vld [vmem:[%s169 + $0x178] sm:$0xf]
      %v235 = vld [vmem:[%s169 + $0x17c] sm:$0xff]
      %v236 = vld [vmem:[%s169 + $0x184] sm:$0xff]
      %v237 = vld [vmem:[%s169 + $0x18c] sm:$0xf]
      %v238 = vld [vmem:[%s169 + $0x190] sm:$0xff]
      %v239 = vld [vmem:[%s169 + $0x198] sm:$0xff]
      %v240 = vld [vmem:[%s169 + $0x1a0] sm:$0xf]
      %v241 = vld [vmem:[%s169 + $0x1a4] sm:$0xff]
      %v242 = vld [vmem:[%s169 + $0x1ac] sm:$0xff]
      %v243 = vld [vmem:[%s169 + $0x1b4] sm:$0xf]
      %v244 = vld [vmem:[%s169 + $0x1b8] sm:$0xff]
      %v245 = vld [vmem:[%s169 + $0x1c0] sm:$0xff]
      %v246 = vld [vmem:[%s169 + $0x1c8] sm:$0xf]
      %v247 = vld [vmem:[%s169 + $0x1cc] sm:$0xff]
      %v248 = vld [vmem:[%s169 + $0x1d4] sm:$0xff]
      %v249 = vld [vmem:[%s169 + $0x1dc] sm:$0xf]
      %v250 = vld [vmem:[%s169 + $0x1e0] sm:$0xff]
      %v251 = vld [vmem:[%s169 + $0x1e8] sm:$0xff]
      %v252 = vld [vmem:[%s169 + $0x1f0] sm:$0xf]
      %v253 = vld [vmem:[%s169 + $0x1f4] sm:$0xff]
      %v254 = vld [vmem:[%s169 + $0x1fc] sm:$0xff]
      %v255 = vld [vmem:[%s169 + $0x204] sm:$0xf]
      %v256 = vld [vmem:[%s169 + $0x208] sm:$0xff]
      %v257 = vld [vmem:[%s169 + $0x210] sm:$0xff]
      %v258 = vld [vmem:[%s169 + $0x218] sm:$0xf]
      %v259 = vld [vmem:[%s169 + $0x21c] sm:$0xff]
      %v260 = vld [vmem:[%s169 + $0x224] sm:$0xff]
      %v261 = vld [vmem:[%s169 + $0x22c] sm:$0xf]
      %v262 = vld [vmem:[%s169 + $0x230] sm:$0xff]
      %v263 = vld [vmem:[%s169 + $0x238] sm:$0xff]
      %v264 = vld [vmem:[%s169 + $0x240] sm:$0xf]
      %v265 = vld [vmem:[%s169 + $0x244] sm:$0xff]
      %v266 = vld [vmem:[%s169 + $0x24c] sm:$0xff]
      %v267 = vld [vmem:[%s169 + $0x254] sm:$0xf]
      %v268 = vld [vmem:[%s169 + $0x258] sm:$0xff]
      %v269 = vld [vmem:[%s169 + $0x260] sm:$0xff]
      %v270 = vld [vmem:[%s169 + $0x268] sm:$0xf]
      %v271 = vld [vmem:[%s169 + $0x26c] sm:$0xff]
      %v272 = vld [vmem:[%s169 + $0x274] sm:$0xff]
      %v273 = vld [vmem:[%s169 + $0x27c] sm:$0xf]
      %v274 = vld [vmem:[%s1] sm:$0xf]
      %v275 = vld [vmem:[%s1 + $0x4] sm:$0xf]
      %v276 = vld [vmem:[%s1 + $0x8] sm:$0xf]
      %v277 = vld [vmem:[%s1 + $0xc] sm:$0xf]
      %v278 = vld [vmem:[%s1 + $0x10] sm:$0xf]
      %v279 = vld [vmem:[%s1 + $0x14] sm:$0xf]
      %v280 = vld [vmem:[%s1 + $0x18] sm:$0xf]
      %v281 = vld [vmem:[%s1 + $0x1c] sm:$0xf]
      %v282 = vld [vmem:[%s1 + $0x20] sm:$0xf]
      %v283 = vld [vmem:[%s1 + $0x24] sm:$0xf]
      %v284 = vld [vmem:[%s1 + $0x28] sm:$0xf]
      %v285 = vld [vmem:[%s1 + $0x2c] sm:$0xf]
      %v286 = vld [vmem:[%s1 + $0x30] sm:$0xf]
      %v287 = vld [vmem:[%s1 + $0x34] sm:$0xf]
      %v288 = vld [vmem:[%s1 + $0x38] sm:$0xf]
      %v289 = vld [vmem:[%s1 + $0x3c] sm:$0xf]
      %v290 = vld [vmem:[%s1 + $0x40] sm:$0xf]
      %v291 = vld [vmem:[%s1 + $0x44] sm:$0xf]
      %v292 = vld [vmem:[%s1 + $0x48] sm:$0xf]
      %v293 = vld [vmem:[%s1 + $0x4c] sm:$0xf]
      %v294 = vld [vmem:[%s1 + $0x50] sm:$0xf]
      %v295 = vld [vmem:[%s1 + $0x54] sm:$0xf]
      %v296 = vld [vmem:[%s1 + $0x58] sm:$0xf]
      %v297 = vld [vmem:[%s1 + $0x5c] sm:$0xf]
      %v298 = vld [vmem:[%s1 + $0x60] sm:$0xf]
      %v299 = vld [vmem:[%s1 + $0x64] sm:$0xf]
      %v300 = vld [vmem:[%s1 + $0x68] sm:$0xf]
      %v301 = vld [vmem:[%s1 + $0x6c] sm:$0xf]
      %v302 = vld [vmem:[%s1 + $0x70] sm:$0xf]
      %v303 = vld [vmem:[%s1 + $0x74] sm:$0xf]
      %v304 = vld [vmem:[%s1 + $0x78] sm:$0xf]
      %v305 = vld [vmem:[%s1 + $0x7c] sm:$0xf]
      %v306 = vld [vmem:[%s1 + $0x80] sm:$0xf]
      %v307 = vld [vmem:[%s1 + $0x84] sm:$0xf]
      %v308 = vld [vmem:[%s1 + $0x88] sm:$0xf]
      %v309 = vld [vmem:[%s1 + $0x8c] sm:$0xf]
      %v310 = vld [vmem:[%s1 + $0x90] sm:$0xf]
      %v311 = vld [vmem:[%s1 + $0x94] sm:$0xf]
      %v312 = vld [vmem:[%s1 + $0x98] sm:$0xf]
      %v313 = vld [vmem:[%s1 + $0x9c] sm:$0xf]
      %v314 = vld [vmem:[%s1 + $0xa0] sm:$0xf]
      %v315 = vld [vmem:[%s1 + $0xa4] sm:$0xf]
      %v316 = vld [vmem:[%s1 + $0xa8] sm:$0xf]
      %v317 = vld [vmem:[%s1 + $0xac] sm:$0xf]
      %v318 = vld [vmem:[%s1 + $0xb0] sm:$0xf]
      %v319 = vld [vmem:[%s1 + $0xb4] sm:$0xf]
      %v320 = vld [vmem:[%s1 + $0xb8] sm:$0xf]
      %v321 = vld [vmem:[%s1 + $0xbc] sm:$0xf]
      %v322 = vld [vmem:[%s1 + $0xc0] sm:$0xf]
      %v323 = vld [vmem:[%s1 + $0xc4] sm:$0xf]
      %v324 = vld [vmem:[%s1 + $0xc8] sm:$0xf]
      %v325 = vld [vmem:[%s1 + $0xcc] sm:$0xf]
      %v326 = vld [vmem:[%s1 + $0xd0] sm:$0xf]
      %v327 = vld [vmem:[%s1 + $0xd4] sm:$0xf]
      %v328 = vld [vmem:[%s1 + $0xd8] sm:$0xf]
      %v329 = vld [vmem:[%s1 + $0xdc] sm:$0xf]
      %v330 = vld [vmem:[%s1 + $0xe0] sm:$0xf]
      %v331 = vld [vmem:[%s1 + $0xe4] sm:$0xf]
      %v332 = vld [vmem:[%s1 + $0xe8] sm:$0xf]
      %v333 = vld [vmem:[%s1 + $0xec] sm:$0xf]
      %v334 = vld [vmem:[%s1 + $0xf0] sm:$0xf]
      %v335 = vld [vmem:[%s1 + $0xf4] sm:$0xf]
      %v336 = vld [vmem:[%s1 + $0xf8] sm:$0xf]
      %v337 = vld [vmem:[%s1 + $0xfc] sm:$0xf]
      %v338 = vld [vmem:[%s1 + $0x100] sm:$0xf]
      %v339 = vld [vmem:[%s1 + $0x104] sm:$0xf]
      %v340 = vld [vmem:[%s1 + $0x108] sm:$0xf]
      %v341 = vld [vmem:[%s1 + $0x10c] sm:$0xf]
      %v342 = vld [vmem:[%s1 + $0x110] sm:$0xf]
      %v343 = vld [vmem:[%s1 + $0x114] sm:$0xf]
      %v344 = vld [vmem:[%s1 + $0x118] sm:$0xf]
      %v345 = vld [vmem:[%s1 + $0x11c] sm:$0xf]
      %v346 = vld [vmem:[%s2] sm:$0x1]
      %v348 = vlaneseq
      %v349 = vshrl.u32 %v348, 7
      %v350 = vsub.s32 0, %v349
      %v351 = vrot.slane %v346, %v350
      %v449 = vunpack.c.l.b16 %v178
      %v450 = vunpack.c.h.b16 %v178
      %v451 = vunpack.c.l.b16 %v179
      %v452 = vunpack.c.h.b16 %v179
      %v453 = vunpack.c.l.b16 %v180
      %v454 = vunpack.c.l.b16 %v181
      %v455 = vunpack.c.h.b16 %v181
      %v456 = vunpack.c.l.b16 %v182
      %v457 = vunpack.c.h.b16 %v182
      %v458 = vunpack.c.l.b16 %v183
      %v459 = vunpack.c.l.b16 %v184
      %v460 = vunpack.c.h.b16 %v184
      %v461 = vunpack.c.l.b16 %v185
      %v462 = vunpack.c.h.b16 %v185
      %v463 = vunpack.c.l.b16 %v186
      %v464 = vunpack.c.l.b16 %v187
      %v465 = vunpack.c.h.b16 %v187
      %v466 = vunpack.c.l.b16 %v188
      %v467 = vunpack.c.h.b16 %v188
      %v468 = vunpack.c.l.b16 %v189
      %v469 = vunpack.c.l.b16 %v190
      %v470 = vunpack.c.h.b16 %v190
      %v471 = vunpack.c.l.b16 %v191
      %v472 = vunpack.c.h.b16 %v191
      %v473 = vunpack.c.l.b16 %v192
      %v474 = vunpack.c.l.b16 %v193
      %v475 = vunpack.c.h.b16 %v193
      %v476 = vunpack.c.l.b16 %v194
      %v477 = vunpack.c.h.b16 %v194
      %v478 = vunpack.c.l.b16 %v195
      %v479 = vunpack.c.l.b16 %v196
      %v480 = vunpack.c.h.b16 %v196
      %v481 = vunpack.c.l.b16 %v197
      %v482 = vunpack.c.h.b16 %v197
      %v483 = vunpack.c.l.b16 %v198
      %v484 = vunpack.c.l.b16 %v199
      %v485 = vunpack.c.h.b16 %v199
      %v486 = vunpack.c.l.b16 %v200
      %v487 = vunpack.c.h.b16 %v200
      %v488 = vunpack.c.l.b16 %v201
      %v489 = vunpack.c.l.b16 %v202
      %v490 = vunpack.c.h.b16 %v202
      %v491 = vunpack.c.l.b16 %v203
      %v492 = vunpack.c.h.b16 %v203
      %v493 = vunpack.c.l.b16 %v204
      %v494 = vunpack.c.l.b16 %v205
      %v495 = vunpack.c.h.b16 %v205
      %v496 = vunpack.c.l.b16 %v206
      %v497 = vunpack.c.h.b16 %v206
      %v498 = vunpack.c.l.b16 %v207
      %v499 = vunpack.c.l.b16 %v208
      %v500 = vunpack.c.h.b16 %v208
      %v501 = vunpack.c.l.b16 %v209
      %v502 = vunpack.c.h.b16 %v209
      %v503 = vunpack.c.l.b16 %v210
      %v504 = vunpack.c.l.b16 %v211
      %v505 = vunpack.c.h.b16 %v211
      %v506 = vunpack.c.l.b16 %v212
      %v507 = vunpack.c.h.b16 %v212
      %v508 = vunpack.c.l.b16 %v213
      %v509 = vunpack.c.l.b16 %v214
      %v510 = vunpack.c.h.b16 %v214
      %v511 = vunpack.c.l.b16 %v215
      %v512 = vunpack.c.h.b16 %v215
      %v513 = vunpack.c.l.b16 %v216
      %v514 = vunpack.c.l.b16 %v217
      %v515 = vunpack.c.h.b16 %v217
      %v516 = vunpack.c.l.b16 %v218
      %v517 = vunpack.c.h.b16 %v218
      %v518 = vunpack.c.l.b16 %v219
      %v519 = vunpack.c.l.b16 %v220
      %v520 = vunpack.c.h.b16 %v220
      %v521 = vunpack.c.l.b16 %v221
      %v522 = vunpack.c.h.b16 %v221
      %v523 = vunpack.c.l.b16 %v222
      %v524 = vunpack.c.l.b16 %v223
      %v525 = vunpack.c.h.b16 %v223
      %v526 = vunpack.c.l.b16 %v224
      %v527 = vunpack.c.h.b16 %v224
      %v528 = vunpack.c.l.b16 %v225
      %v529 = vunpack.c.l.b16 %v226
      %v530 = vunpack.c.h.b16 %v226
      %v531 = vunpack.c.l.b16 %v227
      %v532 = vunpack.c.h.b16 %v227
      %v533 = vunpack.c.l.b16 %v228
      %v534 = vunpack.c.l.b16 %v229
      %v535 = vunpack.c.h.b16 %v229
      %v536 = vunpack.c.l.b16 %v230
      %v537 = vunpack.c.h.b16 %v230
      %v538 = vunpack.c.l.b16 %v231
      %v539 = vunpack.c.l.b16 %v232
      %v540 = vunpack.c.h.b16 %v232
      %v541 = vunpack.c.l.b16 %v233
      %v542 = vunpack.c.h.b16 %v233
      %v543 = vunpack.c.l.b16 %v234
      %v544 = vunpack.c.l.b16 %v235
      %v545 = vunpack.c.h.b16 %v235
      %v546 = vunpack.c.l.b16 %v236
      %v547 = vunpack.c.h.b16 %v236
      %v548 = vunpack.c.l.b16 %v237
      %v549 = vunpack.c.l.b16 %v238
      %v550 = vunpack.c.h.b16 %v238
      %v551 = vunpack.c.l.b16 %v239
      %v552 = vunpack.c.h.b16 %v239
      %v553 = vunpack.c.l.b16 %v240
      %v554 = vunpack.c.l.b16 %v241
      %v555 = vunpack.c.h.b16 %v241
      %v556 = vunpack.c.l.b16 %v242
      %v557 = vunpack.c.h.b16 %v242
      %v558 = vunpack.c.l.b16 %v243
      %v559 = vunpack.c.l.b16 %v244
      %v560 = vunpack.c.h.b16 %v244
      %v561 = vunpack.c.l.b16 %v245
      %v562 = vunpack.c.h.b16 %v245
      %v563 = vunpack.c.l.b16 %v246
      %v564 = vunpack.c.l.b16 %v247
      %v565 = vunpack.c.h.b16 %v247
      %v566 = vunpack.c.l.b16 %v248
      %v567 = vunpack.c.h.b16 %v248
      %v568 = vunpack.c.l.b16 %v249
      %v569 = vunpack.c.l.b16 %v250
      %v570 = vunpack.c.h.b16 %v250
      %v571 = vunpack.c.l.b16 %v251
      %v572 = vunpack.c.h.b16 %v251
      %v573 = vunpack.c.l.b16 %v252
      %v574 = vunpack.c.l.b16 %v253
      %v575 = vunpack.c.h.b16 %v253
      %v576 = vunpack.c.l.b16 %v254
      %v577 = vunpack.c.h.b16 %v254
      %v578 = vunpack.c.l.b16 %v255
      %v579 = vunpack.c.l.b16 %v256
      %v580 = vunpack.c.h.b16 %v256
      %v581 = vunpack.c.l.b16 %v257
      %v582 = vunpack.c.h.b16 %v257
      %v583 = vunpack.c.l.b16 %v258
      %v584 = vunpack.c.l.b16 %v259
      %v585 = vunpack.c.h.b16 %v259
      %v586 = vunpack.c.l.b16 %v260
      %v587 = vunpack.c.h.b16 %v260
      %v588 = vunpack.c.l.b16 %v261
      %v589 = vunpack.c.l.b16 %v262
      %v590 = vunpack.c.h.b16 %v262
      %v591 = vunpack.c.l.b16 %v263
      %v592 = vunpack.c.h.b16 %v263
      %v593 = vunpack.c.l.b16 %v264
      %v594 = vunpack.c.l.b16 %v265
      %v595 = vunpack.c.h.b16 %v265
      %v596 = vunpack.c.l.b16 %v266
      %v597 = vunpack.c.h.b16 %v266
      %v598 = vunpack.c.l.b16 %v267
      %v599 = vunpack.c.l.b16 %v268
      %v600 = vunpack.c.h.b16 %v268
      %v601 = vunpack.c.l.b16 %v269
      %v602 = vunpack.c.h.b16 %v269
      %v603 = vunpack.c.l.b16 %v270
      %v604 = vunpack.c.l.b16 %v271
      %v605 = vunpack.c.h.b16 %v271
      %v606 = vunpack.c.l.b16 %v272
      %v607 = vunpack.c.h.b16 %v272
      %v608 = vunpack.c.l.b16 %v273
      %v609 = vpack.c.b16 %v454, %v449
      %v610 = vpack.c.b16 %v455, %v450
      %v611 = vpack.c.b16 %v456, %v451
      %v612 = vpack.c.b16 %v457, %v452
      %v613 = vpack.c.b16 %v458, %v453
      %v614 = vpack.c.b16 %v464, %v459
      %v615 = vpack.c.b16 %v465, %v460
      %v616 = vpack.c.b16 %v466, %v461
      %v617 = vpack.c.b16 %v467, %v462
      %v618 = vpack.c.b16 %v468, %v463
      %v619 = vpack.c.b16 %v474, %v469
      %v620 = vpack.c.b16 %v475, %v470
      %v621 = vpack.c.b16 %v476, %v471
      %v622 = vpack.c.b16 %v477, %v472
      %v623 = vpack.c.b16 %v478, %v473
      %v624 = vpack.c.b16 %v484, %v479
      %v625 = vpack.c.b16 %v485, %v480
      %v626 = vpack.c.b16 %v486, %v481
      %v627 = vpack.c.b16 %v487, %v482
      %v628 = vpack.c.b16 %v488, %v483
      %v629 = vpack.c.b16 %v494, %v489
      %v630 = vpack.c.b16 %v495, %v490
      %v631 = vpack.c.b16 %v496, %v491
      %v632 = vpack.c.b16 %v497, %v492
      %v633 = vpack.c.b16 %v498, %v493
      %v634 = vpack.c.b16 %v504, %v499
      %v635 = vpack.c.b16 %v505, %v500
      %v636 = vpack.c.b16 %v506, %v501
      %v637 = vpack.c.b16 %v507, %v502
      %v638 = vpack.c.b16 %v508, %v503
      %v639 = vpack.c.b16 %v514, %v509
      %v640 = vpack.c.b16 %v515, %v510
      %v641 = vpack.c.b16 %v516, %v511
      %v642 = vpack.c.b16 %v517, %v512
      %v643 = vpack.c.b16 %v518, %v513
      %v644 = vpack.c.b16 %v524, %v519
      %v645 = vpack.c.b16 %v525, %v520
      %v646 = vpack.c.b16 %v526, %v521
      %v647 = vpack.c.b16 %v527, %v522
      %v648 = vpack.c.b16 %v528, %v523
      %v649 = vpack.c.b16 %v534, %v529
      %v650 = vpack.c.b16 %v535, %v530
      %v651 = vpack.c.b16 %v536, %v531
      %v652 = vpack.c.b16 %v537, %v532
      %v653 = vpack.c.b16 %v538, %v533
      %v654 = vpack.c.b16 %v544, %v539
      %v655 = vpack.c.b16 %v545, %v540
      %v656 = vpack.c.b16 %v546, %v541
      %v657 = vpack.c.b16 %v547, %v542
      %v658 = vpack.c.b16 %v548, %v543
      %v659 = vpack.c.b16 %v554, %v549
      %v660 = vpack.c.b16 %v555, %v550
      %v661 = vpack.c.b16 %v556, %v551
      %v662 = vpack.c.b16 %v557, %v552
      %v663 = vpack.c.b16 %v558, %v553
      %v664 = vpack.c.b16 %v564, %v559
      %v665 = vpack.c.b16 %v565, %v560
      %v666 = vpack.c.b16 %v566, %v561
      %v667 = vpack.c.b16 %v567, %v562
      %v668 = vpack.c.b16 %v568, %v563
      %v669 = vpack.c.b16 %v574, %v569
      %v670 = vpack.c.b16 %v575, %v570
      %v671 = vpack.c.b16 %v576, %v571
      %v672 = vpack.c.b16 %v577, %v572
      %v673 = vpack.c.b16 %v578, %v573
      %v674 = vpack.c.b16 %v584, %v579
      %v675 = vpack.c.b16 %v585, %v580
      %v676 = vpack.c.b16 %v586, %v581
      %v677 = vpack.c.b16 %v587, %v582
      %v678 = vpack.c.b16 %v588, %v583
      %v679 = vpack.c.b16 %v594, %v589
      %v680 = vpack.c.b16 %v595, %v590
      %v681 = vpack.c.b16 %v596, %v591
      %v682 = vpack.c.b16 %v597, %v592
      %v683 = vpack.c.b16 %v598, %v593
      %v684 = vpack.c.b16 %v604, %v599
      %v685 = vpack.c.b16 %v605, %v600
      %v686 = vpack.c.b16 %v606, %v601
      %v687 = vpack.c.b16 %v607, %v602
      %v688 = vpack.c.b16 %v608, %v603
      %v825 = vunpack.c.l.b16 %v274
      %v826 = vunpack.c.l.b16 %v275
      %v827 = vunpack.c.l.b16 %v276
      %v828 = vunpack.c.l.b16 %v277
      %v829 = vunpack.c.l.b16 %v278
      %v830 = vunpack.c.l.b16 %v279
      %v831 = vunpack.c.l.b16 %v280
      %v832 = vunpack.c.l.b16 %v281
      %v833 = vunpack.c.l.b16 %v282
      %v834 = vunpack.c.l.b16 %v283
      %v835 = vunpack.c.l.b16 %v284
      %v836 = vunpack.c.l.b16 %v285
      %v837 = vunpack.c.l.b16 %v286
      %v838 = vunpack.c.l.b16 %v287
      %v839 = vunpack.c.l.b16 %v288
      %v840 = vunpack.c.l.b16 %v289
      %v841 = vunpack.c.l.b16 %v290
      %v842 = vunpack.c.l.b16 %v291
      %v843 = vunpack.c.l.b16 %v292
      %v844 = vunpack.c.l.b16 %v293
      %v845 = vunpack.c.l.b16 %v294
      %v846 = vunpack.c.l.b16 %v295
      %v847 = vunpack.c.l.b16 %v296
      %v848 = vunpack.c.l.b16 %v297
      %v849 = vunpack.c.l.b16 %v298
      %v850 = vunpack.c.l.b16 %v299
      %v851 = vunpack.c.l.b16 %v300
      %v852 = vunpack.c.l.b16 %v301
      %v853 = vunpack.c.l.b16 %v302
      %v854 = vunpack.c.l.b16 %v303
      %v855 = vunpack.c.l.b16 %v304
      %v856 = vunpack.c.l.b16 %v305
      %v857 = vunpack.c.l.b16 %v306
      %v858 = vunpack.c.l.b16 %v307
      %v859 = vunpack.c.l.b16 %v308
      %v860 = vunpack.c.l.b16 %v309
      %v861 = vunpack.c.l.b16 %v310
      %v862 = vunpack.c.l.b16 %v311
      %v863 = vunpack.c.l.b16 %v312
      %v864 = vunpack.c.l.b16 %v313
      %v865 = vunpack.c.l.b16 %v314
      %v866 = vunpack.c.l.b16 %v315
      %v867 = vunpack.c.l.b16 %v316
      %v868 = vunpack.c.l.b16 %v317
      %v869 = vunpack.c.l.b16 %v318
      %v870 = vunpack.c.l.b16 %v319
      %v871 = vunpack.c.l.b16 %v320
      %v872 = vunpack.c.l.b16 %v321
      %v873 = vunpack.c.l.b16 %v322
      %v874 = vunpack.c.l.b16 %v323
      %v875 = vunpack.c.l.b16 %v324
      %v876 = vunpack.c.l.b16 %v325
      %v877 = vunpack.c.l.b16 %v326
      %v878 = vunpack.c.l.b16 %v327
      %v879 = vunpack.c.l.b16 %v328
      %v880 = vunpack.c.l.b16 %v329
      %v881 = vunpack.c.l.b16 %v330
      %v882 = vunpack.c.l.b16 %v331
      %v883 = vunpack.c.l.b16 %v332
      %v884 = vunpack.c.l.b16 %v333
      %v885 = vunpack.c.l.b16 %v334
      %v886 = vunpack.c.l.b16 %v335
      %v887 = vunpack.c.l.b16 %v336
      %v888 = vunpack.c.l.b16 %v337
      %v889 = vunpack.c.l.b16 %v338
      %v890 = vunpack.c.l.b16 %v339
      %v891 = vunpack.c.l.b16 %v340
      %v892 = vunpack.c.l.b16 %v341
      %v893 = vunpack.c.l.b16 %v342
      %v894 = vunpack.c.l.b16 %v343
      %v895 = vunpack.c.l.b16 %v344
      %v896 = vunpack.c.l.b16 %v345
      %v897 = vpack.c.b16 %v826, %v825
      %v898 = vpack.c.b16 %v828, %v827
      %v899 = vpack.c.b16 %v830, %v829
      %v900 = vpack.c.b16 %v832, %v831
      %v901 = vpack.c.b16 %v834, %v833
      %v902 = vpack.c.b16 %v836, %v835
      %v903 = vpack.c.b16 %v838, %v837
      %v904 = vpack.c.b16 %v840, %v839
      %v905 = vpack.c.b16 %v842, %v841
      %v906 = vpack.c.b16 %v844, %v843
      %v907 = vpack.c.b16 %v846, %v845
      %v908 = vpack.c.b16 %v848, %v847
      %v909 = vpack.c.b16 %v850, %v849
      %v910 = vpack.c.b16 %v852, %v851
      %v911 = vpack.c.b16 %v854, %v853
      %v912 = vpack.c.b16 %v856, %v855
      %v913 = vpack.c.b16 %v858, %v857
      %v914 = vpack.c.b16 %v860, %v859
      %v915 = vpack.c.b16 %v862, %v861
      %v916 = vpack.c.b16 %v864, %v863
      %v917 = vpack.c.b16 %v866, %v865
      %v918 = vpack.c.b16 %v868, %v867
      %v919 = vpack.c.b16 %v870, %v869
      %v920 = vpack.c.b16 %v872, %v871
      %v921 = vpack.c.b16 %v874, %v873
      %v922 = vpack.c.b16 %v876, %v875
      %v923 = vpack.c.b16 %v878, %v877
      %v924 = vpack.c.b16 %v880, %v879
      %v925 = vpack.c.b16 %v882, %v881
      %v926 = vpack.c.b16 %v884, %v883
      %v927 = vpack.c.b16 %v886, %v885
      %v928 = vpack.c.b16 %v888, %v887
      %v929 = vpack.c.b16 %v890, %v889
      %v930 = vpack.c.b16 %v892, %v891
      %v931 = vpack.c.b16 %v894, %v893
      %v932 = vpack.c.b16 %v896, %v895
      %vm969 = vcmask 523264
      %v971 = vsel %vm969, %v613, 0
      %v974 = vsel %vm969, %v618, 0
      %v977 = vsel %vm969, %v623, 0
      %v980 = vsel %vm969, %v628, 0
      %v983 = vsel %vm969, %v633, 0
      %v986 = vsel %vm969, %v638, 0
      %v989 = vsel %vm969, %v643, 0
      %v992 = vsel %vm969, %v648, 0
      %v995 = vsel %vm969, %v653, 0
      %v998 = vsel %vm969, %v658, 0
      %v1001 = vsel %vm969, %v663, 0
      %v1004 = vsel %vm969, %v668, 0
      %v1007 = vsel %vm969, %v673, 0
      %v1010 = vsel %vm969, %v678, 0
      %v1013 = vsel %vm969, %v683, 0
      %v1016 = vsel %vm969, %v688, 0
      %1018 = vmatprep.subr.bf16.mxu0 0
      %1019 = vmatpush1.bf16.msra.mxu0 %v897
      %1020 = vmatprep.subr.bf16.mxu0 0
      %1021 = vmatpush1.bf16.msra.mxu0 %v898
      %1022 = vmatprep.subr.bf16.mxu0 0
      %1023 = vmatpush1.bf16.msra.mxu0 %v899
      %1024 = vmatprep.subr.bf16.mxu0 0
      %1025 = vmatpush1.bf16.msra.mxu0 %v900
      %1026 = vmatprep.subr.bf16.mxu0 0
      %1027 = vmatpush1.bf16.msra.mxu0 %v901
      %1028 = vmatprep.subr.bf16.mxu0 0
      %1029 = vmatpush1.bf16.msra.mxu0 %v902
      %1030 = vmatprep.subr.bf16.mxu0 0
      %1031 = vmatpush1.bf16.msra.mxu0 %v903
      %1032 = vmatprep.subr.bf16.mxu0 0
      %1033 = vmatpush1.bf16.msra.mxu0 %v904
      %1034 = vmatprep.subr.bf16.mxu0 0
      %1035 = vmatpush1.bf16.msra.mxu0 %v905
      %1036 = vmatprep.subr.bf16.mxu0 0
      %1037 = vmatpush1.bf16.msra.mxu0 %v906
      %1038 = vmatprep.subr.bf16.mxu0 0
      %1039 = vmatpush1.bf16.msra.mxu0 %v907
      %1040 = vmatprep.subr.bf16.mxu0 0
      %1041 = vmatpush1.bf16.msra.mxu0 %v908
      %1042 = vmatprep.subr.bf16.mxu0 0
      %1043 = vmatpush1.bf16.msra.mxu0 %v909
      %1044 = vmatprep.subr.bf16.mxu0 0
      %1045 = vmatpush1.bf16.msra.mxu0 %v910
      %1046 = vmatprep.subr.bf16.mxu0 0
      %1047 = vmatpush1.bf16.msra.mxu0 %v911
      %1048 = vmatprep.subr.bf16.mxu0 0
      %1049 = vmatpush1.bf16.msra.mxu0 %v912
      %1050 = vmatprep.mubr.bf16.mxu0 %v610
      %1051 = vmatmul.mubr.bf16.gmra.mrb[0].mxu0 %v609
      %v1052 = vpop.f32.mrb[0].mxu0
      %v1053 = vadd.f32 %v351, %v1052
      %v1054 = vpop.f32.mrb[0].mxu0
      %v1055 = vpop.f32.mrb[0].mxu0
      %v1056 = vadd.f32 %v351, %v1055
      %v1057 = vpop.f32.mrb[0].mxu0
      %1058 = vmatprep.mubr.bf16.mxu0 %v615
      %1059 = vmatmul.mubr.bf16.gmra.mrb[0].mxu0 %v614
      %v1060 = vpop.f32.mrb[0].mxu0
      %v1061 = vadd.f32 %v351, %v1060
      %v1062 = vpop.f32.mrb[0].mxu0
      %v1063 = vpop.f32.mrb[0].mxu0
      %v1064 = vadd.f32 %v351, %v1063
      %v1065 = vpop.f32.mrb[0].mxu0
      %1066 = vmatprep.mubr.bf16.mxu0 %v620
      %1067 = vmatmul.mubr.bf16.gmra.mrb[0].mxu0 %v619
      %v1068 = vpop.f32.mrb[0].mxu0
      %v1069 = vadd.f32 %v351, %v1068
      %v1070 = vpop.f32.mrb[0].mxu0
      %v1071 = vpop.f32.mrb[0].mxu0
      %v1072 = vadd.f32 %v351, %v1071
      %v1073 = vpop.f32.mrb[0].mxu0
      %1074 = vmatprep.mubr.bf16.mxu0 %v625
      %1075 = vmatmul.mubr.bf16.gmra.mrb[0].mxu0 %v624
      %v1076 = vpop.f32.mrb[0].mxu0
      %v1077 = vadd.f32 %v351, %v1076
      %v1078 = vpop.f32.mrb[0].mxu0
      %v1079 = vpop.f32.mrb[0].mxu0
      %v1080 = vadd.f32 %v351, %v1079
      %v1081 = vpop.f32.mrb[0].mxu0
      %1082 = vmatprep.mubr.bf16.mxu0 %v630
      %1083 = vmatmul.mubr.bf16.gmra.mrb[0].mxu0 %v629
      %v1084 = vpop.f32.mrb[0].mxu0
      %v1085 = vadd.f32 %v351, %v1084
      %v1086 = vpop.f32.mrb[0].mxu0
      %v1087 = vpop.f32.mrb[0].mxu0
      %v1088 = vadd.f32 %v351, %v1087
      %v1089 = vpop.f32.mrb[0].mxu0
      %1090 = vmatprep.mubr.bf16.mxu0 %v635
      %1091 = vmatmul.mubr.bf16.gmra.mrb[0].mxu0 %v634
      %v1092 = vpop.f32.mrb[0].mxu0
      %v1093 = vadd.f32 %v351, %v1092
      %v1094 = vpop.f32.mrb[0].mxu0
      %v1095 = vpop.f32.mrb[0].mxu0
      %v1096 = vadd.f32 %v351, %v1095
      %v1097 = vpop.f32.mrb[0].mxu0
      %1098 = vmatprep.mubr.bf16.mxu0 %v640
      %1099 = vmatmul.mubr.bf16.gmra.mrb[0].mxu0 %v639
      %v1100 = vpop.f32.mrb[0].mxu0
      %v1101 = vadd.f32 %v351, %v1100
      %v1102 = vpop.f32.mrb[0].mxu0
      %v1103 = vpop.f32.mrb[0].mxu0
      %v1104 = vadd.f32 %v351, %v1103
      %v1105 = vpop.f32.mrb[0].mxu0
      %1106 = vmatprep.mubr.bf16.mxu0 %v645
      %1107 = vmatmul.mubr.bf16.gmra.mrb[0].mxu0 %v644
      %v1108 = vpop.f32.mrb[0].mxu0
      %v1109 = vadd.f32 %v351, %v1108
      %v1110 = vpop.f32.mrb[0].mxu0
      %v1111 = vpop.f32.mrb[0].mxu0
      %v1112 = vadd.f32 %v351, %v1111
      %v1113 = vpop.f32.mrb[0].mxu0
      %1114 = vmatprep.mubr.bf16.mxu0 %v650
      %1115 = vmatmul.mubr.bf16.gmra.mrb[0].mxu0 %v649
      %v1116 = vpop.f32.mrb[0].mxu0
      %v1117 = vadd.f32 %v351, %v1116
      %v1118 = vpop.f32.mrb[0].mxu0
      %v1119 = vpop.f32.mrb[0].mxu0
      %v1120 = vadd.f32 %v351, %v1119
      %v1121 = vpop.f32.mrb[0].mxu0
      %1122 = vmatprep.mubr.bf16.mxu0 %v655
      %1123 = vmatmul.mubr.bf16.gmra.mrb[0].mxu0 %v654
      %v1124 = vpop.f32.mrb[0].mxu0
      %v1125 = vadd.f32 %v351, %v1124
      %v1126 = vpop.f32.mrb[0].mxu0
      %v1127 = vpop.f32.mrb[0].mxu0
      %v1128 = vadd.f32 %v351, %v1127
      %v1129 = vpop.f32.mrb[0].mxu0
      %1130 = vmatprep.mubr.bf16.mxu0 %v660
      %1131 = vmatmul.mubr.bf16.gmra.mrb[0].mxu0 %v659
      %v1132 = vpop.f32.mrb[0].mxu0
      %v1133 = vadd.f32 %v351, %v1132
      %v1134 = vpop.f32.mrb[0].mxu0
      %v1135 = vpop.f32.mrb[0].mxu0
      %v1136 = vadd.f32 %v351, %v1135
      %v1137 = vpop.f32.mrb[0].mxu0
      %1138 = vmatprep.mubr.bf16.mxu0 %v665
      %1139 = vmatmul.mubr.bf16.gmra.mrb[0].mxu0 %v664
      %v1140 = vpop.f32.mrb[0].mxu0
      %v1141 = vadd.f32 %v351, %v1140
      %v1142 = vpop.f32.mrb[0].mxu0
      %v1143 = vpop.f32.mrb[0].mxu0
      %v1144 = vadd.f32 %v351, %v1143
      %v1145 = vpop.f32.mrb[0].mxu0
      %1146 = vmatprep.mubr.bf16.mxu0 %v670
      %1147 = vmatmul.mubr.bf16.gmra.mrb[0].mxu0 %v669
      %v1148 = vpop.f32.mrb[0].mxu0
      %v1149 = vadd.f32 %v351, %v1148
      %v1150 = vpop.f32.mrb[0].mxu0
      %v1151 = vpop.f32.mrb[0].mxu0
      %v1152 = vadd.f32 %v351, %v1151
      %v1153 = vpop.f32.mrb[0].mxu0
      %1154 = vmatprep.mubr.bf16.mxu0 %v675
      %1155 = vmatmul.mubr.bf16.gmra.mrb[0].mxu0 %v674
      %v1156 = vpop.f32.mrb[0].mxu0
      %v1157 = vadd.f32 %v351, %v1156
      %v1158 = vpop.f32.mrb[0].mxu0
      %v1159 = vpop.f32.mrb[0].mxu0
      %v1160 = vadd.f32 %v351, %v1159
      %v1161 = vpop.f32.mrb[0].mxu0
      %1162 = vmatprep.mubr.bf16.mxu0 %v680
      %1163 = vmatmul.mubr.bf16.gmra.mrb[0].mxu0 %v679
      %v1164 = vpop.f32.mrb[0].mxu0
      %v1165 = vadd.f32 %v351, %v1164
      %v1166 = vpop.f32.mrb[0].mxu0
      %v1167 = vpop.f32.mrb[0].mxu0
      %v1168 = vadd.f32 %v351, %v1167
      %v1169 = vpop.f32.mrb[0].mxu0
      %1170 = vmatprep.mubr.bf16.mxu0 %v685
      %1171 = vmatmul.mubr.bf16.gmra.mrb[0].mxu0 %v684
      %v1172 = vpop.f32.mrb[0].mxu0
      %v1173 = vadd.f32 %v351, %v1172
      %v1174 = vpop.f32.mrb[0].mxu0
      %v1175 = vpop.f32.mrb[0].mxu0
      %v1176 = vadd.f32 %v351, %v1175
      %v1177 = vpop.f32.mrb[0].mxu0
      %1178 = vdwg.mxu0
      %1179 = vmatprep.subr.bf16.mxu0 0
      %1180 = vmatpush1.bf16.msra.mxu0 %v913
      %1181 = vmatprep.subr.bf16.mxu0 0
      %1182 = vmatpush1.bf16.msra.mxu0 %v914
      %1183 = vmatprep.subr.bf16.mxu0 0
      %1184 = vmatpush1.bf16.msra.mxu0 %v915
      %1185 = vmatprep.subr.bf16.mxu0 0
      %1186 = vmatpush1.bf16.msra.mxu0 %v916
      %1187 = vmatprep.subr.bf16.mxu0 0
      %1188 = vmatpush1.bf16.msra.mxu0 %v917
      %1189 = vmatprep.subr.bf16.mxu0 0
      %1190 = vmatpush1.bf16.msra.mxu0 %v918
      %1191 = vmatprep.subr.bf16.mxu0 0
      %1192 = vmatpush1.bf16.msra.mxu0 %v919
      %1193 = vmatprep.subr.bf16.mxu0 0
      %1194 = vmatpush1.bf16.msra.mxu0 %v920
      %1195 = vmatprep.subr.bf16.mxu0 0
      %1196 = vmatpush1.bf16.msra.mxu0 %v921
      %1197 = vmatprep.subr.bf16.mxu0 0
      %1198 = vmatpush1.bf16.msra.mxu0 %v922
      %1199 = vmatprep.subr.bf16.mxu0 0
      %1200 = vmatpush1.bf16.msra.mxu0 %v923
      %1201 = vmatprep.subr.bf16.mxu0 0
      %1202 = vmatpush1.bf16.msra.mxu0 %v924
      %1203 = vmatprep.subr.bf16.mxu0 0
      %1204 = vmatpush1.bf16.msra.mxu0 %v925
      %1205 = vmatprep.subr.bf16.mxu0 0
      %1206 = vmatpush1.bf16.msra.mxu0 %v926
      %1207 = vmatprep.subr.bf16.mxu0 0
      %1208 = vmatpush1.bf16.msra.mxu0 %v927
      %1209 = vmatprep.subr.bf16.mxu0 0
      %1210 = vmatpush1.bf16.msra.mxu0 %v928
      %1211 = vmatprep.mubr.bf16.mxu0 %v612
      %1212 = vmatmul.mubr.bf16.gmra.mrb[0].mxu0 %v611
      %v1213 = vpop.f32.mrb[0].mxu0
      %v1214 = vadd.f32 %v1053, %v1213
      %v1215 = vpop.f32.mrb[0].mxu0
      %v1216 = vpop.f32.mrb[0].mxu0
      %v1217 = vadd.f32 %v1056, %v1216
      %v1218 = vpop.f32.mrb[0].mxu0
      %1219 = vmatprep.mubr.bf16.mxu0 %v617
      %1220 = vmatmul.mubr.bf16.gmra.mrb[0].mxu0 %v616
      %v1221 = vpop.f32.mrb[0].mxu0
      %v1222 = vadd.f32 %v1061, %v1221
      %v1223 = vpop.f32.mrb[0].mxu0
      %v1224 = vpop.f32.mrb[0].mxu0
      %v1225 = vadd.f32 %v1064, %v1224
      %v1226 = vpop.f32.mrb[0].mxu0
      %1227 = vmatprep.mubr.bf16.mxu0 %v622
      %1228 = vmatmul.mubr.bf16.gmra.mrb[0].mxu0 %v621
      %v1229 = vpop.f32.mrb[0].mxu0
      %v1230 = vadd.f32 %v1069, %v1229
      %v1231 = vpop.f32.mrb[0].mxu0
      %v1232 = vpop.f32.mrb[0].mxu0
      %v1233 = vadd.f32 %v1072, %v1232
      %v1234 = vpop.f32.mrb[0].mxu0
      %1235 = vmatprep.mubr.bf16.mxu0 %v627
      %1236 = vmatmul.mubr.bf16.gmra.mrb[0].mxu0 %v626
      %v1237 = vpop.f32.mrb[0].mxu0
      %v1238 = vadd.f32 %v1077, %v1237
      %v1239 = vpop.f32.mrb[0].mxu0
      %v1240 = vpop.f32.mrb[0].mxu0
      %v1241 = vadd.f32 %v1080, %v1240
      %v1242 = vpop.f32.mrb[0].mxu0
      %1243 = vmatprep.mubr.bf16.mxu0 %v632
      %1244 = vmatmul.mubr.bf16.gmra.mrb[0].mxu0 %v631
      %v1245 = vpop.f32.mrb[0].mxu0
      %v1246 = vadd.f32 %v1085, %v1245
      %v1247 = vpop.f32.mrb[0].mxu0
      %v1248 = vpop.f32.mrb[0].mxu0
      %v1249 = vadd.f32 %v1088, %v1248
      %v1250 = vpop.f32.mrb[0].mxu0
      %1251 = vmatprep.mubr.bf16.mxu0 %v637
      %1252 = vmatmul.mubr.bf16.gmra.mrb[0].mxu0 %v636
      %v1253 = vpop.f32.mrb[0].mxu0
      %v1254 = vadd.f32 %v1093, %v1253
      %v1255 = vpop.f32.mrb[0].mxu0
      %v1256 = vpop.f32.mrb[0].mxu0
      %v1257 = vadd.f32 %v1096, %v1256
      %v1258 = vpop.f32.mrb[0].mxu0
      %1259 = vmatprep.mubr.bf16.mxu0 %v642
      %1260 = vmatmul.mubr.bf16.gmra.mrb[0].mxu0 %v641
      %v1261 = vpop.f32.mrb[0].mxu0
      %v1262 = vadd.f32 %v1101, %v1261
      %v1263 = vpop.f32.mrb[0].mxu0
      %v1264 = vpop.f32.mrb[0].mxu0
      %v1265 = vadd.f32 %v1104, %v1264
      %v1266 = vpop.f32.mrb[0].mxu0
      %1267 = vmatprep.mubr.bf16.mxu0 %v647
      %1268 = vmatmul.mubr.bf16.gmra.mrb[0].mxu0 %v646
      %v1269 = vpop.f32.mrb[0].mxu0
      %v1270 = vadd.f32 %v1109, %v1269
      %v1271 = vpop.f32.mrb[0].mxu0
      %v1272 = vpop.f32.mrb[0].mxu0
      %v1273 = vadd.f32 %v1112, %v1272
      %v1274 = vpop.f32.mrb[0].mxu0
      %1275 = vmatprep.mubr.bf16.mxu0 %v652
      %1276 = vmatmul.mubr.bf16.gmra.mrb[0].mxu0 %v651
      %v1277 = vpop.f32.mrb[0].mxu0
      %v1278 = vadd.f32 %v1117, %v1277
      %v1279 = vpop.f32.mrb[0].mxu0
      %v1280 = vpop.f32.mrb[0].mxu0
      %v1281 = vadd.f32 %v1120, %v1280
      %v1282 = vpop.f32.mrb[0].mxu0
      %1283 = vmatprep.mubr.bf16.mxu0 %v657
      %1284 = vmatmul.mubr.bf16.gmra.mrb[0].mxu0 %v656
      %v1285 = vpop.f32.mrb[0].mxu0
      %v1286 = vadd.f32 %v1125, %v1285
      %v1287 = vpop.f32.mrb[0].mxu0
      %v1288 = vpop.f32.mrb[0].mxu0
      %v1289 = vadd.f32 %v1128, %v1288
      %v1290 = vpop.f32.mrb[0].mxu0
      %1291 = vmatprep.mubr.bf16.mxu0 %v662
      %1292 = vmatmul.mubr.bf16.gmra.mrb[0].mxu0 %v661
      %v1293 = vpop.f32.mrb[0].mxu0
      %v1294 = vadd.f32 %v1133, %v1293
      %v1295 = vpop.f32.mrb[0].mxu0
      %v1296 = vpop.f32.mrb[0].mxu0
      %v1297 = vadd.f32 %v1136, %v1296
      %v1298 = vpop.f32.mrb[0].mxu0
      %1299 = vmatprep.mubr.bf16.mxu0 %v667
      %1300 = vmatmul.mubr.bf16.gmra.mrb[0].mxu0 %v666
      %v1301 = vpop.f32.mrb[0].mxu0
      %v1302 = vadd.f32 %v1141, %v1301
      %v1303 = vpop.f32.mrb[0].mxu0
      %v1304 = vpop.f32.mrb[0].mxu0
      %v1305 = vadd.f32 %v1144, %v1304
      %v1306 = vpop.f32.mrb[0].mxu0
      %1307 = vmatprep.mubr.bf16.mxu0 %v672
      %1308 = vmatmul.mubr.bf16.gmra.mrb[0].mxu0 %v671
      %v1309 = vpop.f32.mrb[0].mxu0
      %v1310 = vadd.f32 %v1149, %v1309
      %v1311 = vpop.f32.mrb[0].mxu0
      %v1312 = vpop.f32.mrb[0].mxu0
      %v1313 = vadd.f32 %v1152, %v1312
      %v1314 = vpop.f32.mrb[0].mxu0
      %1315 = vmatprep.mubr.bf16.mxu0 %v677
      %1316 = vmatmul.mubr.bf16.gmra.mrb[0].mxu0 %v676
      %v1317 = vpop.f32.mrb[0].mxu0
      %v1318 = vadd.f32 %v1157, %v1317
      %v1319 = vpop.f32.mrb[0].mxu0
      %v1320 = vpop.f32.mrb[0].mxu0
      %v1321 = vadd.f32 %v1160, %v1320
      %v1322 = vpop.f32.mrb[0].mxu0
      %1323 = vmatprep.mubr.bf16.mxu0 %v682
      %1324 = vmatmul.mubr.bf16.gmra.mrb[0].mxu0 %v681
      %v1325 = vpop.f32.mrb[0].mxu0
      %v1326 = vadd.f32 %v1165, %v1325
      %v1327 = vpop.f32.mrb[0].mxu0
      %v1328 = vpop.f32.mrb[0].mxu0
      %v1329 = vadd.f32 %v1168, %v1328
      %v1330 = vpop.f32.mrb[0].mxu0
      %1331 = vmatprep.mubr.bf16.mxu0 %v687
      %1332 = vmatmul.mubr.bf16.gmra.mrb[0].mxu0 %v686
      %v1333 = vpop.f32.mrb[0].mxu0
      %v1334 = vadd.f32 %v1173, %v1333
      %v1335 = vpop.f32.mrb[0].mxu0
      %v1336 = vpop.f32.mrb[0].mxu0
      %v1337 = vadd.f32 %v1176, %v1336
      %v1338 = vpop.f32.mrb[0].mxu0
      %1339 = vdwg.mxu0
      %1340 = vmatprep.subr.bf16.mxu0 0
      %1341 = vmatpush1.bf16.msra.mxu0 %v929
      %1342 = vmatprep.subr.bf16.mxu0 0
      %1343 = vmatpush1.bf16.msra.mxu0 %v930
      %1344 = vmatprep.subr.bf16.mxu0 0
      %1345 = vmatpush1.bf16.msra.mxu0 %v931
      %1346 = vmatprep.subr.bf16.mxu0 0
      %1347 = vmatpush1.bf16.msra.mxu0 %v932
      %1348 = vmatprep.subr.bf16.mxu0 0
      %1349 = vmatpush1.bf16.msra.mxu0 0
      %1350 = vmatprep.subr.bf16.mxu0 0
      %1351 = vmatpush1.bf16.msra.mxu0 0
      %1352 = vmatprep.subr.bf16.mxu0 0
      %1353 = vmatpush1.bf16.msra.mxu0 0
      %1354 = vmatprep.subr.bf16.mxu0 0
      %1355 = vmatpush1.bf16.msra.mxu0 0
      %1356 = vmatprep.subr.bf16.mxu0 0
      %1357 = vmatpush1.bf16.msra.mxu0 0
      %1358 = vmatprep.subr.bf16.mxu0 0
      %1359 = vmatpush1.bf16.msra.mxu0 0
      %1360 = vmatprep.subr.bf16.mxu0 0
      %1361 = vmatpush1.bf16.msra.mxu0 0
      %1362 = vmatprep.subr.bf16.mxu0 0
      %1363 = vmatpush1.bf16.msra.mxu0 0
      %1364 = vmatprep.subr.bf16.mxu0 0
      %1365 = vmatpush1.bf16.msra.mxu0 0
      %1366 = vmatprep.subr.bf16.mxu0 0
      %1367 = vmatpush1.bf16.msra.mxu0 0
      %1368 = vmatprep.subr.bf16.mxu0 0
      %1369 = vmatpush1.bf16.msra.mxu0 0
      %1370 = vmatprep.subr.bf16.mxu0 0
      %1371 = vmatpush1.bf16.msra.mxu0 0
      %1372 = vmatprep.mubr.bf16.mxu0 0
      %1373 = vmatmul.mubr.bf16.gmra.mrb[0].mxu0 %v971
      %v1374 = vpop.f32.mrb[0].mxu0
      %v1375 = vadd.f32 %v1214, %v1374
      %v1376 = vpop.f32.mrb[0].mxu0
      %v1377 = vpop.f32.mrb[0].mxu0
      %v1378 = vadd.f32 %v1217, %v1377
      %v1379 = vpop.f32.mrb[0].mxu0
      %1380 = vmatprep.mubr.bf16.mxu0 0
      %1381 = vmatmul.mubr.bf16.gmra.mrb[0].mxu0 %v974
      %v1382 = vpop.f32.mrb[0].mxu0
      %v1383 = vadd.f32 %v1222, %v1382
      %v1384 = vpop.f32.mrb[0].mxu0
      %v1385 = vpop.f32.mrb[0].mxu0
      %v1386 = vadd.f32 %v1225, %v1385
      %v1387 = vpop.f32.mrb[0].mxu0
      %1388 = vmatprep.mubr.bf16.mxu0 0
      %1389 = vmatmul.mubr.bf16.gmra.mrb[0].mxu0 %v977
      %v1390 = vpop.f32.mrb[0].mxu0
      %v1391 = vadd.f32 %v1230, %v1390
      %v1392 = vpop.f32.mrb[0].mxu0
      %v1393 = vpop.f32.mrb[0].mxu0
      %v1394 = vadd.f32 %v1233, %v1393
      %v1395 = vpop.f32.mrb[0].mxu0
      %1396 = vmatprep.mubr.bf16.mxu0 0
      %1397 = vmatmul.mubr.bf16.gmra.mrb[0].mxu0 %v980
      %v1398 = vpop.f32.mrb[0].mxu0
      %v1399 = vadd.f32 %v1238, %v1398
      %v1400 = vpop.f32.mrb[0].mxu0
      %v1401 = vpop.f32.mrb[0].mxu0
      %v1402 = vadd.f32 %v1241, %v1401
      %v1403 = vpop.f32.mrb[0].mxu0
      %1404 = vmatprep.mubr.bf16.mxu0 0
      %1405 = vmatmul.mubr.bf16.gmra.mrb[0].mxu0 %v983
      %v1406 = vpop.f32.mrb[0].mxu0
      %v1407 = vadd.f32 %v1246, %v1406
      %v1408 = vpop.f32.mrb[0].mxu0
      %v1409 = vpop.f32.mrb[0].mxu0
      %v1410 = vadd.f32 %v1249, %v1409
      %v1411 = vpop.f32.mrb[0].mxu0
      %1412 = vmatprep.mubr.bf16.mxu0 0
      %1413 = vmatmul.mubr.bf16.gmra.mrb[0].mxu0 %v986
      %v1414 = vpop.f32.mrb[0].mxu0
      %v1415 = vadd.f32 %v1254, %v1414
      %v1416 = vpop.f32.mrb[0].mxu0
      %v1417 = vpop.f32.mrb[0].mxu0
      %v1418 = vadd.f32 %v1257, %v1417
      %v1419 = vpop.f32.mrb[0].mxu0
      %1420 = vmatprep.mubr.bf16.mxu0 0
      %1421 = vmatmul.mubr.bf16.gmra.mrb[0].mxu0 %v989
      %v1422 = vpop.f32.mrb[0].mxu0
      %v1423 = vadd.f32 %v1262, %v1422
      %v1424 = vpop.f32.mrb[0].mxu0
      %v1425 = vpop.f32.mrb[0].mxu0
      %v1426 = vadd.f32 %v1265, %v1425
      %v1427 = vpop.f32.mrb[0].mxu0
      %1428 = vmatprep.mubr.bf16.mxu0 0
      %1429 = vmatmul.mubr.bf16.gmra.mrb[0].mxu0 %v992
      %v1430 = vpop.f32.mrb[0].mxu0
      %v1431 = vadd.f32 %v1270, %v1430
      %v1432 = vpop.f32.mrb[0].mxu0
      %v1433 = vpop.f32.mrb[0].mxu0
      %v1434 = vadd.f32 %v1273, %v1433
      %v1435 = vpop.f32.mrb[0].mxu0
      %1436 = vmatprep.mubr.bf16.mxu0 0
      %1437 = vmatmul.mubr.bf16.gmra.mrb[0].mxu0 %v995
      %v1438 = vpop.f32.mrb[0].mxu0
      %v1439 = vadd.f32 %v1278, %v1438
      %v1440 = vpop.f32.mrb[0].mxu0
      %v1441 = vpop.f32.mrb[0].mxu0
      %v1442 = vadd.f32 %v1281, %v1441
      %v1443 = vpop.f32.mrb[0].mxu0
      %1444 = vmatprep.mubr.bf16.mxu0 0
      %1445 = vmatmul.mubr.bf16.gmra.mrb[0].mxu0 %v998
      %v1446 = vpop.f32.mrb[0].mxu0
      %v1447 = vadd.f32 %v1286, %v1446
      %v1448 = vpop.f32.mrb[0].mxu0
      %v1449 = vpop.f32.mrb[0].mxu0
      %v1450 = vadd.f32 %v1289, %v1449
      %v1451 = vpop.f32.mrb[0].mxu0
      %1452 = vmatprep.mubr.bf16.mxu0 0
      %1453 = vmatmul.mubr.bf16.gmra.mrb[0].mxu0 %v1001
      %v1454 = vpop.f32.mrb[0].mxu0
      %v1455 = vadd.f32 %v1294, %v1454
      %v1456 = vpop.f32.mrb[0].mxu0
      %v1457 = vpop.f32.mrb[0].mxu0
      %v1458 = vadd.f32 %v1297, %v1457
      %v1459 = vpop.f32.mrb[0].mxu0
      %1460 = vmatprep.mubr.bf16.mxu0 0
      %1461 = vmatmul.mubr.bf16.gmra.mrb[0].mxu0 %v1004
      %v1462 = vpop.f32.mrb[0].mxu0
      %v1463 = vadd.f32 %v1302, %v1462
      %v1464 = vpop.f32.mrb[0].mxu0
      %v1465 = vpop.f32.mrb[0].mxu0
      %v1466 = vadd.f32 %v1305, %v1465
      %v1467 = vpop.f32.mrb[0].mxu0
      %1468 = vmatprep.mubr.bf16.mxu0 0
      %1469 = vmatmul.mubr.bf16.gmra.mrb[0].mxu0 %v1007
      %v1470 = vpop.f32.mrb[0].mxu0
      %v1471 = vadd.f32 %v1310, %v1470
      %v1472 = vpop.f32.mrb[0].mxu0
      %v1473 = vpop.f32.mrb[0].mxu0
      %v1474 = vadd.f32 %v1313, %v1473
      %v1475 = vpop.f32.mrb[0].mxu0
      %1476 = vmatprep.mubr.bf16.mxu0 0
      %1477 = vmatmul.mubr.bf16.gmra.mrb[0].mxu0 %v1010
      %v1478 = vpop.f32.mrb[0].mxu0
      %v1479 = vadd.f32 %v1318, %v1478
      %v1480 = vpop.f32.mrb[0].mxu0
      %v1481 = vpop.f32.mrb[0].mxu0
      %v1482 = vadd.f32 %v1321, %v1481
      %v1483 = vpop.f32.mrb[0].mxu0
      %1484 = vmatprep.mubr.bf16.mxu0 0
      %1485 = vmatmul.mubr.bf16.gmra.mrb[0].mxu0 %v1013
      %v1486 = vpop.f32.mrb[0].mxu0
      %v1487 = vadd.f32 %v1326, %v1486
      %v1488 = vpop.f32.mrb[0].mxu0
      %v1489 = vpop.f32.mrb[0].mxu0
      %v1490 = vadd.f32 %v1329, %v1489
      %v1491 = vpop.f32.mrb[0].mxu0
      %1492 = vmatprep.mubr.bf16.mxu0 0
      %1493 = vmatmul.mubr.bf16.gmra.mrb[0].mxu0 %v1016
      %v1494 = vpop.f32.mrb[0].mxu0
      %v1495 = vadd.f32 %v1334, %v1494
      %v1496 = vpop.f32.mrb[0].mxu0
      %v1497 = vpop.f32.mrb[0].mxu0
      %v1498 = vadd.f32 %v1337, %v1497
      %v1499 = vpop.f32.mrb[0].mxu0
      %1500 = vdwg.mxu0
      %v1501 = vmax.f32 %v1375, 0.0
      %v1502 = vmax.f32 %v1378, 0.0
      %v1503 = vmax.f32 %v1383, 0.0
      %v1504 = vmax.f32 %v1386, 0.0
      %v1505 = vmax.f32 %v1391, 0.0
      %v1506 = vmax.f32 %v1394, 0.0
      %v1507 = vmax.f32 %v1399, 0.0
      %v1508 = vmax.f32 %v1402, 0.0
      %v1509 = vmax.f32 %v1407, 0.0
      %v1510 = vmax.f32 %v1410, 0.0
      %v1511 = vmax.f32 %v1415, 0.0
      %v1512 = vmax.f32 %v1418, 0.0
      %v1513 = vmax.f32 %v1423, 0.0
      %v1514 = vmax.f32 %v1426, 0.0
      %v1515 = vmax.f32 %v1431, 0.0
      %v1516 = vmax.f32 %v1434, 0.0
      %v1517 = vmax.f32 %v1439, 0.0
      %v1518 = vmax.f32 %v1442, 0.0
      %v1519 = vmax.f32 %v1447, 0.0
      %v1520 = vmax.f32 %v1450, 0.0
      %v1521 = vmax.f32 %v1455, 0.0
      %v1522 = vmax.f32 %v1458, 0.0
      %v1523 = vmax.f32 %v1463, 0.0
      %v1524 = vmax.f32 %v1466, 0.0
      %v1525 = vmax.f32 %v1471, 0.0
      %v1526 = vmax.f32 %v1474, 0.0
      %v1527 = vmax.f32 %v1479, 0.0
      %v1528 = vmax.f32 %v1482, 0.0
      %v1529 = vmax.f32 %v1487, 0.0
      %v1530 = vmax.f32 %v1490, 0.0
      %v1531 = vmax.f32 %v1495, 0.0
      %v1532 = vmax.f32 %v1498, 0.0
      %1533 = vst [vmem:[%s175] sm:$0xff] %v1501
      %1534 = vst [vmem:[%s175 + $0x8] sm:$0xff] %v1502
      %1535 = vst [vmem:[%s175 + $0x10] sm:$0xff] %v1503
      %1536 = vst [vmem:[%s175 + $0x18] sm:$0xff] %v1504
      %1537 = vst [vmem:[%s175 + $0x20] sm:$0xff] %v1505
      %1538 = vst [vmem:[%s175 + $0x28] sm:$0xff] %v1506
      %1539 = vst [vmem:[%s175 + $0x30] sm:$0xff] %v1507
      %1540 = vst [vmem:[%s175 + $0x38] sm:$0xff] %v1508
      %1541 = vst [vmem:[%s175 + $0x40] sm:$0xff] %v1509
      %1542 = vst [vmem:[%s175 + $0x48] sm:$0xff] %v1510
      %1543 = vst [vmem:[%s175 + $0x50] sm:$0xff] %v1511
      %1544 = vst [vmem:[%s175 + $0x58] sm:$0xff] %v1512
      %1545 = vst [vmem:[%s175 + $0x60] sm:$0xff] %v1513
      %1546 = vst [vmem:[%s175 + $0x68] sm:$0xff] %v1514
      %1547 = vst [vmem:[%s175 + $0x70] sm:$0xff] %v1515
      %1548 = vst [vmem:[%s175 + $0x78] sm:$0xff] %v1516
      %1549 = vst [vmem:[%s175 + $0x80] sm:$0xff] %v1517
      %1550 = vst [vmem:[%s175 + $0x88] sm:$0xff] %v1518
      %1551 = vst [vmem:[%s175 + $0x90] sm:$0xff] %v1519
      %1552 = vst [vmem:[%s175 + $0x98] sm:$0xff] %v1520
      %1553 = vst [vmem:[%s175 + $0xa0] sm:$0xff] %v1521
      %1554 = vst [vmem:[%s175 + $0xa8] sm:$0xff] %v1522
      %1555 = vst [vmem:[%s175 + $0xb0] sm:$0xff] %v1523
      %1556 = vst [vmem:[%s175 + $0xb8] sm:$0xff] %v1524
      %1557 = vst [vmem:[%s175 + $0xc0] sm:$0xff] %v1525
      %1558 = vst [vmem:[%s175 + $0xc8] sm:$0xff] %v1526
      %1559 = vst [vmem:[%s175 + $0xd0] sm:$0xff] %v1527
      %1560 = vst [vmem:[%s175 + $0xd8] sm:$0xff] %v1528
      %1561 = vst [vmem:[%s175 + $0xe0] sm:$0xff] %v1529
      %1562 = vst [vmem:[%s175 + $0xe8] sm:$0xff] %v1530
      %1563 = vst [vmem:[%s175 + $0xf0] sm:$0xff] %v1531
      %1564 = vst [vmem:[%s175 + $0xf8] sm:$0xff] %v1532
      %s1565 = smul.u32 32, %s14
      %p1566 = scmp.lt.s32.totalorder %s1565, 127
      %s1567 = scalar_select %p1566, %s1565, 127
      %s1568 = smul.addr %s1567, 8
      %s1569 = scalar_lea.vmem %s3, %s1568
      // Predicated region
      $region33: #{udanet_forward.8} parent=31 // pred_check
        %p1570 = pneg %p100
      $region34: #{udanet_forward.8} parent=31 // pred_check_branch
        %1572 = sbr.rel (%p1570) target = $region36
      $region35: #{udanet_forward.8} parent=31 // pred_region
        %s1573 = smul.u32 32, %s14
      $region36: #{udanet_forward.8} parent=31 // pred_fallthru
        _
    $region32: #{udanet_forward.8} parent=5 // pred_fallthru
      _
    %p1574 = scmp.le.s32.totalorder 2, %s9
    // Predicated region
    $region37: #{udanet_forward.8} parent=5 // pred_check
      %p1575 = pneg %p1574
    $region38: #{udanet_forward.8} parent=5 // pred_check_branch
      %1577 = sbr.rel (%p1575) target = $region40
    $region39: #{udanet_forward.8} parent=5 // pred_region
      %s1578 = ssub.s32 %s9, 2
      // Predicated region
      $region41: #{udanet_forward.8} parent=39 // pred_check
        %p1579 = pneg %p106
      $region42: #{udanet_forward.8} parent=39 // pred_check_branch
        %1581 = sbr.rel (%p1579) target = $region44
      $region43: #{udanet_forward.8} parent=39 // pred_region
        %s1582 = smul.u32 32, %s15
        %p1583 = scmp.lt.s32.totalorder %s1582, 127
        %s1584 = scalar_select %p1583, %s1582, 127
        %s1585 = smul.addr %s1584, 8
        %s1586 = scalar_lea.vmem %s3, %s1585
      $region44: #{udanet_forward.8} parent=39 // pred_fallthru
        _
    $region40: #{udanet_forward.8} parent=5 // pred_fallthru
      _
  $region6: #{udanet_forward.8} parent=0 // loop_footer
    %s13 = sadd.s32 1, %s9
  $region7: #{udanet_forward.8} parent=0 // loop_footer_branch
    %8 = sbr.rel target = $region3
  $region8: #{udanet_forward.8} parent=0 // loop_exit
    _

// kernel: udanet_forward.9
$region0: #{udanet_forward.9}
  #allocation0 [shape = 'u32[]', space=smem, size = 0x4, offset = 0x4, fixed_abs, tag = 'smem constant byte address 0x4 - core index']
  #allocation1 [shape = 'u32[144,128]{1,0:T(1,128)}', space=vmem, size = 0x12000, scoped, tag = 'internal scratch']
  %s0 = inlined_call_operand.vmem [shape: bf16[512,1152], index: 0, kind: input, shape index: {}]
  %s1 = inlined_call_operand.vmem [shape: bf16[1152,64], index: 1, kind: input, shape index: {}]
  %s2 = inlined_call_operand.vmem [shape: f32[1,64], index: 2, kind: input, shape index: {}]
  %s3 = inlined_call_operand.vmem [shape: f32[512,64], index: 3, kind: output, shape index: {}]
  %s4 = sld [smem:[#allocation0]]
  $region45: #{udanet_forward.9} parent=0
    _
  %s6 = ssub.s32 1, %s4
  %s7 = scalar_select 0, %s6, %s4
  loop: start=0, step=1, limit=4
  $region2: #{udanet_forward.9} parent=0 // loop_pre_header
    _
  $region3: #{udanet_forward.9} parent=0 // loop_header
    %s9 = sphi 0, %s13
    %p10 = scmp.ge.s32.totalorder %s9, 4
    %s19 = sphi 0, %s21
    %s22 = sphi 0, %s19
    %s23 = sphi 0, %s22
    %s39 = sphi 0, %s23
    %s43 = sphi 0, %s43
    %s45 = sphi 0, %s43
    %s46 = sphi 0, %s45
    %s60 = sphi 0, %s46
    %s64 = sphi 0, %s64
    %s66 = sphi 0, %s64
    %s67 = sphi 0, %s66
    %s81 = sphi 0, %s67
    %s87 = sphi 0, %s89
    %s90 = sphi 0, %s87
    %s91 = sphi 0, %s90
    %s107 = sphi 0, %s91
  $region4: #{udanet_forward.9} parent=0 // loop_header_branch
    %12 = sbr.rel (%p10) target = $region8
  $region5: #{udanet_forward.9} parent=0 // loop_body
    %s14 = ssub.s32 %s9, 1
    %s15 = ssub.s32 %s9, 2
    %s16 = sadd.s32 %s9, 1
    %s17 = ssub.s32 %s9, %s16
    %p18 = scmp.eq.s32.totalorder %s17, 0
    %s20 = sadd.s32 %s19, 1
    %s21 = scalar_select %p18, %s19, %s20
    %p24 = pneg %p18
    %p25 = scmp.eq.s32.totalorder %s9, 1
    %p26 = por %p24, %p25
    %p27 = scmp.ne.s32.totalorder %s19, %s22
    %p28 = scmp.eq.s32.totalorder %s9, 0
    %p29 = por %p27, %p28
    %p30 = scmp.ne.s32.totalorder %s19, %s22
    %p31 = scmp.eq.s32.totalorder %s14, 1
    %p32 = por %p30, %p31
    %p33 = scmp.ne.s32.totalorder %s22, %s23
    %p34 = scmp.eq.s32.totalorder %s14, 0
    %p35 = por %p33, %p34
    %p36 = scmp.ne.s32.totalorder %s22, %s23
    %p37 = scmp.eq.s32.totalorder %s15, 1
    %p38 = por %p36, %p37
    %p40 = scmp.ne.s32.totalorder %s23, %s39
    %p41 = scmp.eq.s32.totalorder %s15, 0
    %p42 = por %p40, %p41
    %s44 = sadd.s32 %s43, 1
    %p47 = scmp.eq.s32.totalorder %s9, 1
    %p48 = scmp.ne.s32.totalorder %s43, %s45
    %p49 = scmp.eq.s32.totalorder %s9, 0
    %p50 = por %p48, %p49
    %p51 = scmp.ne.s32.totalorder %s43, %s45
    %p52 = scmp.eq.s32.totalorder %s14, 1
    %p53 = por %p51, %p52
    %p54 = scmp.ne.s32.totalorder %s45, %s46
    %p55 = scmp.eq.s32.totalorder %s14, 0
    %p56 = por %p54, %p55
    %p57 = scmp.ne.s32.totalorder %s45, %s46
    %p58 = scmp.eq.s32.totalorder %s15, 1
    %p59 = por %p57, %p58
    %p61 = scmp.ne.s32.totalorder %s46, %s60
    %p62 = scmp.eq.s32.totalorder %s15, 0
    %p63 = por %p61, %p62
    %s65 = sadd.s32 %s64, 1
    %p68 = scmp.eq.s32.totalorder %s9, 1
    %p69 = scmp.ne.s32.totalorder %s64, %s66
    %p70 = scmp.eq.s32.totalorder %s9, 0
    %p71 = por %p69, %p70
    %p72 = scmp.ne.s32.totalorder %s64, %s66
    %p73 = scmp.eq.s32.totalorder %s14, 1
    %p74 = por %p72, %p73
    %p75 = scmp.ne.s32.totalorder %s66, %s67
    %p76 = scmp.eq.s32.totalorder %s14, 0
    %p77 = por %p75, %p76
    %p78 = scmp.ne.s32.totalorder %s66, %s67
    %p79 = scmp.eq.s32.totalorder %s15, 1
    %p80 = por %p78, %p79
    %p82 = scmp.ne.s32.totalorder %s67, %s81
    %p83 = scmp.eq.s32.totalorder %s15, 0
    %p84 = por %p82, %p83
    %s85 = ssub.s32 %s9, %s16
    %p86 = scmp.eq.s32.totalorder %s85, 0
    %s88 = sadd.s32 %s87, 1
    %s89 = scalar_select %p86, %s87, %s88
    %p92 = pneg %p86
    %p93 = scmp.eq.s32.totalorder %s9, 1
    %p94 = por %p92, %p93
    %p95 = scmp.ne.s32.totalorder %s87, %s90
    %p96 = scmp.eq.s32.totalorder %s9, 0
    %p97 = por %p95, %p96
    %p98 = scmp.ne.s32.totalorder %s87, %s90
    %p99 = scmp.eq.s32.totalorder %s14, 1
    %p100 = por %p98, %p99
    %p101 = scmp.ne.s32.totalorder %s90, %s91
    %p102 = scmp.eq.s32.totalorder %s14, 0
    %p103 = por %p101, %p102
    %p104 = scmp.ne.s32.totalorder %s90, %s91
    %p105 = scmp.eq.s32.totalorder %s15, 1
    %p106 = por %p104, %p105
    %p108 = scmp.ne.s32.totalorder %s91, %s107
    %p109 = scmp.eq.s32.totalorder %s15, 0
    %p110 = por %p108, %p109
    %p111 = scmp.le.s32.totalorder 1, %s9
    %p112 = scmp.lt.s32.totalorder %s9, 3
    %p113 = pnand %p111, %p112
    %p114 = pneg %p113
    // Predicated region
    $region9: #{udanet_forward.9} parent=5 // pred_check
      _
    $region10: #{udanet_forward.9} parent=5 // pred_check_branch
      %116 = sbr.rel (%p113) target = $region12
    $region11: #{udanet_forward.9} parent=5 // pred_region
      %s117 = ssub.s32 %s9, 1
      // Predicated region
      $region13: #{udanet_forward.9} parent=11 // pred_check
        %p118 = pneg %p56
      $region14: #{udanet_forward.9} parent=11 // pred_check_branch
        %120 = sbr.rel (%p118) target = $region16
      $region15: #{udanet_forward.9} parent=11 // pred_region
        _
      $region16: #{udanet_forward.9} parent=11 // pred_fallthru
        _
      // Predicated region
      $region17: #{udanet_forward.9} parent=11 // pred_check
        %p121 = pneg %p77
      $region18: #{udanet_forward.9} parent=11 // pred_check_branch
        %123 = sbr.rel (%p121) target = $region20
      $region19: #{udanet_forward.9} parent=11 // pred_region
        _
      $region20: #{udanet_forward.9} parent=11 // pred_fallthru
        _
    $region12: #{udanet_forward.9} parent=5 // pred_fallthru
      _
    %p124 = scmp.lt.s32.totalorder %s9, 2
    // Predicated region
    $region21: #{udanet_forward.9} parent=5 // pred_check
      %p125 = pneg %p124
    $region22: #{udanet_forward.9} parent=5 // pred_check_branch
      %127 = sbr.rel (%p125) target = $region24
    $region23: #{udanet_forward.9} parent=5 // pred_region
      // Predicated region
      $region25: #{udanet_forward.9} parent=23 // pred_check
        %p128 = pneg %p29
      $region26: #{udanet_forward.9} parent=23 // pred_check_branch
        %130 = sbr.rel (%p128) target = $region28
      $region27: #{udanet_forward.9} parent=23 // pred_region
        %s131 = smul.u32 32, %s9
        %p132 = scmp.lt.s32.totalorder %s131, 63
        %s133 = scalar_select %p132, %s131, 63
        %s134 = smul.addr %s133, 9
        %s135 = smul.addr %s134, 4
        %s136 = scalar_lea.vmem %s0, %s135
        %s137 = smul.u32 32, %s9
      $region28: #{udanet_forward.9} parent=23 // pred_fallthru
        _
    $region24: #{udanet_forward.9} parent=5 // pred_fallthru
      _
    %p138 = scmp.le.s32.totalorder 1, %s9
    %p139 = scmp.lt.s32.totalorder %s9, 3
    %p140 = pnand %p138, %p139
    %p141 = pneg %p140
    // Predicated region
    $region29: #{udanet_forward.9} parent=5 // pred_check
      _
    $region30: #{udanet_forward.9} parent=5 // pred_check_branch
      %143 = sbr.rel (%p140) target = $region32
    $region31: #{udanet_forward.9} parent=5 // pred_region
      %s144 = ssub.s32 %s9, 1
      %s145 = smul.u32 32, %s14
      %p146 = scmp.lt.s32.totalorder %s145, 63
      %s147 = scalar_select %p146, %s145, 63
      %s148 = smul.addr %s147, 9
      %s149 = smul.addr %s148, 4
      %s150 = scalar_lea.vmem %s0, %s149
      %p151 = pneg %p35
      %p152 = pneg %p32
      %p153 = pneg %p56
      %p154 = pneg %p53
      %p155 = pneg %p77
      %p156 = pneg %p74
      %p157 = pneg %p103
      %p158 = pneg %p100
      %s159 = smul.u32 32, %s14
      %p160 = scmp.lt.s32.totalorder %s159, 63
      %s161 = scalar_select %p160, %s159, 63
      %s162 = smul.addr %s161, 8
      %s163 = scalar_lea.vmem %s3, %s162
      %s164 = smul.u32 32, %s14
      %p165 = scmp.lt.s32.totalorder %s164, 63
      %s166 = scalar_select %p165, %s164, 63
      %s167 = smul.addr %s166, 9
      %s168 = smul.addr %s167, 4
      %s169 = scalar_lea.vmem %s0, %s168
      %s170 = smul.u32 32, %s14
      %s171 = smul.u32 32, %s14
      %p172 = scmp.lt.s32.totalorder %s171, 63
      %s173 = scalar_select %p172, %s171, 63
      %s174 = smul.addr %s173, 8
      %s175 = scalar_lea.vmem %s3, %s174
      %s176 = smul.u32 32, %s14
      %v178 = vld [vmem:[%s169] sm:$0xff]
      %v179 = vld [vmem:[%s169 + $0x8] sm:$0xff]
      %v180 = vld [vmem:[%s169 + $0x10] sm:$0xff]
      %v181 = vld [vmem:[%s169 + $0x18] sm:$0xff]
      %v182 = vld [vmem:[%s169 + $0x20] sm:$0xf]
      %v183 = vld [vmem:[%s169 + $0x24] sm:$0xff]
      %v184 = vld [vmem:[%s169 + $0x2c] sm:$0xff]
      %v185 = vld [vmem:[%s169 + $0x34] sm:$0xff]
      %v186 = vld [vmem:[%s169 + $0x3c] sm:$0xff]
      %v187 = vld [vmem:[%s169 + $0x44] sm:$0xf]
      %v188 = vld [vmem:[%s169 + $0x48] sm:$0xff]
      %v189 = vld [vmem:[%s169 + $0x50] sm:$0xff]
      %v190 = vld [vmem:[%s169 + $0x58] sm:$0xff]
      %v191 = vld [vmem:[%s169 + $0x60] sm:$0xff]
      %v192 = vld [vmem:[%s169 + $0x68] sm:$0xf]
      %v193 = vld [vmem:[%s169 + $0x6c] sm:$0xff]
      %v194 = vld [vmem:[%s169 + $0x74] sm:$0xff]
      %v195 = vld [vmem:[%s169 + $0x7c] sm:$0xff]
      %v196 = vld [vmem:[%s169 + $0x84] sm:$0xff]
      %v197 = vld [vmem:[%s169 + $0x8c] sm:$0xf]
      %v198 = vld [vmem:[%s169 + $0x90] sm:$0xff]
      %v199 = vld [vmem:[%s169 + $0x98] sm:$0xff]
      %v200 = vld [vmem:[%s169 + $0xa0] sm:$0xff]
      %v201 = vld [vmem:[%s169 + $0xa8] sm:$0xff]
      %v202 = vld [vmem:[%s169 + $0xb0] sm:$0xf]
      %v203 = vld [vmem:[%s169 + $0xb4] sm:$0xff]
      %v204 = vld [vmem:[%s169 + $0xbc] sm:$0xff]
      %v205 = vld [vmem:[%s169 + $0xc4] sm:$0xff]
      %v206 = vld [vmem:[%s169 + $0xcc] sm:$0xff]
      %v207 = vld [vmem:[%s169 + $0xd4] sm:$0xf]
      %v208 = vld [vmem:[%s169 + $0xd8] sm:$0xff]
      %v209 = vld [vmem:[%s169 + $0xe0] sm:$0xff]
      %v210 = vld [vmem:[%s169 + $0xe8] sm:$0xff]
      %v211 = vld [vmem:[%s169 + $0xf0] sm:$0xff]
      %v212 = vld [vmem:[%s169 + $0xf8] sm:$0xf]
      %v213 = vld [vmem:[%s169 + $0xfc] sm:$0xff]
      %v214 = vld [vmem:[%s169 + $0x104] sm:$0xff]
      %v215 = vld [vmem:[%s169 + $0x10c] sm:$0xff]
      %v216 = vld [vmem:[%s169 + $0x114] sm:$0xff]
      %v217 = vld [vmem:[%s169 + $0x11c] sm:$0xf]
      %v218 = vld [vmem:[%s169 + $0x120] sm:$0xff]
      %v219 = vld [vmem:[%s169 + $0x128] sm:$0xff]
      %v220 = vld [vmem:[%s169 + $0x130] sm:$0xff]
      %v221 = vld [vmem:[%s169 + $0x138] sm:$0xff]
      %v222 = vld [vmem:[%s169 + $0x140] sm:$0xf]
      %v223 = vld [vmem:[%s169 + $0x144] sm:$0xff]
      %v224 = vld [vmem:[%s169 + $0x14c] sm:$0xff]
      %v225 = vld [vmem:[%s169 + $0x154] sm:$0xff]
      %v226 = vld [vmem:[%s169 + $0x15c] sm:$0xff]
      %v227 = vld [vmem:[%s169 + $0x164] sm:$0xf]
      %v228 = vld [vmem:[%s169 + $0x168] sm:$0xff]
      %v229 = vld [vmem:[%s169 + $0x170] sm:$0xff]
      %v230 = vld [vmem:[%s169 + $0x178] sm:$0xff]
      %v231 = vld [vmem:[%s169 + $0x180] sm:$0xff]
      %v232 = vld [vmem:[%s169 + $0x188] sm:$0xf]
      %v233 = vld [vmem:[%s169 + $0x18c] sm:$0xff]
      %v234 = vld [vmem:[%s169 + $0x194] sm:$0xff]
      %v235 = vld [vmem:[%s169 + $0x19c] sm:$0xff]
      %v236 = vld [vmem:[%s169 + $0x1a4] sm:$0xff]
      %v237 = vld [vmem:[%s169 + $0x1ac] sm:$0xf]
      %v238 = vld [vmem:[%s169 + $0x1b0] sm:$0xff]
      %v239 = vld [vmem:[%s169 + $0x1b8] sm:$0xff]
      %v240 = vld [vmem:[%s169 + $0x1c0] sm:$0xff]
      %v241 = vld [vmem:[%s169 + $0x1c8] sm:$0xff]
      %v242 = vld [vmem:[%s169 + $0x1d0] sm:$0xf]
      %v243 = vld [vmem:[%s169 + $0x1d4] sm:$0xff]
      %v244 = vld [vmem:[%s169 + $0x1dc] sm:$0xff]
      %v245 = vld [vmem:[%s169 + $0x1e4] sm:$0xff]
      %v246 = vld [vmem:[%s169 + $0x1ec] sm:$0xff]
      %v247 = vld [vmem:[%s169 + $0x1f4] sm:$0xf]
      %v248 = vld [vmem:[%s169 + $0x1f8] sm:$0xff]
      %v249 = vld [vmem:[%s169 + $0x200] sm:$0xff]
      %v250 = vld [vmem:[%s169 + $0x208] sm:$0xff]
      %v251 = vld [vmem:[%s169 + $0x210] sm:$0xff]
      %v252 = vld [vmem:[%s169 + $0x218] sm:$0xf]
      %v253 = vld [vmem:[%s169 + $0x21c] sm:$0xff]
      %v254 = vld [vmem:[%s169 + $0x224] sm:$0xff]
      %v255 = vld [vmem:[%s169 + $0x22c] sm:$0xff]
      %v256 = vld [vmem:[%s169 + $0x234] sm:$0xff]
      %v257 = vld [vmem:[%s169 + $0x23c] sm:$0xf]
      %v258 = vld [vmem:[%s169 + $0x240] sm:$0xff]
      %v259 = vld [vmem:[%s169 + $0x248] sm:$0xff]
      %v260 = vld [vmem:[%s169 + $0x250] sm:$0xff]
      %v261 = vld [vmem:[%s169 + $0x258] sm:$0xff]
      %v262 = vld [vmem:[%s169 + $0x260] sm:$0xf]
      %v263 = vld [vmem:[%s169 + $0x264] sm:$0xff]
      %v264 = vld [vmem:[%s169 + $0x26c] sm:$0xff]
      %v265 = vld [vmem:[%s169 + $0x274] sm:$0xff]
      %v266 = vld [vmem:[%s169 + $0x27c] sm:$0xff]
      %v267 = vld [vmem:[%s169 + $0x284] sm:$0xf]
      %v268 = vld [vmem:[%s169 + $0x288] sm:$0xff]
      %v269 = vld [vmem:[%s169 + $0x290] sm:$0xff]
      %v270 = vld [vmem:[%s169 + $0x298] sm:$0xff]
      %v271 = vld [vmem:[%s169 + $0x2a0] sm:$0xff]
      %v272 = vld [vmem:[%s169 + $0x2a8] sm:$0xf]
      %v273 = vld [vmem:[%s169 + $0x2ac] sm:$0xff]
      %v274 = vld [vmem:[%s169 + $0x2b4] sm:$0xff]
      %v275 = vld [vmem:[%s169 + $0x2bc] sm:$0xff]
      %v276 = vld [vmem:[%s169 + $0x2c4] sm:$0xff]
      %v277 = vld [vmem:[%s169 + $0x2cc] sm:$0xf]
      %v278 = vld [vmem:[%s169 + $0x2d0] sm:$0xff]
      %v279 = vld [vmem:[%s169 + $0x2d8] sm:$0xff]
      %v280 = vld [vmem:[%s169 + $0x2e0] sm:$0xff]
      %v281 = vld [vmem:[%s169 + $0x2e8] sm:$0xff]
      %v282 = vld [vmem:[%s169 + $0x2f0] sm:$0xf]
      %v283 = vld [vmem:[%s169 + $0x2f4] sm:$0xff]
      %v284 = vld [vmem:[%s169 + $0x2fc] sm:$0xff]
      %v285 = vld [vmem:[%s169 + $0x304] sm:$0xff]
      %v286 = vld [vmem:[%s169 + $0x30c] sm:$0xff]
      %v287 = vld [vmem:[%s169 + $0x314] sm:$0xf]
      %v288 = vld [vmem:[%s169 + $0x318] sm:$0xff]
      %v289 = vld [vmem:[%s169 + $0x320] sm:$0xff]
      %v290 = vld [vmem:[%s169 + $0x328] sm:$0xff]
      %v291 = vld [vmem:[%s169 + $0x330] sm:$0xff]
      %v292 = vld [vmem:[%s169 + $0x338] sm:$0xf]
      %v293 = vld [vmem:[%s169 + $0x33c] sm:$0xff]
      %v294 = vld [vmem:[%s169 + $0x344] sm:$0xff]
      %v295 = vld [vmem:[%s169 + $0x34c] sm:$0xff]
      %v296 = vld [vmem:[%s169 + $0x354] sm:$0xff]
      %v297 = vld [vmem:[%s169 + $0x35c] sm:$0xf]
      %v298 = vld [vmem:[%s169 + $0x360] sm:$0xff]
      %v299 = vld [vmem:[%s169 + $0x368] sm:$0xff]
      %v300 = vld [vmem:[%s169 + $0x370] sm:$0xff]
      %v301 = vld [vmem:[%s169 + $0x378] sm:$0xff]
      %v302 = vld [vmem:[%s169 + $0x380] sm:$0xf]
      %v303 = vld [vmem:[%s169 + $0x384] sm:$0xff]
      %v304 = vld [vmem:[%s169 + $0x38c] sm:$0xff]
      %v305 = vld [vmem:[%s169 + $0x394] sm:$0xff]
      %v306 = vld [vmem:[%s169 + $0x39c] sm:$0xff]
      %v307 = vld [vmem:[%s169 + $0x3a4] sm:$0xf]
      %v308 = vld [vmem:[%s169 + $0x3a8] sm:$0xff]
      %v309 = vld [vmem:[%s169 + $0x3b0] sm:$0xff]
      %v310 = vld [vmem:[%s169 + $0x3b8] sm:$0xff]
      %v311 = vld [vmem:[%s169 + $0x3c0] sm:$0xff]
      %v312 = vld [vmem:[%s169 + $0x3c8] sm:$0xf]
      %v313 = vld [vmem:[%s169 + $0x3cc] sm:$0xff]
      %v314 = vld [vmem:[%s169 + $0x3d4] sm:$0xff]
      %v315 = vld [vmem:[%s169 + $0x3dc] sm:$0xff]
      %v316 = vld [vmem:[%s169 + $0x3e4] sm:$0xff]
      %v317 = vld [vmem:[%s169 + $0x3ec] sm:$0xf]
      %v318 = vld [vmem:[%s169 + $0x3f0] sm:$0xff]
      %v319 = vld [vmem:[%s169 + $0x3f8] sm:$0xff]
      %v320 = vld [vmem:[%s169 + $0x400] sm:$0xff]
      %v321 = vld [vmem:[%s169 + $0x408] sm:$0xff]
      %v322 = vld [vmem:[%s169 + $0x410] sm:$0xf]
      %v323 = vld [vmem:[%s169 + $0x414] sm:$0xff]
      %v324 = vld [vmem:[%s169 + $0x41c] sm:$0xff]
      %v325 = vld [vmem:[%s169 + $0x424] sm:$0xff]
      %v326 = vld [vmem:[%s169 + $0x42c] sm:$0xff]
      %v327 = vld [vmem:[%s169 + $0x434] sm:$0xf]
      %v328 = vld [vmem:[%s169 + $0x438] sm:$0xff]
      %v329 = vld [vmem:[%s169 + $0x440] sm:$0xff]
      %v330 = vld [vmem:[%s169 + $0x448] sm:$0xff]
      %v331 = vld [vmem:[%s169 + $0x450] sm:$0xff]
      %v332 = vld [vmem:[%s169 + $0x458] sm:$0xf]
      %v333 = vld [vmem:[%s169 + $0x45c] sm:$0xff]
      %v334 = vld [vmem:[%s169 + $0x464] sm:$0xff]
      %v335 = vld [vmem:[%s169 + $0x46c] sm:$0xff]
      %v336 = vld [vmem:[%s169 + $0x474] sm:$0xff]
      %v337 = vld [vmem:[%s169 + $0x47c] sm:$0xf]
      %v338 = vld [vmem:[%s1] sm:$0xf]
      %v339 = vld [vmem:[%s1 + $0x4] sm:$0xf]
      %v340 = vld [vmem:[%s1 + $0x8] sm:$0xf]
      %v341 = vld [vmem:[%s1 + $0xc] sm:$0xf]
      %v342 = vld [vmem:[%s1 + $0x10] sm:$0xf]
      %v343 = vld [vmem:[%s1 + $0x14] sm:$0xf]
      %v344 = vld [vmem:[%s1 + $0x18] sm:$0xf]
      %v345 = vld [vmem:[%s1 + $0x1c] sm:$0xf]
      %v346 = vld [vmem:[%s1 + $0x20] sm:$0xf]
      %v347 = vld [vmem:[%s1 + $0x24] sm:$0xf]
      %v348 = vld [vmem:[%s1 + $0x28] sm:$0xf]
      %v349 = vld [vmem:[%s1 + $0x2c] sm:$0xf]
      %v350 = vld [vmem:[%s1 + $0x30] sm:$0xf]
      %v351 = vld [vmem:[%s1 + $0x34] sm:$0xf]
      %v352 = vld [vmem:[%s1 + $0x38] sm:$0xf]
      %v353 = vld [vmem:[%s1 + $0x3c] sm:$0xf]
      %v354 = vld [vmem:[%s1 + $0x40] sm:$0xf]
      %v355 = vld [vmem:[%s1 + $0x44] sm:$0xf]
      %v356 = vld [vmem:[%s1 + $0x48] sm:$0xf]
      %v357 = vld [vmem:[%s1 + $0x4c] sm:$0xf]
      %v358 = vld [vmem:[%s1 + $0x50] sm:$0xf]
      %v359 = vld [vmem:[%s1 + $0x54] sm:$0xf]
      %v360 = vld [vmem:[%s1 + $0x58] sm:$0xf]
      %v361 = vld [vmem:[%s1 + $0x5c] sm:$0xf]
      %v362 = vld [vmem:[%s1 + $0x60] sm:$0xf]
      %v363 = vld [vmem:[%s1 + $0x64] sm:$0xf]
      %v364 = vld [vmem:[%s1 + $0x68] sm:$0xf]
      %v365 = vld [vmem:[%s1 + $0x6c] sm:$0xf]
      %v366 = vld [vmem:[%s1 + $0x70] sm:$0xf]
      %v367 = vld [vmem:[%s1 + $0x74] sm:$0xf]
      %v368 = vld [vmem:[%s1 + $0x78] sm:$0xf]
      %v369 = vld [vmem:[%s1 + $0x7c] sm:$0xf]
      %v370 = vld [vmem:[%s1 + $0x80] sm:$0xf]
      %v371 = vld [vmem:[%s1 + $0x84] sm:$0xf]
      %v372 = vld [vmem:[%s1 + $0x88] sm:$0xf]
      %v373 = vld [vmem:[%s1 + $0x8c] sm:$0xf]
      %v374 = vld [vmem:[%s1 + $0x90] sm:$0xf]
      %v375 = vld [vmem:[%s1 + $0x94] sm:$0xf]
      %v376 = vld [vmem:[%s1 + $0x98] sm:$0xf]
      %v377 = vld [vmem:[%s1 + $0x9c] sm:$0xf]
      %v378 = vld [vmem:[%s1 + $0xa0] sm:$0xf]
      %v379 = vld [vmem:[%s1 + $0xa4] sm:$0xf]
      %v380 = vld [vmem:[%s1 + $0xa8] sm:$0xf]
      %v381 = vld [vmem:[%s1 + $0xac] sm:$0xf]
      %v382 = vld [vmem:[%s1 + $0xb0] sm:$0xf]
      %v383 = vld [vmem:[%s1 + $0xb4] sm:$0xf]
      %v384 = vld [vmem:[%s1 + $0xb8] sm:$0xf]
      %v385 = vld [vmem:[%s1 + $0xbc] sm:$0xf]
      %v386 = vld [vmem:[%s1 + $0xc0] sm:$0xf]
      %v387 = vld [vmem:[%s1 + $0xc4] sm:$0xf]
      %v388 = vld [vmem:[%s1 + $0xc8] sm:$0xf]
      %v389 = vld [vmem:[%s1 + $0xcc] sm:$0xf]
      %v390 = vld [vmem:[%s1 + $0xd0] sm:$0xf]
      %v391 = vld [vmem:[%s1 + $0xd4] sm:$0xf]
      %v392 = vld [vmem:[%s1 + $0xd8] sm:$0xf]
      %v393 = vld [vmem:[%s1 + $0xdc] sm:$0xf]
      %v394 = vld [vmem:[%s1 + $0xe0] sm:$0xf]
      %v395 = vld [vmem:[%s1 + $0xe4] sm:$0xf]
      %v396 = vld [vmem:[%s1 + $0xe8] sm:$0xf]
      %v397 = vld [vmem:[%s1 + $0xec] sm:$0xf]
      %v398 = vld [vmem:[%s1 + $0xf0] sm:$0xf]
      %v399 = vld [vmem:[%s1 + $0xf4] sm:$0xf]
      %v400 = vld [vmem:[%s1 + $0xf8] sm:$0xf]
      %v401 = vld [vmem:[%s1 + $0xfc] sm:$0xf]
      %v402 = vld [vmem:[%s1 + $0x100] sm:$0xf]
      %v403 = vld [vmem:[%s1 + $0x104] sm:$0xf]
      %v404 = vld [vmem:[%s1 + $0x108] sm:$0xf]
      %v405 = vld [vmem:[%s1 + $0x10c] sm:$0xf]
      %v406 = vld [vmem:[%s1 + $0x110] sm:$0xf]
      %v407 = vld [vmem:[%s1 + $0x114] sm:$0xf]
      %v408 = vld [vmem:[%s1 + $0x118] sm:$0xf]
      %v409 = vld [vmem:[%s1 + $0x11c] sm:$0xf]
      %v410 = vld [vmem:[%s1 + $0x120] sm:$0xf]
      %v411 = vld [vmem:[%s1 + $0x124] sm:$0xf]
      %v412 = vld [vmem:[%s1 + $0x128] sm:$0xf]
      %v413 = vld [vmem:[%s1 + $0x12c] sm:$0xf]
      %v414 = vld [vmem:[%s1 + $0x130] sm:$0xf]
      %v415 = vld [vmem:[%s1 + $0x134] sm:$0xf]
      %v416 = vld [vmem:[%s1 + $0x138] sm:$0xf]
      %v417 = vld [vmem:[%s1 + $0x13c] sm:$0xf]
      %v418 = vld [vmem:[%s1 + $0x140] sm:$0xf]
      %v419 = vld [vmem:[%s1 + $0x144] sm:$0xf]
      %v420 = vld [vmem:[%s1 + $0x148] sm:$0xf]
      %v421 = vld [vmem:[%s1 + $0x14c] sm:$0xf]
      %v422 = vld [vmem:[%s1 + $0x150] sm:$0xf]
      %v423 = vld [vmem:[%s1 + $0x154] sm:$0xf]
      %v424 = vld [vmem:[%s1 + $0x158] sm:$0xf]
      %v425 = vld [vmem:[%s1 + $0x15c] sm:$0xf]
      %v426 = vld [vmem:[%s1 + $0x160] sm:$0xf]
      %v427 = vld [vmem:[%s1 + $0x164] sm:$0xf]
      %v428 = vld [vmem:[%s1 + $0x168] sm:$0xf]
      %v429 = vld [vmem:[%s1 + $0x16c] sm:$0xf]
      %v430 = vld [vmem:[%s1 + $0x170] sm:$0xf]
      %v431 = vld [vmem:[%s1 + $0x174] sm:$0xf]
      %v432 = vld [vmem:[%s1 + $0x178] sm:$0xf]
      %v433 = vld [vmem:[%s1 + $0x17c] sm:$0xf]
      %v434 = vld [vmem:[%s1 + $0x180] sm:$0xf]
      %v435 = vld [vmem:[%s1 + $0x184] sm:$0xf]
      %v436 = vld [vmem:[%s1 + $0x188] sm:$0xf]
      %v437 = vld [vmem:[%s1 + $0x18c] sm:$0xf]
      %v438 = vld [vmem:[%s1 + $0x190] sm:$0xf]
      %v439 = vld [vmem:[%s1 + $0x194] sm:$0xf]
      %v440 = vld [vmem:[%s1 + $0x198] sm:$0xf]
      %v441 = vld [vmem:[%s1 + $0x19c] sm:$0xf]
      %v442 = vld [vmem:[%s1 + $0x1a0] sm:$0xf]
      %v443 = vld [vmem:[%s1 + $0x1a4] sm:$0xf]
      %v444 = vld [vmem:[%s1 + $0x1a8] sm:$0xf]
      %v445 = vld [vmem:[%s1 + $0x1ac] sm:$0xf]
      %v446 = vld [vmem:[%s1 + $0x1b0] sm:$0xf]
      %v447 = vld [vmem:[%s1 + $0x1b4] sm:$0xf]
      %v448 = vld [vmem:[%s1 + $0x1b8] sm:$0xf]
      %v449 = vld [vmem:[%s1 + $0x1bc] sm:$0xf]
      %v450 = vld [vmem:[%s1 + $0x1c0] sm:$0xf]
      %v451 = vld [vmem:[%s1 + $0x1c4] sm:$0xf]
      %v452 = vld [vmem:[%s1 + $0x1c8] sm:$0xf]
      %v453 = vld [vmem:[%s1 + $0x1cc] sm:$0xf]
      %v454 = vld [vmem:[%s1 + $0x1d0] sm:$0xf]
      %v455 = vld [vmem:[%s1 + $0x1d4] sm:$0xf]
      %v456 = vld [vmem:[%s1 + $0x1d8] sm:$0xf]
      %v457 = vld [vmem:[%s1 + $0x1dc] sm:$0xf]
      %v458 = vld [vmem:[%s1 + $0x1e0] sm:$0xf]
      %v459 = vld [vmem:[%s1 + $0x1e4] sm:$0xf]
      %v460 = vld [vmem:[%s1 + $0x1e8] sm:$0xf]
      %v461 = vld [vmem:[%s1 + $0x1ec] sm:$0xf]
      %v462 = vld [vmem:[%s1 + $0x1f0] sm:$0xf]
      %v463 = vld [vmem:[%s1 + $0x1f4] sm:$0xf]
      %v464 = vld [vmem:[%s1 + $0x1f8] sm:$0xf]
      %v465 = vld [vmem:[%s1 + $0x1fc] sm:$0xf]
      %v466 = vld [vmem:[%s1 + $0x200] sm:$0xf]
      %v467 = vld [vmem:[%s1 + $0x204] sm:$0xf]
      %v468 = vld [vmem:[%s1 + $0x208] sm:$0xf]
      %v469 = vld [vmem:[%s1 + $0x20c] sm:$0xf]
      %v470 = vld [vmem:[%s1 + $0x210] sm:$0xf]
      %v471 = vld [vmem:[%s1 + $0x214] sm:$0xf]
      %v472 = vld [vmem:[%s1 + $0x218] sm:$0xf]
      %v473 = vld [vmem:[%s1 + $0x21c] sm:$0xf]
      %v474 = vld [vmem:[%s1 + $0x220] sm:$0xf]
      %v475 = vld [vmem:[%s1 + $0x224] sm:$0xf]
      %v476 = vld [vmem:[%s1 + $0x228] sm:$0xf]
      %v477 = vld [vmem:[%s1 + $0x22c] sm:$0xf]
      %v478 = vld [vmem:[%s1 + $0x230] sm:$0xf]
      %v479 = vld [vmem:[%s1 + $0x234] sm:$0xf]
      %v480 = vld [vmem:[%s1 + $0x238] sm:$0xf]
      %v481 = vld [vmem:[%s1 + $0x23c] sm:$0xf]
      %v482 = vld [vmem:[%s2] sm:$0x1]
      %v484 = vlaneseq
      %v485 = vshrl.u32 %v484, 7
      %v486 = vsub.s32 0, %v485
      %v487 = vrot.slane %v482, %v486
      %v649 = vunpack.c.l.b16 %v178
      %v650 = vunpack.c.h.b16 %v178
      %v651 = vunpack.c.l.b16 %v179
      %v652 = vunpack.c.h.b16 %v179
      %v653 = vunpack.c.l.b16 %v180
      %v654 = vunpack.c.h.b16 %v180
      %v655 = vunpack.c.l.b16 %v181
      %v656 = vunpack.c.h.b16 %v181
      %v657 = vunpack.c.l.b16 %v182
      %v658 = vunpack.c.l.b16 %v183
      %v659 = vunpack.c.h.b16 %v183
      %v660 = vunpack.c.l.b16 %v184
      %v661 = vunpack.c.h.b16 %v184
      %v662 = vunpack.c.l.b16 %v185
      %v663 = vunpack.c.h.b16 %v185
      %v664 = vunpack.c.l.b16 %v186
      %v665 = vunpack.c.h.b16 %v186
      %v666 = vunpack.c.l.b16 %v187
      %v667 = vunpack.c.l.b16 %v188
      %v668 = vunpack.c.h.b16 %v188
      %v669 = vunpack.c.l.b16 %v189
      %v670 = vunpack.c.h.b16 %v189
      %v671 = vunpack.c.l.b16 %v190
      %v672 = vunpack.c.h.b16 %v190
      %v673 = vunpack.c.l.b16 %v191
      %v674 = vunpack.c.h.b16 %v191
      %v675 = vunpack.c.l.b16 %v192
      %v676 = vunpack.c.l.b16 %v193
      %v677 = vunpack.c.h.b16 %v193
      %v678 = vunpack.c.l.b16 %v194
      %v679 = vunpack.c.h.b16 %v194
      %v680 = vunpack.c.l.b16 %v195
      %v681 = vunpack.c.h.b16 %v195
      %v682 = vunpack.c.l.b16 %v196
      %v683 = vunpack.c.h.b16 %v196
      %v684 = vunpack.c.l.b16 %v197
      %v685 = vunpack.c.l.b16 %v198
      %v686 = vunpack.c.h.b16 %v198
      %v687 = vunpack.c.l.b16 %v199
      %v688 = vunpack.c.h.b16 %v199
      %v689 = vunpack.c.l.b16 %v200
      %v690 = vunpack.c.h.b16 %v200
      %v691 = vunpack.c.l.b16 %v201
      %v692 = vunpack.c.h.b16 %v201
      %v693 = vunpack.c.l.b16 %v202
      %v694 = vunpack.c.l.b16 %v203
      %v695 = vunpack.c.h.b16 %v203
      %v696 = vunpack.c.l.b16 %v204
      %v697 = vunpack.c.h.b16 %v204
      %v698 = vunpack.c.l.b16 %v205
      %v699 = vunpack.c.h.b16 %v205
      %v700 = vunpack.c.l.b16 %v206
      %v701 = vunpack.c.h.b16 %v206
      %v702 = vunpack.c.l.b16 %v207
      %v703 = vunpack.c.l.b16 %v208
      %v704 = vunpack.c.h.b16 %v208
      %v705 = vunpack.c.l.b16 %v209
      %v706 = vunpack.c.h.b16 %v209
      %v707 = vunpack.c.l.b16 %v210
      %v708 = vunpack.c.h.b16 %v210
      %v709 = vunpack.c.l.b16 %v211
      %v710 = vunpack.c.h.b16 %v211
      %v711 = vunpack.c.l.b16 %v212
      %v712 = vunpack.c.l.b16 %v213
      %v713 = vunpack.c.h.b16 %v213
      %v714 = vunpack.c.l.b16 %v214
      %v715 = vunpack.c.h.b16 %v214
      %v716 = vunpack.c.l.b16 %v215
      %v717 = vunpack.c.h.b16 %v215
      %v718 = vunpack.c.l.b16 %v216
      %v719 = vunpack.c.h.b16 %v216
      %v720 = vunpack.c.l.b16 %v217
      %v721 = vunpack.c.l.b16 %v218
      %v722 = vunpack.c.h.b16 %v218
      %v723 = vunpack.c.l.b16 %v219
      %v724 = vunpack.c.h.b16 %v219
      %v725 = vunpack.c.l.b16 %v220
      %v726 = vunpack.c.h.b16 %v220
      %v727 = vunpack.c.l.b16 %v221
      %v728 = vunpack.c.h.b16 %v221
      %v729 = vunpack.c.l.b16 %v222
      %v730 = vunpack.c.l.b16 %v223
      %v731 = vunpack.c.h.b16 %v223
      %v732 = vunpack.c.l.b16 %v224
      %v733 = vunpack.c.h.b16 %v224
      %v734 = vunpack.c.l.b16 %v225
      %v735 = vunpack.c.h.b16 %v225
      %v736 = vunpack.c.l.b16 %v226
      %v737 = vunpack.c.h.b16 %v226
      %v738 = vunpack.c.l.b16 %v227
      %v739 = vunpack.c.l.b16 %v228
      %v740 = vunpack.c.h.b16 %v228
      %v741 = vunpack.c.l.b16 %v229
      %v742 = vunpack.c.h.b16 %v229
      %v743 = vunpack.c.l.b16 %v230
      %v744 = vunpack.c.h.b16 %v230
      %v745 = vunpack.c.l.b16 %v231
      %v746 = vunpack.c.h.b16 %v231
      %v747 = vunpack.c.l.b16 %v232
      %v748 = vunpack.c.l.b16 %v233
      %v749 = vunpack.c.h.b16 %v233
      %v750 = vunpack.c.l.b16 %v234
      %v751 = vunpack.c.h.b16 %v234
      %v752 = vunpack.c.l.b16 %v235
      %v753 = vunpack.c.h.b16 %v235
      %v754 = vunpack.c.l.b16 %v236
      %v755 = vunpack.c.h.b16 %v236
      %v756 = vunpack.c.l.b16 %v237
      %v757 = vunpack.c.l.b16 %v238
      %v758 = vunpack.c.h.b16 %v238
      %v759 = vunpack.c.l.b16 %v239
      %v760 = vunpack.c.h.b16 %v239
      %v761 = vunpack.c.l.b16 %v240
      %v762 = vunpack.c.h.b16 %v240
      %v763 = vunpack.c.l.b16 %v241
      %v764 = vunpack.c.h.b16 %v241
      %v765 = vunpack.c.l.b16 %v242
      %v766 = vunpack.c.l.b16 %v243
      %v767 = vunpack.c.h.b16 %v243
      %v768 = vunpack.c.l.b16 %v244
      %v769 = vunpack.c.h.b16 %v244
      %v770 = vunpack.c.l.b16 %v245
      %v771 = vunpack.c.h.b16 %v245
      %v772 = vunpack.c.l.b16 %v246
      %v773 = vunpack.c.h.b16 %v246
      %v774 = vunpack.c.l.b16 %v247
      %v775 = vunpack.c.l.b16 %v248
      %v776 = vunpack.c.h.b16 %v248
      %v777 = vunpack.c.l.b16 %v249
      %v778 = vunpack.c.h.b16 %v249
      %v779 = vunpack.c.l.b16 %v250
      %v780 = vunpack.c.h.b16 %v250
      %v781 = vunpack.c.l.b16 %v251
      %v782 = vunpack.c.h.b16 %v251
      %v783 = vunpack.c.l.b16 %v252
      %v784 = vunpack.c.l.b16 %v253
      %v785 = vunpack.c.h.b16 %v253
      %v786 = vunpack.c.l.b16 %v254
      %v787 = vunpack.c.h.b16 %v254
      %v788 = vunpack.c.l.b16 %v255
      %v789 = vunpack.c.h.b16 %v255
      %v790 = vunpack.c.l.b16 %v256
      %v791 = vunpack.c.h.b16 %v256
      %v792 = vunpack.c.l.b16 %v257
      %v793 = vunpack.c.l.b16 %v258
      %v794 = vunpack.c.h.b16 %v258
      %v795 = vunpack.c.l.b16 %v259
      %v796 = vunpack.c.h.b16 %v259
      %v797 = vunpack.c.l.b16 %v260
      %v798 = vunpack.c.h.b16 %v260
      %v799 = vunpack.c.l.b16 %v261
      %v800 = vunpack.c.h.b16 %v261
      %v801 = vunpack.c.l.b16 %v262
      %v802 = vunpack.c.l.b16 %v263
      %v803 = vunpack.c.h.b16 %v263
      %v804 = vunpack.c.l.b16 %v264
      %v805 = vunpack.c.h.b16 %v264
      %v806 = vunpack.c.l.b16 %v265
      %v807 = vunpack.c.h.b16 %v265
      %v808 = vunpack.c.l.b16 %v266
      %v809 = vunpack.c.h.b16 %v266
      %v810 = vunpack.c.l.b16 %v267
      %v811 = vunpack.c.l.b16 %v268
      %v812 = vunpack.c.h.b16 %v268
      %v813 = vunpack.c.l.b16 %v269
      %v814 = vunpack.c.h.b16 %v269
      %v815 = vunpack.c.l.b16 %v270
      %v816 = vunpack.c.h.b16 %v270
      %v817 = vunpack.c.l.b16 %v271
      %v818 = vunpack.c.h.b16 %v271
      %v819 = vunpack.c.l.b16 %v272
      %v820 = vunpack.c.l.b16 %v273
      %v821 = vunpack.c.h.b16 %v273
      %v822 = vunpack.c.l.b16 %v274
      %v823 = vunpack.c.h.b16 %v274
      %v824 = vunpack.c.l.b16 %v275
      %v825 = vunpack.c.h.b16 %v275
      %v826 = vunpack.c.l.b16 %v276
      %v827 = vunpack.c.h.b16 %v276
      %v828 = vunpack.c.l.b16 %v277
      %v829 = vunpack.c.l.b16 %v278
      %v830 = vunpack.c.h.b16 %v278
      %v831 = vunpack.c.l.b16 %v279
      %v832 = vunpack.c.h.b16 %v279
      %v833 = vunpack.c.l.b16 %v280
      %v834 = vunpack.c.h.b16 %v280
      %v835 = vunpack.c.l.b16 %v281
      %v836 = vunpack.c.h.b16 %v281
      %v837 = vunpack.c.l.b16 %v282
      %v838 = vunpack.c.l.b16 %v283
      %v839 = vunpack.c.h.b16 %v283
      %v840 = vunpack.c.l.b16 %v284
      %v841 = vunpack.c.h.b16 %v284
      %v842 = vunpack.c.l.b16 %v285
      %v843 = vunpack.c.h.b16 %v285
      %v844 = vunpack.c.l.b16 %v286
      %v845 = vunpack.c.h.b16 %v286
      %v846 = vunpack.c.l.b16 %v287
      %v847 = vunpack.c.l.b16 %v288
      %v848 = vunpack.c.h.b16 %v288
      %v849 = vunpack.c.l.b16 %v289
      %v850 = vunpack.c.h.b16 %v289
      %v851 = vunpack.c.l.b16 %v290
      %v852 = vunpack.c.h.b16 %v290
      %v853 = vunpack.c.l.b16 %v291
      %v854 = vunpack.c.h.b16 %v291
      %v855 = vunpack.c.l.b16 %v292
      %v856 = vunpack.c.l.b16 %v293
      %v857 = vunpack.c.h.b16 %v293
      %v858 = vunpack.c.l.b16 %v294
      %v859 = vunpack.c.h.b16 %v294
      %v860 = vunpack.c.l.b16 %v295
      %v861 = vunpack.c.h.b16 %v295
      %v862 = vunpack.c.l.b16 %v296
      %v863 = vunpack.c.h.b16 %v296
      %v864 = vunpack.c.l.b16 %v297
      %v865 = vunpack.c.l.b16 %v298
      %v866 = vunpack.c.h.b16 %v298
      %v867 = vunpack.c.l.b16 %v299
      %v868 = vunpack.c.h.b16 %v299
      %v869 = vunpack.c.l.b16 %v300
      %v870 = vunpack.c.h.b16 %v300
      %v871 = vunpack.c.l.b16 %v301
      %v872 = vunpack.c.h.b16 %v301
      %v873 = vunpack.c.l.b16 %v302
      %v874 = vunpack.c.l.b16 %v303
      %v875 = vunpack.c.h.b16 %v303
      %v876 = vunpack.c.l.b16 %v304
      %v877 = vunpack.c.h.b16 %v304
      %v878 = vunpack.c.l.b16 %v305
      %v879 = vunpack.c.h.b16 %v305
      %v880 = vunpack.c.l.b16 %v306
      %v881 = vunpack.c.h.b16 %v306
      %v882 = vunpack.c.l.b16 %v307
      %v883 = vunpack.c.l.b16 %v308
      %v884 = vunpack.c.h.b16 %v308
      %v885 = vunpack.c.l.b16 %v309
      %v886 = vunpack.c.h.b16 %v309
      %v887 = vunpack.c.l.b16 %v310
      %v888 = vunpack.c.h.b16 %v310
      %v889 = vunpack.c.l.b16 %v311
      %v890 = vunpack.c.h.b16 %v311
      %v891 = vunpack.c.l.b16 %v312
      %v892 = vunpack.c.l.b16 %v313
      %v893 = vunpack.c.h.b16 %v313
      %v894 = vunpack.c.l.b16 %v314
      %v895 = vunpack.c.h.b16 %v314
      %v896 = vunpack.c.l.b16 %v315
      %v897 = vunpack.c.h.b16 %v315
      %v898 = vunpack.c.l.b16 %v316
      %v899 = vunpack.c.h.b16 %v316
      %v900 = vunpack.c.l.b16 %v317
      %v901 = vunpack.c.l.b16 %v318
      %v902 = vunpack.c.h.b16 %v318
      %v903 = vunpack.c.l.b16 %v319
      %v904 = vunpack.c.h.b16 %v319
      %v905 = vunpack.c.l.b16 %v320
      %v906 = vunpack.c.h.b16 %v320
      %v907 = vunpack.c.l.b16 %v321
      %v908 = vunpack.c.h.b16 %v321
      %v909 = vunpack.c.l.b16 %v322
      %v910 = vunpack.c.l.b16 %v323
      %v911 = vunpack.c.h.b16 %v323
      %v912 = vunpack.c.l.b16 %v324
      %v913 = vunpack.c.h.b16 %v324
      %v914 = vunpack.c.l.b16 %v325
      %v915 = vunpack.c.h.b16 %v325
      %v916 = vunpack.c.l.b16 %v326
      %v917 = vunpack.c.h.b16 %v326
      %v918 = vunpack.c.l.b16 %v327
      %v919 = vunpack.c.l.b16 %v328
      %v920 = vunpack.c.h.b16 %v328
      %v921 = vunpack.c.l.b16 %v329
      %v922 = vunpack.c.h.b16 %v329
      %v923 = vunpack.c.l.b16 %v330
      %v924 = vunpack.c.h.b16 %v330
      %v925 = vunpack.c.l.b16 %v331
      %v926 = vunpack.c.h.b16 %v331
      %v927 = vunpack.c.l.b16 %v332
      %v928 = vunpack.c.l.b16 %v333
      %v929 = vunpack.c.h.b16 %v333
      %v930 = vunpack.c.l.b16 %v334
      %v931 = vunpack.c.h.b16 %v334
      %v932 = vunpack.c.l.b16 %v335
      %v933 = vunpack.c.h.b16 %v335
      %v934 = vunpack.c.l.b16 %v336
      %v935 = vunpack.c.h.b16 %v336
      %v936 = vunpack.c.l.b16 %v337
      %v937 = vpack.c.b16 %v658, %v649
      %v938 = vpack.c.b16 %v659, %v650
      %v939 = vpack.c.b16 %v660, %v651
      %v940 = vpack.c.b16 %v661, %v652
      %v941 = vpack.c.b16 %v662, %v653
      %v942 = vpack.c.b16 %v663, %v654
      %v943 = vpack.c.b16 %v664, %v655
      %v944 = vpack.c.b16 %v665, %v656
      %v945 = vpack.c.b16 %v666, %v657
      %v946 = vpack.c.b16 %v676, %v667
      %v947 = vpack.c.b16 %v677, %v668
      %v948 = vpack.c.b16 %v678, %v669
      %v949 = vpack.c.b16 %v679, %v670
      %v950 = vpack.c.b16 %v680, %v671
      %v951 = vpack.c.b16 %v681, %v672
      %v952 = vpack.c.b16 %v682, %v673
      %v953 = vpack.c.b16 %v683, %v674
      %v954 = vpack.c.b16 %v684, %v675
      %v955 = vpack.c.b16 %v694, %v685
      %v956 = vpack.c.b16 %v695, %v686
      %v957 = vpack.c.b16 %v696, %v687
      %v958 = vpack.c.b16 %v697, %v688
      %v959 = vpack.c.b16 %v698, %v689
      %v960 = vpack.c.b16 %v699, %v690
      %v961 = vpack.c.b16 %v700, %v691
      %v962 = vpack.c.b16 %v701, %v692
      %v963 = vpack.c.b16 %v702, %v693
      %v964 = vpack.c.b16 %v712, %v703
      %v965 = vpack.c.b16 %v713, %v704
      %v966 = vpack.c.b16 %v714, %v705
      %v967 = vpack.c.b16 %v715, %v706
      %v968 = vpack.c.b16 %v716, %v707
      %v969 = vpack.c.b16 %v717, %v708
      %v970 = vpack.c.b16 %v718, %v709
      %v971 = vpack.c.b16 %v719, %v710
      %v972 = vpack.c.b16 %v720, %v711
      %v973 = vpack.c.b16 %v730, %v721
      %v974 = vpack.c.b16 %v731, %v722
      %v975 = vpack.c.b16 %v732, %v723
      %v976 = vpack.c.b16 %v733, %v724
      %v977 = vpack.c.b16 %v734, %v725
      %v978 = vpack.c.b16 %v735, %v726
      %v979 = vpack.c.b16 %v736, %v727
      %v980 = vpack.c.b16 %v737, %v728
      %v981 = vpack.c.b16 %v738, %v729
      %v982 = vpack.c.b16 %v748, %v739
      %v983 = vpack.c.b16 %v749, %v740
      %v984 = vpack.c.b16 %v750, %v741
      %v985 = vpack.c.b16 %v751, %v742
      %v986 = vpack.c.b16 %v752, %v743
      %v987 = vpack.c.b16 %v753, %v744
      %v988 = vpack.c.b16 %v754, %v745
      %v989 = vpack.c.b16 %v755, %v746
      %v990 = vpack.c.b16 %v756, %v747
      %v991 = vpack.c.b16 %v766, %v757
      %v992 = vpack.c.b16 %v767, %v758
      %v993 = vpack.c.b16 %v768, %v759
      %v994 = vpack.c.b16 %v769, %v760
      %v995 = vpack.c.b16 %v770, %v761
      %v996 = vpack.c.b16 %v771, %v762
      %v997 = vpack.c.b16 %v772, %v763
      %v998 = vpack.c.b16 %v773, %v764
      %v999 = vpack.c.b16 %v774, %v765
      %v1000 = vpack.c.b16 %v784, %v775
      %v1001 = vpack.c.b16 %v785, %v776
      %v1002 = vpack.c.b16 %v786, %v777
      %v1003 = vpack.c.b16 %v787, %v778
      %v1004 = vpack.c.b16 %v788, %v779
      %v1005 = vpack.c.b16 %v789, %v780
      %v1006 = vpack.c.b16 %v790, %v781
      %v1007 = vpack.c.b16 %v791, %v782
      %v1008 = vpack.c.b16 %v792, %v783
      %v1009 = vpack.c.b16 %v802, %v793
      %v1010 = vpack.c.b16 %v803, %v794
      %v1011 = vpack.c.b16 %v804, %v795
      %v1012 = vpack.c.b16 %v805, %v796
      %v1013 = vpack.c.b16 %v806, %v797
      %v1014 = vpack.c.b16 %v807, %v798
      %v1015 = vpack.c.b16 %v808, %v799
      %v1016 = vpack.c.b16 %v809, %v800
      %v1017 = vpack.c.b16 %v810, %v801
      %v1018 = vpack.c.b16 %v820, %v811
      %v1019 = vpack.c.b16 %v821, %v812
      %v1020 = vpack.c.b16 %v822, %v813
      %v1021 = vpack.c.b16 %v823, %v814
      %v1022 = vpack.c.b16 %v824, %v815
      %v1023 = vpack.c.b16 %v825, %v816
      %v1024 = vpack.c.b16 %v826, %v817
      %v1025 = vpack.c.b16 %v827, %v818
      %v1026 = vpack.c.b16 %v828, %v819
      %v1027 = vpack.c.b16 %v838, %v829
      %v1028 = vpack.c.b16 %v839, %v830
      %v1029 = vpack.c.b16 %v840, %v831
      %v1030 = vpack.c.b16 %v841, %v832
      %v1031 = vpack.c.b16 %v842, %v833
      %v1032 = vpack.c.b16 %v843, %v834
      %v1033 = vpack.c.b16 %v844, %v835
      %v1034 = vpack.c.b16 %v845, %v836
      %v1035 = vpack.c.b16 %v846, %v837
      %v1036 = vpack.c.b16 %v856, %v847
      %v1037 = vpack.c.b16 %v857, %v848
      %v1038 = vpack.c.b16 %v858, %v849
      %v1039 = vpack.c.b16 %v859, %v850
      %v1040 = vpack.c.b16 %v860, %v851
      %v1041 = vpack.c.b16 %v861, %v852
      %v1042 = vpack.c.b16 %v862, %v853
      %v1043 = vpack.c.b16 %v863, %v854
      %v1044 = vpack.c.b16 %v864, %v855
      %v1045 = vpack.c.b16 %v874, %v865
      %v1046 = vpack.c.b16 %v875, %v866
      %v1047 = vpack.c.b16 %v876, %v867
      %v1048 = vpack.c.b16 %v877, %v868
      %v1049 = vpack.c.b16 %v878, %v869
      %v1050 = vpack.c.b16 %v879, %v870
      %v1051 = vpack.c.b16 %v880, %v871
      %v1052 = vpack.c.b16 %v881, %v872
      %v1053 = vpack.c.b16 %v882, %v873
      %v1054 = vpack.c.b16 %v892, %v883
      %v1055 = vpack.c.b16 %v893, %v884
      %v1056 = vpack.c.b16 %v894, %v885
      %v1057 = vpack.c.b16 %v895, %v886
      %v1058 = vpack.c.b16 %v896, %v887
      %v1059 = vpack.c.b16 %v897, %v888
      %v1060 = vpack.c.b16 %v898, %v889
      %v1061 = vpack.c.b16 %v899, %v890
      %v1062 = vpack.c.b16 %v900, %v891
      %v1063 = vpack.c.b16 %v910, %v901
      %v1064 = vpack.c.b16 %v911, %v902
      %v1065 = vpack.c.b16 %v912, %v903
      %v1066 = vpack.c.b16 %v913, %v904
      %v1067 = vpack.c.b16 %v914, %v905
      %v1068 = vpack.c.b16 %v915, %v906
      %v1069 = vpack.c.b16 %v916, %v907
      %v1070 = vpack.c.b16 %v917, %v908
      %v1071 = vpack.c.b16 %v918, %v909
      %v1072 = vpack.c.b16 %v928, %v919
      %v1073 = vpack.c.b16 %v929, %v920
      %v1074 = vpack.c.b16 %v930, %v921
      %v1075 = vpack.c.b16 %v931, %v922
      %v1076 = vpack.c.b16 %v932, %v923
      %v1077 = vpack.c.b16 %v933, %v924
      %v1078 = vpack.c.b16 %v934, %v925
      %v1079 = vpack.c.b16 %v935, %v926
      %v1080 = vpack.c.b16 %v936, %v927
      %v1369 = vunpack.c.l.b16 %v338
      %v1370 = vunpack.c.l.b16 %v339
      %v1371 = vunpack.c.l.b16 %v340
      %v1372 = vunpack.c.l.b16 %v341
      %v1373 = vunpack.c.l.b16 %v342
      %v1374 = vunpack.c.l.b16 %v343
      %v1375 = vunpack.c.l.b16 %v344
      %v1376 = vunpack.c.l.b16 %v345
      %v1377 = vunpack.c.l.b16 %v346
      %v1378 = vunpack.c.l.b16 %v347
      %v1379 = vunpack.c.l.b16 %v348
      %v1380 = vunpack.c.l.b16 %v349
      %v1381 = vunpack.c.l.b16 %v350
      %v1382 = vunpack.c.l.b16 %v351
      %v1383 = vunpack.c.l.b16 %v352
      %v1384 = vunpack.c.l.b16 %v353
      %v1385 = vunpack.c.l.b16 %v354
      %v1386 = vunpack.c.l.b16 %v355
      %v1387 = vunpack.c.l.b16 %v356
      %v1388 = vunpack.c.l.b16 %v357
      %v1389 = vunpack.c.l.b16 %v358
      %v1390 = vunpack.c.l.b16 %v359
      %v1391 = vunpack.c.l.b16 %v360
      %v1392 = vunpack.c.l.b16 %v361
      %v1393 = vunpack.c.l.b16 %v362
      %v1394 = vunpack.c.l.b16 %v363
      %v1395 = vunpack.c.l.b16 %v364
      %v1396 = vunpack.c.l.b16 %v365
      %v1397 = vunpack.c.l.b16 %v366
      %v1398 = vunpack.c.l.b16 %v367
      %v1399 = vunpack.c.l.b16 %v368
      %v1400 = vunpack.c.l.b16 %v369
      %v1401 = vunpack.c.l.b16 %v370
      %v1402 = vunpack.c.l.b16 %v371
      %v1403 = vunpack.c.l.b16 %v372
      %v1404 = vunpack.c.l.b16 %v373
      %v1405 = vunpack.c.l.b16 %v374
      %v1406 = vunpack.c.l.b16 %v375
      %v1407 = vunpack.c.l.b16 %v376
      %v1408 = vunpack.c.l.b16 %v377
      %v1409 = vunpack.c.l.b16 %v378
      %v1410 = vunpack.c.l.b16 %v379
      %v1411 = vunpack.c.l.b16 %v380
      %v1412 = vunpack.c.l.b16 %v381
      %v1413 = vunpack.c.l.b16 %v382
      %v1414 = vunpack.c.l.b16 %v383
      %v1415 = vunpack.c.l.b16 %v384
      %v1416 = vunpack.c.l.b16 %v385
      %v1417 = vunpack.c.l.b16 %v386
      %v1418 = vunpack.c.l.b16 %v387
      %v1419 = vunpack.c.l.b16 %v388
      %v1420 = vunpack.c.l.b16 %v389
      %v1421 = vunpack.c.l.b16 %v390
      %v1422 = vunpack.c.l.b16 %v391
      %v1423 = vunpack.c.l.b16 %v392
      %v1424 = vunpack.c.l.b16 %v393
      %v1425 = vunpack.c.l.b16 %v394
      %v1426 = vunpack.c.l.b16 %v395
      %v1427 = vunpack.c.l.b16 %v396
      %v1428 = vunpack.c.l.b16 %v397
      %v1429 = vunpack.c.l.b16 %v398
      %v1430 = vunpack.c.l.b16 %v399
      %v1431 = vunpack.c.l.b16 %v400
      %v1432 = vunpack.c.l.b16 %v401
      %v1433 = vunpack.c.l.b16 %v402
      %v1434 = vunpack.c.l.b16 %v403
      %v1435 = vunpack.c.l.b16 %v404
      %v1436 = vunpack.c.l.b16 %v405
      %v1437 = vunpack.c.l.b16 %v406
      %v1438 = vunpack.c.l.b16 %v407
      %v1439 = vunpack.c.l.b16 %v408
      %v1440 = vunpack.c.l.b16 %v409
      %v1441 = vunpack.c.l.b16 %v410
      %v1442 = vunpack.c.l.b16 %v411
      %v1443 = vunpack.c.l.b16 %v412
      %v1444 = vunpack.c.l.b16 %v413
      %v1445 = vunpack.c.l.b16 %v414
      %v1446 = vunpack.c.l.b16 %v415
      %v1447 = vunpack.c.l.b16 %v416
      %v1448 = vunpack.c.l.b16 %v417
      %v1449 = vunpack.c.l.b16 %v418
      %v1450 = vunpack.c.l.b16 %v419
      %v1451 = vunpack.c.l.b16 %v420
      %v1452 = vunpack.c.l.b16 %v421
      %v1453 = vunpack.c.l.b16 %v422
      %v1454 = vunpack.c.l.b16 %v423
      %v1455 = vunpack.c.l.b16 %v424
      %v1456 = vunpack.c.l.b16 %v425
      %v1457 = vunpack.c.l.b16 %v426
      %v1458 = vunpack.c.l.b16 %v427
      %v1459 = vunpack.c.l.b16 %v428
      %v1460 = vunpack.c.l.b16 %v429
      %v1461 = vunpack.c.l.b16 %v430
      %v1462 = vunpack.c.l.b16 %v431
      %v1463 = vunpack.c.l.b16 %v432
      %v1464 = vunpack.c.l.b16 %v433
      %v1465 = vunpack.c.l.b16 %v434
      %v1466 = vunpack.c.l.b16 %v435
      %v1467 = vunpack.c.l.b16 %v436
      %v1468 = vunpack.c.l.b16 %v437
      %v1469 = vunpack.c.l.b16 %v438
      %v1470 = vunpack.c.l.b16 %v439
      %v1471 = vunpack.c.l.b16 %v440
      %v1472 = vunpack.c.l.b16 %v441
      %v1473 = vunpack.c.l.b16 %v442
      %v1474 = vunpack.c.l.b16 %v443
      %v1475 = vunpack.c.l.b16 %v444
      %v1476 = vunpack.c.l.b16 %v445
      %v1477 = vunpack.c.l.b16 %v446
      %v1478 = vunpack.c.l.b16 %v447
      %v1479 = vunpack.c.l.b16 %v448
      %v1480 = vunpack.c.l.b16 %v449
      %v1481 = vunpack.c.l.b16 %v450
      %v1482 = vunpack.c.l.b16 %v451
      %v1483 = vunpack.c.l.b16 %v452
      %v1484 = vunpack.c.l.b16 %v453
      %v1485 = vunpack.c.l.b16 %v454
      %v1486 = vunpack.c.l.b16 %v455
      %v1487 = vunpack.c.l.b16 %v456
      %v1488 = vunpack.c.l.b16 %v457
      %v1489 = vunpack.c.l.b16 %v458
      %v1490 = vunpack.c.l.b16 %v459
      %v1491 = vunpack.c.l.b16 %v460
      %v1492 = vunpack.c.l.b16 %v461
      %v1493 = vunpack.c.l.b16 %v462
      %v1494 = vunpack.c.l.b16 %v463
      %v1495 = vunpack.c.l.b16 %v464
      %v1496 = vunpack.c.l.b16 %v465
      %v1497 = vunpack.c.l.b16 %v466
      %v1498 = vunpack.c.l.b16 %v467
      %v1499 = vunpack.c.l.b16 %v468
      %v1500 = vunpack.c.l.b16 %v469
      %v1501 = vunpack.c.l.b16 %v470
      %v1502 = vunpack.c.l.b16 %v471
      %v1503 = vunpack.c.l.b16 %v472
      %v1504 = vunpack.c.l.b16 %v473
      %v1505 = vunpack.c.l.b16 %v474
      %v1506 = vunpack.c.l.b16 %v475
      %v1507 = vunpack.c.l.b16 %v476
      %v1508 = vunpack.c.l.b16 %v477
      %v1509 = vunpack.c.l.b16 %v478
      %v1510 = vunpack.c.l.b16 %v479
      %v1511 = vunpack.c.l.b16 %v480
      %v1512 = vunpack.c.l.b16 %v481
      %v1513 = vpack.c.b16 %v1370, %v1369
      %v1514 = vpack.c.b16 %v1372, %v1371
      %v1515 = vpack.c.b16 %v1374, %v1373
      %v1516 = vpack.c.b16 %v1376, %v1375
      %v1517 = vpack.c.b16 %v1378, %v1377
      %v1518 = vpack.c.b16 %v1380, %v1379
      %v1519 = vpack.c.b16 %v1382, %v1381
      %v1520 = vpack.c.b16 %v1384, %v1383
      %v1521 = vpack.c.b16 %v1386, %v1385
      %v1522 = vpack.c.b16 %v1388, %v1387
      %v1523 = vpack.c.b16 %v1390, %v1389
      %v1524 = vpack.c.b16 %v1392, %v1391
      %v1525 = vpack.c.b16 %v1394, %v1393
      %v1526 = vpack.c.b16 %v1396, %v1395
      %v1527 = vpack.c.b16 %v1398, %v1397
      %v1528 = vpack.c.b16 %v1400, %v1399
      %v1529 = vpack.c.b16 %v1402, %v1401
      %v1530 = vpack.c.b16 %v1404, %v1403
      %v1531 = vpack.c.b16 %v1406, %v1405
      %v1532 = vpack.c.b16 %v1408, %v1407
      %v1533 = vpack.c.b16 %v1410, %v1409
      %v1534 = vpack.c.b16 %v1412, %v1411
      %v1535 = vpack.c.b16 %v1414, %v1413
      %v1536 = vpack.c.b16 %v1416, %v1415
      %v1537 = vpack.c.b16 %v1418, %v1417
      %v1538 = vpack.c.b16 %v1420, %v1419
      %v1539 = vpack.c.b16 %v1422, %v1421
      %v1540 = vpack.c.b16 %v1424, %v1423
      %v1541 = vpack.c.b16 %v1426, %v1425
      %v1542 = vpack.c.b16 %v1428, %v1427
      %v1543 = vpack.c.b16 %v1430, %v1429
      %v1544 = vpack.c.b16 %v1432, %v1431
      %v1545 = vpack.c.b16 %v1434, %v1433
      %v1546 = vpack.c.b16 %v1436, %v1435
      %v1547 = vpack.c.b16 %v1438, %v1437
      %v1548 = vpack.c.b16 %v1440, %v1439
      %v1549 = vpack.c.b16 %v1442, %v1441
      %v1550 = vpack.c.b16 %v1444, %v1443
      %v1551 = vpack.c.b16 %v1446, %v1445
      %v1552 = vpack.c.b16 %v1448, %v1447
      %v1553 = vpack.c.b16 %v1450, %v1449
      %v1554 = vpack.c.b16 %v1452, %v1451
      %v1555 = vpack.c.b16 %v1454, %v1453
      %v1556 = vpack.c.b16 %v1456, %v1455
      %v1557 = vpack.c.b16 %v1458, %v1457
      %v1558 = vpack.c.b16 %v1460, %v1459
      %v1559 = vpack.c.b16 %v1462, %v1461
      %v1560 = vpack.c.b16 %v1464, %v1463
      %v1561 = vpack.c.b16 %v1466, %v1465
      %v1562 = vpack.c.b16 %v1468, %v1467
      %v1563 = vpack.c.b16 %v1470, %v1469
      %v1564 = vpack.c.b16 %v1472, %v1471
      %v1565 = vpack.c.b16 %v1474, %v1473
      %v1566 = vpack.c.b16 %v1476, %v1475
      %v1567 = vpack.c.b16 %v1478, %v1477
      %v1568 = vpack.c.b16 %v1480, %v1479
      %v1569 = vpack.c.b16 %v1482, %v1481
      %v1570 = vpack.c.b16 %v1484, %v1483
      %v1571 = vpack.c.b16 %v1486, %v1485
      %v1572 = vpack.c.b16 %v1488, %v1487
      %v1573 = vpack.c.b16 %v1490, %v1489
      %v1574 = vpack.c.b16 %v1492, %v1491
      %v1575 = vpack.c.b16 %v1494, %v1493
      %v1576 = vpack.c.b16 %v1496, %v1495
      %v1577 = vpack.c.b16 %v1498, %v1497
      %v1578 = vpack.c.b16 %v1500, %v1499
      %v1579 = vpack.c.b16 %v1502, %v1501
      %v1580 = vpack.c.b16 %v1504, %v1503
      %v1581 = vpack.c.b16 %v1506, %v1505
      %v1582 = vpack.c.b16 %v1508, %v1507
      %v1583 = vpack.c.b16 %v1510, %v1509
      %v1584 = vpack.c.b16 %v1512, %v1511
      %1657 = vmatprep.subr.bf16.mxu0 0
      %1658 = vmatpush1.bf16.msra.mxu0 %v1513
      %1659 = vmatprep.subr.bf16.mxu0 0
      %1660 = vmatpush1.bf16.msra.mxu0 %v1514
      %1661 = vmatprep.subr.bf16.mxu0 0
      %1662 = vmatpush1.bf16.msra.mxu0 %v1515
      %1663 = vmatprep.subr.bf16.mxu0 0
      %1664 = vmatpush1.bf16.msra.mxu0 %v1516
      %1665 = vmatprep.subr.bf16.mxu0 0
      %1666 = vmatpush1.bf16.msra.mxu0 %v1517
      %1667 = vmatprep.subr.bf16.mxu0 0
      %1668 = vmatpush1.bf16.msra.mxu0 %v1518
      %1669 = vmatprep.subr.bf16.mxu0 0
      %1670 = vmatpush1.bf16.msra.mxu0 %v1519
      %1671 = vmatprep.subr.bf16.mxu0 0
      %1672 = vmatpush1.bf16.msra.mxu0 %v1520
      %1673 = vmatprep.subr.bf16.mxu0 0
      %1674 = vmatpush1.bf16.msra.mxu0 %v1521
      %1675 = vmatprep.subr.bf16.mxu0 0
      %1676 = vmatpush1.bf16.msra.mxu0 %v1522
      %1677 = vmatprep.subr.bf16.mxu0 0
      %1678 = vmatpush1.bf16.msra.mxu0 %v1523
      %1679 = vmatprep.subr.bf16.mxu0 0
      %1680 = vmatpush1.bf16.msra.mxu0 %v1524
      %1681 = vmatprep.subr.bf16.mxu0 0
      %1682 = vmatpush1.bf16.msra.mxu0 %v1525
      %1683 = vmatprep.subr.bf16.mxu0 0
      %1684 = vmatpush1.bf16.msra.mxu0 %v1526
      %1685 = vmatprep.subr.bf16.mxu0 0
      %1686 = vmatpush1.bf16.msra.mxu0 %v1527
      %1687 = vmatprep.subr.bf16.mxu0 0
      %1688 = vmatpush1.bf16.msra.mxu0 %v1528
      %1689 = vmatprep.mubr.bf16.mxu0 %v938
      %1690 = vmatmul.mubr.bf16.gmra.mrb[0].mxu0 %v937
      %v1691 = vpop.f32.mrb[0].mxu0
      %v1692 = vadd.f32 %v487, %v1691
      %v1693 = vpop.f32.mrb[0].mxu0
      %v1694 = vpop.f32.mrb[0].mxu0
      %v1695 = vadd.f32 %v487, %v1694
      %v1696 = vpop.f32.mrb[0].mxu0
      %1697 = vmatprep.mubr.bf16.mxu0 %v947
      %1698 = vmatmul.mubr.bf16.gmra.mrb[0].mxu0 %v946
      %v1699 = vpop.f32.mrb[0].mxu0
      %v1700 = vadd.f32 %v487, %v1699
      %v1701 = vpop.f32.mrb[0].mxu0
      %v1702 = vpop.f32.mrb[0].mxu0
      %v1703 = vadd.f32 %v487, %v1702
      %v1704 = vpop.f32.mrb[0].mxu0
      %1705 = vmatprep.mubr.bf16.mxu0 %v956
      %1706 = vmatmul.mubr.bf16.gmra.mrb[0].mxu0 %v955
      %v1707 = vpop.f32.mrb[0].mxu0
      %v1708 = vadd.f32 %v487, %v1707
      %v1709 = vpop.f32.mrb[0].mxu0
      %v1710 = vpop.f32.mrb[0].mxu0
      %v1711 = vadd.f32 %v487, %v1710
      %v1712 = vpop.f32.mrb[0].mxu0
      %1713 = vmatprep.mubr.bf16.mxu0 %v965
      %1714 = vmatmul.mubr.bf16.gmra.mrb[0].mxu0 %v964
      %v1715 = vpop.f32.mrb[0].mxu0
      %v1716 = vadd.f32 %v487, %v1715
      %v1717 = vpop.f32.mrb[0].mxu0
      %v1718 = vpop.f32.mrb[0].mxu0
      %v1719 = vadd.f32 %v487, %v1718
      %v1720 = vpop.f32.mrb[0].mxu0
      %1721 = vmatprep.mubr.bf16.mxu0 %v974
      %1722 = vmatmul.mubr.bf16.gmra.mrb[0].mxu0 %v973
      %v1723 = vpop.f32.mrb[0].mxu0
      %v1724 = vadd.f32 %v487, %v1723
      %v1725 = vpop.f32.mrb[0].mxu0
      %v1726 = vpop.f32.mrb[0].mxu0
      %v1727 = vadd.f32 %v487, %v1726
      %v1728 = vpop.f32.mrb[0].mxu0
      %1729 = vmatprep.mubr.bf16.mxu0 %v983
      %1730 = vmatmul.mubr.bf16.gmra.mrb[0].mxu0 %v982
      %v1731 = vpop.f32.mrb[0].mxu0
      %v1732 = vadd.f32 %v487, %v1731
      %v1733 = vpop.f32.mrb[0].mxu0
      %v1734 = vpop.f32.mrb[0].mxu0
      %v1735 = vadd.f32 %v487, %v1734
      %v1736 = vpop.f32.mrb[0].mxu0
      %1737 = vmatprep.mubr.bf16.mxu0 %v992
      %1738 = vmatmul.mubr.bf16.gmra.mrb[0].mxu0 %v991
      %v1739 = vpop.f32.mrb[0].mxu0
      %v1740 = vadd.f32 %v487, %v1739
      %v1741 = vpop.f32.mrb[0].mxu0
      %v1742 = vpop.f32.mrb[0].mxu0
      %v1743 = vadd.f32 %v487, %v1742
      %v1744 = vpop.f32.mrb[0].mxu0
      %1745 = vmatprep.mubr.bf16.mxu0 %v1001
      %1746 = vmatmul.mubr.bf16.gmra.mrb[0].mxu0 %v1000
      %v1747 = vpop.f32.mrb[0].mxu0
      %v1748 = vadd.f32 %v487, %v1747
      %v1749 = vpop.f32.mrb[0].mxu0
      %v1750 = vpop.f32.mrb[0].mxu0
      %v1751 = vadd.f32 %v487, %v1750
      %v1752 = vpop.f32.mrb[0].mxu0
      %1753 = vmatprep.mubr.bf16.mxu0 %v1010
      %1754 = vmatmul.mubr.bf16.gmra.mrb[0].mxu0 %v1009
      %v1755 = vpop.f32.mrb[0].mxu0
      %v1756 = vadd.f32 %v487, %v1755
      %v1757 = vpop.f32.mrb[0].mxu0
      %v1758 = vpop.f32.mrb[0].mxu0
      %v1759 = vadd.f32 %v487, %v1758
      %v1760 = vpop.f32.mrb[0].mxu0
      %1761 = vmatprep.mubr.bf16.mxu0 %v1019
      %1762 = vmatmul.mubr.bf16.gmra.mrb[0].mxu0 %v1018
      %v1763 = vpop.f32.mrb[0].mxu0
      %v1764 = vadd.f32 %v487, %v1763
      %v1765 = vpop.f32.mrb[0].mxu0
      %v1766 = vpop.f32.mrb[0].mxu0
      %v1767 = vadd.f32 %v487, %v1766
      %v1768 = vpop.f32.mrb[0].mxu0
      %1769 = vmatprep.mubr.bf16.mxu0 %v1028
      %1770 = vmatmul.mubr.bf16.gmra.mrb[0].mxu0 %v1027
      %v1771 = vpop.f32.mrb[0].mxu0
      %v1772 = vadd.f32 %v487, %v1771
      %v1773 = vpop.f32.mrb[0].mxu0
      %v1774 = vpop.f32.mrb[0].mxu0
      %v1775 = vadd.f32 %v487, %v1774
      %v1776 = vpop.f32.mrb[0].mxu0
      %1777 = vmatprep.mubr.bf16.mxu0 %v1037
      %1778 = vmatmul.mubr.bf16.gmra.mrb[0].mxu0 %v1036
      %v1779 = vpop.f32.mrb[0].mxu0
      %v1780 = vadd.f32 %v487, %v1779
      %v1781 = vpop.f32.mrb[0].mxu0
      %v1782 = vpop.f32.mrb[0].mxu0
      %v1783 = vadd.f32 %v487, %v1782
      %v1784 = vpop.f32.mrb[0].mxu0
      %1785 = vmatprep.mubr.bf16.mxu0 %v1046
      %1786 = vmatmul.mubr.bf16.gmra.mrb[0].mxu0 %v1045
      %v1787 = vpop.f32.mrb[0].mxu0
      %v1788 = vadd.f32 %v487, %v1787
      %v1789 = vpop.f32.mrb[0].mxu0
      %v1790 = vpop.f32.mrb[0].mxu0
      %v1791 = vadd.f32 %v487, %v1790
      %v1792 = vpop.f32.mrb[0].mxu0
      %1793 = vmatprep.mubr.bf16.mxu0 %v1055
      %1794 = vmatmul.mubr.bf16.gmra.mrb[0].mxu0 %v1054
      %v1795 = vpop.f32.mrb[0].mxu0
      %v1796 = vadd.f32 %v487, %v1795
      %v1797 = vpop.f32.mrb[0].mxu0
      %v1798 = vpop.f32.mrb[0].mxu0
      %v1799 = vadd.f32 %v487, %v1798
      %v1800 = vpop.f32.mrb[0].mxu0
      %1801 = vmatprep.mubr.bf16.mxu0 %v1064
      %1802 = vmatmul.mubr.bf16.gmra.mrb[0].mxu0 %v1063
      %v1803 = vpop.f32.mrb[0].mxu0
      %v1804 = vadd.f32 %v487, %v1803
      %v1805 = vpop.f32.mrb[0].mxu0
      %v1806 = vpop.f32.mrb[0].mxu0
      %v1807 = vadd.f32 %v487, %v1806
      %v1808 = vpop.f32.mrb[0].mxu0
      %1809 = vmatprep.mubr.bf16.mxu0 %v1073
      %1810 = vmatmul.mubr.bf16.gmra.mrb[0].mxu0 %v1072
      %v1811 = vpop.f32.mrb[0].mxu0
      %v1812 = vadd.f32 %v487, %v1811
      %v1813 = vpop.f32.mrb[0].mxu0
      %v1814 = vpop.f32.mrb[0].mxu0
      %v1815 = vadd.f32 %v487, %v1814
      %v1816 = vpop.f32.mrb[0].mxu0
      %1817 = vdwg.mxu0
      %1818 = vmatprep.subr.bf16.mxu0 0
      %1819 = vmatpush1.bf16.msra.mxu0 %v1529
      %1820 = vmatprep.subr.bf16.mxu0 0
      %1821 = vmatpush1.bf16.msra.mxu0 %v1530
      %1822 = vmatprep.subr.bf16.mxu0 0
      %1823 = vmatpush1.bf16.msra.mxu0 %v1531
      %1824 = vmatprep.subr.bf16.mxu0 0
      %1825 = vmatpush1.bf16.msra.mxu0 %v1532
      %1826 = vmatprep.subr.bf16.mxu0 0
      %1827 = vmatpush1.bf16.msra.mxu0 %v1533
      %1828 = vmatprep.subr.bf16.mxu0 0
      %1829 = vmatpush1.bf16.msra.mxu0 %v1534
      %1830 = vmatprep.subr.bf16.mxu0 0
      %1831 = vmatpush1.bf16.msra.mxu0 %v1535
      %1832 = vmatprep.subr.bf16.mxu0 0
      %1833 = vmatpush1.bf16.msra.mxu0 %v1536
      %1834 = vmatprep.subr.bf16.mxu0 0
      %1835 = vmatpush1.bf16.msra.mxu0 %v1537
      %1836 = vmatprep.subr.bf16.mxu0 0
      %1837 = vmatpush1.bf16.msra.mxu0 %v1538
      %1838 = vmatprep.subr.bf16.mxu0 0
      %1839 = vmatpush1.bf16.msra.mxu0 %v1539
      %1840 = vmatprep.subr.bf16.mxu0 0
      %1841 = vmatpush1.bf16.msra.mxu0 %v1540
      %1842 = vmatprep.subr.bf16.mxu0 0
      %1843 = vmatpush1.bf16.msra.mxu0 %v1541
      %1844 = vmatprep.subr.bf16.mxu0 0
      %1845 = vmatpush1.bf16.msra.mxu0 %v1542
      %1846 = vmatprep.subr.bf16.mxu0 0
      %1847 = vmatpush1.bf16.msra.mxu0 %v1543
      %1848 = vmatprep.subr.bf16.mxu0 0
      %1849 = vmatpush1.bf16.msra.mxu0 %v1544
      %1850 = vmatprep.mubr.bf16.mxu0 %v940
      %1851 = vmatmul.mubr.bf16.gmra.mrb[0].mxu0 %v939
      %v1852 = vpop.f32.mrb[0].mxu0
      %v1853 = vadd.f32 %v1692, %v1852
      %v1854 = vpop.f32.mrb[0].mxu0
      %v1855 = vpop.f32.mrb[0].mxu0
      %v1856 = vadd.f32 %v1695, %v1855
      %v1857 = vpop.f32.mrb[0].mxu0
      %1858 = vmatprep.mubr.bf16.mxu0 %v949
      %1859 = vmatmul.mubr.bf16.gmra.mrb[0].mxu0 %v948
      %v1860 = vpop.f32.mrb[0].mxu0
      %v1861 = vadd.f32 %v1700, %v1860
      %v1862 = vpop.f32.mrb[0].mxu0
      %v1863 = vpop.f32.mrb[0].mxu0
      %v1864 = vadd.f32 %v1703, %v1863
      %v1865 = vpop.f32.mrb[0].mxu0
      %1866 = vmatprep.mubr.bf16.mxu0 %v958
      %1867 = vmatmul.mubr.bf16.gmra.mrb[0].mxu0 %v957
      %v1868 = vpop.f32.mrb[0].mxu0
      %v1869 = vadd.f32 %v1708, %v1868
      %v1870 = vpop.f32.mrb[0].mxu0
      %v1871 = vpop.f32.mrb[0].mxu0
      %v1872 = vadd.f32 %v1711, %v1871
      %v1873 = vpop.f32.mrb[0].mxu0
      %1874 = vmatprep.mubr.bf16.mxu0 %v967
      %1875 = vmatmul.mubr.bf16.gmra.mrb[0].mxu0 %v966
      %v1876 = vpop.f32.mrb[0].mxu0
      %v1877 = vadd.f32 %v1716, %v1876
      %v1878 = vpop.f32.mrb[0].mxu0
      %v1879 = vpop.f32.mrb[0].mxu0
      %v1880 = vadd.f32 %v1719, %v1879
      %v1881 = vpop.f32.mrb[0].mxu0
      %1882 = vmatprep.mubr.bf16.mxu0 %v976
      %1883 = vmatmul.mubr.bf16.gmra.mrb[0].mxu0 %v975
      %v1884 = vpop.f32.mrb[0].mxu0
      %v1885 = vadd.f32 %v1724, %v1884
      %v1886 = vpop.f32.mrb[0].mxu0
      %v1887 = vpop.f32.mrb[0].mxu0
      %v1888 = vadd.f32 %v1727, %v1887
      %v1889 = vpop.f32.mrb[0].mxu0
      %1890 = vmatprep.mubr.bf16.mxu0 %v985
      %1891 = vmatmul.mubr.bf16.gmra.mrb[0].mxu0 %v984
      %v1892 = vpop.f32.mrb[0].mxu0
      %v1893 = vadd.f32 %v1732, %v1892
      %v1894 = vpop.f32.mrb[0].mxu0
      %v1895 = vpop.f32.mrb[0].mxu0
      %v1896 = vadd.f32 %v1735, %v1895
      %v1897 = vpop.f32.mrb[0].mxu0
      %1898 = vmatprep.mubr.bf16.mxu0 %v994
      %1899 = vmatmul.mubr.bf16.gmra.mrb[0].mxu0 %v993
      %v1900 = vpop.f32.mrb[0].mxu0
      %v1901 = vadd.f32 %v1740, %v1900
      %v1902 = vpop.f32.mrb[0].mxu0
      %v1903 = vpop.f32.mrb[0].mxu0
      %v1904 = vadd.f32 %v1743, %v1903
      %v1905 = vpop.f32.mrb[0].mxu0
      %1906 = vmatprep.mubr.bf16.mxu0 %v1003
      %1907 = vmatmul.mubr.bf16.gmra.mrb[0].mxu0 %v1002
      %v1908 = vpop.f32.mrb[0].mxu0
      %v1909 = vadd.f32 %v1748, %v1908
      %v1910 = vpop.f32.mrb[0].mxu0
      %v1911 = vpop.f32.mrb[0].mxu0
      %v1912 = vadd.f32 %v1751, %v1911
      %v1913 = vpop.f32.mrb[0].mxu0
      %1914 = vmatprep.mubr.bf16.mxu0 %v1012
      %1915 = vmatmul.mubr.bf16.gmra.mrb[0].mxu0 %v1011
      %v1916 = vpop.f32.mrb[0].mxu0
      %v1917 = vadd.f32 %v1756, %v1916
      %v1918 = vpop.f32.mrb[0].mxu0
      %v1919 = vpop.f32.mrb[0].mxu0
      %v1920 = vadd.f32 %v1759, %v1919
      %v1921 = vpop.f32.mrb[0].mxu0
      %1922 = vmatprep.mubr.bf16.mxu0 %v1021
      %1923 = vmatmul.mubr.bf16.gmra.mrb[0].mxu0 %v1020
      %v1924 = vpop.f32.mrb[0].mxu0
      %v1925 = vadd.f32 %v1764, %v1924
      %v1926 = vpop.f32.mrb[0].mxu0
      %v1927 = vpop.f32.mrb[0].mxu0
      %v1928 = vadd.f32 %v1767, %v1927
      %v1929 = vpop.f32.mrb[0].mxu0
      %1930 = vmatprep.mubr.bf16.mxu0 %v1030
      %1931 = vmatmul.mubr.bf16.gmra.mrb[0].mxu0 %v1029
      %v1932 = vpop.f32.mrb[0].mxu0
      %v1933 = vadd.f32 %v1772, %v1932
      %v1934 = vpop.f32.mrb[0].mxu0
      %v1935 = vpop.f32.mrb[0].mxu0
      %v1936 = vadd.f32 %v1775, %v1935
      %v1937 = vpop.f32.mrb[0].mxu0
      %1938 = vmatprep.mubr.bf16.mxu0 %v1039
      %1939 = vmatmul.mubr.bf16.gmra.mrb[0].mxu0 %v1038
      %v1940 = vpop.f32.mrb[0].mxu0
      %v1941 = vadd.f32 %v1780, %v1940
      %v1942 = vpop.f32.mrb[0].mxu0
      %v1943 = vpop.f32.mrb[0].mxu0
      %v1944 = vadd.f32 %v1783, %v1943
      %v1945 = vpop.f32.mrb[0].mxu0
      %1946 = vmatprep.mubr.bf16.mxu0 %v1048
      %1947 = vmatmul.mubr.bf16.gmra.mrb[0].mxu0 %v1047
      %v1948 = vpop.f32.mrb[0].mxu0
      %v1949 = vadd.f32 %v1788, %v1948
      %v1950 = vpop.f32.mrb[0].mxu0
      %v1951 = vpop.f32.mrb[0].mxu0
      %v1952 = vadd.f32 %v1791, %v1951
      %v1953 = vpop.f32.mrb[0].mxu0
      %1954 = vmatprep.mubr.bf16.mxu0 %v1057
      %1955 = vmatmul.mubr.bf16.gmra.mrb[0].mxu0 %v1056
      %v1956 = vpop.f32.mrb[0].mxu0
      %v1957 = vadd.f32 %v1796, %v1956
      %v1958 = vpop.f32.mrb[0].mxu0
      %v1959 = vpop.f32.mrb[0].mxu0
      %v1960 = vadd.f32 %v1799, %v1959
      %v1961 = vpop.f32.mrb[0].mxu0
      %1962 = vmatprep.mubr.bf16.mxu0 %v1066
      %1963 = vmatmul.mubr.bf16.gmra.mrb[0].mxu0 %v1065
      %v1964 = vpop.f32.mrb[0].mxu0
      %v1965 = vadd.f32 %v1804, %v1964
      %v1966 = vpop.f32.mrb[0].mxu0
      %v1967 = vpop.f32.mrb[0].mxu0
      %v1968 = vadd.f32 %v1807, %v1967
      %v1969 = vpop.f32.mrb[0].mxu0
      %1970 = vmatprep.mubr.bf16.mxu0 %v1075
      %1971 = vmatmul.mubr.bf16.gmra.mrb[0].mxu0 %v1074
      %v1972 = vpop.f32.mrb[0].mxu0
      %v1973 = vadd.f32 %v1812, %v1972
      %v1974 = vpop.f32.mrb[0].mxu0
      %v1975 = vpop.f32.mrb[0].mxu0
      %v1976 = vadd.f32 %v1815, %v1975
      %v1977 = vpop.f32.mrb[0].mxu0
      %1978 = vdwg.mxu0
      %1979 = vmatprep.subr.bf16.mxu0 0
      %1980 = vmatpush1.bf16.msra.mxu0 %v1545
      %1981 = vmatprep.subr.bf16.mxu0 0
      %1982 = vmatpush1.bf16.msra.mxu0 %v1546
      %1983 = vmatprep.subr.bf16.mxu0 0
      %1984 = vmatpush1.bf16.msra.mxu0 %v1547
      %1985 = vmatprep.subr.bf16.mxu0 0
      %1986 = vmatpush1.bf16.msra.mxu0 %v1548
      %1987 = vmatprep.subr.bf16.mxu0 0
      %1988 = vmatpush1.bf16.msra.mxu0 %v1549
      %1989 = vmatprep.subr.bf16.mxu0 0
      %1990 = vmatpush1.bf16.msra.mxu0 %v1550
      %1991 = vmatprep.subr.bf16.mxu0 0
      %1992 = vmatpush1.bf16.msra.mxu0 %v1551
      %1993 = vmatprep.subr.bf16.mxu0 0
      %1994 = vmatpush1.bf16.msra.mxu0 %v1552
      %1995 = vmatprep.subr.bf16.mxu0 0
      %1996 = vmatpush1.bf16.msra.mxu0 %v1553
      %1997 = vmatprep.subr.bf16.mxu0 0
      %1998 = vmatpush1.bf16.msra.mxu0 %v1554
      %1999 = vmatprep.subr.bf16.mxu0 0
      %2000 = vmatpush1.bf16.msra.mxu0 %v1555
      %2001 = vmatprep.subr.bf16.mxu0 0
      %2002 = vmatpush1.bf16.msra.mxu0 %v1556
      %2003 = vmatprep.subr.bf16.mxu0 0
      %2004 = vmatpush1.bf16.msra.mxu0 %v1557
      %2005 = vmatprep.subr.bf16.mxu0 0
      %2006 = vmatpush1.bf16.msra.mxu0 %v1558
      %2007 = vmatprep.subr.bf16.mxu0 0
      %2008 = vmatpush1.bf16.msra.mxu0 %v1559
      %2009 = vmatprep.subr.bf16.mxu0 0
      %2010 = vmatpush1.bf16.msra.mxu0 %v1560
      %2011 = vmatprep.mubr.bf16.mxu0 %v942
      %2012 = vmatmul.mubr.bf16.gmra.mrb[0].mxu0 %v941
      %v2013 = vpop.f32.mrb[0].mxu0
      %v2014 = vadd.f32 %v1853, %v2013
      %v2015 = vpop.f32.mrb[0].mxu0
      %v2016 = vpop.f32.mrb[0].mxu0
      %v2017 = vadd.f32 %v1856, %v2016
      %v2018 = vpop.f32.mrb[0].mxu0
      %2019 = vmatprep.mubr.bf16.mxu0 %v951
      %2020 = vmatmul.mubr.bf16.gmra.mrb[0].mxu0 %v950
      %v2021 = vpop.f32.mrb[0].mxu0
      %v2022 = vadd.f32 %v1861, %v2021
      %v2023 = vpop.f32.mrb[0].mxu0
      %v2024 = vpop.f32.mrb[0].mxu0
      %v2025 = vadd.f32 %v1864, %v2024
      %v2026 = vpop.f32.mrb[0].mxu0
      %2027 = vmatprep.mubr.bf16.mxu0 %v960
      %2028 = vmatmul.mubr.bf16.gmra.mrb[0].mxu0 %v959
      %v2029 = vpop.f32.mrb[0].mxu0
      %v2030 = vadd.f32 %v1869, %v2029
      %v2031 = vpop.f32.mrb[0].mxu0
      %v2032 = vpop.f32.mrb[0].mxu0
      %v2033 = vadd.f32 %v1872, %v2032
      %v2034 = vpop.f32.mrb[0].mxu0
      %2035 = vmatprep.mubr.bf16.mxu0 %v969
      %2036 = vmatmul.mubr.bf16.gmra.mrb[0].mxu0 %v968
      %v2037 = vpop.f32.mrb[0].mxu0
      %v2038 = vadd.f32 %v1877, %v2037
      %v2039 = vpop.f32.mrb[0].mxu0
      %v2040 = vpop.f32.mrb[0].mxu0
      %v2041 = vadd.f32 %v1880, %v2040
      %v2042 = vpop.f32.mrb[0].mxu0
      %2043 = vmatprep.mubr.bf16.mxu0 %v978
      %2044 = vmatmul.mubr.bf16.gmra.mrb[0].mxu0 %v977
      %v2045 = vpop.f32.mrb[0].mxu0
      %v2046 = vadd.f32 %v1885, %v2045
      %v2047 = vpop.f32.mrb[0].mxu0
      %v2048 = vpop.f32.mrb[0].mxu0
      %v2049 = vadd.f32 %v1888, %v2048
      %v2050 = vpop.f32.mrb[0].mxu0
      %2051 = vmatprep.mubr.bf16.mxu0 %v987
      %2052 = vmatmul.mubr.bf16.gmra.mrb[0].mxu0 %v986
      %v2053 = vpop.f32.mrb[0].mxu0
      %v2054 = vadd.f32 %v1893, %v2053
      %v2055 = vpop.f32.mrb[0].mxu0
      %v2056 = vpop.f32.mrb[0].mxu0
      %v2057 = vadd.f32 %v1896, %v2056
      %v2058 = vpop.f32.mrb[0].mxu0
      %2059 = vmatprep.mubr.bf16.mxu0 %v996
      %2060 = vmatmul.mubr.bf16.gmra.mrb[0].mxu0 %v995
      %v2061 = vpop.f32.mrb[0].mxu0
      %v2062 = vadd.f32 %v1901, %v2061
      %v2063 = vpop.f32.mrb[0].mxu0
      %v2064 = vpop.f32.mrb[0].mxu0
      %v2065 = vadd.f32 %v1904, %v2064
      %v2066 = vpop.f32.mrb[0].mxu0
      %2067 = vmatprep.mubr.bf16.mxu0 %v1005
      %2068 = vmatmul.mubr.bf16.gmra.mrb[0].mxu0 %v1004
      %v2069 = vpop.f32.mrb[0].mxu0
      %v2070 = vadd.f32 %v1909, %v2069
      %v2071 = vpop.f32.mrb[0].mxu0
      %v2072 = vpop.f32.mrb[0].mxu0
      %v2073 = vadd.f32 %v1912, %v2072
      %v2074 = vpop.f32.mrb[0].mxu0
      %2075 = vmatprep.mubr.bf16.mxu0 %v1014
      %2076 = vmatmul.mubr.bf16.gmra.mrb[0].mxu0 %v1013
      %v2077 = vpop.f32.mrb[0].mxu0
      %v2078 = vadd.f32 %v1917, %v2077
      %v2079 = vpop.f32.mrb[0].mxu0
      %v2080 = vpop.f32.mrb[0].mxu0
      %v2081 = vadd.f32 %v1920, %v2080
      %v2082 = vpop.f32.mrb[0].mxu0
      %2083 = vmatprep.mubr.bf16.mxu0 %v1023
      %2084 = vmatmul.mubr.bf16.gmra.mrb[0].mxu0 %v1022
      %v2085 = vpop.f32.mrb[0].mxu0
      %v2086 = vadd.f32 %v1925, %v2085
      %v2087 = vpop.f32.mrb[0].mxu0
      %v2088 = vpop.f32.mrb[0].mxu0
      %v2089 = vadd.f32 %v1928, %v2088
      %v2090 = vpop.f32.mrb[0].mxu0
      %2091 = vmatprep.mubr.bf16.mxu0 %v1032
      %2092 = vmatmul.mubr.bf16.gmra.mrb[0].mxu0 %v1031
      %v2093 = vpop.f32.mrb[0].mxu0
      %v2094 = vadd.f32 %v1933, %v2093
      %v2095 = vpop.f32.mrb[0].mxu0
      %v2096 = vpop.f32.mrb[0].mxu0
      %v2097 = vadd.f32 %v1936, %v2096
      %v2098 = vpop.f32.mrb[0].mxu0
      %2099 = vmatprep.mubr.bf16.mxu0 %v1041
      %2100 = vmatmul.mubr.bf16.gmra.mrb[0].mxu0 %v1040
      %v2101 = vpop.f32.mrb[0].mxu0
      %v2102 = vadd.f32 %v1941, %v2101
      %v2103 = vpop.f32.mrb[0].mxu0
      %v2104 = vpop.f32.mrb[0].mxu0
      %v2105 = vadd.f32 %v1944, %v2104
      %v2106 = vpop.f32.mrb[0].mxu0
      %2107 = vmatprep.mubr.bf16.mxu0 %v1050
      %2108 = vmatmul.mubr.bf16.gmra.mrb[0].mxu0 %v1049
      %v2109 = vpop.f32.mrb[0].mxu0
      %v2110 = vadd.f32 %v1949, %v2109
      %v2111 = vpop.f32.mrb[0].mxu0
      %v2112 = vpop.f32.mrb[0].mxu0
      %v2113 = vadd.f32 %v1952, %v2112
      %v2114 = vpop.f32.mrb[0].mxu0
      %2115 = vmatprep.mubr.bf16.mxu0 %v1059
      %2116 = vmatmul.mubr.bf16.gmra.mrb[0].mxu0 %v1058
      %v2117 = vpop.f32.mrb[0].mxu0
      %v2118 = vadd.f32 %v1957, %v2117
      %v2119 = vpop.f32.mrb[0].mxu0
      %v2120 = vpop.f32.mrb[0].mxu0
      %v2121 = vadd.f32 %v1960, %v2120
      %v2122 = vpop.f32.mrb[0].mxu0
      %2123 = vmatprep.mubr.bf16.mxu0 %v1068
      %2124 = vmatmul.mubr.bf16.gmra.mrb[0].mxu0 %v1067
      %v2125 = vpop.f32.mrb[0].mxu0
      %v2126 = vadd.f32 %v1965, %v2125
      %v2127 = vpop.f32.mrb[0].mxu0
      %v2128 = vpop.f32.mrb[0].mxu0
      %v2129 = vadd.f32 %v1968, %v2128
      %v2130 = vpop.f32.mrb[0].mxu0
      %2131 = vmatprep.mubr.bf16.mxu0 %v1077
      %2132 = vmatmul.mubr.bf16.gmra.mrb[0].mxu0 %v1076
      %v2133 = vpop.f32.mrb[0].mxu0
      %v2134 = vadd.f32 %v1973, %v2133
      %v2135 = vpop.f32.mrb[0].mxu0
      %v2136 = vpop.f32.mrb[0].mxu0
      %v2137 = vadd.f32 %v1976, %v2136
      %v2138 = vpop.f32.mrb[0].mxu0
      %2139 = vdwg.mxu0
      %2140 = vmatprep.subr.bf16.mxu0 0
      %2141 = vmatpush1.bf16.msra.mxu0 %v1561
      %2142 = vmatprep.subr.bf16.mxu0 0
      %2143 = vmatpush1.bf16.msra.mxu0 %v1562
      %2144 = vmatprep.subr.bf16.mxu0 0
      %2145 = vmatpush1.bf16.msra.mxu0 %v1563
      %2146 = vmatprep.subr.bf16.mxu0 0
      %2147 = vmatpush1.bf16.msra.mxu0 %v1564
      %2148 = vmatprep.subr.bf16.mxu0 0
      %2149 = vmatpush1.bf16.msra.mxu0 %v1565
      %2150 = vmatprep.subr.bf16.mxu0 0
      %2151 = vmatpush1.bf16.msra.mxu0 %v1566
      %2152 = vmatprep.subr.bf16.mxu0 0
      %2153 = vmatpush1.bf16.msra.mxu0 %v1567
      %2154 = vmatprep.subr.bf16.mxu0 0
      %2155 = vmatpush1.bf16.msra.mxu0 %v1568
      %2156 = vmatprep.subr.bf16.mxu0 0
      %2157 = vmatpush1.bf16.msra.mxu0 %v1569
      %2158 = vmatprep.subr.bf16.mxu0 0
      %2159 = vmatpush1.bf16.msra.mxu0 %v1570
      %2160 = vmatprep.subr.bf16.mxu0 0
      %2161 = vmatpush1.bf16.msra.mxu0 %v1571
      %2162 = vmatprep.subr.bf16.mxu0 0
      %2163 = vmatpush1.bf16.msra.mxu0 %v1572
      %2164 = vmatprep.subr.bf16.mxu0 0
      %2165 = vmatpush1.bf16.msra.mxu0 %v1573
      %2166 = vmatprep.subr.bf16.mxu0 0
      %2167 = vmatpush1.bf16.msra.mxu0 %v1574
      %2168 = vmatprep.subr.bf16.mxu0 0
      %2169 = vmatpush1.bf16.msra.mxu0 %v1575
      %2170 = vmatprep.subr.bf16.mxu0 0
      %2171 = vmatpush1.bf16.msra.mxu0 %v1576
      %2172 = vmatprep.mubr.bf16.mxu0 %v944
      %2173 = vmatmul.mubr.bf16.gmra.mrb[0].mxu0 %v943
      %v2174 = vpop.f32.mrb[0].mxu0
      %v2175 = vadd.f32 %v2014, %v2174
      %v2176 = vpop.f32.mrb[0].mxu0
      %v2177 = vpop.f32.mrb[0].mxu0
      %v2178 = vadd.f32 %v2017, %v2177
      %v2179 = vpop.f32.mrb[0].mxu0
      %2180 = vmatprep.mubr.bf16.mxu0 %v953
      %2181 = vmatmul.mubr.bf16.gmra.mrb[0].mxu0 %v952
      %v2182 = vpop.f32.mrb[0].mxu0
      %v2183 = vadd.f32 %v2022, %v2182
      %v2184 = vpop.f32.mrb[0].mxu0
      %v2185 = vpop.f32.mrb[0].mxu0
      %v2186 = vadd.f32 %v2025, %v2185
      %v2187 = vpop.f32.mrb[0].mxu0
      %2188 = vmatprep.mubr.bf16.mxu0 %v962
      %2189 = vmatmul.mubr.bf16.gmra.mrb[0].mxu0 %v961
      %v2190 = vpop.f32.mrb[0].mxu0
      %v2191 = vadd.f32 %v2030, %v2190
      %v2192 = vpop.f32.mrb[0].mxu0
      %v2193 = vpop.f32.mrb[0].mxu0
      %v2194 = vadd.f32 %v2033, %v2193
      %v2195 = vpop.f32.mrb[0].mxu0
      %2196 = vmatprep.mubr.bf16.mxu0 %v971
      %2197 = vmatmul.mubr.bf16.gmra.mrb[0].mxu0 %v970
      %v2198 = vpop.f32.mrb[0].mxu0
      %v2199 = vadd.f32 %v2038, %v2198
      %v2200 = vpop.f32.mrb[0].mxu0
      %v2201 = vpop.f32.mrb[0].mxu0
      %v2202 = vadd.f32 %v2041, %v2201
      %v2203 = vpop.f32.mrb[0].mxu0
      %2204 = vmatprep.mubr.bf16.mxu0 %v980
      %2205 = vmatmul.mubr.bf16.gmra.mrb[0].mxu0 %v979
      %v2206 = vpop.f32.mrb[0].mxu0
      %v2207 = vadd.f32 %v2046, %v2206
      %v2208 = vpop.f32.mrb[0].mxu0
      %v2209 = vpop.f32.mrb[0].mxu0
      %v2210 = vadd.f32 %v2049, %v2209
      %v2211 = vpop.f32.mrb[0].mxu0
      %2212 = vmatprep.mubr.bf16.mxu0 %v989
      %2213 = vmatmul.mubr.bf16.gmra.mrb[0].mxu0 %v988
      %v2214 = vpop.f32.mrb[0].mxu0
      %v2215 = vadd.f32 %v2054, %v2214
      %v2216 = vpop.f32.mrb[0].mxu0
      %v2217 = vpop.f32.mrb[0].mxu0
      %v2218 = vadd.f32 %v2057, %v2217
      %v2219 = vpop.f32.mrb[0].mxu0
      %2220 = vmatprep.mubr.bf16.mxu0 %v998
      %2221 = vmatmul.mubr.bf16.gmra.mrb[0].mxu0 %v997
      %v2222 = vpop.f32.mrb[0].mxu0
      %v2223 = vadd.f32 %v2062, %v2222
      %v2224 = vpop.f32.mrb[0].mxu0
      %v2225 = vpop.f32.mrb[0].mxu0
      %v2226 = vadd.f32 %v2065, %v2225
      %v2227 = vpop.f32.mrb[0].mxu0
      %2228 = vmatprep.mubr.bf16.mxu0 %v1007
      %2229 = vmatmul.mubr.bf16.gmra.mrb[0].mxu0 %v1006
      %v2230 = vpop.f32.mrb[0].mxu0
      %v2231 = vadd.f32 %v2070, %v2230
      %v2232 = vpop.f32.mrb[0].mxu0
      %v2233 = vpop.f32.mrb[0].mxu0
      %v2234 = vadd.f32 %v2073, %v2233
      %v2235 = vpop.f32.mrb[0].mxu0
      %2236 = vmatprep.mubr.bf16.mxu0 %v1016
      %2237 = vmatmul.mubr.bf16.gmra.mrb[0].mxu0 %v1015
      %v2238 = vpop.f32.mrb[0].mxu0
      %v2239 = vadd.f32 %v2078, %v2238
      %v2240 = vpop.f32.mrb[0].mxu0
      %v2241 = vpop.f32.mrb[0].mxu0
      %v2242 = vadd.f32 %v2081, %v2241
      %v2243 = vpop.f32.mrb[0].mxu0
      %2244 = vmatprep.mubr.bf16.mxu0 %v1025
      %2245 = vmatmul.mubr.bf16.gmra.mrb[0].mxu0 %v1024
      %v2246 = vpop.f32.mrb[0].mxu0
      %v2247 = vadd.f32 %v2086, %v2246
      %v2248 = vpop.f32.mrb[0].mxu0
      %v2249 = vpop.f32.mrb[0].mxu0
      %v2250 = vadd.f32 %v2089, %v2249
      %v2251 = vpop.f32.mrb[0].mxu0
      %2252 = vmatprep.mubr.bf16.mxu0 %v1034
      %2253 = vmatmul.mubr.bf16.gmra.mrb[0].mxu0 %v1033
      %v2254 = vpop.f32.mrb[0].mxu0
      %v2255 = vadd.f32 %v2094, %v2254
      %v2256 = vpop.f32.mrb[0].mxu0
      %v2257 = vpop.f32.mrb[0].mxu0
      %v2258 = vadd.f32 %v2097, %v2257
      %v2259 = vpop.f32.mrb[0].mxu0
      %2260 = vmatprep.mubr.bf16.mxu0 %v1043
      %2261 = vmatmul.mubr.bf16.gmra.mrb[0].mxu0 %v1042
      %v2262 = vpop.f32.mrb[0].mxu0
      %v2263 = vadd.f32 %v2102, %v2262
      %v2264 = vpop.f32.mrb[0].mxu0
      %v2265 = vpop.f32.mrb[0].mxu0
      %v2266 = vadd.f32 %v2105, %v2265
      %v2267 = vpop.f32.mrb[0].mxu0
      %2268 = vmatprep.mubr.bf16.mxu0 %v1052
      %2269 = vmatmul.mubr.bf16.gmra.mrb[0].mxu0 %v1051
      %v2270 = vpop.f32.mrb[0].mxu0
      %v2271 = vadd.f32 %v2110, %v2270
      %v2272 = vpop.f32.mrb[0].mxu0
      %v2273 = vpop.f32.mrb[0].mxu0
      %v2274 = vadd.f32 %v2113, %v2273
      %v2275 = vpop.f32.mrb[0].mxu0
      %2276 = vmatprep.mubr.bf16.mxu0 %v1061
      %2277 = vmatmul.mubr.bf16.gmra.mrb[0].mxu0 %v1060
      %v2278 = vpop.f32.mrb[0].mxu0
      %v2279 = vadd.f32 %v2118, %v2278
      %v2280 = vpop.f32.mrb[0].mxu0
      %v2281 = vpop.f32.mrb[0].mxu0
      %v2282 = vadd.f32 %v2121, %v2281
      %v2283 = vpop.f32.mrb[0].mxu0
      %2284 = vmatprep.mubr.bf16.mxu0 %v1070
      %2285 = vmatmul.mubr.bf16.gmra.mrb[0].mxu0 %v1069
      %v2286 = vpop.f32.mrb[0].mxu0
      %v2287 = vadd.f32 %v2126, %v2286
      %v2288 = vpop.f32.mrb[0].mxu0
      %v2289 = vpop.f32.mrb[0].mxu0
      %v2290 = vadd.f32 %v2129, %v2289
      %v2291 = vpop.f32.mrb[0].mxu0
      %2292 = vmatprep.mubr.bf16.mxu0 %v1079
      %2293 = vmatmul.mubr.bf16.gmra.mrb[0].mxu0 %v1078
      %v2294 = vpop.f32.mrb[0].mxu0
      %v2295 = vadd.f32 %v2134, %v2294
      %v2296 = vpop.f32.mrb[0].mxu0
      %v2297 = vpop.f32.mrb[0].mxu0
      %v2298 = vadd.f32 %v2137, %v2297
      %v2299 = vpop.f32.mrb[0].mxu0
      %2300 = vdwg.mxu0
      %2301 = vmatprep.subr.bf16.mxu0 0
      %2302 = vmatpush1.bf16.msra.mxu0 %v1577
      %2303 = vmatprep.subr.bf16.mxu0 0
      %2304 = vmatpush1.bf16.msra.mxu0 %v1578
      %2305 = vmatprep.subr.bf16.mxu0 0
      %2306 = vmatpush1.bf16.msra.mxu0 %v1579
      %2307 = vmatprep.subr.bf16.mxu0 0
      %2308 = vmatpush1.bf16.msra.mxu0 %v1580
      %2309 = vmatprep.subr.bf16.mxu0 0
      %2310 = vmatpush1.bf16.msra.mxu0 %v1581
      %2311 = vmatprep.subr.bf16.mxu0 0
      %2312 = vmatpush1.bf16.msra.mxu0 %v1582
      %2313 = vmatprep.subr.bf16.mxu0 0
      %2314 = vmatpush1.bf16.msra.mxu0 %v1583
      %2315 = vmatprep.subr.bf16.mxu0 0
      %2316 = vmatpush1.bf16.msra.mxu0 %v1584
      %2317 = vmatprep.subr.bf16.mxu0 0
      %2318 = vmatpush1.bf16.msra.mxu0 0
      %2319 = vmatprep.subr.bf16.mxu0 0
      %2320 = vmatpush1.bf16.msra.mxu0 0
      %2321 = vmatprep.subr.bf16.mxu0 0
      %2322 = vmatpush1.bf16.msra.mxu0 0
      %2323 = vmatprep.subr.bf16.mxu0 0
      %2324 = vmatpush1.bf16.msra.mxu0 0
      %2325 = vmatprep.subr.bf16.mxu0 0
      %2326 = vmatpush1.bf16.msra.mxu0 0
      %2327 = vmatprep.subr.bf16.mxu0 0
      %2328 = vmatpush1.bf16.msra.mxu0 0
      %2329 = vmatprep.subr.bf16.mxu0 0
      %2330 = vmatpush1.bf16.msra.mxu0 0
      %2331 = vmatprep.subr.bf16.mxu0 0
      %2332 = vmatpush1.bf16.msra.mxu0 0
      %2333 = vmatprep.mubr.bf16.mxu0 0
      %2334 = vmatmul.mubr.bf16.gmra.mrb[0].mxu0 %v945
      %v2335 = vpop.f32.mrb[0].mxu0
      %v2336 = vadd.f32 %v2175, %v2335
      %v2337 = vpop.f32.mrb[0].mxu0
      %v2338 = vpop.f32.mrb[0].mxu0
      %v2339 = vadd.f32 %v2178, %v2338
      %v2340 = vpop.f32.mrb[0].mxu0
      %2341 = vmatprep.mubr.bf16.mxu0 0
      %2342 = vmatmul.mubr.bf16.gmra.mrb[0].mxu0 %v954
      %v2343 = vpop.f32.mrb[0].mxu0
      %v2344 = vadd.f32 %v2183, %v2343
      %v2345 = vpop.f32.mrb[0].mxu0
      %v2346 = vpop.f32.mrb[0].mxu0
      %v2347 = vadd.f32 %v2186, %v2346
      %v2348 = vpop.f32.mrb[0].mxu0
      %2349 = vmatprep.mubr.bf16.mxu0 0
      %2350 = vmatmul.mubr.bf16.gmra.mrb[0].mxu0 %v963
      %v2351 = vpop.f32.mrb[0].mxu0
      %v2352 = vadd.f32 %v2191, %v2351
      %v2353 = vpop.f32.mrb[0].mxu0
      %v2354 = vpop.f32.mrb[0].mxu0
      %v2355 = vadd.f32 %v2194, %v2354
      %v2356 = vpop.f32.mrb[0].mxu0
      %2357 = vmatprep.mubr.bf16.mxu0 0
      %2358 = vmatmul.mubr.bf16.gmra.mrb[0].mxu0 %v972
      %v2359 = vpop.f32.mrb[0].mxu0
      %v2360 = vadd.f32 %v2199, %v2359
      %v2361 = vpop.f32.mrb[0].mxu0
      %v2362 = vpop.f32.mrb[0].mxu0
      %v2363 = vadd.f32 %v2202, %v2362
      %v2364 = vpop.f32.mrb[0].mxu0
      %2365 = vmatprep.mubr.bf16.mxu0 0
      %2366 = vmatmul.mubr.bf16.gmra.mrb[0].mxu0 %v981
      %v2367 = vpop.f32.mrb[0].mxu0
      %v2368 = vadd.f32 %v2207, %v2367
      %v2369 = vpop.f32.mrb[0].mxu0
      %v2370 = vpop.f32.mrb[0].mxu0
      %v2371 = vadd.f32 %v2210, %v2370
      %v2372 = vpop.f32.mrb[0].mxu0
      %2373 = vmatprep.mubr.bf16.mxu0 0
      %2374 = vmatmul.mubr.bf16.gmra.mrb[0].mxu0 %v990
      %v2375 = vpop.f32.mrb[0].mxu0
      %v2376 = vadd.f32 %v2215, %v2375
      %v2377 = vpop.f32.mrb[0].mxu0
      %v2378 = vpop.f32.mrb[0].mxu0
      %v2379 = vadd.f32 %v2218, %v2378
      %v2380 = vpop.f32.mrb[0].mxu0
      %2381 = vmatprep.mubr.bf16.mxu0 0
      %2382 = vmatmul.mubr.bf16.gmra.mrb[0].mxu0 %v999
      %v2383 = vpop.f32.mrb[0].mxu0
      %v2384 = vadd.f32 %v2223, %v2383
      %v2385 = vpop.f32.mrb[0].mxu0
      %v2386 = vpop.f32.mrb[0].mxu0
      %v2387 = vadd.f32 %v2226, %v2386
      %v2388 = vpop.f32.mrb[0].mxu0
      %2389 = vmatprep.mubr.bf16.mxu0 0
      %2390 = vmatmul.mubr.bf16.gmra.mrb[0].mxu0 %v1008
      %v2391 = vpop.f32.mrb[0].mxu0
      %v2392 = vadd.f32 %v2231, %v2391
      %v2393 = vpop.f32.mrb[0].mxu0
      %v2394 = vpop.f32.mrb[0].mxu0
      %v2395 = vadd.f32 %v2234, %v2394
      %v2396 = vpop.f32.mrb[0].mxu0
      %2397 = vmatprep.mubr.bf16.mxu0 0
      %2398 = vmatmul.mubr.bf16.gmra.mrb[0].mxu0 %v1017
      %v2399 = vpop.f32.mrb[0].mxu0
      %v2400 = vadd.f32 %v2239, %v2399
      %v2401 = vpop.f32.mrb[0].mxu0
      %v2402 = vpop.f32.mrb[0].mxu0
      %v2403 = vadd.f32 %v2242, %v2402
      %v2404 = vpop.f32.mrb[0].mxu0
      %2405 = vmatprep.mubr.bf16.mxu0 0
      %2406 = vmatmul.mubr.bf16.gmra.mrb[0].mxu0 %v1026
      %v2407 = vpop.f32.mrb[0].mxu0
      %v2408 = vadd.f32 %v2247, %v2407
      %v2409 = vpop.f32.mrb[0].mxu0
      %v2410 = vpop.f32.mrb[0].mxu0
      %v2411 = vadd.f32 %v2250, %v2410
      %v2412 = vpop.f32.mrb[0].mxu0
      %2413 = vmatprep.mubr.bf16.mxu0 0
      %2414 = vmatmul.mubr.bf16.gmra.mrb[0].mxu0 %v1035
      %v2415 = vpop.f32.mrb[0].mxu0
      %v2416 = vadd.f32 %v2255, %v2415
      %v2417 = vpop.f32.mrb[0].mxu0
      %v2418 = vpop.f32.mrb[0].mxu0
      %v2419 = vadd.f32 %v2258, %v2418
      %v2420 = vpop.f32.mrb[0].mxu0
      %2421 = vmatprep.mubr.bf16.mxu0 0
      %2422 = vmatmul.mubr.bf16.gmra.mrb[0].mxu0 %v1044
      %v2423 = vpop.f32.mrb[0].mxu0
      %v2424 = vadd.f32 %v2263, %v2423
      %v2425 = vpop.f32.mrb[0].mxu0
      %v2426 = vpop.f32.mrb[0].mxu0
      %v2427 = vadd.f32 %v2266, %v2426
      %v2428 = vpop.f32.mrb[0].mxu0
      %2429 = vmatprep.mubr.bf16.mxu0 0
      %2430 = vmatmul.mubr.bf16.gmra.mrb[0].mxu0 %v1053
      %v2431 = vpop.f32.mrb[0].mxu0
      %v2432 = vadd.f32 %v2271, %v2431
      %v2433 = vpop.f32.mrb[0].mxu0
      %v2434 = vpop.f32.mrb[0].mxu0
      %v2435 = vadd.f32 %v2274, %v2434
      %v2436 = vpop.f32.mrb[0].mxu0
      %2437 = vmatprep.mubr.bf16.mxu0 0
      %2438 = vmatmul.mubr.bf16.gmra.mrb[0].mxu0 %v1062
      %v2439 = vpop.f32.mrb[0].mxu0
      %v2440 = vadd.f32 %v2279, %v2439
      %v2441 = vpop.f32.mrb[0].mxu0
      %v2442 = vpop.f32.mrb[0].mxu0
      %v2443 = vadd.f32 %v2282, %v2442
      %v2444 = vpop.f32.mrb[0].mxu0
      %2445 = vmatprep.mubr.bf16.mxu0 0
      %2446 = vmatmul.mubr.bf16.gmra.mrb[0].mxu0 %v1071
      %v2447 = vpop.f32.mrb[0].mxu0
      %v2448 = vadd.f32 %v2287, %v2447
      %v2449 = vpop.f32.mrb[0].mxu0
      %v2450 = vpop.f32.mrb[0].mxu0
      %v2451 = vadd.f32 %v2290, %v2450
      %v2452 = vpop.f32.mrb[0].mxu0
      %2453 = vmatprep.mubr.bf16.mxu0 0
      %2454 = vmatmul.mubr.bf16.gmra.mrb[0].mxu0 %v1080
      %v2455 = vpop.f32.mrb[0].mxu0
      %v2456 = vadd.f32 %v2295, %v2455
      %v2457 = vpop.f32.mrb[0].mxu0
      %v2458 = vpop.f32.mrb[0].mxu0
      %v2459 = vadd.f32 %v2298, %v2458
      %v2460 = vpop.f32.mrb[0].mxu0
      %2461 = vdwg.mxu0
      %v2462 = vmax.f32 %v2336, 0.0
      %v2463 = vmax.f32 %v2339, 0.0
      %v2464 = vmax.f32 %v2344, 0.0
      %v2465 = vmax.f32 %v2347, 0.0
      %v2466 = vmax.f32 %v2352, 0.0
      %v2467 = vmax.f32 %v2355, 0.0
      %v2468 = vmax.f32 %v2360, 0.0
      %v2469 = vmax.f32 %v2363, 0.0
      %v2470 = vmax.f32 %v2368, 0.0
      %v2471 = vmax.f32 %v2371, 0.0
      %v2472 = vmax.f32 %v2376, 0.0
      %v2473 = vmax.f32 %v2379, 0.0
      %v2474 = vmax.f32 %v2384, 0.0
      %v2475 = vmax.f32 %v2387, 0.0
      %v2476 = vmax.f32 %v2392, 0.0
      %v2477 = vmax.f32 %v2395, 0.0
      %v2478 = vmax.f32 %v2400, 0.0
      %v2479 = vmax.f32 %v2403, 0.0
      %v2480 = vmax.f32 %v2408, 0.0
      %v2481 = vmax.f32 %v2411, 0.0
      %v2482 = vmax.f32 %v2416, 0.0
      %v2483 = vmax.f32 %v2419, 0.0
      %v2484 = vmax.f32 %v2424, 0.0
      %v2485 = vmax.f32 %v2427, 0.0
      %v2486 = vmax.f32 %v2432, 0.0
      %v2487 = vmax.f32 %v2435, 0.0
      %v2488 = vmax.f32 %v2440, 0.0
      %v2489 = vmax.f32 %v2443, 0.0
      %v2490 = vmax.f32 %v2448, 0.0
      %v2491 = vmax.f32 %v2451, 0.0
      %v2492 = vmax.f32 %v2456, 0.0
      %v2493 = vmax.f32 %v2459, 0.0
      %vm2494 = vcmask 523264
      %2495 = vst.msk [vmem:[%s175] sm:$0xff] %vm2494, %v2462
      %2496 = vst.msk [vmem:[%s175 + $0x8] sm:$0xff] %vm2494, %v2463
      %2497 = vst.msk [vmem:[%s175 + $0x10] sm:$0xff] %vm2494, %v2464
      %2498 = vst.msk [vmem:[%s175 + $0x18] sm:$0xff] %vm2494, %v2465
      %2499 = vst.msk [vmem:[%s175 + $0x20] sm:$0xff] %vm2494, %v2466
      %2500 = vst.msk [vmem:[%s175 + $0x28] sm:$0xff] %vm2494, %v2467
      %2501 = vst.msk [vmem:[%s175 + $0x30] sm:$0xff] %vm2494, %v2468
      %2502 = vst.msk [vmem:[%s175 + $0x38] sm:$0xff] %vm2494, %v2469
      %2503 = vst.msk [vmem:[%s175 + $0x40] sm:$0xff] %vm2494, %v2470
      %2504 = vst.msk [vmem:[%s175 + $0x48] sm:$0xff] %vm2494, %v2471
      %2505 = vst.msk [vmem:[%s175 + $0x50] sm:$0xff] %vm2494, %v2472
      %2506 = vst.msk [vmem:[%s175 + $0x58] sm:$0xff] %vm2494, %v2473
      %2507 = vst.msk [vmem:[%s175 + $0x60] sm:$0xff] %vm2494, %v2474
      %2508 = vst.msk [vmem:[%s175 + $0x68] sm:$0xff] %vm2494, %v2475
      %2509 = vst.msk [vmem:[%s175 + $0x70] sm:$0xff] %vm2494, %v2476
      %2510 = vst.msk [vmem:[%s175 + $0x78] sm:$0xff] %vm2494, %v2477
      %2511 = vst.msk [vmem:[%s175 + $0x80] sm:$0xff] %vm2494, %v2478
      %2512 = vst.msk [vmem:[%s175 + $0x88] sm:$0xff] %vm2494, %v2479
      %2513 = vst.msk [vmem:[%s175 + $0x90] sm:$0xff] %vm2494, %v2480
      %2514 = vst.msk [vmem:[%s175 + $0x98] sm:$0xff] %vm2494, %v2481
      %2515 = vst.msk [vmem:[%s175 + $0xa0] sm:$0xff] %vm2494, %v2482
      %2516 = vst.msk [vmem:[%s175 + $0xa8] sm:$0xff] %vm2494, %v2483
      %2517 = vst.msk [vmem:[%s175 + $0xb0] sm:$0xff] %vm2494, %v2484
      %2518 = vst.msk [vmem:[%s175 + $0xb8] sm:$0xff] %vm2494, %v2485
      %2519 = vst.msk [vmem:[%s175 + $0xc0] sm:$0xff] %vm2494, %v2486
      %2520 = vst.msk [vmem:[%s175 + $0xc8] sm:$0xff] %vm2494, %v2487
      %2521 = vst.msk [vmem:[%s175 + $0xd0] sm:$0xff] %vm2494, %v2488
      %2522 = vst.msk [vmem:[%s175 + $0xd8] sm:$0xff] %vm2494, %v2489
      %2523 = vst.msk [vmem:[%s175 + $0xe0] sm:$0xff] %vm2494, %v2490
      %2524 = vst.msk [vmem:[%s175 + $0xe8] sm:$0xff] %vm2494, %v2491
      %2525 = vst.msk [vmem:[%s175 + $0xf0] sm:$0xff] %vm2494, %v2492
      %2526 = vst.msk [vmem:[%s175 + $0xf8] sm:$0xff] %vm2494, %v2493
      %s2527 = smul.u32 32, %s14
      %p2528 = scmp.lt.s32.totalorder %s2527, 63
      %s2529 = scalar_select %p2528, %s2527, 63
      %s2530 = smul.addr %s2529, 8
      %s2531 = scalar_lea.vmem %s3, %s2530
      // Predicated region
      $region33: #{udanet_forward.9} parent=31 // pred_check
        %p2532 = pneg %p100
      $region34: #{udanet_forward.9} parent=31 // pred_check_branch
        %2534 = sbr.rel (%p2532) target = $region36
      $region35: #{udanet_forward.9} parent=31 // pred_region
        %s2535 = smul.u32 32, %s14
      $region36: #{udanet_forward.9} parent=31 // pred_fallthru
        _
    $region32: #{udanet_forward.9} parent=5 // pred_fallthru
      _
    %p2536 = scmp.le.s32.totalorder 2, %s9
    // Predicated region
    $region37: #{udanet_forward.9} parent=5 // pred_check
      %p2537 = pneg %p2536
    $region38: #{udanet_forward.9} parent=5 // pred_check_branch
      %2539 = sbr.rel (%p2537) target = $region40
    $region39: #{udanet_forward.9} parent=5 // pred_region
      %s2540 = ssub.s32 %s9, 2
      // Predicated region
      $region41: #{udanet_forward.9} parent=39 // pred_check
        %p2541 = pneg %p106
      $region42: #{udanet_forward.9} parent=39 // pred_check_branch
        %2543 = sbr.rel (%p2541) target = $region44
      $region43: #{udanet_forward.9} parent=39 // pred_region
        %s2544 = smul.u32 32, %s15
        %p2545 = scmp.lt.s32.totalorder %s2544, 63
        %s2546 = scalar_select %p2545, %s2544, 63
        %s2547 = smul.addr %s2546, 8
        %s2548 = scalar_lea.vmem %s3, %s2547
      $region44: #{udanet_forward.9} parent=39 // pred_fallthru
        _
    $region40: #{udanet_forward.9} parent=5 // pred_fallthru
      _
  $region6: #{udanet_forward.9} parent=0 // loop_footer
    %s13 = sadd.s32 1, %s9
  $region7: #{udanet_forward.9} parent=0 // loop_footer_branch
    %8 = sbr.rel target = $region3
  $region8: #{udanet_forward.9} parent=0 // loop_exit
    _

// kernel: udanet_forward.10
$region0: #{udanet_forward.10}
  #allocation0 [shape = 'u32[]', space=smem, size = 0x4, offset = 0x4, fixed_abs, tag = 'smem constant byte address 0x4 - core index']
  #allocation1 [shape = 'u32[144,128]{1,0:T(1,128)}', space=vmem, size = 0x12000, scoped, tag = 'internal scratch']
  %s0 = inlined_call_operand.vmem [shape: bf16[512,576], index: 0, kind: input, shape index: {}]
  %s1 = inlined_call_operand.vmem [shape: bf16[576,3], index: 1, kind: input, shape index: {}]
  %s2 = inlined_call_operand.vmem [shape: f32[1,3], index: 2, kind: input, shape index: {}]
  %s3 = inlined_call_operand.vmem [shape: f32[512,3], index: 3, kind: output, shape index: {}]
  %s4 = sld [smem:[#allocation0]]
  $region45: #{udanet_forward.10} parent=0
    _
  %s6 = ssub.s32 1, %s4
  %s7 = scalar_select 0, %s6, %s4
  loop: start=0, step=1, limit=4
  $region2: #{udanet_forward.10} parent=0 // loop_pre_header
    _
  $region3: #{udanet_forward.10} parent=0 // loop_header
    %s9 = sphi 0, %s13
    %p10 = scmp.ge.s32.totalorder %s9, 4
    %s19 = sphi 0, %s21
    %s22 = sphi 0, %s19
    %s23 = sphi 0, %s22
    %s39 = sphi 0, %s23
    %s43 = sphi 0, %s43
    %s45 = sphi 0, %s43
    %s46 = sphi 0, %s45
    %s60 = sphi 0, %s46
    %s64 = sphi 0, %s64
    %s66 = sphi 0, %s64
    %s67 = sphi 0, %s66
    %s81 = sphi 0, %s67
    %s87 = sphi 0, %s89
    %s90 = sphi 0, %s87
    %s91 = sphi 0, %s90
    %s107 = sphi 0, %s91
  $region4: #{udanet_forward.10} parent=0 // loop_header_branch
    %12 = sbr.rel (%p10) target = $region8
  $region5: #{udanet_forward.10} parent=0 // loop_body
    %s14 = ssub.s32 %s9, 1
    %s15 = ssub.s32 %s9, 2
    %s16 = sadd.s32 %s9, 1
    %s17 = ssub.s32 %s9, %s16
    %p18 = scmp.eq.s32.totalorder %s17, 0
    %s20 = sadd.s32 %s19, 1
    %s21 = scalar_select %p18, %s19, %s20
    %p24 = pneg %p18
    %p25 = scmp.eq.s32.totalorder %s9, 1
    %p26 = por %p24, %p25
    %p27 = scmp.ne.s32.totalorder %s19, %s22
    %p28 = scmp.eq.s32.totalorder %s9, 0
    %p29 = por %p27, %p28
    %p30 = scmp.ne.s32.totalorder %s19, %s22
    %p31 = scmp.eq.s32.totalorder %s14, 1
    %p32 = por %p30, %p31
    %p33 = scmp.ne.s32.totalorder %s22, %s23
    %p34 = scmp.eq.s32.totalorder %s14, 0
    %p35 = por %p33, %p34
    %p36 = scmp.ne.s32.totalorder %s22, %s23
    %p37 = scmp.eq.s32.totalorder %s15, 1
    %p38 = por %p36, %p37
    %p40 = scmp.ne.s32.totalorder %s23, %s39
    %p41 = scmp.eq.s32.totalorder %s15, 0
    %p42 = por %p40, %p41
    %s44 = sadd.s32 %s43, 1
    %p47 = scmp.eq.s32.totalorder %s9, 1
    %p48 = scmp.ne.s32.totalorder %s43, %s45
    %p49 = scmp.eq.s32.totalorder %s9, 0
    %p50 = por %p48, %p49
    %p51 = scmp.ne.s32.totalorder %s43, %s45
    %p52 = scmp.eq.s32.totalorder %s14, 1
    %p53 = por %p51, %p52
    %p54 = scmp.ne.s32.totalorder %s45, %s46
    %p55 = scmp.eq.s32.totalorder %s14, 0
    %p56 = por %p54, %p55
    %p57 = scmp.ne.s32.totalorder %s45, %s46
    %p58 = scmp.eq.s32.totalorder %s15, 1
    %p59 = por %p57, %p58
    %p61 = scmp.ne.s32.totalorder %s46, %s60
    %p62 = scmp.eq.s32.totalorder %s15, 0
    %p63 = por %p61, %p62
    %s65 = sadd.s32 %s64, 1
    %p68 = scmp.eq.s32.totalorder %s9, 1
    %p69 = scmp.ne.s32.totalorder %s64, %s66
    %p70 = scmp.eq.s32.totalorder %s9, 0
    %p71 = por %p69, %p70
    %p72 = scmp.ne.s32.totalorder %s64, %s66
    %p73 = scmp.eq.s32.totalorder %s14, 1
    %p74 = por %p72, %p73
    %p75 = scmp.ne.s32.totalorder %s66, %s67
    %p76 = scmp.eq.s32.totalorder %s14, 0
    %p77 = por %p75, %p76
    %p78 = scmp.ne.s32.totalorder %s66, %s67
    %p79 = scmp.eq.s32.totalorder %s15, 1
    %p80 = por %p78, %p79
    %p82 = scmp.ne.s32.totalorder %s67, %s81
    %p83 = scmp.eq.s32.totalorder %s15, 0
    %p84 = por %p82, %p83
    %s85 = ssub.s32 %s9, %s16
    %p86 = scmp.eq.s32.totalorder %s85, 0
    %s88 = sadd.s32 %s87, 1
    %s89 = scalar_select %p86, %s87, %s88
    %p92 = pneg %p86
    %p93 = scmp.eq.s32.totalorder %s9, 1
    %p94 = por %p92, %p93
    %p95 = scmp.ne.s32.totalorder %s87, %s90
    %p96 = scmp.eq.s32.totalorder %s9, 0
    %p97 = por %p95, %p96
    %p98 = scmp.ne.s32.totalorder %s87, %s90
    %p99 = scmp.eq.s32.totalorder %s14, 1
    %p100 = por %p98, %p99
    %p101 = scmp.ne.s32.totalorder %s90, %s91
    %p102 = scmp.eq.s32.totalorder %s14, 0
    %p103 = por %p101, %p102
    %p104 = scmp.ne.s32.totalorder %s90, %s91
    %p105 = scmp.eq.s32.totalorder %s15, 1
    %p106 = por %p104, %p105
    %p108 = scmp.ne.s32.totalorder %s91, %s107
    %p109 = scmp.eq.s32.totalorder %s15, 0
    %p110 = por %p108, %p109
    %p111 = scmp.le.s32.totalorder 1, %s9
    %p112 = scmp.lt.s32.totalorder %s9, 3
    %p113 = pnand %p111, %p112
    %p114 = pneg %p113
    // Predicated region
    $region9: #{udanet_forward.10} parent=5 // pred_check
      _
    $region10: #{udanet_forward.10} parent=5 // pred_check_branch
      %116 = sbr.rel (%p113) target = $region12
    $region11: #{udanet_forward.10} parent=5 // pred_region
      %s117 = ssub.s32 %s9, 1
      // Predicated region
      $region13: #{udanet_forward.10} parent=11 // pred_check
        %p118 = pneg %p56
      $region14: #{udanet_forward.10} parent=11 // pred_check_branch
        %120 = sbr.rel (%p118) target = $region16
      $region15: #{udanet_forward.10} parent=11 // pred_region
        _
      $region16: #{udanet_forward.10} parent=11 // pred_fallthru
        _
      // Predicated region
      $region17: #{udanet_forward.10} parent=11 // pred_check
        %p121 = pneg %p77
      $region18: #{udanet_forward.10} parent=11 // pred_check_branch
        %123 = sbr.rel (%p121) target = $region20
      $region19: #{udanet_forward.10} parent=11 // pred_region
        _
      $region20: #{udanet_forward.10} parent=11 // pred_fallthru
        _
    $region12: #{udanet_forward.10} parent=5 // pred_fallthru
      _
    %p124 = scmp.lt.s32.totalorder %s9, 2
    // Predicated region
    $region21: #{udanet_forward.10} parent=5 // pred_check
      %p125 = pneg %p124
    $region22: #{udanet_forward.10} parent=5 // pred_check_branch
      %127 = sbr.rel (%p125) target = $region24
    $region23: #{udanet_forward.10} parent=5 // pred_region
      // Predicated region
      $region25: #{udanet_forward.10} parent=23 // pred_check
        %p128 = pneg %p29
      $region26: #{udanet_forward.10} parent=23 // pred_check_branch
        %130 = sbr.rel (%p128) target = $region28
      $region27: #{udanet_forward.10} parent=23 // pred_region
        %s131 = smul.u32 32, %s9
        %p132 = scmp.lt.s32.totalorder %s131, 63
        %s133 = scalar_select %p132, %s131, 63
        %s134 = smul.addr %s133, 5
        %s135 = smul.addr %s134, 4
        %s136 = scalar_lea.vmem %s0, %s135
        %s137 = smul.u32 32, %s9
      $region28: #{udanet_forward.10} parent=23 // pred_fallthru
        _
    $region24: #{udanet_forward.10} parent=5 // pred_fallthru
      _
    %p138 = scmp.le.s32.totalorder 1, %s9
    %p139 = scmp.lt.s32.totalorder %s9, 3
    %p140 = pnand %p138, %p139
    %p141 = pneg %p140
    // Predicated region
    $region29: #{udanet_forward.10} parent=5 // pred_check
      _
    $region30: #{udanet_forward.10} parent=5 // pred_check_branch
      %143 = sbr.rel (%p140) target = $region32
    $region31: #{udanet_forward.10} parent=5 // pred_region
      %s144 = ssub.s32 %s9, 1
      %s145 = smul.u32 32, %s14
      %p146 = scmp.lt.s32.totalorder %s145, 63
      %s147 = scalar_select %p146, %s145, 63
      %s148 = smul.addr %s147, 5
      %s149 = smul.addr %s148, 4
      %s150 = scalar_lea.vmem %s0, %s149
      %p151 = pneg %p35
      %p152 = pneg %p32
      %p153 = pneg %p56
      %p154 = pneg %p53
      %p155 = pneg %p77
      %p156 = pneg %p74
      %p157 = pneg %p103
      %p158 = pneg %p100
      %s159 = smul.u32 32, %s14
      %p160 = scmp.lt.s32.totalorder %s159, 63
      %s161 = scalar_select %p160, %s159, 63
      %s162 = smul.addr %s161, 8
      %s163 = scalar_lea.vmem %s3, %s162
      %s164 = smul.u32 32, %s14
      %p165 = scmp.lt.s32.totalorder %s164, 63
      %s166 = scalar_select %p165, %s164, 63
      %s167 = smul.addr %s166, 5
      %s168 = smul.addr %s167, 4
      %s169 = scalar_lea.vmem %s0, %s168
      %s170 = smul.u32 32, %s14
      %s171 = smul.u32 32, %s14
      %p172 = scmp.lt.s32.totalorder %s171, 63
      %s173 = scalar_select %p172, %s171, 63
      %s174 = smul.addr %s173, 8
      %s175 = scalar_lea.vmem %s3, %s174
      %s176 = smul.u32 32, %s14
      %v178 = vld [vmem:[%s169] sm:$0xff]
      %v179 = vld [vmem:[%s169 + $0x8] sm:$0xff]
      %v180 = vld [vmem:[%s169 + $0x10] sm:$0xf]
      %v181 = vld [vmem:[%s169 + $0x14] sm:$0xff]
      %v182 = vld [vmem:[%s169 + $0x1c] sm:$0xff]
      %v183 = vld [vmem:[%s169 + $0x24] sm:$0xf]
      %v184 = vld [vmem:[%s169 + $0x28] sm:$0xff]
      %v185 = vld [vmem:[%s169 + $0x30] sm:$0xff]
      %v186 = vld [vmem:[%s169 + $0x38] sm:$0xf]
      %v187 = vld [vmem:[%s169 + $0x3c] sm:$0xff]
      %v188 = vld [vmem:[%s169 + $0x44] sm:$0xff]
      %v189 = vld [vmem:[%s169 + $0x4c] sm:$0xf]
      %v190 = vld [vmem:[%s169 + $0x50] sm:$0xff]
      %v191 = vld [vmem:[%s169 + $0x58] sm:$0xff]
      %v192 = vld [vmem:[%s169 + $0x60] sm:$0xf]
      %v193 = vld [vmem:[%s169 + $0x64] sm:$0xff]
      %v194 = vld [vmem:[%s169 + $0x6c] sm:$0xff]
      %v195 = vld [vmem:[%s169 + $0x74] sm:$0xf]
      %v196 = vld [vmem:[%s169 + $0x78] sm:$0xff]
      %v197 = vld [vmem:[%s169 + $0x80] sm:$0xff]
      %v198 = vld [vmem:[%s169 + $0x88] sm:$0xf]
      %v199 = vld [vmem:[%s169 + $0x8c] sm:$0xff]
      %v200 = vld [vmem:[%s169 + $0x94] sm:$0xff]
      %v201 = vld [vmem:[%s169 + $0x9c] sm:$0xf]
      %v202 = vld [vmem:[%s169 + $0xa0] sm:$0xff]
      %v203 = vld [vmem:[%s169 + $0xa8] sm:$0xff]
      %v204 = vld [vmem:[%s169 + $0xb0] sm:$0xf]
      %v205 = vld [vmem:[%s169 + $0xb4] sm:$0xff]
      %v206 = vld [vmem:[%s169 + $0xbc] sm:$0xff]
      %v207 = vld [vmem:[%s169 + $0xc4] sm:$0xf]
      %v208 = vld [vmem:[%s169 + $0xc8] sm:$0xff]
      %v209 = vld [vmem:[%s169 + $0xd0] sm:$0xff]
      %v210 = vld [vmem:[%s169 + $0xd8] sm:$0xf]
      %v211 = vld [vmem:[%s169 + $0xdc] sm:$0xff]
      %v212 = vld [vmem:[%s169 + $0xe4] sm:$0xff]
      %v213 = vld [vmem:[%s169 + $0xec] sm:$0xf]
      %v214 = vld [vmem:[%s169 + $0xf0] sm:$0xff]
      %v215 = vld [vmem:[%s169 + $0xf8] sm:$0xff]
      %v216 = vld [vmem:[%s169 + $0x100] sm:$0xf]
      %v217 = vld [vmem:[%s169 + $0x104] sm:$0xff]
      %v218 = vld [vmem:[%s169 + $0x10c] sm:$0xff]
      %v219 = vld [vmem:[%s169 + $0x114] sm:$0xf]
      %v220 = vld [vmem:[%s169 + $0x118] sm:$0xff]
      %v221 = vld [vmem:[%s169 + $0x120] sm:$0xff]
      %v222 = vld [vmem:[%s169 + $0x128] sm:$0xf]
      %v223 = vld [vmem:[%s169 + $0x12c] sm:$0xff]
      %v224 = vld [vmem:[%s169 + $0x134] sm:$0xff]
      %v225 = vld [vmem:[%s169 + $0x13c] sm:$0xf]
      %v226 = vld [vmem:[%s169 + $0x140] sm:$0xff]
      %v227 = vld [vmem:[%s169 + $0x148] sm:$0xff]
      %v228 = vld [vmem:[%s169 + $0x150] sm:$0xf]
      %v229 = vld [vmem:[%s169 + $0x154] sm:$0xff]
      %v230 = vld [vmem:[%s169 + $0x15c] sm:$0xff]
      %v231 = vld [vmem:[%s169 + $0x164] sm:$0xf]
      %v232 = vld [vmem:[%s169 + $0x168] sm:$0xff]
      %v233 = vld [vmem:[%s169 + $0x170] sm:$0xff]
      %v234 = vld [vmem:[%s169 + $0x178] sm:$0xf]
      %v235 = vld [vmem:[%s169 + $0x17c] sm:$0xff]
      %v236 = vld [vmem:[%s169 + $0x184] sm:$0xff]
      %v237 = vld [vmem:[%s169 + $0x18c] sm:$0xf]
      %v238 = vld [vmem:[%s169 + $0x190] sm:$0xff]
      %v239 = vld [vmem:[%s169 + $0x198] sm:$0xff]
      %v240 = vld [vmem:[%s169 + $0x1a0] sm:$0xf]
      %v241 = vld [vmem:[%s169 + $0x1a4] sm:$0xff]
      %v242 = vld [vmem:[%s169 + $0x1ac] sm:$0xff]
      %v243 = vld [vmem:[%s169 + $0x1b4] sm:$0xf]
      %v244 = vld [vmem:[%s169 + $0x1b8] sm:$0xff]
      %v245 = vld [vmem:[%s169 + $0x1c0] sm:$0xff]
      %v246 = vld [vmem:[%s169 + $0x1c8] sm:$0xf]
      %v247 = vld [vmem:[%s169 + $0x1cc] sm:$0xff]
      %v248 = vld [vmem:[%s169 + $0x1d4] sm:$0xff]
      %v249 = vld [vmem:[%s169 + $0x1dc] sm:$0xf]
      %v250 = vld [vmem:[%s169 + $0x1e0] sm:$0xff]
      %v251 = vld [vmem:[%s169 + $0x1e8] sm:$0xff]
      %v252 = vld [vmem:[%s169 + $0x1f0] sm:$0xf]
      %v253 = vld [vmem:[%s169 + $0x1f4] sm:$0xff]
      %v254 = vld [vmem:[%s169 + $0x1fc] sm:$0xff]
      %v255 = vld [vmem:[%s169 + $0x204] sm:$0xf]
      %v256 = vld [vmem:[%s169 + $0x208] sm:$0xff]
      %v257 = vld [vmem:[%s169 + $0x210] sm:$0xff]
      %v258 = vld [vmem:[%s169 + $0x218] sm:$0xf]
      %v259 = vld [vmem:[%s169 + $0x21c] sm:$0xff]
      %v260 = vld [vmem:[%s169 + $0x224] sm:$0xff]
      %v261 = vld [vmem:[%s169 + $0x22c] sm:$0xf]
      %v262 = vld [vmem:[%s169 + $0x230] sm:$0xff]
      %v263 = vld [vmem:[%s169 + $0x238] sm:$0xff]
      %v264 = vld [vmem:[%s169 + $0x240] sm:$0xf]
      %v265 = vld [vmem:[%s169 + $0x244] sm:$0xff]
      %v266 = vld [vmem:[%s169 + $0x24c] sm:$0xff]
      %v267 = vld [vmem:[%s169 + $0x254] sm:$0xf]
      %v268 = vld [vmem:[%s169 + $0x258] sm:$0xff]
      %v269 = vld [vmem:[%s169 + $0x260] sm:$0xff]
      %v270 = vld [vmem:[%s169 + $0x268] sm:$0xf]
      %v271 = vld [vmem:[%s169 + $0x26c] sm:$0xff]
      %v272 = vld [vmem:[%s169 + $0x274] sm:$0xff]
      %v273 = vld [vmem:[%s169 + $0x27c] sm:$0xf]
      %v274 = vld [vmem:[%s1] sm:$0xf]
      %v275 = vld [vmem:[%s1 + $0x4] sm:$0xf]
      %v276 = vld [vmem:[%s1 + $0x8] sm:$0xf]
      %v277 = vld [vmem:[%s1 + $0xc] sm:$0xf]
      %v278 = vld [vmem:[%s1 + $0x10] sm:$0xf]
      %v279 = vld [vmem:[%s1 + $0x14] sm:$0xf]
      %v280 = vld [vmem:[%s1 + $0x18] sm:$0xf]
      %v281 = vld [vmem:[%s1 + $0x1c] sm:$0xf]
      %v282 = vld [vmem:[%s1 + $0x20] sm:$0xf]
      %v283 = vld [vmem:[%s1 + $0x24] sm:$0xf]
      %v284 = vld [vmem:[%s1 + $0x28] sm:$0xf]
      %v285 = vld [vmem:[%s1 + $0x2c] sm:$0xf]
      %v286 = vld [vmem:[%s1 + $0x30] sm:$0xf]
      %v287 = vld [vmem:[%s1 + $0x34] sm:$0xf]
      %v288 = vld [vmem:[%s1 + $0x38] sm:$0xf]
      %v289 = vld [vmem:[%s1 + $0x3c] sm:$0xf]
      %v290 = vld [vmem:[%s1 + $0x40] sm:$0xf]
      %v291 = vld [vmem:[%s1 + $0x44] sm:$0xf]
      %v292 = vld [vmem:[%s1 + $0x48] sm:$0xf]
      %v293 = vld [vmem:[%s1 + $0x4c] sm:$0xf]
      %v294 = vld [vmem:[%s1 + $0x50] sm:$0xf]
      %v295 = vld [vmem:[%s1 + $0x54] sm:$0xf]
      %v296 = vld [vmem:[%s1 + $0x58] sm:$0xf]
      %v297 = vld [vmem:[%s1 + $0x5c] sm:$0xf]
      %v298 = vld [vmem:[%s1 + $0x60] sm:$0xf]
      %v299 = vld [vmem:[%s1 + $0x64] sm:$0xf]
      %v300 = vld [vmem:[%s1 + $0x68] sm:$0xf]
      %v301 = vld [vmem:[%s1 + $0x6c] sm:$0xf]
      %v302 = vld [vmem:[%s1 + $0x70] sm:$0xf]
      %v303 = vld [vmem:[%s1 + $0x74] sm:$0xf]
      %v304 = vld [vmem:[%s1 + $0x78] sm:$0xf]
      %v305 = vld [vmem:[%s1 + $0x7c] sm:$0xf]
      %v306 = vld [vmem:[%s1 + $0x80] sm:$0xf]
      %v307 = vld [vmem:[%s1 + $0x84] sm:$0xf]
      %v308 = vld [vmem:[%s1 + $0x88] sm:$0xf]
      %v309 = vld [vmem:[%s1 + $0x8c] sm:$0xf]
      %v310 = vld [vmem:[%s1 + $0x90] sm:$0xf]
      %v311 = vld [vmem:[%s1 + $0x94] sm:$0xf]
      %v312 = vld [vmem:[%s1 + $0x98] sm:$0xf]
      %v313 = vld [vmem:[%s1 + $0x9c] sm:$0xf]
      %v314 = vld [vmem:[%s1 + $0xa0] sm:$0xf]
      %v315 = vld [vmem:[%s1 + $0xa4] sm:$0xf]
      %v316 = vld [vmem:[%s1 + $0xa8] sm:$0xf]
      %v317 = vld [vmem:[%s1 + $0xac] sm:$0xf]
      %v318 = vld [vmem:[%s1 + $0xb0] sm:$0xf]
      %v319 = vld [vmem:[%s1 + $0xb4] sm:$0xf]
      %v320 = vld [vmem:[%s1 + $0xb8] sm:$0xf]
      %v321 = vld [vmem:[%s1 + $0xbc] sm:$0xf]
      %v322 = vld [vmem:[%s1 + $0xc0] sm:$0xf]
      %v323 = vld [vmem:[%s1 + $0xc4] sm:$0xf]
      %v324 = vld [vmem:[%s1 + $0xc8] sm:$0xf]
      %v325 = vld [vmem:[%s1 + $0xcc] sm:$0xf]
      %v326 = vld [vmem:[%s1 + $0xd0] sm:$0xf]
      %v327 = vld [vmem:[%s1 + $0xd4] sm:$0xf]
      %v328 = vld [vmem:[%s1 + $0xd8] sm:$0xf]
      %v329 = vld [vmem:[%s1 + $0xdc] sm:$0xf]
      %v330 = vld [vmem:[%s1 + $0xe0] sm:$0xf]
      %v331 = vld [vmem:[%s1 + $0xe4] sm:$0xf]
      %v332 = vld [vmem:[%s1 + $0xe8] sm:$0xf]
      %v333 = vld [vmem:[%s1 + $0xec] sm:$0xf]
      %v334 = vld [vmem:[%s1 + $0xf0] sm:$0xf]
      %v335 = vld [vmem:[%s1 + $0xf4] sm:$0xf]
      %v336 = vld [vmem:[%s1 + $0xf8] sm:$0xf]
      %v337 = vld [vmem:[%s1 + $0xfc] sm:$0xf]
      %v338 = vld [vmem:[%s1 + $0x100] sm:$0xf]
      %v339 = vld [vmem:[%s1 + $0x104] sm:$0xf]
      %v340 = vld [vmem:[%s1 + $0x108] sm:$0xf]
      %v341 = vld [vmem:[%s1 + $0x10c] sm:$0xf]
      %v342 = vld [vmem:[%s1 + $0x110] sm:$0xf]
      %v343 = vld [vmem:[%s1 + $0x114] sm:$0xf]
      %v344 = vld [vmem:[%s1 + $0x118] sm:$0xf]
      %v345 = vld [vmem:[%s1 + $0x11c] sm:$0xf]
      %v346 = vld [vmem:[%s2] sm:$0x1]
      %v348 = vlaneseq
      %v349 = vshrl.u32 %v348, 7
      %v350 = vsub.s32 0, %v349
      %v351 = vrot.slane %v346, %v350
      %v449 = vunpack.c.l.b16 %v178
      %v450 = vunpack.c.h.b16 %v178
      %v451 = vunpack.c.l.b16 %v179
      %v452 = vunpack.c.h.b16 %v179
      %v453 = vunpack.c.l.b16 %v180
      %v454 = vunpack.c.l.b16 %v181
      %v455 = vunpack.c.h.b16 %v181
      %v456 = vunpack.c.l.b16 %v182
      %v457 = vunpack.c.h.b16 %v182
      %v458 = vunpack.c.l.b16 %v183
      %v459 = vunpack.c.l.b16 %v184
      %v460 = vunpack.c.h.b16 %v184
      %v461 = vunpack.c.l.b16 %v185
      %v462 = vunpack.c.h.b16 %v185
      %v463 = vunpack.c.l.b16 %v186
      %v464 = vunpack.c.l.b16 %v187
      %v465 = vunpack.c.h.b16 %v187
      %v466 = vunpack.c.l.b16 %v188
      %v467 = vunpack.c.h.b16 %v188
      %v468 = vunpack.c.l.b16 %v189
      %v469 = vunpack.c.l.b16 %v190
      %v470 = vunpack.c.h.b16 %v190
      %v471 = vunpack.c.l.b16 %v191
      %v472 = vunpack.c.h.b16 %v191
      %v473 = vunpack.c.l.b16 %v192
      %v474 = vunpack.c.l.b16 %v193
      %v475 = vunpack.c.h.b16 %v193
      %v476 = vunpack.c.l.b16 %v194
      %v477 = vunpack.c.h.b16 %v194
      %v478 = vunpack.c.l.b16 %v195
      %v479 = vunpack.c.l.b16 %v196
      %v480 = vunpack.c.h.b16 %v196
      %v481 = vunpack.c.l.b16 %v197
      %v482 = vunpack.c.h.b16 %v197
      %v483 = vunpack.c.l.b16 %v198
      %v484 = vunpack.c.l.b16 %v199
      %v485 = vunpack.c.h.b16 %v199
      %v486 = vunpack.c.l.b16 %v200
      %v487 = vunpack.c.h.b16 %v200
      %v488 = vunpack.c.l.b16 %v201
      %v489 = vunpack.c.l.b16 %v202
      %v490 = vunpack.c.h.b16 %v202
      %v491 = vunpack.c.l.b16 %v203
      %v492 = vunpack.c.h.b16 %v203
      %v493 = vunpack.c.l.b16 %v204
      %v494 = vunpack.c.l.b16 %v205
      %v495 = vunpack.c.h.b16 %v205
      %v496 = vunpack.c.l.b16 %v206
      %v497 = vunpack.c.h.b16 %v206
      %v498 = vunpack.c.l.b16 %v207
      %v499 = vunpack.c.l.b16 %v208
      %v500 = vunpack.c.h.b16 %v208
      %v501 = vunpack.c.l.b16 %v209
      %v502 = vunpack.c.h.b16 %v209
      %v503 = vunpack.c.l.b16 %v210
      %v504 = vunpack.c.l.b16 %v211
      %v505 = vunpack.c.h.b16 %v211
      %v506 = vunpack.c.l.b16 %v212
      %v507 = vunpack.c.h.b16 %v212
      %v508 = vunpack.c.l.b16 %v213
      %v509 = vunpack.c.l.b16 %v214
      %v510 = vunpack.c.h.b16 %v214
      %v511 = vunpack.c.l.b16 %v215
      %v512 = vunpack.c.h.b16 %v215
      %v513 = vunpack.c.l.b16 %v216
      %v514 = vunpack.c.l.b16 %v217
      %v515 = vunpack.c.h.b16 %v217
      %v516 = vunpack.c.l.b16 %v218
      %v517 = vunpack.c.h.b16 %v218
      %v518 = vunpack.c.l.b16 %v219
      %v519 = vunpack.c.l.b16 %v220
      %v520 = vunpack.c.h.b16 %v220
      %v521 = vunpack.c.l.b16 %v221
      %v522 = vunpack.c.h.b16 %v221
      %v523 = vunpack.c.l.b16 %v222
      %v524 = vunpack.c.l.b16 %v223
      %v525 = vunpack.c.h.b16 %v223
      %v526 = vunpack.c.l.b16 %v224
      %v527 = vunpack.c.h.b16 %v224
      %v528 = vunpack.c.l.b16 %v225
      %v529 = vunpack.c.l.b16 %v226
      %v530 = vunpack.c.h.b16 %v226
      %v531 = vunpack.c.l.b16 %v227
      %v532 = vunpack.c.h.b16 %v227
      %v533 = vunpack.c.l.b16 %v228
      %v534 = vunpack.c.l.b16 %v229
      %v535 = vunpack.c.h.b16 %v229
      %v536 = vunpack.c.l.b16 %v230
      %v537 = vunpack.c.h.b16 %v230
      %v538 = vunpack.c.l.b16 %v231
      %v539 = vunpack.c.l.b16 %v232
      %v540 = vunpack.c.h.b16 %v232
      %v541 = vunpack.c.l.b16 %v233
      %v542 = vunpack.c.h.b16 %v233
      %v543 = vunpack.c.l.b16 %v234
      %v544 = vunpack.c.l.b16 %v235
      %v545 = vunpack.c.h.b16 %v235
      %v546 = vunpack.c.l.b16 %v236
      %v547 = vunpack.c.h.b16 %v236
      %v548 = vunpack.c.l.b16 %v237
      %v549 = vunpack.c.l.b16 %v238
      %v550 = vunpack.c.h.b16 %v238
      %v551 = vunpack.c.l.b16 %v239
      %v552 = vunpack.c.h.b16 %v239
      %v553 = vunpack.c.l.b16 %v240
      %v554 = vunpack.c.l.b16 %v241
      %v555 = vunpack.c.h.b16 %v241
      %v556 = vunpack.c.l.b16 %v242
      %v557 = vunpack.c.h.b16 %v242
      %v558 = vunpack.c.l.b16 %v243
      %v559 = vunpack.c.l.b16 %v244
      %v560 = vunpack.c.h.b16 %v244
      %v561 = vunpack.c.l.b16 %v245
      %v562 = vunpack.c.h.b16 %v245
      %v563 = vunpack.c.l.b16 %v246
      %v564 = vunpack.c.l.b16 %v247
      %v565 = vunpack.c.h.b16 %v247
      %v566 = vunpack.c.l.b16 %v248
      %v567 = vunpack.c.h.b16 %v248
      %v568 = vunpack.c.l.b16 %v249
      %v569 = vunpack.c.l.b16 %v250
      %v570 = vunpack.c.h.b16 %v250
      %v571 = vunpack.c.l.b16 %v251
      %v572 = vunpack.c.h.b16 %v251
      %v573 = vunpack.c.l.b16 %v252
      %v574 = vunpack.c.l.b16 %v253
      %v575 = vunpack.c.h.b16 %v253
      %v576 = vunpack.c.l.b16 %v254
      %v577 = vunpack.c.h.b16 %v254
      %v578 = vunpack.c.l.b16 %v255
      %v579 = vunpack.c.l.b16 %v256
      %v580 = vunpack.c.h.b16 %v256
      %v581 = vunpack.c.l.b16 %v257
      %v582 = vunpack.c.h.b16 %v257
      %v583 = vunpack.c.l.b16 %v258
      %v584 = vunpack.c.l.b16 %v259
      %v585 = vunpack.c.h.b16 %v259
      %v586 = vunpack.c.l.b16 %v260
      %v587 = vunpack.c.h.b16 %v260
      %v588 = vunpack.c.l.b16 %v261
      %v589 = vunpack.c.l.b16 %v262
      %v590 = vunpack.c.h.b16 %v262
      %v591 = vunpack.c.l.b16 %v263
      %v592 = vunpack.c.h.b16 %v263
      %v593 = vunpack.c.l.b16 %v264
      %v594 = vunpack.c.l.b16 %v265
      %v595 = vunpack.c.h.b16 %v265
      %v596 = vunpack.c.l.b16 %v266
      %v597 = vunpack.c.h.b16 %v266
      %v598 = vunpack.c.l.b16 %v267
      %v599 = vunpack.c.l.b16 %v268
      %v600 = vunpack.c.h.b16 %v268
      %v601 = vunpack.c.l.b16 %v269
      %v602 = vunpack.c.h.b16 %v269
      %v603 = vunpack.c.l.b16 %v270
      %v604 = vunpack.c.l.b16 %v271
      %v605 = vunpack.c.h.b16 %v271
      %v606 = vunpack.c.l.b16 %v272
      %v607 = vunpack.c.h.b16 %v272
      %v608 = vunpack.c.l.b16 %v273
      %v609 = vpack.c.b16 %v454, %v449
      %v610 = vpack.c.b16 %v455, %v450
      %v611 = vpack.c.b16 %v456, %v451
      %v612 = vpack.c.b16 %v457, %v452
      %v613 = vpack.c.b16 %v458, %v453
      %v614 = vpack.c.b16 %v464, %v459
      %v615 = vpack.c.b16 %v465, %v460
      %v616 = vpack.c.b16 %v466, %v461
      %v617 = vpack.c.b16 %v467, %v462
      %v618 = vpack.c.b16 %v468, %v463
      %v619 = vpack.c.b16 %v474, %v469
      %v620 = vpack.c.b16 %v475, %v470
      %v621 = vpack.c.b16 %v476, %v471
      %v622 = vpack.c.b16 %v477, %v472
      %v623 = vpack.c.b16 %v478, %v473
      %v624 = vpack.c.b16 %v484, %v479
      %v625 = vpack.c.b16 %v485, %v480
      %v626 = vpack.c.b16 %v486, %v481
      %v627 = vpack.c.b16 %v487, %v482
      %v628 = vpack.c.b16 %v488, %v483
      %v629 = vpack.c.b16 %v494, %v489
      %v630 = vpack.c.b16 %v495, %v490
      %v631 = vpack.c.b16 %v496, %v491
      %v632 = vpack.c.b16 %v497, %v492
      %v633 = vpack.c.b16 %v498, %v493
      %v634 = vpack.c.b16 %v504, %v499
      %v635 = vpack.c.b16 %v505, %v500
      %v636 = vpack.c.b16 %v506, %v501
      %v637 = vpack.c.b16 %v507, %v502
      %v638 = vpack.c.b16 %v508, %v503
      %v639 = vpack.c.b16 %v514, %v509
      %v640 = vpack.c.b16 %v515, %v510
      %v641 = vpack.c.b16 %v516, %v511
      %v642 = vpack.c.b16 %v517, %v512
      %v643 = vpack.c.b16 %v518, %v513
      %v644 = vpack.c.b16 %v524, %v519
      %v645 = vpack.c.b16 %v525, %v520
      %v646 = vpack.c.b16 %v526, %v521
      %v647 = vpack.c.b16 %v527, %v522
      %v648 = vpack.c.b16 %v528, %v523
      %v649 = vpack.c.b16 %v534, %v529
      %v650 = vpack.c.b16 %v535, %v530
      %v651 = vpack.c.b16 %v536, %v531
      %v652 = vpack.c.b16 %v537, %v532
      %v653 = vpack.c.b16 %v538, %v533
      %v654 = vpack.c.b16 %v544, %v539
      %v655 = vpack.c.b16 %v545, %v540
      %v656 = vpack.c.b16 %v546, %v541
      %v657 = vpack.c.b16 %v547, %v542
      %v658 = vpack.c.b16 %v548, %v543
      %v659 = vpack.c.b16 %v554, %v549
      %v660 = vpack.c.b16 %v555, %v550
      %v661 = vpack.c.b16 %v556, %v551
      %v662 = vpack.c.b16 %v557, %v552
      %v663 = vpack.c.b16 %v558, %v553
      %v664 = vpack.c.b16 %v564, %v559
      %v665 = vpack.c.b16 %v565, %v560
      %v666 = vpack.c.b16 %v566, %v561
      %v667 = vpack.c.b16 %v567, %v562
      %v668 = vpack.c.b16 %v568, %v563
      %v669 = vpack.c.b16 %v574, %v569
      %v670 = vpack.c.b16 %v575, %v570
      %v671 = vpack.c.b16 %v576, %v571
      %v672 = vpack.c.b16 %v577, %v572
      %v673 = vpack.c.b16 %v578, %v573
      %v674 = vpack.c.b16 %v584, %v579
      %v675 = vpack.c.b16 %v585, %v580
      %v676 = vpack.c.b16 %v586, %v581
      %v677 = vpack.c.b16 %v587, %v582
      %v678 = vpack.c.b16 %v588, %v583
      %v679 = vpack.c.b16 %v594, %v589
      %v680 = vpack.c.b16 %v595, %v590
      %v681 = vpack.c.b16 %v596, %v591
      %v682 = vpack.c.b16 %v597, %v592
      %v683 = vpack.c.b16 %v598, %v593
      %v684 = vpack.c.b16 %v604, %v599
      %v685 = vpack.c.b16 %v605, %v600
      %v686 = vpack.c.b16 %v606, %v601
      %v687 = vpack.c.b16 %v607, %v602
      %v688 = vpack.c.b16 %v608, %v603
      %v825 = vunpack.c.l.b16 %v274
      %v826 = vunpack.c.l.b16 %v275
      %v827 = vunpack.c.l.b16 %v276
      %v828 = vunpack.c.l.b16 %v277
      %v829 = vunpack.c.l.b16 %v278
      %v830 = vunpack.c.l.b16 %v279
      %v831 = vunpack.c.l.b16 %v280
      %v832 = vunpack.c.l.b16 %v281
      %v833 = vunpack.c.l.b16 %v282
      %v834 = vunpack.c.l.b16 %v283
      %v835 = vunpack.c.l.b16 %v284
      %v836 = vunpack.c.l.b16 %v285
      %v837 = vunpack.c.l.b16 %v286
      %v838 = vunpack.c.l.b16 %v287
      %v839 = vunpack.c.l.b16 %v288
      %v840 = vunpack.c.l.b16 %v289
      %v841 = vunpack.c.l.b16 %v290
      %v842 = vunpack.c.l.b16 %v291
      %v843 = vunpack.c.l.b16 %v292
      %v844 = vunpack.c.l.b16 %v293
      %v845 = vunpack.c.l.b16 %v294
      %v846 = vunpack.c.l.b16 %v295
      %v847 = vunpack.c.l.b16 %v296
      %v848 = vunpack.c.l.b16 %v297
      %v849 = vunpack.c.l.b16 %v298
      %v850 = vunpack.c.l.b16 %v299
      %v851 = vunpack.c.l.b16 %v300
      %v852 = vunpack.c.l.b16 %v301
      %v853 = vunpack.c.l.b16 %v302
      %v854 = vunpack.c.l.b16 %v303
      %v855 = vunpack.c.l.b16 %v304
      %v856 = vunpack.c.l.b16 %v305
      %v857 = vunpack.c.l.b16 %v306
      %v858 = vunpack.c.l.b16 %v307
      %v859 = vunpack.c.l.b16 %v308
      %v860 = vunpack.c.l.b16 %v309
      %v861 = vunpack.c.l.b16 %v310
      %v862 = vunpack.c.l.b16 %v311
      %v863 = vunpack.c.l.b16 %v312
      %v864 = vunpack.c.l.b16 %v313
      %v865 = vunpack.c.l.b16 %v314
      %v866 = vunpack.c.l.b16 %v315
      %v867 = vunpack.c.l.b16 %v316
      %v868 = vunpack.c.l.b16 %v317
      %v869 = vunpack.c.l.b16 %v318
      %v870 = vunpack.c.l.b16 %v319
      %v871 = vunpack.c.l.b16 %v320
      %v872 = vunpack.c.l.b16 %v321
      %v873 = vunpack.c.l.b16 %v322
      %v874 = vunpack.c.l.b16 %v323
      %v875 = vunpack.c.l.b16 %v324
      %v876 = vunpack.c.l.b16 %v325
      %v877 = vunpack.c.l.b16 %v326
      %v878 = vunpack.c.l.b16 %v327
      %v879 = vunpack.c.l.b16 %v328
      %v880 = vunpack.c.l.b16 %v329
      %v881 = vunpack.c.l.b16 %v330
      %v882 = vunpack.c.l.b16 %v331
      %v883 = vunpack.c.l.b16 %v332
      %v884 = vunpack.c.l.b16 %v333
      %v885 = vunpack.c.l.b16 %v334
      %v886 = vunpack.c.l.b16 %v335
      %v887 = vunpack.c.l.b16 %v336
      %v888 = vunpack.c.l.b16 %v337
      %v889 = vunpack.c.l.b16 %v338
      %v890 = vunpack.c.l.b16 %v339
      %v891 = vunpack.c.l.b16 %v340
      %v892 = vunpack.c.l.b16 %v341
      %v893 = vunpack.c.l.b16 %v342
      %v894 = vunpack.c.l.b16 %v343
      %v895 = vunpack.c.l.b16 %v344
      %v896 = vunpack.c.l.b16 %v345
      %v897 = vpack.c.b16 %v826, %v825
      %v898 = vpack.c.b16 %v828, %v827
      %v899 = vpack.c.b16 %v830, %v829
      %v900 = vpack.c.b16 %v832, %v831
      %v901 = vpack.c.b16 %v834, %v833
      %v902 = vpack.c.b16 %v836, %v835
      %v903 = vpack.c.b16 %v838, %v837
      %v904 = vpack.c.b16 %v840, %v839
      %v905 = vpack.c.b16 %v842, %v841
      %v906 = vpack.c.b16 %v844, %v843
      %v907 = vpack.c.b16 %v846, %v845
      %v908 = vpack.c.b16 %v848, %v847
      %v909 = vpack.c.b16 %v850, %v849
      %v910 = vpack.c.b16 %v852, %v851
      %v911 = vpack.c.b16 %v854, %v853
      %v912 = vpack.c.b16 %v856, %v855
      %v913 = vpack.c.b16 %v858, %v857
      %v914 = vpack.c.b16 %v860, %v859
      %v915 = vpack.c.b16 %v862, %v861
      %v916 = vpack.c.b16 %v864, %v863
      %v917 = vpack.c.b16 %v866, %v865
      %v918 = vpack.c.b16 %v868, %v867
      %v919 = vpack.c.b16 %v870, %v869
      %v920 = vpack.c.b16 %v872, %v871
      %v921 = vpack.c.b16 %v874, %v873
      %v922 = vpack.c.b16 %v876, %v875
      %v923 = vpack.c.b16 %v878, %v877
      %v924 = vpack.c.b16 %v880, %v879
      %v925 = vpack.c.b16 %v882, %v881
      %v926 = vpack.c.b16 %v884, %v883
      %v927 = vpack.c.b16 %v886, %v885
      %v928 = vpack.c.b16 %v888, %v887
      %v929 = vpack.c.b16 %v890, %v889
      %v930 = vpack.c.b16 %v892, %v891
      %v931 = vpack.c.b16 %v894, %v893
      %v932 = vpack.c.b16 %v896, %v895
      %vm969 = vcmask 523264
      %v971 = vsel %vm969, %v613, 0
      %v974 = vsel %vm969, %v618, 0
      %v977 = vsel %vm969, %v623, 0
      %v980 = vsel %vm969, %v628, 0
      %v983 = vsel %vm969, %v633, 0
      %v986 = vsel %vm969, %v638, 0
      %v989 = vsel %vm969, %v643, 0
      %v992 = vsel %vm969, %v648, 0
      %v995 = vsel %vm969, %v653, 0
      %v998 = vsel %vm969, %v658, 0
      %v1001 = vsel %vm969, %v663, 0
      %v1004 = vsel %vm969, %v668, 0
      %v1007 = vsel %vm969, %v673, 0
      %v1010 = vsel %vm969, %v678, 0
      %v1013 = vsel %vm969, %v683, 0
      %v1016 = vsel %vm969, %v688, 0
      %1018 = vmatprep.subr.bf16.mxu0 0
      %1019 = vmatpush1.bf16.msra.mxu0 %v897
      %1020 = vmatprep.subr.bf16.mxu0 0
      %1021 = vmatpush1.bf16.msra.mxu0 %v898
      %1022 = vmatprep.subr.bf16.mxu0 0
      %1023 = vmatpush1.bf16.msra.mxu0 %v899
      %1024 = vmatprep.subr.bf16.mxu0 0
      %1025 = vmatpush1.bf16.msra.mxu0 %v900
      %1026 = vmatprep.subr.bf16.mxu0 0
      %1027 = vmatpush1.bf16.msra.mxu0 %v901
      %1028 = vmatprep.subr.bf16.mxu0 0
      %1029 = vmatpush1.bf16.msra.mxu0 %v902
      %1030 = vmatprep.subr.bf16.mxu0 0
      %1031 = vmatpush1.bf16.msra.mxu0 %v903
      %1032 = vmatprep.subr.bf16.mxu0 0
      %1033 = vmatpush1.bf16.msra.mxu0 %v904
      %1034 = vmatprep.subr.bf16.mxu0 0
      %1035 = vmatpush1.bf16.msra.mxu0 %v905
      %1036 = vmatprep.subr.bf16.mxu0 0
      %1037 = vmatpush1.bf16.msra.mxu0 %v906
      %1038 = vmatprep.subr.bf16.mxu0 0
      %1039 = vmatpush1.bf16.msra.mxu0 %v907
      %1040 = vmatprep.subr.bf16.mxu0 0
      %1041 = vmatpush1.bf16.msra.mxu0 %v908
      %1042 = vmatprep.subr.bf16.mxu0 0
      %1043 = vmatpush1.bf16.msra.mxu0 %v909
      %1044 = vmatprep.subr.bf16.mxu0 0
      %1045 = vmatpush1.bf16.msra.mxu0 %v910
      %1046 = vmatprep.subr.bf16.mxu0 0
      %1047 = vmatpush1.bf16.msra.mxu0 %v911
      %1048 = vmatprep.subr.bf16.mxu0 0
      %1049 = vmatpush1.bf16.msra.mxu0 %v912
      %1050 = vmatprep.mubr.bf16.mxu0 %v610
      %1051 = vmatmul.mubr.bf16.gmra.mrb[0].mxu0 %v609
      %v1052 = vpop.f32.mrb[0].mxu0
      %v1053 = vadd.f32 %v351, %v1052
      %v1054 = vpop.f32.mrb[0].mxu0
      %v1055 = vpop.f32.mrb[0].mxu0
      %v1056 = vadd.f32 %v351, %v1055
      %v1057 = vpop.f32.mrb[0].mxu0
      %1058 = vmatprep.mubr.bf16.mxu0 %v615
      %1059 = vmatmul.mubr.bf16.gmra.mrb[0].mxu0 %v614
      %v1060 = vpop.f32.mrb[0].mxu0
      %v1061 = vadd.f32 %v351, %v1060
      %v1062 = vpop.f32.mrb[0].mxu0
      %v1063 = vpop.f32.mrb[0].mxu0
      %v1064 = vadd.f32 %v351, %v1063
      %v1065 = vpop.f32.mrb[0].mxu0
      %1066 = vmatprep.mubr.bf16.mxu0 %v620
      %1067 = vmatmul.mubr.bf16.gmra.mrb[0].mxu0 %v619
      %v1068 = vpop.f32.mrb[0].mxu0
      %v1069 = vadd.f32 %v351, %v1068
      %v1070 = vpop.f32.mrb[0].mxu0
      %v1071 = vpop.f32.mrb[0].mxu0
      %v1072 = vadd.f32 %v351, %v1071
      %v1073 = vpop.f32.mrb[0].mxu0
      %1074 = vmatprep.mubr.bf16.mxu0 %v625
      %1075 = vmatmul.mubr.bf16.gmra.mrb[0].mxu0 %v624
      %v1076 = vpop.f32.mrb[0].mxu0
      %v1077 = vadd.f32 %v351, %v1076
      %v1078 = vpop.f32.mrb[0].mxu0
      %v1079 = vpop.f32.mrb[0].mxu0
      %v1080 = vadd.f32 %v351, %v1079
      %v1081 = vpop.f32.mrb[0].mxu0
      %1082 = vmatprep.mubr.bf16.mxu0 %v630
      %1083 = vmatmul.mubr.bf16.gmra.mrb[0].mxu0 %v629
      %v1084 = vpop.f32.mrb[0].mxu0
      %v1085 = vadd.f32 %v351, %v1084
      %v1086 = vpop.f32.mrb[0].mxu0
      %v1087 = vpop.f32.mrb[0].mxu0
      %v1088 = vadd.f32 %v351, %v1087
      %v1089 = vpop.f32.mrb[0].mxu0
      %1090 = vmatprep.mubr.bf16.mxu0 %v635
      %1091 = vmatmul.mubr.bf16.gmra.mrb[0].mxu0 %v634
      %v1092 = vpop.f32.mrb[0].mxu0
      %v1093 = vadd.f32 %v351, %v1092
      %v1094 = vpop.f32.mrb[0].mxu0
      %v1095 = vpop.f32.mrb[0].mxu0
      %v1096 = vadd.f32 %v351, %v1095
      %v1097 = vpop.f32.mrb[0].mxu0
      %1098 = vmatprep.mubr.bf16.mxu0 %v640
      %1099 = vmatmul.mubr.bf16.gmra.mrb[0].mxu0 %v639
      %v1100 = vpop.f32.mrb[0].mxu0
      %v1101 = vadd.f32 %v351, %v1100
      %v1102 = vpop.f32.mrb[0].mxu0
      %v1103 = vpop.f32.mrb[0].mxu0
      %v1104 = vadd.f32 %v351, %v1103
      %v1105 = vpop.f32.mrb[0].mxu0
      %1106 = vmatprep.mubr.bf16.mxu0 %v645
      %1107 = vmatmul.mubr.bf16.gmra.mrb[0].mxu0 %v644
      %v1108 = vpop.f32.mrb[0].mxu0
      %v1109 = vadd.f32 %v351, %v1108
      %v1110 = vpop.f32.mrb[0].mxu0
      %v1111 = vpop.f32.mrb[0].mxu0
      %v1112 = vadd.f32 %v351, %v1111
      %v1113 = vpop.f32.mrb[0].mxu0
      %1114 = vmatprep.mubr.bf16.mxu0 %v650
      %1115 = vmatmul.mubr.bf16.gmra.mrb[0].mxu0 %v649
      %v1116 = vpop.f32.mrb[0].mxu0
      %v1117 = vadd.f32 %v351, %v1116
      %v1118 = vpop.f32.mrb[0].mxu0
      %v1119 = vpop.f32.mrb[0].mxu0
      %v1120 = vadd.f32 %v351, %v1119
      %v1121 = vpop.f32.mrb[0].mxu0
      %1122 = vmatprep.mubr.bf16.mxu0 %v655
      %1123 = vmatmul.mubr.bf16.gmra.mrb[0].mxu0 %v654
      %v1124 = vpop.f32.mrb[0].mxu0
      %v1125 = vadd.f32 %v351, %v1124
      %v1126 = vpop.f32.mrb[0].mxu0
      %v1127 = vpop.f32.mrb[0].mxu0
      %v1128 = vadd.f32 %v351, %v1127
      %v1129 = vpop.f32.mrb[0].mxu0
      %1130 = vmatprep.mubr.bf16.mxu0 %v660
      %1131 = vmatmul.mubr.bf16.gmra.mrb[0].mxu0 %v659
      %v1132 = vpop.f32.mrb[0].mxu0
      %v1133 = vadd.f32 %v351, %v1132
      %v1134 = vpop.f32.mrb[0].mxu0
      %v1135 = vpop.f32.mrb[0].mxu0
      %v1136 = vadd.f32 %v351, %v1135
      %v1137 = vpop.f32.mrb[0].mxu0
      %1138 = vmatprep.mubr.bf16.mxu0 %v665
      %1139 = vmatmul.mubr.bf16.gmra.mrb[0].mxu0 %v664
      %v1140 = vpop.f32.mrb[0].mxu0
      %v1141 = vadd.f32 %v351, %v1140
      %v1142 = vpop.f32.mrb[0].mxu0
      %v1143 = vpop.f32.mrb[0].mxu0
      %v1144 = vadd.f32 %v351, %v1143
      %v1145 = vpop.f32.mrb[0].mxu0
      %1146 = vmatprep.mubr.bf16.mxu0 %v670
      %1147 = vmatmul.mubr.bf16.gmra.mrb[0].mxu0 %v669
      %v1148 = vpop.f32.mrb[0].mxu0
      %v1149 = vadd.f32 %v351, %v1148
      %v1150 = vpop.f32.mrb[0].mxu0
      %v1151 = vpop.f32.mrb[0].mxu0
      %v1152 = vadd.f32 %v351, %v1151
      %v1153 = vpop.f32.mrb[0].mxu0
      %1154 = vmatprep.mubr.bf16.mxu0 %v675
      %1155 = vmatmul.mubr.bf16.gmra.mrb[0].mxu0 %v674
      %v1156 = vpop.f32.mrb[0].mxu0
      %v1157 = vadd.f32 %v351, %v1156
      %v1158 = vpop.f32.mrb[0].mxu0
      %v1159 = vpop.f32.mrb[0].mxu0
      %v1160 = vadd.f32 %v351, %v1159
      %v1161 = vpop.f32.mrb[0].mxu0
      %1162 = vmatprep.mubr.bf16.mxu0 %v680
      %1163 = vmatmul.mubr.bf16.gmra.mrb[0].mxu0 %v679
      %v1164 = vpop.f32.mrb[0].mxu0
      %v1165 = vadd.f32 %v351, %v1164
      %v1166 = vpop.f32.mrb[0].mxu0
      %v1167 = vpop.f32.mrb[0].mxu0
      %v1168 = vadd.f32 %v351, %v1167
      %v1169 = vpop.f32.mrb[0].mxu0
      %1170 = vmatprep.mubr.bf16.mxu0 %v685
      %1171 = vmatmul.mubr.bf16.gmra.mrb[0].mxu0 %v684
      %v1172 = vpop.f32.mrb[0].mxu0
      %v1173 = vadd.f32 %v351, %v1172
      %v1174 = vpop.f32.mrb[0].mxu0
      %v1175 = vpop.f32.mrb[0].mxu0
      %v1176 = vadd.f32 %v351, %v1175
      %v1177 = vpop.f32.mrb[0].mxu0
      %1178 = vdwg.mxu0
      %1179 = vmatprep.subr.bf16.mxu0 0
      %1180 = vmatpush1.bf16.msra.mxu0 %v913
      %1181 = vmatprep.subr.bf16.mxu0 0
      %1182 = vmatpush1.bf16.msra.mxu0 %v914
      %1183 = vmatprep.subr.bf16.mxu0 0
      %1184 = vmatpush1.bf16.msra.mxu0 %v915
      %1185 = vmatprep.subr.bf16.mxu0 0
      %1186 = vmatpush1.bf16.msra.mxu0 %v916
      %1187 = vmatprep.subr.bf16.mxu0 0
      %1188 = vmatpush1.bf16.msra.mxu0 %v917
      %1189 = vmatprep.subr.bf16.mxu0 0
      %1190 = vmatpush1.bf16.msra.mxu0 %v918
      %1191 = vmatprep.subr.bf16.mxu0 0
      %1192 = vmatpush1.bf16.msra.mxu0 %v919
      %1193 = vmatprep.subr.bf16.mxu0 0
      %1194 = vmatpush1.bf16.msra.mxu0 %v920
      %1195 = vmatprep.subr.bf16.mxu0 0
      %1196 = vmatpush1.bf16.msra.mxu0 %v921
      %1197 = vmatprep.subr.bf16.mxu0 0
      %1198 = vmatpush1.bf16.msra.mxu0 %v922
      %1199 = vmatprep.subr.bf16.mxu0 0
      %1200 = vmatpush1.bf16.msra.mxu0 %v923
      %1201 = vmatprep.subr.bf16.mxu0 0
      %1202 = vmatpush1.bf16.msra.mxu0 %v924
      %1203 = vmatprep.subr.bf16.mxu0 0
      %1204 = vmatpush1.bf16.msra.mxu0 %v925
      %1205 = vmatprep.subr.bf16.mxu0 0
      %1206 = vmatpush1.bf16.msra.mxu0 %v926
      %1207 = vmatprep.subr.bf16.mxu0 0
      %1208 = vmatpush1.bf16.msra.mxu0 %v927
      %1209 = vmatprep.subr.bf16.mxu0 0
      %1210 = vmatpush1.bf16.msra.mxu0 %v928
      %1211 = vmatprep.mubr.bf16.mxu0 %v612
      %1212 = vmatmul.mubr.bf16.gmra.mrb[0].mxu0 %v611
      %v1213 = vpop.f32.mrb[0].mxu0
      %v1214 = vadd.f32 %v1053, %v1213
      %v1215 = vpop.f32.mrb[0].mxu0
      %v1216 = vpop.f32.mrb[0].mxu0
      %v1217 = vadd.f32 %v1056, %v1216
      %v1218 = vpop.f32.mrb[0].mxu0
      %1219 = vmatprep.mubr.bf16.mxu0 %v617
      %1220 = vmatmul.mubr.bf16.gmra.mrb[0].mxu0 %v616
      %v1221 = vpop.f32.mrb[0].mxu0
      %v1222 = vadd.f32 %v1061, %v1221
      %v1223 = vpop.f32.mrb[0].mxu0
      %v1224 = vpop.f32.mrb[0].mxu0
      %v1225 = vadd.f32 %v1064, %v1224
      %v1226 = vpop.f32.mrb[0].mxu0
      %1227 = vmatprep.mubr.bf16.mxu0 %v622
      %1228 = vmatmul.mubr.bf16.gmra.mrb[0].mxu0 %v621
      %v1229 = vpop.f32.mrb[0].mxu0
      %v1230 = vadd.f32 %v1069, %v1229
      %v1231 = vpop.f32.mrb[0].mxu0
      %v1232 = vpop.f32.mrb[0].mxu0
      %v1233 = vadd.f32 %v1072, %v1232
      %v1234 = vpop.f32.mrb[0].mxu0
      %1235 = vmatprep.mubr.bf16.mxu0 %v627
      %1236 = vmatmul.mubr.bf16.gmra.mrb[0].mxu0 %v626
      %v1237 = vpop.f32.mrb[0].mxu0
      %v1238 = vadd.f32 %v1077, %v1237
      %v1239 = vpop.f32.mrb[0].mxu0
      %v1240 = vpop.f32.mrb[0].mxu0
      %v1241 = vadd.f32 %v1080, %v1240
      %v1242 = vpop.f32.mrb[0].mxu0
      %1243 = vmatprep.mubr.bf16.mxu0 %v632
      %1244 = vmatmul.mubr.bf16.gmra.mrb[0].mxu0 %v631
      %v1245 = vpop.f32.mrb[0].mxu0
      %v1246 = vadd.f32 %v1085, %v1245
      %v1247 = vpop.f32.mrb[0].mxu0
      %v1248 = vpop.f32.mrb[0].mxu0
      %v1249 = vadd.f32 %v1088, %v1248
      %v1250 = vpop.f32.mrb[0].mxu0
      %1251 = vmatprep.mubr.bf16.mxu0 %v637
      %1252 = vmatmul.mubr.bf16.gmra.mrb[0].mxu0 %v636
      %v1253 = vpop.f32.mrb[0].mxu0
      %v1254 = vadd.f32 %v1093, %v1253
      %v1255 = vpop.f32.mrb[0].mxu0
      %v1256 = vpop.f32.mrb[0].mxu0
      %v1257 = vadd.f32 %v1096, %v1256
      %v1258 = vpop.f32.mrb[0].mxu0
      %1259 = vmatprep.mubr.bf16.mxu0 %v642
      %1260 = vmatmul.mubr.bf16.gmra.mrb[0].mxu0 %v641
      %v1261 = vpop.f32.mrb[0].mxu0
      %v1262 = vadd.f32 %v1101, %v1261
      %v1263 = vpop.f32.mrb[0].mxu0
      %v1264 = vpop.f32.mrb[0].mxu0
      %v1265 = vadd.f32 %v1104, %v1264
      %v1266 = vpop.f32.mrb[0].mxu0
      %1267 = vmatprep.mubr.bf16.mxu0 %v647
      %1268 = vmatmul.mubr.bf16.gmra.mrb[0].mxu0 %v646
      %v1269 = vpop.f32.mrb[0].mxu0
      %v1270 = vadd.f32 %v1109, %v1269
      %v1271 = vpop.f32.mrb[0].mxu0
      %v1272 = vpop.f32.mrb[0].mxu0
      %v1273 = vadd.f32 %v1112, %v1272
      %v1274 = vpop.f32.mrb[0].mxu0
      %1275 = vmatprep.mubr.bf16.mxu0 %v652
      %1276 = vmatmul.mubr.bf16.gmra.mrb[0].mxu0 %v651
      %v1277 = vpop.f32.mrb[0].mxu0
      %v1278 = vadd.f32 %v1117, %v1277
      %v1279 = vpop.f32.mrb[0].mxu0
      %v1280 = vpop.f32.mrb[0].mxu0
      %v1281 = vadd.f32 %v1120, %v1280
      %v1282 = vpop.f32.mrb[0].mxu0
      %1283 = vmatprep.mubr.bf16.mxu0 %v657
      %1284 = vmatmul.mubr.bf16.gmra.mrb[0].mxu0 %v656
      %v1285 = vpop.f32.mrb[0].mxu0
      %v1286 = vadd.f32 %v1125, %v1285
      %v1287 = vpop.f32.mrb[0].mxu0
      %v1288 = vpop.f32.mrb[0].mxu0
      %v1289 = vadd.f32 %v1128, %v1288
      %v1290 = vpop.f32.mrb[0].mxu0
      %1291 = vmatprep.mubr.bf16.mxu0 %v662
      %1292 = vmatmul.mubr.bf16.gmra.mrb[0].mxu0 %v661
      %v1293 = vpop.f32.mrb[0].mxu0
      %v1294 = vadd.f32 %v1133, %v1293
      %v1295 = vpop.f32.mrb[0].mxu0
      %v1296 = vpop.f32.mrb[0].mxu0
      %v1297 = vadd.f32 %v1136, %v1296
      %v1298 = vpop.f32.mrb[0].mxu0
      %1299 = vmatprep.mubr.bf16.mxu0 %v667
      %1300 = vmatmul.mubr.bf16.gmra.mrb[0].mxu0 %v666
      %v1301 = vpop.f32.mrb[0].mxu0
      %v1302 = vadd.f32 %v1141, %v1301
      %v1303 = vpop.f32.mrb[0].mxu0
      %v1304 = vpop.f32.mrb[0].mxu0
      %v1305 = vadd.f32 %v1144, %v1304
      %v1306 = vpop.f32.mrb[0].mxu0
      %1307 = vmatprep.mubr.bf16.mxu0 %v672
      %1308 = vmatmul.mubr.bf16.gmra.mrb[0].mxu0 %v671
      %v1309 = vpop.f32.mrb[0].mxu0
      %v1310 = vadd.f32 %v1149, %v1309
      %v1311 = vpop.f32.mrb[0].mxu0
      %v1312 = vpop.f32.mrb[0].mxu0
      %v1313 = vadd.f32 %v1152, %v1312
      %v1314 = vpop.f32.mrb[0].mxu0
      %1315 = vmatprep.mubr.bf16.mxu0 %v677
      %1316 = vmatmul.mubr.bf16.gmra.mrb[0].mxu0 %v676
      %v1317 = vpop.f32.mrb[0].mxu0
      %v1318 = vadd.f32 %v1157, %v1317
      %v1319 = vpop.f32.mrb[0].mxu0
      %v1320 = vpop.f32.mrb[0].mxu0
      %v1321 = vadd.f32 %v1160, %v1320
      %v1322 = vpop.f32.mrb[0].mxu0
      %1323 = vmatprep.mubr.bf16.mxu0 %v682
      %1324 = vmatmul.mubr.bf16.gmra.mrb[0].mxu0 %v681
      %v1325 = vpop.f32.mrb[0].mxu0
      %v1326 = vadd.f32 %v1165, %v1325
      %v1327 = vpop.f32.mrb[0].mxu0
      %v1328 = vpop.f32.mrb[0].mxu0
      %v1329 = vadd.f32 %v1168, %v1328
      %v1330 = vpop.f32.mrb[0].mxu0
      %1331 = vmatprep.mubr.bf16.mxu0 %v687
      %1332 = vmatmul.mubr.bf16.gmra.mrb[0].mxu0 %v686
      %v1333 = vpop.f32.mrb[0].mxu0
      %v1334 = vadd.f32 %v1173, %v1333
      %v1335 = vpop.f32.mrb[0].mxu0
      %v1336 = vpop.f32.mrb[0].mxu0
      %v1337 = vadd.f32 %v1176, %v1336
      %v1338 = vpop.f32.mrb[0].mxu0
      %1339 = vdwg.mxu0
      %1340 = vmatprep.subr.bf16.mxu0 0
      %1341 = vmatpush1.bf16.msra.mxu0 %v929
      %1342 = vmatprep.subr.bf16.mxu0 0
      %1343 = vmatpush1.bf16.msra.mxu0 %v930
      %1344 = vmatprep.subr.bf16.mxu0 0
      %1345 = vmatpush1.bf16.msra.mxu0 %v931
      %1346 = vmatprep.subr.bf16.mxu0 0
      %1347 = vmatpush1.bf16.msra.mxu0 %v932
      %1348 = vmatprep.subr.bf16.mxu0 0
      %1349 = vmatpush1.bf16.msra.mxu0 0
      %1350 = vmatprep.subr.bf16.mxu0 0
      %1351 = vmatpush1.bf16.msra.mxu0 0
      %1352 = vmatprep.subr.bf16.mxu0 0
      %1353 = vmatpush1.bf16.msra.mxu0 0
      %1354 = vmatprep.subr.bf16.mxu0 0
      %1355 = vmatpush1.bf16.msra.mxu0 0
      %1356 = vmatprep.subr.bf16.mxu0 0
      %1357 = vmatpush1.bf16.msra.mxu0 0
      %1358 = vmatprep.subr.bf16.mxu0 0
      %1359 = vmatpush1.bf16.msra.mxu0 0
      %1360 = vmatprep.subr.bf16.mxu0 0
      %1361 = vmatpush1.bf16.msra.mxu0 0
      %1362 = vmatprep.subr.bf16.mxu0 0
      %1363 = vmatpush1.bf16.msra.mxu0 0
      %1364 = vmatprep.subr.bf16.mxu0 0
      %1365 = vmatpush1.bf16.msra.mxu0 0
      %1366 = vmatprep.subr.bf16.mxu0 0
      %1367 = vmatpush1.bf16.msra.mxu0 0
      %1368 = vmatprep.subr.bf16.mxu0 0
      %1369 = vmatpush1.bf16.msra.mxu0 0
      %1370 = vmatprep.subr.bf16.mxu0 0
      %1371 = vmatpush1.bf16.msra.mxu0 0
      %1372 = vmatprep.mubr.bf16.mxu0 0
      %1373 = vmatmul.mubr.bf16.gmra.mrb[0].mxu0 %v971
      %v1374 = vpop.f32.mrb[0].mxu0
      %v1375 = vadd.f32 %v1214, %v1374
      %v1376 = vpop.f32.mrb[0].mxu0
      %v1377 = vpop.f32.mrb[0].mxu0
      %v1378 = vadd.f32 %v1217, %v1377
      %v1379 = vpop.f32.mrb[0].mxu0
      %1380 = vmatprep.mubr.bf16.mxu0 0
      %1381 = vmatmul.mubr.bf16.gmra.mrb[0].mxu0 %v974
      %v1382 = vpop.f32.mrb[0].mxu0
      %v1383 = vadd.f32 %v1222, %v1382
      %v1384 = vpop.f32.mrb[0].mxu0
      %v1385 = vpop.f32.mrb[0].mxu0
      %v1386 = vadd.f32 %v1225, %v1385
      %v1387 = vpop.f32.mrb[0].mxu0
      %1388 = vmatprep.mubr.bf16.mxu0 0
      %1389 = vmatmul.mubr.bf16.gmra.mrb[0].mxu0 %v977
      %v1390 = vpop.f32.mrb[0].mxu0
      %v1391 = vadd.f32 %v1230, %v1390
      %v1392 = vpop.f32.mrb[0].mxu0
      %v1393 = vpop.f32.mrb[0].mxu0
      %v1394 = vadd.f32 %v1233, %v1393
      %v1395 = vpop.f32.mrb[0].mxu0
      %1396 = vmatprep.mubr.bf16.mxu0 0
      %1397 = vmatmul.mubr.bf16.gmra.mrb[0].mxu0 %v980
      %v1398 = vpop.f32.mrb[0].mxu0
      %v1399 = vadd.f32 %v1238, %v1398
      %v1400 = vpop.f32.mrb[0].mxu0
      %v1401 = vpop.f32.mrb[0].mxu0
      %v1402 = vadd.f32 %v1241, %v1401
      %v1403 = vpop.f32.mrb[0].mxu0
      %1404 = vmatprep.mubr.bf16.mxu0 0
      %1405 = vmatmul.mubr.bf16.gmra.mrb[0].mxu0 %v983
      %v1406 = vpop.f32.mrb[0].mxu0
      %v1407 = vadd.f32 %v1246, %v1406
      %v1408 = vpop.f32.mrb[0].mxu0
      %v1409 = vpop.f32.mrb[0].mxu0
      %v1410 = vadd.f32 %v1249, %v1409
      %v1411 = vpop.f32.mrb[0].mxu0
      %1412 = vmatprep.mubr.bf16.mxu0 0
      %1413 = vmatmul.mubr.bf16.gmra.mrb[0].mxu0 %v986
      %v1414 = vpop.f32.mrb[0].mxu0
      %v1415 = vadd.f32 %v1254, %v1414
      %v1416 = vpop.f32.mrb[0].mxu0
      %v1417 = vpop.f32.mrb[0].mxu0
      %v1418 = vadd.f32 %v1257, %v1417
      %v1419 = vpop.f32.mrb[0].mxu0
      %1420 = vmatprep.mubr.bf16.mxu0 0
      %1421 = vmatmul.mubr.bf16.gmra.mrb[0].mxu0 %v989
      %v1422 = vpop.f32.mrb[0].mxu0
      %v1423 = vadd.f32 %v1262, %v1422
      %v1424 = vpop.f32.mrb[0].mxu0
      %v1425 = vpop.f32.mrb[0].mxu0
      %v1426 = vadd.f32 %v1265, %v1425
      %v1427 = vpop.f32.mrb[0].mxu0
      %1428 = vmatprep.mubr.bf16.mxu0 0
      %1429 = vmatmul.mubr.bf16.gmra.mrb[0].mxu0 %v992
      %v1430 = vpop.f32.mrb[0].mxu0
      %v1431 = vadd.f32 %v1270, %v1430
      %v1432 = vpop.f32.mrb[0].mxu0
      %v1433 = vpop.f32.mrb[0].mxu0
      %v1434 = vadd.f32 %v1273, %v1433
      %v1435 = vpop.f32.mrb[0].mxu0
      %1436 = vmatprep.mubr.bf16.mxu0 0
      %1437 = vmatmul.mubr.bf16.gmra.mrb[0].mxu0 %v995
      %v1438 = vpop.f32.mrb[0].mxu0
      %v1439 = vadd.f32 %v1278, %v1438
      %v1440 = vpop.f32.mrb[0].mxu0
      %v1441 = vpop.f32.mrb[0].mxu0
      %v1442 = vadd.f32 %v1281, %v1441
      %v1443 = vpop.f32.mrb[0].mxu0
      %1444 = vmatprep.mubr.bf16.mxu0 0
      %1445 = vmatmul.mubr.bf16.gmra.mrb[0].mxu0 %v998
      %v1446 = vpop.f32.mrb[0].mxu0
      %v1447 = vadd.f32 %v1286, %v1446
      %v1448 = vpop.f32.mrb[0].mxu0
      %v1449 = vpop.f32.mrb[0].mxu0
      %v1450 = vadd.f32 %v1289, %v1449
      %v1451 = vpop.f32.mrb[0].mxu0
      %1452 = vmatprep.mubr.bf16.mxu0 0
      %1453 = vmatmul.mubr.bf16.gmra.mrb[0].mxu0 %v1001
      %v1454 = vpop.f32.mrb[0].mxu0
      %v1455 = vadd.f32 %v1294, %v1454
      %v1456 = vpop.f32.mrb[0].mxu0
      %v1457 = vpop.f32.mrb[0].mxu0
      %v1458 = vadd.f32 %v1297, %v1457
      %v1459 = vpop.f32.mrb[0].mxu0
      %1460 = vmatprep.mubr.bf16.mxu0 0
      %1461 = vmatmul.mubr.bf16.gmra.mrb[0].mxu0 %v1004
      %v1462 = vpop.f32.mrb[0].mxu0
      %v1463 = vadd.f32 %v1302, %v1462
      %v1464 = vpop.f32.mrb[0].mxu0
      %v1465 = vpop.f32.mrb[0].mxu0
      %v1466 = vadd.f32 %v1305, %v1465
      %v1467 = vpop.f32.mrb[0].mxu0
      %1468 = vmatprep.mubr.bf16.mxu0 0
      %1469 = vmatmul.mubr.bf16.gmra.mrb[0].mxu0 %v1007
      %v1470 = vpop.f32.mrb[0].mxu0
      %v1471 = vadd.f32 %v1310, %v1470
      %v1472 = vpop.f32.mrb[0].mxu0
      %v1473 = vpop.f32.mrb[0].mxu0
      %v1474 = vadd.f32 %v1313, %v1473
      %v1475 = vpop.f32.mrb[0].mxu0
      %1476 = vmatprep.mubr.bf16.mxu0 0
      %1477 = vmatmul.mubr.bf16.gmra.mrb[0].mxu0 %v1010
      %v1478 = vpop.f32.mrb[0].mxu0
      %v1479 = vadd.f32 %v1318, %v1478
      %v1480 = vpop.f32.mrb[0].mxu0
      %v1481 = vpop.f32.mrb[0].mxu0
      %v1482 = vadd.f32 %v1321, %v1481
      %v1483 = vpop.f32.mrb[0].mxu0
      %1484 = vmatprep.mubr.bf16.mxu0 0
      %1485 = vmatmul.mubr.bf16.gmra.mrb[0].mxu0 %v1013
      %v1486 = vpop.f32.mrb[0].mxu0
      %v1487 = vadd.f32 %v1326, %v1486
      %v1488 = vpop.f32.mrb[0].mxu0
      %v1489 = vpop.f32.mrb[0].mxu0
      %v1490 = vadd.f32 %v1329, %v1489
      %v1491 = vpop.f32.mrb[0].mxu0
      %1492 = vmatprep.mubr.bf16.mxu0 0
      %1493 = vmatmul.mubr.bf16.gmra.mrb[0].mxu0 %v1016
      %v1494 = vpop.f32.mrb[0].mxu0
      %v1495 = vadd.f32 %v1334, %v1494
      %v1496 = vpop.f32.mrb[0].mxu0
      %v1497 = vpop.f32.mrb[0].mxu0
      %v1498 = vadd.f32 %v1337, %v1497
      %v1499 = vpop.f32.mrb[0].mxu0
      %1500 = vdwg.mxu0
      %vm1501 = vcmask 23552
      %1502 = vst.msk [vmem:[%s175] sm:$0xff] %vm1501, %v1375
      %1503 = vst.msk [vmem:[%s175 + $0x8] sm:$0xff] %vm1501, %v1378
      %1504 = vst.msk [vmem:[%s175 + $0x10] sm:$0xff] %vm1501, %v1383
      %1505 = vst.msk [vmem:[%s175 + $0x18] sm:$0xff] %vm1501, %v1386
      %1506 = vst.msk [vmem:[%s175 + $0x20] sm:$0xff] %vm1501, %v1391
      %1507 = vst.msk [vmem:[%s175 + $0x28] sm:$0xff] %vm1501, %v1394
      %1508 = vst.msk [vmem:[%s175 + $0x30] sm:$0xff] %vm1501, %v1399
      %1509 = vst.msk [vmem:[%s175 + $0x38] sm:$0xff] %vm1501, %v1402
      %1510 = vst.msk [vmem:[%s175 + $0x40] sm:$0xff] %vm1501, %v1407
      %1511 = vst.msk [vmem:[%s175 + $0x48] sm:$0xff] %vm1501, %v1410
      %1512 = vst.msk [vmem:[%s175 + $0x50] sm:$0xff] %vm1501, %v1415
      %1513 = vst.msk [vmem:[%s175 + $0x58] sm:$0xff] %vm1501, %v1418
      %1514 = vst.msk [vmem:[%s175 + $0x60] sm:$0xff] %vm1501, %v1423
      %1515 = vst.msk [vmem:[%s175 + $0x68] sm:$0xff] %vm1501, %v1426
      %1516 = vst.msk [vmem:[%s175 + $0x70] sm:$0xff] %vm1501, %v1431
      %1517 = vst.msk [vmem:[%s175 + $0x78] sm:$0xff] %vm1501, %v1434
      %1518 = vst.msk [vmem:[%s175 + $0x80] sm:$0xff] %vm1501, %v1439
      %1519 = vst.msk [vmem:[%s175 + $0x88] sm:$0xff] %vm1501, %v1442
      %1520 = vst.msk [vmem:[%s175 + $0x90] sm:$0xff] %vm1501, %v1447
      %1521 = vst.msk [vmem:[%s175 + $0x98] sm:$0xff] %vm1501, %v1450
      %1522 = vst.msk [vmem:[%s175 + $0xa0] sm:$0xff] %vm1501, %v1455
      %1523 = vst.msk [vmem:[%s175 + $0xa8] sm:$0xff] %vm1501, %v1458
      %1524 = vst.msk [vmem:[%s175 + $0xb0] sm:$0xff] %vm1501, %v1463
      %1525 = vst.msk [vmem:[%s175 + $0xb8] sm:$0xff] %vm1501, %v1466
      %1526 = vst.msk [vmem:[%s175 + $0xc0] sm:$0xff] %vm1501, %v1471
      %1527 = vst.msk [vmem:[%s175 + $0xc8] sm:$0xff] %vm1501, %v1474
      %1528 = vst.msk [vmem:[%s175 + $0xd0] sm:$0xff] %vm1501, %v1479
      %1529 = vst.msk [vmem:[%s175 + $0xd8] sm:$0xff] %vm1501, %v1482
      %1530 = vst.msk [vmem:[%s175 + $0xe0] sm:$0xff] %vm1501, %v1487
      %1531 = vst.msk [vmem:[%s175 + $0xe8] sm:$0xff] %vm1501, %v1490
      %1532 = vst.msk [vmem:[%s175 + $0xf0] sm:$0xff] %vm1501, %v1495
      %1533 = vst.msk [vmem:[%s175 + $0xf8] sm:$0xff] %vm1501, %v1498
      %s1534 = smul.u32 32, %s14
      %p1535 = scmp.lt.s32.totalorder %s1534, 63
      %s1536 = scalar_select %p1535, %s1534, 63
      %s1537 = smul.addr %s1536, 8
      %s1538 = scalar_lea.vmem %s3, %s1537
      // Predicated region
      $region33: #{udanet_forward.10} parent=31 // pred_check
        %p1539 = pneg %p100
      $region34: #{udanet_forward.10} parent=31 // pred_check_branch
        %1541 = sbr.rel (%p1539) target = $region36
      $region35: #{udanet_forward.10} parent=31 // pred_region
        %s1542 = smul.u32 32, %s14
      $region36: #{udanet_forward.10} parent=31 // pred_fallthru
        _
    $region32: #{udanet_forward.10} parent=5 // pred_fallthru
      _
    %p1543 = scmp.le.s32.totalorder 2, %s9
    // Predicated region
    $region37: #{udanet_forward.10} parent=5 // pred_check
      %p1544 = pneg %p1543
    $region38: #{udanet_forward.10} parent=5 // pred_check_branch
      %1546 = sbr.rel (%p1544) target = $region40
    $region39: #{udanet_forward.10} parent=5 // pred_region
      %s1547 = ssub.s32 %s9, 2
      // Predicated region
      $region41: #{udanet_forward.10} parent=39 // pred_check
        %p1548 = pneg %p106
      $region42: #{udanet_forward.10} parent=39 // pred_check_branch
        %1550 = sbr.rel (%p1548) target = $region44
      $region43: #{udanet_forward.10} parent=39 // pred_region
        %s1551 = smul.u32 32, %s15
        %p1552 = scmp.lt.s32.totalorder %s1551, 63
        %s1553 = scalar_select %p1552, %s1551, 63
        %s1554 = smul.addr %s1553, 8
        %s1555 = scalar_lea.vmem %s3, %s1554
      $region44: #{udanet_forward.10} parent=39 // pred_fallthru
        _
    $region40: #{udanet_forward.10} parent=5 // pred_fallthru
      _
  $region6: #{udanet_forward.10} parent=0 // loop_footer
    %s13 = sadd.s32 1, %s9
  $region7: #{udanet_forward.10} parent=0 // loop_footer_branch
    %8 = sbr.rel target = $region3
  $region8: #{udanet_forward.10} parent=0 // loop_exit
    _

// kernel: udanet_forward.11
$region0: #{udanet_forward.11}
  #allocation0 [shape = 'u32[]', space=smem, size = 0x4, offset = 0x4, fixed_abs, tag = 'smem constant byte address 0x4 - core index']
  #allocation1 [shape = 'u32[144,128]{1,0:T(1,128)}', space=vmem, size = 0x12000, scoped, tag = 'internal scratch']
  %s0 = inlined_call_operand.vmem [shape: bf16[1024,1152], index: 0, kind: input, shape index: {}]
  %s1 = inlined_call_operand.vmem [shape: bf16[1152,64], index: 1, kind: input, shape index: {}]
  %s2 = inlined_call_operand.vmem [shape: f32[1,64], index: 2, kind: input, shape index: {}]
  %s3 = inlined_call_operand.vmem [shape: f32[1024,64], index: 3, kind: output, shape index: {}]
  %s4 = sld [smem:[#allocation0]]
  $region45: #{udanet_forward.11} parent=0
    _
  %s6 = ssub.s32 1, %s4
  %s7 = scalar_select 0, %s6, %s4
  loop: start=0, step=1, limit=6
  $region2: #{udanet_forward.11} parent=0 // loop_pre_header
    _
  $region3: #{udanet_forward.11} parent=0 // loop_header
    %s9 = sphi 0, %s13
    %p10 = scmp.ge.s32.totalorder %s9, 6
    %s19 = sphi 0, %s21
    %s22 = sphi 0, %s19
    %s23 = sphi 0, %s22
    %s39 = sphi 0, %s23
    %s43 = sphi 0, %s43
    %s45 = sphi 0, %s43
    %s46 = sphi 0, %s45
    %s60 = sphi 0, %s46
    %s64 = sphi 0, %s64
    %s66 = sphi 0, %s64
    %s67 = sphi 0, %s66
    %s81 = sphi 0, %s67
    %s87 = sphi 0, %s89
    %s90 = sphi 0, %s87
    %s91 = sphi 0, %s90
    %s107 = sphi 0, %s91
  $region4: #{udanet_forward.11} parent=0 // loop_header_branch
    %12 = sbr.rel (%p10) target = $region8
  $region5: #{udanet_forward.11} parent=0 // loop_body
    %s14 = ssub.s32 %s9, 1
    %s15 = ssub.s32 %s9, 2
    %s16 = sadd.s32 %s9, 1
    %s17 = ssub.s32 %s9, %s16
    %p18 = scmp.eq.s32.totalorder %s17, 0
    %s20 = sadd.s32 %s19, 1
    %s21 = scalar_select %p18, %s19, %s20
    %p24 = pneg %p18
    %p25 = scmp.eq.s32.totalorder %s9, 3
    %p26 = por %p24, %p25
    %p27 = scmp.ne.s32.totalorder %s19, %s22
    %p28 = scmp.eq.s32.totalorder %s9, 0
    %p29 = por %p27, %p28
    %p30 = scmp.ne.s32.totalorder %s19, %s22
    %p31 = scmp.eq.s32.totalorder %s14, 3
    %p32 = por %p30, %p31
    %p33 = scmp.ne.s32.totalorder %s22, %s23
    %p34 = scmp.eq.s32.totalorder %s14, 0
    %p35 = por %p33, %p34
    %p36 = scmp.ne.s32.totalorder %s22, %s23
    %p37 = scmp.eq.s32.totalorder %s15, 3
    %p38 = por %p36, %p37
    %p40 = scmp.ne.s32.totalorder %s23, %s39
    %p41 = scmp.eq.s32.totalorder %s15, 0
    %p42 = por %p40, %p41
    %s44 = sadd.s32 %s43, 1
    %p47 = scmp.eq.s32.totalorder %s9, 3
    %p48 = scmp.ne.s32.totalorder %s43, %s45
    %p49 = scmp.eq.s32.totalorder %s9, 0
    %p50 = por %p48, %p49
    %p51 = scmp.ne.s32.totalorder %s43, %s45
    %p52 = scmp.eq.s32.totalorder %s14, 3
    %p53 = por %p51, %p52
    %p54 = scmp.ne.s32.totalorder %s45, %s46
    %p55 = scmp.eq.s32.totalorder %s14, 0
    %p56 = por %p54, %p55
    %p57 = scmp.ne.s32.totalorder %s45, %s46
    %p58 = scmp.eq.s32.totalorder %s15, 3
    %p59 = por %p57, %p58
    %p61 = scmp.ne.s32.totalorder %s46, %s60
    %p62 = scmp.eq.s32.totalorder %s15, 0
    %p63 = por %p61, %p62
    %s65 = sadd.s32 %s64, 1
    %p68 = scmp.eq.s32.totalorder %s9, 3
    %p69 = scmp.ne.s32.totalorder %s64, %s66
    %p70 = scmp.eq.s32.totalorder %s9, 0
    %p71 = por %p69, %p70
    %p72 = scmp.ne.s32.totalorder %s64, %s66
    %p73 = scmp.eq.s32.totalorder %s14, 3
    %p74 = por %p72, %p73
    %p75 = scmp.ne.s32.totalorder %s66, %s67
    %p76 = scmp.eq.s32.totalorder %s14, 0
    %p77 = por %p75, %p76
    %p78 = scmp.ne.s32.totalorder %s66, %s67
    %p79 = scmp.eq.s32.totalorder %s15, 3
    %p80 = por %p78, %p79
    %p82 = scmp.ne.s32.totalorder %s67, %s81
    %p83 = scmp.eq.s32.totalorder %s15, 0
    %p84 = por %p82, %p83
    %s85 = ssub.s32 %s9, %s16
    %p86 = scmp.eq.s32.totalorder %s85, 0
    %s88 = sadd.s32 %s87, 1
    %s89 = scalar_select %p86, %s87, %s88
    %p92 = pneg %p86
    %p93 = scmp.eq.s32.totalorder %s9, 3
    %p94 = por %p92, %p93
    %p95 = scmp.ne.s32.totalorder %s87, %s90
    %p96 = scmp.eq.s32.totalorder %s9, 0
    %p97 = por %p95, %p96
    %p98 = scmp.ne.s32.totalorder %s87, %s90
    %p99 = scmp.eq.s32.totalorder %s14, 3
    %p100 = por %p98, %p99
    %p101 = scmp.ne.s32.totalorder %s90, %s91
    %p102 = scmp.eq.s32.totalorder %s14, 0
    %p103 = por %p101, %p102
    %p104 = scmp.ne.s32.totalorder %s90, %s91
    %p105 = scmp.eq.s32.totalorder %s15, 3
    %p106 = por %p104, %p105
    %p108 = scmp.ne.s32.totalorder %s91, %s107
    %p109 = scmp.eq.s32.totalorder %s15, 0
    %p110 = por %p108, %p109
    %p111 = scmp.le.s32.totalorder 1, %s9
    %p112 = scmp.lt.s32.totalorder %s9, 5
    %p113 = pnand %p111, %p112
    %p114 = pneg %p113
    // Predicated region
    $region9: #{udanet_forward.11} parent=5 // pred_check
      _
    $region10: #{udanet_forward.11} parent=5 // pred_check_branch
      %116 = sbr.rel (%p113) target = $region12
    $region11: #{udanet_forward.11} parent=5 // pred_region
      %s117 = ssub.s32 %s9, 1
      // Predicated region
      $region13: #{udanet_forward.11} parent=11 // pred_check
        %p118 = pneg %p56
      $region14: #{udanet_forward.11} parent=11 // pred_check_branch
        %120 = sbr.rel (%p118) target = $region16
      $region15: #{udanet_forward.11} parent=11 // pred_region
        _
      $region16: #{udanet_forward.11} parent=11 // pred_fallthru
        _
      // Predicated region
      $region17: #{udanet_forward.11} parent=11 // pred_check
        %p121 = pneg %p77
      $region18: #{udanet_forward.11} parent=11 // pred_check_branch
        %123 = sbr.rel (%p121) target = $region20
      $region19: #{udanet_forward.11} parent=11 // pred_region
        _
      $region20: #{udanet_forward.11} parent=11 // pred_fallthru
        _
    $region12: #{udanet_forward.11} parent=5 // pred_fallthru
      _
    %p124 = scmp.lt.s32.totalorder %s9, 4
    // Predicated region
    $region21: #{udanet_forward.11} parent=5 // pred_check
      %p125 = pneg %p124
    $region22: #{udanet_forward.11} parent=5 // pred_check_branch
      %127 = sbr.rel (%p125) target = $region24
    $region23: #{udanet_forward.11} parent=5 // pred_region
      // Predicated region
      $region25: #{udanet_forward.11} parent=23 // pred_check
        %p128 = pneg %p29
      $region26: #{udanet_forward.11} parent=23 // pred_check_branch
        %130 = sbr.rel (%p128) target = $region28
      $region27: #{udanet_forward.11} parent=23 // pred_region
        %s131 = smul.u32 32, %s9
        %p132 = scmp.lt.s32.totalorder %s131, 127
        %s133 = scalar_select %p132, %s131, 127
        %s134 = smul.addr %s133, 9
        %s135 = smul.addr %s134, 4
        %s136 = scalar_lea.vmem %s0, %s135
        %s137 = smul.u32 32, %s9
      $region28: #{udanet_forward.11} parent=23 // pred_fallthru
        _
    $region24: #{udanet_forward.11} parent=5 // pred_fallthru
      _
    %p138 = scmp.le.s32.totalorder 1, %s9
    %p139 = scmp.lt.s32.totalorder %s9, 5
    %p140 = pnand %p138, %p139
    %p141 = pneg %p140
    // Predicated region
    $region29: #{udanet_forward.11} parent=5 // pred_check
      _
    $region30: #{udanet_forward.11} parent=5 // pred_check_branch
      %143 = sbr.rel (%p140) target = $region32
    $region31: #{udanet_forward.11} parent=5 // pred_region
      %s144 = ssub.s32 %s9, 1
      %s145 = smul.u32 32, %s14
      %p146 = scmp.lt.s32.totalorder %s145, 127
      %s147 = scalar_select %p146, %s145, 127
      %s148 = smul.addr %s147, 9
      %s149 = smul.addr %s148, 4
      %s150 = scalar_lea.vmem %s0, %s149
      %p151 = pneg %p35
      %p152 = pneg %p32
      %p153 = pneg %p56
      %p154 = pneg %p53
      %p155 = pneg %p77
      %p156 = pneg %p74
      %p157 = pneg %p103
      %p158 = pneg %p100
      %s159 = smul.u32 32, %s14
      %p160 = scmp.lt.s32.totalorder %s159, 127
      %s161 = scalar_select %p160, %s159, 127
      %s162 = smul.addr %s161, 8
      %s163 = scalar_lea.vmem %s3, %s162
      %s164 = smul.u32 32, %s14
      %p165 = scmp.lt.s32.totalorder %s164, 127
      %s166 = scalar_select %p165, %s164, 127
      %s167 = smul.addr %s166, 9
      %s168 = smul.addr %s167, 4
      %s169 = scalar_lea.vmem %s0, %s168
      %s170 = smul.u32 32, %s14
      %s171 = smul.u32 32, %s14
      %p172 = scmp.lt.s32.totalorder %s171, 127
      %s173 = scalar_select %p172, %s171, 127
      %s174 = smul.addr %s173, 8
      %s175 = scalar_lea.vmem %s3, %s174
      %s176 = smul.u32 32, %s14
      %v178 = vld [vmem:[%s169] sm:$0xff]
      %v179 = vld [vmem:[%s169 + $0x8] sm:$0xff]
      %v180 = vld [vmem:[%s169 + $0x10] sm:$0xff]
      %v181 = vld [vmem:[%s169 + $0x18] sm:$0xff]
      %v182 = vld [vmem:[%s169 + $0x20] sm:$0xf]
      %v183 = vld [vmem:[%s169 + $0x24] sm:$0xff]
      %v184 = vld [vmem:[%s169 + $0x2c] sm:$0xff]
      %v185 = vld [vmem:[%s169 + $0x34] sm:$0xff]
      %v186 = vld [vmem:[%s169 + $0x3c] sm:$0xff]
      %v187 = vld [vmem:[%s169 + $0x44] sm:$0xf]
      %v188 = vld [vmem:[%s169 + $0x48] sm:$0xff]
      %v189 = vld [vmem:[%s169 + $0x50] sm:$0xff]
      %v190 = vld [vmem:[%s169 + $0x58] sm:$0xff]
      %v191 = vld [vmem:[%s169 + $0x60] sm:$0xff]
      %v192 = vld [vmem:[%s169 + $0x68] sm:$0xf]
      %v193 = vld [vmem:[%s169 + $0x6c] sm:$0xff]
      %v194 = vld [vmem:[%s169 + $0x74] sm:$0xff]
      %v195 = vld [vmem:[%s169 + $0x7c] sm:$0xff]
      %v196 = vld [vmem:[%s169 + $0x84] sm:$0xff]
      %v197 = vld [vmem:[%s169 + $0x8c] sm:$0xf]
      %v198 = vld [vmem:[%s169 + $0x90] sm:$0xff]
      %v199 = vld [vmem:[%s169 + $0x98] sm:$0xff]
      %v200 = vld [vmem:[%s169 + $0xa0] sm:$0xff]
      %v201 = vld [vmem:[%s169 + $0xa8] sm:$0xff]
      %v202 = vld [vmem:[%s169 + $0xb0] sm:$0xf]
      %v203 = vld [vmem:[%s169 + $0xb4] sm:$0xff]
      %v204 = vld [vmem:[%s169 + $0xbc] sm:$0xff]
      %v205 = vld [vmem:[%s169 + $0xc4] sm:$0xff]
      %v206 = vld [vmem:[%s169 + $0xcc] sm:$0xff]
      %v207 = vld [vmem:[%s169 + $0xd4] sm:$0xf]
      %v208 = vld [vmem:[%s169 + $0xd8] sm:$0xff]
      %v209 = vld [vmem:[%s169 + $0xe0] sm:$0xff]
      %v210 = vld [vmem:[%s169 + $0xe8] sm:$0xff]
      %v211 = vld [vmem:[%s169 + $0xf0] sm:$0xff]
      %v212 = vld [vmem:[%s169 + $0xf8] sm:$0xf]
      %v213 = vld [vmem:[%s169 + $0xfc] sm:$0xff]
      %v214 = vld [vmem:[%s169 + $0x104] sm:$0xff]
      %v215 = vld [vmem:[%s169 + $0x10c] sm:$0xff]
      %v216 = vld [vmem:[%s169 + $0x114] sm:$0xff]
      %v217 = vld [vmem:[%s169 + $0x11c] sm:$0xf]
      %v218 = vld [vmem:[%s169 + $0x120] sm:$0xff]
      %v219 = vld [vmem:[%s169 + $0x128] sm:$0xff]
      %v220 = vld [vmem:[%s169 + $0x130] sm:$0xff]
      %v221 = vld [vmem:[%s169 + $0x138] sm:$0xff]
      %v222 = vld [vmem:[%s169 + $0x140] sm:$0xf]
      %v223 = vld [vmem:[%s169 + $0x144] sm:$0xff]
      %v224 = vld [vmem:[%s169 + $0x14c] sm:$0xff]
      %v225 = vld [vmem:[%s169 + $0x154] sm:$0xff]
      %v226 = vld [vmem:[%s169 + $0x15c] sm:$0xff]
      %v227 = vld [vmem:[%s169 + $0x164] sm:$0xf]
      %v228 = vld [vmem:[%s169 + $0x168] sm:$0xff]
      %v229 = vld [vmem:[%s169 + $0x170] sm:$0xff]
      %v230 = vld [vmem:[%s169 + $0x178] sm:$0xff]
      %v231 = vld [vmem:[%s169 + $0x180] sm:$0xff]
      %v232 = vld [vmem:[%s169 + $0x188] sm:$0xf]
      %v233 = vld [vmem:[%s169 + $0x18c] sm:$0xff]
      %v234 = vld [vmem:[%s169 + $0x194] sm:$0xff]
      %v235 = vld [vmem:[%s169 + $0x19c] sm:$0xff]
      %v236 = vld [vmem:[%s169 + $0x1a4] sm:$0xff]
      %v237 = vld [vmem:[%s169 + $0x1ac] sm:$0xf]
      %v238 = vld [vmem:[%s169 + $0x1b0] sm:$0xff]
      %v239 = vld [vmem:[%s169 + $0x1b8] sm:$0xff]
      %v240 = vld [vmem:[%s169 + $0x1c0] sm:$0xff]
      %v241 = vld [vmem:[%s169 + $0x1c8] sm:$0xff]
      %v242 = vld [vmem:[%s169 + $0x1d0] sm:$0xf]
      %v243 = vld [vmem:[%s169 + $0x1d4] sm:$0xff]
      %v244 = vld [vmem:[%s169 + $0x1dc] sm:$0xff]
      %v245 = vld [vmem:[%s169 + $0x1e4] sm:$0xff]
      %v246 = vld [vmem:[%s169 + $0x1ec] sm:$0xff]
      %v247 = vld [vmem:[%s169 + $0x1f4] sm:$0xf]
      %v248 = vld [vmem:[%s169 + $0x1f8] sm:$0xff]
      %v249 = vld [vmem:[%s169 + $0x200] sm:$0xff]
      %v250 = vld [vmem:[%s169 + $0x208] sm:$0xff]
      %v251 = vld [vmem:[%s169 + $0x210] sm:$0xff]
      %v252 = vld [vmem:[%s169 + $0x218] sm:$0xf]
      %v253 = vld [vmem:[%s169 + $0x21c] sm:$0xff]
      %v254 = vld [vmem:[%s169 + $0x224] sm:$0xff]
      %v255 = vld [vmem:[%s169 + $0x22c] sm:$0xff]
      %v256 = vld [vmem:[%s169 + $0x234] sm:$0xff]
      %v257 = vld [vmem:[%s169 + $0x23c] sm:$0xf]
      %v258 = vld [vmem:[%s169 + $0x240] sm:$0xff]
      %v259 = vld [vmem:[%s169 + $0x248] sm:$0xff]
      %v260 = vld [vmem:[%s169 + $0x250] sm:$0xff]
      %v261 = vld [vmem:[%s169 + $0x258] sm:$0xff]
      %v262 = vld [vmem:[%s169 + $0x260] sm:$0xf]
      %v263 = vld [vmem:[%s169 + $0x264] sm:$0xff]
      %v264 = vld [vmem:[%s169 + $0x26c] sm:$0xff]
      %v265 = vld [vmem:[%s169 + $0x274] sm:$0xff]
      %v266 = vld [vmem:[%s169 + $0x27c] sm:$0xff]
      %v267 = vld [vmem:[%s169 + $0x284] sm:$0xf]
      %v268 = vld [vmem:[%s169 + $0x288] sm:$0xff]
      %v269 = vld [vmem:[%s169 + $0x290] sm:$0xff]
      %v270 = vld [vmem:[%s169 + $0x298] sm:$0xff]
      %v271 = vld [vmem:[%s169 + $0x2a0] sm:$0xff]
      %v272 = vld [vmem:[%s169 + $0x2a8] sm:$0xf]
      %v273 = vld [vmem:[%s169 + $0x2ac] sm:$0xff]
      %v274 = vld [vmem:[%s169 + $0x2b4] sm:$0xff]
      %v275 = vld [vmem:[%s169 + $0x2bc] sm:$0xff]
      %v276 = vld [vmem:[%s169 + $0x2c4] sm:$0xff]
      %v277 = vld [vmem:[%s169 + $0x2cc] sm:$0xf]
      %v278 = vld [vmem:[%s169 + $0x2d0] sm:$0xff]
      %v279 = vld [vmem:[%s169 + $0x2d8] sm:$0xff]
      %v280 = vld [vmem:[%s169 + $0x2e0] sm:$0xff]
      %v281 = vld [vmem:[%s169 + $0x2e8] sm:$0xff]
      %v282 = vld [vmem:[%s169 + $0x2f0] sm:$0xf]
      %v283 = vld [vmem:[%s169 + $0x2f4] sm:$0xff]
      %v284 = vld [vmem:[%s169 + $0x2fc] sm:$0xff]
      %v285 = vld [vmem:[%s169 + $0x304] sm:$0xff]
      %v286 = vld [vmem:[%s169 + $0x30c] sm:$0xff]
      %v287 = vld [vmem:[%s169 + $0x314] sm:$0xf]
      %v288 = vld [vmem:[%s169 + $0x318] sm:$0xff]
      %v289 = vld [vmem:[%s169 + $0x320] sm:$0xff]
      %v290 = vld [vmem:[%s169 + $0x328] sm:$0xff]
      %v291 = vld [vmem:[%s169 + $0x330] sm:$0xff]
      %v292 = vld [vmem:[%s169 + $0x338] sm:$0xf]
      %v293 = vld [vmem:[%s169 + $0x33c] sm:$0xff]
      %v294 = vld [vmem:[%s169 + $0x344] sm:$0xff]
      %v295 = vld [vmem:[%s169 + $0x34c] sm:$0xff]
      %v296 = vld [vmem:[%s169 + $0x354] sm:$0xff]
      %v297 = vld [vmem:[%s169 + $0x35c] sm:$0xf]
      %v298 = vld [vmem:[%s169 + $0x360] sm:$0xff]
      %v299 = vld [vmem:[%s169 + $0x368] sm:$0xff]
      %v300 = vld [vmem:[%s169 + $0x370] sm:$0xff]
      %v301 = vld [vmem:[%s169 + $0x378] sm:$0xff]
      %v302 = vld [vmem:[%s169 + $0x380] sm:$0xf]
      %v303 = vld [vmem:[%s169 + $0x384] sm:$0xff]
      %v304 = vld [vmem:[%s169 + $0x38c] sm:$0xff]
      %v305 = vld [vmem:[%s169 + $0x394] sm:$0xff]
      %v306 = vld [vmem:[%s169 + $0x39c] sm:$0xff]
      %v307 = vld [vmem:[%s169 + $0x3a4] sm:$0xf]
      %v308 = vld [vmem:[%s169 + $0x3a8] sm:$0xff]
      %v309 = vld [vmem:[%s169 + $0x3b0] sm:$0xff]
      %v310 = vld [vmem:[%s169 + $0x3b8] sm:$0xff]
      %v311 = vld [vmem:[%s169 + $0x3c0] sm:$0xff]
      %v312 = vld [vmem:[%s169 + $0x3c8] sm:$0xf]
      %v313 = vld [vmem:[%s169 + $0x3cc] sm:$0xff]
      %v314 = vld [vmem:[%s169 + $0x3d4] sm:$0xff]
      %v315 = vld [vmem:[%s169 + $0x3dc] sm:$0xff]
      %v316 = vld [vmem:[%s169 + $0x3e4] sm:$0xff]
      %v317 = vld [vmem:[%s169 + $0x3ec] sm:$0xf]
      %v318 = vld [vmem:[%s169 + $0x3f0] sm:$0xff]
      %v319 = vld [vmem:[%s169 + $0x3f8] sm:$0xff]
      %v320 = vld [vmem:[%s169 + $0x400] sm:$0xff]
      %v321 = vld [vmem:[%s169 + $0x408] sm:$0xff]
      %v322 = vld [vmem:[%s169 + $0x410] sm:$0xf]
      %v323 = vld [vmem:[%s169 + $0x414] sm:$0xff]
      %v324 = vld [vmem:[%s169 + $0x41c] sm:$0xff]
      %v325 = vld [vmem:[%s169 + $0x424] sm:$0xff]
      %v326 = vld [vmem:[%s169 + $0x42c] sm:$0xff]
      %v327 = vld [vmem:[%s169 + $0x434] sm:$0xf]
      %v328 = vld [vmem:[%s169 + $0x438] sm:$0xff]
      %v329 = vld [vmem:[%s169 + $0x440] sm:$0xff]
      %v330 = vld [vmem:[%s169 + $0x448] sm:$0xff]
      %v331 = vld [vmem:[%s169 + $0x450] sm:$0xff]
      %v332 = vld [vmem:[%s169 + $0x458] sm:$0xf]
      %v333 = vld [vmem:[%s169 + $0x45c] sm:$0xff]
      %v334 = vld [vmem:[%s169 + $0x464] sm:$0xff]
      %v335 = vld [vmem:[%s169 + $0x46c] sm:$0xff]
      %v336 = vld [vmem:[%s169 + $0x474] sm:$0xff]
      %v337 = vld [vmem:[%s169 + $0x47c] sm:$0xf]
      %v338 = vld [vmem:[%s1] sm:$0xf]
      %v339 = vld [vmem:[%s1 + $0x4] sm:$0xf]
      %v340 = vld [vmem:[%s1 + $0x8] sm:$0xf]
      %v341 = vld [vmem:[%s1 + $0xc] sm:$0xf]
      %v342 = vld [vmem:[%s1 + $0x10] sm:$0xf]
      %v343 = vld [vmem:[%s1 + $0x14] sm:$0xf]
      %v344 = vld [vmem:[%s1 + $0x18] sm:$0xf]
      %v345 = vld [vmem:[%s1 + $0x1c] sm:$0xf]
      %v346 = vld [vmem:[%s1 + $0x20] sm:$0xf]
      %v347 = vld [vmem:[%s1 + $0x24] sm:$0xf]
      %v348 = vld [vmem:[%s1 + $0x28] sm:$0xf]
      %v349 = vld [vmem:[%s1 + $0x2c] sm:$0xf]
      %v350 = vld [vmem:[%s1 + $0x30] sm:$0xf]
      %v351 = vld [vmem:[%s1 + $0x34] sm:$0xf]
      %v352 = vld [vmem:[%s1 + $0x38] sm:$0xf]
      %v353 = vld [vmem:[%s1 + $0x3c] sm:$0xf]
      %v354 = vld [vmem:[%s1 + $0x40] sm:$0xf]
      %v355 = vld [vmem:[%s1 + $0x44] sm:$0xf]
      %v356 = vld [vmem:[%s1 + $0x48] sm:$0xf]
      %v357 = vld [vmem:[%s1 + $0x4c] sm:$0xf]
      %v358 = vld [vmem:[%s1 + $0x50] sm:$0xf]
      %v359 = vld [vmem:[%s1 + $0x54] sm:$0xf]
      %v360 = vld [vmem:[%s1 + $0x58] sm:$0xf]
      %v361 = vld [vmem:[%s1 + $0x5c] sm:$0xf]
      %v362 = vld [vmem:[%s1 + $0x60] sm:$0xf]
      %v363 = vld [vmem:[%s1 + $0x64] sm:$0xf]
      %v364 = vld [vmem:[%s1 + $0x68] sm:$0xf]
      %v365 = vld [vmem:[%s1 + $0x6c] sm:$0xf]
      %v366 = vld [vmem:[%s1 + $0x70] sm:$0xf]
      %v367 = vld [vmem:[%s1 + $0x74] sm:$0xf]
      %v368 = vld [vmem:[%s1 + $0x78] sm:$0xf]
      %v369 = vld [vmem:[%s1 + $0x7c] sm:$0xf]
      %v370 = vld [vmem:[%s1 + $0x80] sm:$0xf]
      %v371 = vld [vmem:[%s1 + $0x84] sm:$0xf]
      %v372 = vld [vmem:[%s1 + $0x88] sm:$0xf]
      %v373 = vld [vmem:[%s1 + $0x8c] sm:$0xf]
      %v374 = vld [vmem:[%s1 + $0x90] sm:$0xf]
      %v375 = vld [vmem:[%s1 + $0x94] sm:$0xf]
      %v376 = vld [vmem:[%s1 + $0x98] sm:$0xf]
      %v377 = vld [vmem:[%s1 + $0x9c] sm:$0xf]
      %v378 = vld [vmem:[%s1 + $0xa0] sm:$0xf]
      %v379 = vld [vmem:[%s1 + $0xa4] sm:$0xf]
      %v380 = vld [vmem:[%s1 + $0xa8] sm:$0xf]
      %v381 = vld [vmem:[%s1 + $0xac] sm:$0xf]
      %v382 = vld [vmem:[%s1 + $0xb0] sm:$0xf]
      %v383 = vld [vmem:[%s1 + $0xb4] sm:$0xf]
      %v384 = vld [vmem:[%s1 + $0xb8] sm:$0xf]
      %v385 = vld [vmem:[%s1 + $0xbc] sm:$0xf]
      %v386 = vld [vmem:[%s1 + $0xc0] sm:$0xf]
      %v387 = vld [vmem:[%s1 + $0xc4] sm:$0xf]
      %v388 = vld [vmem:[%s1 + $0xc8] sm:$0xf]
      %v389 = vld [vmem:[%s1 + $0xcc] sm:$0xf]
      %v390 = vld [vmem:[%s1 + $0xd0] sm:$0xf]
      %v391 = vld [vmem:[%s1 + $0xd4] sm:$0xf]
      %v392 = vld [vmem:[%s1 + $0xd8] sm:$0xf]
      %v393 = vld [vmem:[%s1 + $0xdc] sm:$0xf]
      %v394 = vld [vmem:[%s1 + $0xe0] sm:$0xf]
      %v395 = vld [vmem:[%s1 + $0xe4] sm:$0xf]
      %v396 = vld [vmem:[%s1 + $0xe8] sm:$0xf]
      %v397 = vld [vmem:[%s1 + $0xec] sm:$0xf]
      %v398 = vld [vmem:[%s1 + $0xf0] sm:$0xf]
      %v399 = vld [vmem:[%s1 + $0xf4] sm:$0xf]
      %v400 = vld [vmem:[%s1 + $0xf8] sm:$0xf]
      %v401 = vld [vmem:[%s1 + $0xfc] sm:$0xf]
      %v402 = vld [vmem:[%s1 + $0x100] sm:$0xf]
      %v403 = vld [vmem:[%s1 + $0x104] sm:$0xf]
      %v404 = vld [vmem:[%s1 + $0x108] sm:$0xf]
      %v405 = vld [vmem:[%s1 + $0x10c] sm:$0xf]
      %v406 = vld [vmem:[%s1 + $0x110] sm:$0xf]
      %v407 = vld [vmem:[%s1 + $0x114] sm:$0xf]
      %v408 = vld [vmem:[%s1 + $0x118] sm:$0xf]
      %v409 = vld [vmem:[%s1 + $0x11c] sm:$0xf]
      %v410 = vld [vmem:[%s1 + $0x120] sm:$0xf]
      %v411 = vld [vmem:[%s1 + $0x124] sm:$0xf]
      %v412 = vld [vmem:[%s1 + $0x128] sm:$0xf]
      %v413 = vld [vmem:[%s1 + $0x12c] sm:$0xf]
      %v414 = vld [vmem:[%s1 + $0x130] sm:$0xf]
      %v415 = vld [vmem:[%s1 + $0x134] sm:$0xf]
      %v416 = vld [vmem:[%s1 + $0x138] sm:$0xf]
      %v417 = vld [vmem:[%s1 + $0x13c] sm:$0xf]
      %v418 = vld [vmem:[%s1 + $0x140] sm:$0xf]
      %v419 = vld [vmem:[%s1 + $0x144] sm:$0xf]
      %v420 = vld [vmem:[%s1 + $0x148] sm:$0xf]
      %v421 = vld [vmem:[%s1 + $0x14c] sm:$0xf]
      %v422 = vld [vmem:[%s1 + $0x150] sm:$0xf]
      %v423 = vld [vmem:[%s1 + $0x154] sm:$0xf]
      %v424 = vld [vmem:[%s1 + $0x158] sm:$0xf]
      %v425 = vld [vmem:[%s1 + $0x15c] sm:$0xf]
      %v426 = vld [vmem:[%s1 + $0x160] sm:$0xf]
      %v427 = vld [vmem:[%s1 + $0x164] sm:$0xf]
      %v428 = vld [vmem:[%s1 + $0x168] sm:$0xf]
      %v429 = vld [vmem:[%s1 + $0x16c] sm:$0xf]
      %v430 = vld [vmem:[%s1 + $0x170] sm:$0xf]
      %v431 = vld [vmem:[%s1 + $0x174] sm:$0xf]
      %v432 = vld [vmem:[%s1 + $0x178] sm:$0xf]
      %v433 = vld [vmem:[%s1 + $0x17c] sm:$0xf]
      %v434 = vld [vmem:[%s1 + $0x180] sm:$0xf]
      %v435 = vld [vmem:[%s1 + $0x184] sm:$0xf]
      %v436 = vld [vmem:[%s1 + $0x188] sm:$0xf]
      %v437 = vld [vmem:[%s1 + $0x18c] sm:$0xf]
      %v438 = vld [vmem:[%s1 + $0x190] sm:$0xf]
      %v439 = vld [vmem:[%s1 + $0x194] sm:$0xf]
      %v440 = vld [vmem:[%s1 + $0x198] sm:$0xf]
      %v441 = vld [vmem:[%s1 + $0x19c] sm:$0xf]
      %v442 = vld [vmem:[%s1 + $0x1a0] sm:$0xf]
      %v443 = vld [vmem:[%s1 + $0x1a4] sm:$0xf]
      %v444 = vld [vmem:[%s1 + $0x1a8] sm:$0xf]
      %v445 = vld [vmem:[%s1 + $0x1ac] sm:$0xf]
      %v446 = vld [vmem:[%s1 + $0x1b0] sm:$0xf]
      %v447 = vld [vmem:[%s1 + $0x1b4] sm:$0xf]
      %v448 = vld [vmem:[%s1 + $0x1b8] sm:$0xf]
      %v449 = vld [vmem:[%s1 + $0x1bc] sm:$0xf]
      %v450 = vld [vmem:[%s1 + $0x1c0] sm:$0xf]
      %v451 = vld [vmem:[%s1 + $0x1c4] sm:$0xf]
      %v452 = vld [vmem:[%s1 + $0x1c8] sm:$0xf]
      %v453 = vld [vmem:[%s1 + $0x1cc] sm:$0xf]
      %v454 = vld [vmem:[%s1 + $0x1d0] sm:$0xf]
      %v455 = vld [vmem:[%s1 + $0x1d4] sm:$0xf]
      %v456 = vld [vmem:[%s1 + $0x1d8] sm:$0xf]
      %v457 = vld [vmem:[%s1 + $0x1dc] sm:$0xf]
      %v458 = vld [vmem:[%s1 + $0x1e0] sm:$0xf]
      %v459 = vld [vmem:[%s1 + $0x1e4] sm:$0xf]
      %v460 = vld [vmem:[%s1 + $0x1e8] sm:$0xf]
      %v461 = vld [vmem:[%s1 + $0x1ec] sm:$0xf]
      %v462 = vld [vmem:[%s1 + $0x1f0] sm:$0xf]
      %v463 = vld [vmem:[%s1 + $0x1f4] sm:$0xf]
      %v464 = vld [vmem:[%s1 + $0x1f8] sm:$0xf]
      %v465 = vld [vmem:[%s1 + $0x1fc] sm:$0xf]
      %v466 = vld [vmem:[%s1 + $0x200] sm:$0xf]
      %v467 = vld [vmem:[%s1 + $0x204] sm:$0xf]
      %v468 = vld [vmem:[%s1 + $0x208] sm:$0xf]
      %v469 = vld [vmem:[%s1 + $0x20c] sm:$0xf]
      %v470 = vld [vmem:[%s1 + $0x210] sm:$0xf]
      %v471 = vld [vmem:[%s1 + $0x214] sm:$0xf]
      %v472 = vld [vmem:[%s1 + $0x218] sm:$0xf]
      %v473 = vld [vmem:[%s1 + $0x21c] sm:$0xf]
      %v474 = vld [vmem:[%s1 + $0x220] sm:$0xf]
      %v475 = vld [vmem:[%s1 + $0x224] sm:$0xf]
      %v476 = vld [vmem:[%s1 + $0x228] sm:$0xf]
      %v477 = vld [vmem:[%s1 + $0x22c] sm:$0xf]
      %v478 = vld [vmem:[%s1 + $0x230] sm:$0xf]
      %v479 = vld [vmem:[%s1 + $0x234] sm:$0xf]
      %v480 = vld [vmem:[%s1 + $0x238] sm:$0xf]
      %v481 = vld [vmem:[%s1 + $0x23c] sm:$0xf]
      %v482 = vld [vmem:[%s2] sm:$0x1]
      %v484 = vlaneseq
      %v485 = vshrl.u32 %v484, 7
      %v486 = vsub.s32 0, %v485
      %v487 = vrot.slane %v482, %v486
      %v649 = vunpack.c.l.b16 %v178
      %v650 = vunpack.c.h.b16 %v178
      %v651 = vunpack.c.l.b16 %v179
      %v652 = vunpack.c.h.b16 %v179
      %v653 = vunpack.c.l.b16 %v180
      %v654 = vunpack.c.h.b16 %v180
      %v655 = vunpack.c.l.b16 %v181
      %v656 = vunpack.c.h.b16 %v181
      %v657 = vunpack.c.l.b16 %v182
      %v658 = vunpack.c.l.b16 %v183
      %v659 = vunpack.c.h.b16 %v183
      %v660 = vunpack.c.l.b16 %v184
      %v661 = vunpack.c.h.b16 %v184
      %v662 = vunpack.c.l.b16 %v185
      %v663 = vunpack.c.h.b16 %v185
      %v664 = vunpack.c.l.b16 %v186
      %v665 = vunpack.c.h.b16 %v186
      %v666 = vunpack.c.l.b16 %v187
      %v667 = vunpack.c.l.b16 %v188
      %v668 = vunpack.c.h.b16 %v188
      %v669 = vunpack.c.l.b16 %v189
      %v670 = vunpack.c.h.b16 %v189
      %v671 = vunpack.c.l.b16 %v190
      %v672 = vunpack.c.h.b16 %v190
      %v673 = vunpack.c.l.b16 %v191
      %v674 = vunpack.c.h.b16 %v191
      %v675 = vunpack.c.l.b16 %v192
      %v676 = vunpack.c.l.b16 %v193
      %v677 = vunpack.c.h.b16 %v193
      %v678 = vunpack.c.l.b16 %v194
      %v679 = vunpack.c.h.b16 %v194
      %v680 = vunpack.c.l.b16 %v195
      %v681 = vunpack.c.h.b16 %v195
      %v682 = vunpack.c.l.b16 %v196
      %v683 = vunpack.c.h.b16 %v196
      %v684 = vunpack.c.l.b16 %v197
      %v685 = vunpack.c.l.b16 %v198
      %v686 = vunpack.c.h.b16 %v198
      %v687 = vunpack.c.l.b16 %v199
      %v688 = vunpack.c.h.b16 %v199
      %v689 = vunpack.c.l.b16 %v200
      %v690 = vunpack.c.h.b16 %v200
      %v691 = vunpack.c.l.b16 %v201
      %v692 = vunpack.c.h.b16 %v201
      %v693 = vunpack.c.l.b16 %v202
      %v694 = vunpack.c.l.b16 %v203
      %v695 = vunpack.c.h.b16 %v203
      %v696 = vunpack.c.l.b16 %v204
      %v697 = vunpack.c.h.b16 %v204
      %v698 = vunpack.c.l.b16 %v205
      %v699 = vunpack.c.h.b16 %v205
      %v700 = vunpack.c.l.b16 %v206
      %v701 = vunpack.c.h.b16 %v206
      %v702 = vunpack.c.l.b16 %v207
      %v703 = vunpack.c.l.b16 %v208
      %v704 = vunpack.c.h.b16 %v208
      %v705 = vunpack.c.l.b16 %v209
      %v706 = vunpack.c.h.b16 %v209
      %v707 = vunpack.c.l.b16 %v210
      %v708 = vunpack.c.h.b16 %v210
      %v709 = vunpack.c.l.b16 %v211
      %v710 = vunpack.c.h.b16 %v211
      %v711 = vunpack.c.l.b16 %v212
      %v712 = vunpack.c.l.b16 %v213
      %v713 = vunpack.c.h.b16 %v213
      %v714 = vunpack.c.l.b16 %v214
      %v715 = vunpack.c.h.b16 %v214
      %v716 = vunpack.c.l.b16 %v215
      %v717 = vunpack.c.h.b16 %v215
      %v718 = vunpack.c.l.b16 %v216
      %v719 = vunpack.c.h.b16 %v216
      %v720 = vunpack.c.l.b16 %v217
      %v721 = vunpack.c.l.b16 %v218
      %v722 = vunpack.c.h.b16 %v218
      %v723 = vunpack.c.l.b16 %v219
      %v724 = vunpack.c.h.b16 %v219
      %v725 = vunpack.c.l.b16 %v220
      %v726 = vunpack.c.h.b16 %v220
      %v727 = vunpack.c.l.b16 %v221
      %v728 = vunpack.c.h.b16 %v221
      %v729 = vunpack.c.l.b16 %v222
      %v730 = vunpack.c.l.b16 %v223
      %v731 = vunpack.c.h.b16 %v223
      %v732 = vunpack.c.l.b16 %v224
      %v733 = vunpack.c.h.b16 %v224
      %v734 = vunpack.c.l.b16 %v225
      %v735 = vunpack.c.h.b16 %v225
      %v736 = vunpack.c.l.b16 %v226
      %v737 = vunpack.c.h.b16 %v226
      %v738 = vunpack.c.l.b16 %v227
      %v739 = vunpack.c.l.b16 %v228
      %v740 = vunpack.c.h.b16 %v228
      %v741 = vunpack.c.l.b16 %v229
      %v742 = vunpack.c.h.b16 %v229
      %v743 = vunpack.c.l.b16 %v230
      %v744 = vunpack.c.h.b16 %v230
      %v745 = vunpack.c.l.b16 %v231
      %v746 = vunpack.c.h.b16 %v231
      %v747 = vunpack.c.l.b16 %v232
      %v748 = vunpack.c.l.b16 %v233
      %v749 = vunpack.c.h.b16 %v233
      %v750 = vunpack.c.l.b16 %v234
      %v751 = vunpack.c.h.b16 %v234
      %v752 = vunpack.c.l.b16 %v235
      %v753 = vunpack.c.h.b16 %v235
      %v754 = vunpack.c.l.b16 %v236
      %v755 = vunpack.c.h.b16 %v236
      %v756 = vunpack.c.l.b16 %v237
      %v757 = vunpack.c.l.b16 %v238
      %v758 = vunpack.c.h.b16 %v238
      %v759 = vunpack.c.l.b16 %v239
      %v760 = vunpack.c.h.b16 %v239
      %v761 = vunpack.c.l.b16 %v240
      %v762 = vunpack.c.h.b16 %v240
      %v763 = vunpack.c.l.b16 %v241
      %v764 = vunpack.c.h.b16 %v241
      %v765 = vunpack.c.l.b16 %v242
      %v766 = vunpack.c.l.b16 %v243
      %v767 = vunpack.c.h.b16 %v243
      %v768 = vunpack.c.l.b16 %v244
      %v769 = vunpack.c.h.b16 %v244
      %v770 = vunpack.c.l.b16 %v245
      %v771 = vunpack.c.h.b16 %v245
      %v772 = vunpack.c.l.b16 %v246
      %v773 = vunpack.c.h.b16 %v246
      %v774 = vunpack.c.l.b16 %v247
      %v775 = vunpack.c.l.b16 %v248
      %v776 = vunpack.c.h.b16 %v248
      %v777 = vunpack.c.l.b16 %v249
      %v778 = vunpack.c.h.b16 %v249
      %v779 = vunpack.c.l.b16 %v250
      %v780 = vunpack.c.h.b16 %v250
      %v781 = vunpack.c.l.b16 %v251
      %v782 = vunpack.c.h.b16 %v251
      %v783 = vunpack.c.l.b16 %v252
      %v784 = vunpack.c.l.b16 %v253
      %v785 = vunpack.c.h.b16 %v253
      %v786 = vunpack.c.l.b16 %v254
      %v787 = vunpack.c.h.b16 %v254
      %v788 = vunpack.c.l.b16 %v255
      %v789 = vunpack.c.h.b16 %v255
      %v790 = vunpack.c.l.b16 %v256
      %v791 = vunpack.c.h.b16 %v256
      %v792 = vunpack.c.l.b16 %v257
      %v793 = vunpack.c.l.b16 %v258
      %v794 = vunpack.c.h.b16 %v258
      %v795 = vunpack.c.l.b16 %v259
      %v796 = vunpack.c.h.b16 %v259
      %v797 = vunpack.c.l.b16 %v260
      %v798 = vunpack.c.h.b16 %v260
      %v799 = vunpack.c.l.b16 %v261
      %v800 = vunpack.c.h.b16 %v261
      %v801 = vunpack.c.l.b16 %v262
      %v802 = vunpack.c.l.b16 %v263
      %v803 = vunpack.c.h.b16 %v263
      %v804 = vunpack.c.l.b16 %v264
      %v805 = vunpack.c.h.b16 %v264
      %v806 = vunpack.c.l.b16 %v265
      %v807 = vunpack.c.h.b16 %v265
      %v808 = vunpack.c.l.b16 %v266
      %v809 = vunpack.c.h.b16 %v266
      %v810 = vunpack.c.l.b16 %v267
      %v811 = vunpack.c.l.b16 %v268
      %v812 = vunpack.c.h.b16 %v268
      %v813 = vunpack.c.l.b16 %v269
      %v814 = vunpack.c.h.b16 %v269
      %v815 = vunpack.c.l.b16 %v270
      %v816 = vunpack.c.h.b16 %v270
      %v817 = vunpack.c.l.b16 %v271
      %v818 = vunpack.c.h.b16 %v271
      %v819 = vunpack.c.l.b16 %v272
      %v820 = vunpack.c.l.b16 %v273
      %v821 = vunpack.c.h.b16 %v273
      %v822 = vunpack.c.l.b16 %v274
      %v823 = vunpack.c.h.b16 %v274
      %v824 = vunpack.c.l.b16 %v275
      %v825 = vunpack.c.h.b16 %v275
      %v826 = vunpack.c.l.b16 %v276
      %v827 = vunpack.c.h.b16 %v276
      %v828 = vunpack.c.l.b16 %v277
      %v829 = vunpack.c.l.b16 %v278
      %v830 = vunpack.c.h.b16 %v278
      %v831 = vunpack.c.l.b16 %v279
      %v832 = vunpack.c.h.b16 %v279
      %v833 = vunpack.c.l.b16 %v280
      %v834 = vunpack.c.h.b16 %v280
      %v835 = vunpack.c.l.b16 %v281
      %v836 = vunpack.c.h.b16 %v281
      %v837 = vunpack.c.l.b16 %v282
      %v838 = vunpack.c.l.b16 %v283
      %v839 = vunpack.c.h.b16 %v283
      %v840 = vunpack.c.l.b16 %v284
      %v841 = vunpack.c.h.b16 %v284
      %v842 = vunpack.c.l.b16 %v285
      %v843 = vunpack.c.h.b16 %v285
      %v844 = vunpack.c.l.b16 %v286
      %v845 = vunpack.c.h.b16 %v286
      %v846 = vunpack.c.l.b16 %v287
      %v847 = vunpack.c.l.b16 %v288
      %v848 = vunpack.c.h.b16 %v288
      %v849 = vunpack.c.l.b16 %v289
      %v850 = vunpack.c.h.b16 %v289
      %v851 = vunpack.c.l.b16 %v290
      %v852 = vunpack.c.h.b16 %v290
      %v853 = vunpack.c.l.b16 %v291
      %v854 = vunpack.c.h.b16 %v291
      %v855 = vunpack.c.l.b16 %v292
      %v856 = vunpack.c.l.b16 %v293
      %v857 = vunpack.c.h.b16 %v293
      %v858 = vunpack.c.l.b16 %v294
      %v859 = vunpack.c.h.b16 %v294
      %v860 = vunpack.c.l.b16 %v295
      %v861 = vunpack.c.h.b16 %v295
      %v862 = vunpack.c.l.b16 %v296
      %v863 = vunpack.c.h.b16 %v296
      %v864 = vunpack.c.l.b16 %v297
      %v865 = vunpack.c.l.b16 %v298
      %v866 = vunpack.c.h.b16 %v298
      %v867 = vunpack.c.l.b16 %v299
      %v868 = vunpack.c.h.b16 %v299
      %v869 = vunpack.c.l.b16 %v300
      %v870 = vunpack.c.h.b16 %v300
      %v871 = vunpack.c.l.b16 %v301
      %v872 = vunpack.c.h.b16 %v301
      %v873 = vunpack.c.l.b16 %v302
      %v874 = vunpack.c.l.b16 %v303
      %v875 = vunpack.c.h.b16 %v303
      %v876 = vunpack.c.l.b16 %v304
      %v877 = vunpack.c.h.b16 %v304
      %v878 = vunpack.c.l.b16 %v305
      %v879 = vunpack.c.h.b16 %v305
      %v880 = vunpack.c.l.b16 %v306
      %v881 = vunpack.c.h.b16 %v306
      %v882 = vunpack.c.l.b16 %v307
      %v883 = vunpack.c.l.b16 %v308
      %v884 = vunpack.c.h.b16 %v308
      %v885 = vunpack.c.l.b16 %v309
      %v886 = vunpack.c.h.b16 %v309
      %v887 = vunpack.c.l.b16 %v310
      %v888 = vunpack.c.h.b16 %v310
      %v889 = vunpack.c.l.b16 %v311
      %v890 = vunpack.c.h.b16 %v311
      %v891 = vunpack.c.l.b16 %v312
      %v892 = vunpack.c.l.b16 %v313
      %v893 = vunpack.c.h.b16 %v313
      %v894 = vunpack.c.l.b16 %v314
      %v895 = vunpack.c.h.b16 %v314
      %v896 = vunpack.c.l.b16 %v315
      %v897 = vunpack.c.h.b16 %v315
      %v898 = vunpack.c.l.b16 %v316
      %v899 = vunpack.c.h.b16 %v316
      %v900 = vunpack.c.l.b16 %v317
      %v901 = vunpack.c.l.b16 %v318
      %v902 = vunpack.c.h.b16 %v318
      %v903 = vunpack.c.l.b16 %v319
      %v904 = vunpack.c.h.b16 %v319
      %v905 = vunpack.c.l.b16 %v320
      %v906 = vunpack.c.h.b16 %v320
      %v907 = vunpack.c.l.b16 %v321
      %v908 = vunpack.c.h.b16 %v321
      %v909 = vunpack.c.l.b16 %v322
      %v910 = vunpack.c.l.b16 %v323
      %v911 = vunpack.c.h.b16 %v323
      %v912 = vunpack.c.l.b16 %v324
      %v913 = vunpack.c.h.b16 %v324
      %v914 = vunpack.c.l.b16 %v325
      %v915 = vunpack.c.h.b16 %v325
      %v916 = vunpack.c.l.b16 %v326
      %v917 = vunpack.c.h.b16 %v326
      %v918 = vunpack.c.l.b16 %v327
      %v919 = vunpack.c.l.b16 %v328
      %v920 = vunpack.c.h.b16 %v328
      %v921 = vunpack.c.l.b16 %v329
      %v922 = vunpack.c.h.b16 %v329
      %v923 = vunpack.c.l.b16 %v330
      %v924 = vunpack.c.h.b16 %v330
      %v925 = vunpack.c.l.b16 %v331
      %v926 = vunpack.c.h.b16 %v331
      %v927 = vunpack.c.l.b16 %v332
      %v928 = vunpack.c.l.b16 %v333
      %v929 = vunpack.c.h.b16 %v333
      %v930 = vunpack.c.l.b16 %v334
      %v931 = vunpack.c.h.b16 %v334
      %v932 = vunpack.c.l.b16 %v335
      %v933 = vunpack.c.h.b16 %v335
      %v934 = vunpack.c.l.b16 %v336
      %v935 = vunpack.c.h.b16 %v336
      %v936 = vunpack.c.l.b16 %v337
      %v937 = vpack.c.b16 %v658, %v649
      %v938 = vpack.c.b16 %v659, %v650
      %v939 = vpack.c.b16 %v660, %v651
      %v940 = vpack.c.b16 %v661, %v652
      %v941 = vpack.c.b16 %v662, %v653
      %v942 = vpack.c.b16 %v663, %v654
      %v943 = vpack.c.b16 %v664, %v655
      %v944 = vpack.c.b16 %v665, %v656
      %v945 = vpack.c.b16 %v666, %v657
      %v946 = vpack.c.b16 %v676, %v667
      %v947 = vpack.c.b16 %v677, %v668
      %v948 = vpack.c.b16 %v678, %v669
      %v949 = vpack.c.b16 %v679, %v670
      %v950 = vpack.c.b16 %v680, %v671
      %v951 = vpack.c.b16 %v681, %v672
      %v952 = vpack.c.b16 %v682, %v673
      %v953 = vpack.c.b16 %v683, %v674
      %v954 = vpack.c.b16 %v684, %v675
      %v955 = vpack.c.b16 %v694, %v685
      %v956 = vpack.c.b16 %v695, %v686
      %v957 = vpack.c.b16 %v696, %v687
      %v958 = vpack.c.b16 %v697, %v688
      %v959 = vpack.c.b16 %v698, %v689
      %v960 = vpack.c.b16 %v699, %v690
      %v961 = vpack.c.b16 %v700, %v691
      %v962 = vpack.c.b16 %v701, %v692
      %v963 = vpack.c.b16 %v702, %v693
      %v964 = vpack.c.b16 %v712, %v703
      %v965 = vpack.c.b16 %v713, %v704
      %v966 = vpack.c.b16 %v714, %v705
      %v967 = vpack.c.b16 %v715, %v706
      %v968 = vpack.c.b16 %v716, %v707
      %v969 = vpack.c.b16 %v717, %v708
      %v970 = vpack.c.b16 %v718, %v709
      %v971 = vpack.c.b16 %v719, %v710
      %v972 = vpack.c.b16 %v720, %v711
      %v973 = vpack.c.b16 %v730, %v721
      %v974 = vpack.c.b16 %v731, %v722
      %v975 = vpack.c.b16 %v732, %v723
      %v976 = vpack.c.b16 %v733, %v724
      %v977 = vpack.c.b16 %v734, %v725
      %v978 = vpack.c.b16 %v735, %v726
      %v979 = vpack.c.b16 %v736, %v727
      %v980 = vpack.c.b16 %v737, %v728
      %v981 = vpack.c.b16 %v738, %v729
      %v982 = vpack.c.b16 %v748, %v739
      %v983 = vpack.c.b16 %v749, %v740
      %v984 = vpack.c.b16 %v750, %v741
      %v985 = vpack.c.b16 %v751, %v742
      %v986 = vpack.c.b16 %v752, %v743
      %v987 = vpack.c.b16 %v753, %v744
      %v988 = vpack.c.b16 %v754, %v745
      %v989 = vpack.c.b16 %v755, %v746
      %v990 = vpack.c.b16 %v756, %v747
      %v991 = vpack.c.b16 %v766, %v757
      %v992 = vpack.c.b16 %v767, %v758
      %v993 = vpack.c.b16 %v768, %v759
      %v994 = vpack.c.b16 %v769, %v760
      %v995 = vpack.c.b16 %v770, %v761
      %v996 = vpack.c.b16 %v771, %v762
      %v997 = vpack.c.b16 %v772, %v763
      %v998 = vpack.c.b16 %v773, %v764
      %v999 = vpack.c.b16 %v774, %v765
      %v1000 = vpack.c.b16 %v784, %v775
      %v1001 = vpack.c.b16 %v785, %v776
      %v1002 = vpack.c.b16 %v786, %v777
      %v1003 = vpack.c.b16 %v787, %v778
      %v1004 = vpack.c.b16 %v788, %v779
      %v1005 = vpack.c.b16 %v789, %v780
      %v1006 = vpack.c.b16 %v790, %v781
      %v1007 = vpack.c.b16 %v791, %v782
      %v1008 = vpack.c.b16 %v792, %v783
      %v1009 = vpack.c.b16 %v802, %v793
      %v1010 = vpack.c.b16 %v803, %v794
      %v1011 = vpack.c.b16 %v804, %v795
      %v1012 = vpack.c.b16 %v805, %v796
      %v1013 = vpack.c.b16 %v806, %v797
      %v1014 = vpack.c.b16 %v807, %v798
      %v1015 = vpack.c.b16 %v808, %v799
      %v1016 = vpack.c.b16 %v809, %v800
      %v1017 = vpack.c.b16 %v810, %v801
      %v1018 = vpack.c.b16 %v820, %v811
      %v1019 = vpack.c.b16 %v821, %v812
      %v1020 = vpack.c.b16 %v822, %v813
      %v1021 = vpack.c.b16 %v823, %v814
      %v1022 = vpack.c.b16 %v824, %v815
      %v1023 = vpack.c.b16 %v825, %v816
      %v1024 = vpack.c.b16 %v826, %v817
      %v1025 = vpack.c.b16 %v827, %v818
      %v1026 = vpack.c.b16 %v828, %v819
      %v1027 = vpack.c.b16 %v838, %v829
      %v1028 = vpack.c.b16 %v839, %v830
      %v1029 = vpack.c.b16 %v840, %v831
      %v1030 = vpack.c.b16 %v841, %v832
      %v1031 = vpack.c.b16 %v842, %v833
      %v1032 = vpack.c.b16 %v843, %v834
      %v1033 = vpack.c.b16 %v844, %v835
      %v1034 = vpack.c.b16 %v845, %v836
      %v1035 = vpack.c.b16 %v846, %v837
      %v1036 = vpack.c.b16 %v856, %v847
      %v1037 = vpack.c.b16 %v857, %v848
      %v1038 = vpack.c.b16 %v858, %v849
      %v1039 = vpack.c.b16 %v859, %v850
      %v1040 = vpack.c.b16 %v860, %v851
      %v1041 = vpack.c.b16 %v861, %v852
      %v1042 = vpack.c.b16 %v862, %v853
      %v1043 = vpack.c.b16 %v863, %v854
      %v1044 = vpack.c.b16 %v864, %v855
      %v1045 = vpack.c.b16 %v874, %v865
      %v1046 = vpack.c.b16 %v875, %v866
      %v1047 = vpack.c.b16 %v876, %v867
      %v1048 = vpack.c.b16 %v877, %v868
      %v1049 = vpack.c.b16 %v878, %v869
      %v1050 = vpack.c.b16 %v879, %v870
      %v1051 = vpack.c.b16 %v880, %v871
      %v1052 = vpack.c.b16 %v881, %v872
      %v1053 = vpack.c.b16 %v882, %v873
      %v1054 = vpack.c.b16 %v892, %v883
      %v1055 = vpack.c.b16 %v893, %v884
      %v1056 = vpack.c.b16 %v894, %v885
      %v1057 = vpack.c.b16 %v895, %v886
      %v1058 = vpack.c.b16 %v896, %v887
      %v1059 = vpack.c.b16 %v897, %v888
      %v1060 = vpack.c.b16 %v898, %v889
      %v1061 = vpack.c.b16 %v899, %v890
      %v1062 = vpack.c.b16 %v900, %v891
      %v1063 = vpack.c.b16 %v910, %v901
      %v1064 = vpack.c.b16 %v911, %v902
      %v1065 = vpack.c.b16 %v912, %v903
      %v1066 = vpack.c.b16 %v913, %v904
      %v1067 = vpack.c.b16 %v914, %v905
      %v1068 = vpack.c.b16 %v915, %v906
      %v1069 = vpack.c.b16 %v916, %v907
      %v1070 = vpack.c.b16 %v917, %v908
      %v1071 = vpack.c.b16 %v918, %v909
      %v1072 = vpack.c.b16 %v928, %v919
      %v1073 = vpack.c.b16 %v929, %v920
      %v1074 = vpack.c.b16 %v930, %v921
      %v1075 = vpack.c.b16 %v931, %v922
      %v1076 = vpack.c.b16 %v932, %v923
      %v1077 = vpack.c.b16 %v933, %v924
      %v1078 = vpack.c.b16 %v934, %v925
      %v1079 = vpack.c.b16 %v935, %v926
      %v1080 = vpack.c.b16 %v936, %v927
      %v1369 = vunpack.c.l.b16 %v338
      %v1370 = vunpack.c.l.b16 %v339
      %v1371 = vunpack.c.l.b16 %v340
      %v1372 = vunpack.c.l.b16 %v341
      %v1373 = vunpack.c.l.b16 %v342
      %v1374 = vunpack.c.l.b16 %v343
      %v1375 = vunpack.c.l.b16 %v344
      %v1376 = vunpack.c.l.b16 %v345
      %v1377 = vunpack.c.l.b16 %v346
      %v1378 = vunpack.c.l.b16 %v347
      %v1379 = vunpack.c.l.b16 %v348
      %v1380 = vunpack.c.l.b16 %v349
      %v1381 = vunpack.c.l.b16 %v350
      %v1382 = vunpack.c.l.b16 %v351
      %v1383 = vunpack.c.l.b16 %v352
      %v1384 = vunpack.c.l.b16 %v353
      %v1385 = vunpack.c.l.b16 %v354
      %v1386 = vunpack.c.l.b16 %v355
      %v1387 = vunpack.c.l.b16 %v356
      %v1388 = vunpack.c.l.b16 %v357
      %v1389 = vunpack.c.l.b16 %v358
      %v1390 = vunpack.c.l.b16 %v359
      %v1391 = vunpack.c.l.b16 %v360
      %v1392 = vunpack.c.l.b16 %v361
      %v1393 = vunpack.c.l.b16 %v362
      %v1394 = vunpack.c.l.b16 %v363
      %v1395 = vunpack.c.l.b16 %v364
      %v1396 = vunpack.c.l.b16 %v365
      %v1397 = vunpack.c.l.b16 %v366
      %v1398 = vunpack.c.l.b16 %v367
      %v1399 = vunpack.c.l.b16 %v368
      %v1400 = vunpack.c.l.b16 %v369
      %v1401 = vunpack.c.l.b16 %v370
      %v1402 = vunpack.c.l.b16 %v371
      %v1403 = vunpack.c.l.b16 %v372
      %v1404 = vunpack.c.l.b16 %v373
      %v1405 = vunpack.c.l.b16 %v374
      %v1406 = vunpack.c.l.b16 %v375
      %v1407 = vunpack.c.l.b16 %v376
      %v1408 = vunpack.c.l.b16 %v377
      %v1409 = vunpack.c.l.b16 %v378
      %v1410 = vunpack.c.l.b16 %v379
      %v1411 = vunpack.c.l.b16 %v380
      %v1412 = vunpack.c.l.b16 %v381
      %v1413 = vunpack.c.l.b16 %v382
      %v1414 = vunpack.c.l.b16 %v383
      %v1415 = vunpack.c.l.b16 %v384
      %v1416 = vunpack.c.l.b16 %v385
      %v1417 = vunpack.c.l.b16 %v386
      %v1418 = vunpack.c.l.b16 %v387
      %v1419 = vunpack.c.l.b16 %v388
      %v1420 = vunpack.c.l.b16 %v389
      %v1421 = vunpack.c.l.b16 %v390
      %v1422 = vunpack.c.l.b16 %v391
      %v1423 = vunpack.c.l.b16 %v392
      %v1424 = vunpack.c.l.b16 %v393
      %v1425 = vunpack.c.l.b16 %v394
      %v1426 = vunpack.c.l.b16 %v395
      %v1427 = vunpack.c.l.b16 %v396
      %v1428 = vunpack.c.l.b16 %v397
      %v1429 = vunpack.c.l.b16 %v398
      %v1430 = vunpack.c.l.b16 %v399
      %v1431 = vunpack.c.l.b16 %v400
      %v1432 = vunpack.c.l.b16 %v401
      %v1433 = vunpack.c.l.b16 %v402
      %v1434 = vunpack.c.l.b16 %v403
      %v1435 = vunpack.c.l.b16 %v404
      %v1436 = vunpack.c.l.b16 %v405
      %v1437 = vunpack.c.l.b16 %v406
      %v1438 = vunpack.c.l.b16 %v407
      %v1439 = vunpack.c.l.b16 %v408
      %v1440 = vunpack.c.l.b16 %v409
      %v1441 = vunpack.c.l.b16 %v410
      %v1442 = vunpack.c.l.b16 %v411
      %v1443 = vunpack.c.l.b16 %v412
      %v1444 = vunpack.c.l.b16 %v413
      %v1445 = vunpack.c.l.b16 %v414
      %v1446 = vunpack.c.l.b16 %v415
      %v1447 = vunpack.c.l.b16 %v416
      %v1448 = vunpack.c.l.b16 %v417
      %v1449 = vunpack.c.l.b16 %v418
      %v1450 = vunpack.c.l.b16 %v419
      %v1451 = vunpack.c.l.b16 %v420
      %v1452 = vunpack.c.l.b16 %v421
      %v1453 = vunpack.c.l.b16 %v422
      %v1454 = vunpack.c.l.b16 %v423
      %v1455 = vunpack.c.l.b16 %v424
      %v1456 = vunpack.c.l.b16 %v425
      %v1457 = vunpack.c.l.b16 %v426
      %v1458 = vunpack.c.l.b16 %v427
      %v1459 = vunpack.c.l.b16 %v428
      %v1460 = vunpack.c.l.b16 %v429
      %v1461 = vunpack.c.l.b16 %v430
      %v1462 = vunpack.c.l.b16 %v431
      %v1463 = vunpack.c.l.b16 %v432
      %v1464 = vunpack.c.l.b16 %v433
      %v1465 = vunpack.c.l.b16 %v434
      %v1466 = vunpack.c.l.b16 %v435
      %v1467 = vunpack.c.l.b16 %v436
      %v1468 = vunpack.c.l.b16 %v437
      %v1469 = vunpack.c.l.b16 %v438
      %v1470 = vunpack.c.l.b16 %v439
      %v1471 = vunpack.c.l.b16 %v440
      %v1472 = vunpack.c.l.b16 %v441
      %v1473 = vunpack.c.l.b16 %v442
      %v1474 = vunpack.c.l.b16 %v443
      %v1475 = vunpack.c.l.b16 %v444
      %v1476 = vunpack.c.l.b16 %v445
      %v1477 = vunpack.c.l.b16 %v446
      %v1478 = vunpack.c.l.b16 %v447
      %v1479 = vunpack.c.l.b16 %v448
      %v1480 = vunpack.c.l.b16 %v449
      %v1481 = vunpack.c.l.b16 %v450
      %v1482 = vunpack.c.l.b16 %v451
      %v1483 = vunpack.c.l.b16 %v452
      %v1484 = vunpack.c.l.b16 %v453
      %v1485 = vunpack.c.l.b16 %v454
      %v1486 = vunpack.c.l.b16 %v455
      %v1487 = vunpack.c.l.b16 %v456
      %v1488 = vunpack.c.l.b16 %v457
      %v1489 = vunpack.c.l.b16 %v458
      %v1490 = vunpack.c.l.b16 %v459
      %v1491 = vunpack.c.l.b16 %v460
      %v1492 = vunpack.c.l.b16 %v461
      %v1493 = vunpack.c.l.b16 %v462
      %v1494 = vunpack.c.l.b16 %v463
      %v1495 = vunpack.c.l.b16 %v464
      %v1496 = vunpack.c.l.b16 %v465
      %v1497 = vunpack.c.l.b16 %v466
      %v1498 = vunpack.c.l.b16 %v467
      %v1499 = vunpack.c.l.b16 %v468
      %v1500 = vunpack.c.l.b16 %v469
      %v1501 = vunpack.c.l.b16 %v470
      %v1502 = vunpack.c.l.b16 %v471
      %v1503 = vunpack.c.l.b16 %v472
      %v1504 = vunpack.c.l.b16 %v473
      %v1505 = vunpack.c.l.b16 %v474
      %v1506 = vunpack.c.l.b16 %v475
      %v1507 = vunpack.c.l.b16 %v476
      %v1508 = vunpack.c.l.b16 %v477
      %v1509 = vunpack.c.l.b16 %v478
      %v1510 = vunpack.c.l.b16 %v479
      %v1511 = vunpack.c.l.b16 %v480
      %v1512 = vunpack.c.l.b16 %v481
      %v1513 = vpack.c.b16 %v1370, %v1369
      %v1514 = vpack.c.b16 %v1372, %v1371
      %v1515 = vpack.c.b16 %v1374, %v1373
      %v1516 = vpack.c.b16 %v1376, %v1375
      %v1517 = vpack.c.b16 %v1378, %v1377
      %v1518 = vpack.c.b16 %v1380, %v1379
      %v1519 = vpack.c.b16 %v1382, %v1381
      %v1520 = vpack.c.b16 %v1384, %v1383
      %v1521 = vpack.c.b16 %v1386, %v1385
      %v1522 = vpack.c.b16 %v1388, %v1387
      %v1523 = vpack.c.b16 %v1390, %v1389
      %v1524 = vpack.c.b16 %v1392, %v1391
      %v1525 = vpack.c.b16 %v1394, %v1393
      %v1526 = vpack.c.b16 %v1396, %v1395
      %v1527 = vpack.c.b16 %v1398, %v1397
      %v1528 = vpack.c.b16 %v1400, %v1399
      %v1529 = vpack.c.b16 %v1402, %v1401
      %v1530 = vpack.c.b16 %v1404, %v1403
      %v1531 = vpack.c.b16 %v1406, %v1405
      %v1532 = vpack.c.b16 %v1408, %v1407
      %v1533 = vpack.c.b16 %v1410, %v1409
      %v1534 = vpack.c.b16 %v1412, %v1411
      %v1535 = vpack.c.b16 %v1414, %v1413
      %v1536 = vpack.c.b16 %v1416, %v1415
      %v1537 = vpack.c.b16 %v1418, %v1417
      %v1538 = vpack.c.b16 %v1420, %v1419
      %v1539 = vpack.c.b16 %v1422, %v1421
      %v1540 = vpack.c.b16 %v1424, %v1423
      %v1541 = vpack.c.b16 %v1426, %v1425
      %v1542 = vpack.c.b16 %v1428, %v1427
      %v1543 = vpack.c.b16 %v1430, %v1429
      %v1544 = vpack.c.b16 %v1432, %v1431
      %v1545 = vpack.c.b16 %v1434, %v1433
      %v1546 = vpack.c.b16 %v1436, %v1435
      %v1547 = vpack.c.b16 %v1438, %v1437
      %v1548 = vpack.c.b16 %v1440, %v1439
      %v1549 = vpack.c.b16 %v1442, %v1441
      %v1550 = vpack.c.b16 %v1444, %v1443
      %v1551 = vpack.c.b16 %v1446, %v1445
      %v1552 = vpack.c.b16 %v1448, %v1447
      %v1553 = vpack.c.b16 %v1450, %v1449
      %v1554 = vpack.c.b16 %v1452, %v1451
      %v1555 = vpack.c.b16 %v1454, %v1453
      %v1556 = vpack.c.b16 %v1456, %v1455
      %v1557 = vpack.c.b16 %v1458, %v1457
      %v1558 = vpack.c.b16 %v1460, %v1459
      %v1559 = vpack.c.b16 %v1462, %v1461
      %v1560 = vpack.c.b16 %v1464, %v1463
      %v1561 = vpack.c.b16 %v1466, %v1465
      %v1562 = vpack.c.b16 %v1468, %v1467
      %v1563 = vpack.c.b16 %v1470, %v1469
      %v1564 = vpack.c.b16 %v1472, %v1471
      %v1565 = vpack.c.b16 %v1474, %v1473
      %v1566 = vpack.c.b16 %v1476, %v1475
      %v1567 = vpack.c.b16 %v1478, %v1477
      %v1568 = vpack.c.b16 %v1480, %v1479
      %v1569 = vpack.c.b16 %v1482, %v1481
      %v1570 = vpack.c.b16 %v1484, %v1483
      %v1571 = vpack.c.b16 %v1486, %v1485
      %v1572 = vpack.c.b16 %v1488, %v1487
      %v1573 = vpack.c.b16 %v1490, %v1489
      %v1574 = vpack.c.b16 %v1492, %v1491
      %v1575 = vpack.c.b16 %v1494, %v1493
      %v1576 = vpack.c.b16 %v1496, %v1495
      %v1577 = vpack.c.b16 %v1498, %v1497
      %v1578 = vpack.c.b16 %v1500, %v1499
      %v1579 = vpack.c.b16 %v1502, %v1501
      %v1580 = vpack.c.b16 %v1504, %v1503
      %v1581 = vpack.c.b16 %v1506, %v1505
      %v1582 = vpack.c.b16 %v1508, %v1507
      %v1583 = vpack.c.b16 %v1510, %v1509
      %v1584 = vpack.c.b16 %v1512, %v1511
      %1657 = vmatprep.subr.bf16.mxu0 0
      %1658 = vmatpush1.bf16.msra.mxu0 %v1513
      %1659 = vmatprep.subr.bf16.mxu0 0
      %1660 = vmatpush1.bf16.msra.mxu0 %v1514
      %1661 = vmatprep.subr.bf16.mxu0 0
      %1662 = vmatpush1.bf16.msra.mxu0 %v1515
      %1663 = vmatprep.subr.bf16.mxu0 0
      %1664 = vmatpush1.bf16.msra.mxu0 %v1516
      %1665 = vmatprep.subr.bf16.mxu0 0
      %1666 = vmatpush1.bf16.msra.mxu0 %v1517
      %1667 = vmatprep.subr.bf16.mxu0 0
      %1668 = vmatpush1.bf16.msra.mxu0 %v1518
      %1669 = vmatprep.subr.bf16.mxu0 0
      %1670 = vmatpush1.bf16.msra.mxu0 %v1519
      %1671 = vmatprep.subr.bf16.mxu0 0
      %1672 = vmatpush1.bf16.msra.mxu0 %v1520
      %1673 = vmatprep.subr.bf16.mxu0 0
      %1674 = vmatpush1.bf16.msra.mxu0 %v1521
      %1675 = vmatprep.subr.bf16.mxu0 0
      %1676 = vmatpush1.bf16.msra.mxu0 %v1522
      %1677 = vmatprep.subr.bf16.mxu0 0
      %1678 = vmatpush1.bf16.msra.mxu0 %v1523
      %1679 = vmatprep.subr.bf16.mxu0 0
      %1680 = vmatpush1.bf16.msra.mxu0 %v1524
      %1681 = vmatprep.subr.bf16.mxu0 0
      %1682 = vmatpush1.bf16.msra.mxu0 %v1525
      %1683 = vmatprep.subr.bf16.mxu0 0
      %1684 = vmatpush1.bf16.msra.mxu0 %v1526
      %1685 = vmatprep.subr.bf16.mxu0 0
      %1686 = vmatpush1.bf16.msra.mxu0 %v1527
      %1687 = vmatprep.subr.bf16.mxu0 0
      %1688 = vmatpush1.bf16.msra.mxu0 %v1528
      %1689 = vmatprep.mubr.bf16.mxu0 %v938
      %1690 = vmatmul.mubr.bf16.gmra.mrb[0].mxu0 %v937
      %v1691 = vpop.f32.mrb[0].mxu0
      %v1692 = vadd.f32 %v487, %v1691
      %v1693 = vpop.f32.mrb[0].mxu0
      %v1694 = vpop.f32.mrb[0].mxu0
      %v1695 = vadd.f32 %v487, %v1694
      %v1696 = vpop.f32.mrb[0].mxu0
      %1697 = vmatprep.mubr.bf16.mxu0 %v947
      %1698 = vmatmul.mubr.bf16.gmra.mrb[0].mxu0 %v946
      %v1699 = vpop.f32.mrb[0].mxu0
      %v1700 = vadd.f32 %v487, %v1699
      %v1701 = vpop.f32.mrb[0].mxu0
      %v1702 = vpop.f32.mrb[0].mxu0
      %v1703 = vadd.f32 %v487, %v1702
      %v1704 = vpop.f32.mrb[0].mxu0
      %1705 = vmatprep.mubr.bf16.mxu0 %v956
      %1706 = vmatmul.mubr.bf16.gmra.mrb[0].mxu0 %v955
      %v1707 = vpop.f32.mrb[0].mxu0
      %v1708 = vadd.f32 %v487, %v1707
      %v1709 = vpop.f32.mrb[0].mxu0
      %v1710 = vpop.f32.mrb[0].mxu0
      %v1711 = vadd.f32 %v487, %v1710
      %v1712 = vpop.f32.mrb[0].mxu0
      %1713 = vmatprep.mubr.bf16.mxu0 %v965
      %1714 = vmatmul.mubr.bf16.gmra.mrb[0].mxu0 %v964
      %v1715 = vpop.f32.mrb[0].mxu0
      %v1716 = vadd.f32 %v487, %v1715
      %v1717 = vpop.f32.mrb[0].mxu0
      %v1718 = vpop.f32.mrb[0].mxu0
      %v1719 = vadd.f32 %v487, %v1718
      %v1720 = vpop.f32.mrb[0].mxu0
      %1721 = vmatprep.mubr.bf16.mxu0 %v974
      %1722 = vmatmul.mubr.bf16.gmra.mrb[0].mxu0 %v973
      %v1723 = vpop.f32.mrb[0].mxu0
      %v1724 = vadd.f32 %v487, %v1723
      %v1725 = vpop.f32.mrb[0].mxu0
      %v1726 = vpop.f32.mrb[0].mxu0
      %v1727 = vadd.f32 %v487, %v1726
      %v1728 = vpop.f32.mrb[0].mxu0
      %1729 = vmatprep.mubr.bf16.mxu0 %v983
      %1730 = vmatmul.mubr.bf16.gmra.mrb[0].mxu0 %v982
      %v1731 = vpop.f32.mrb[0].mxu0
      %v1732 = vadd.f32 %v487, %v1731
      %v1733 = vpop.f32.mrb[0].mxu0
      %v1734 = vpop.f32.mrb[0].mxu0
      %v1735 = vadd.f32 %v487, %v1734
      %v1736 = vpop.f32.mrb[0].mxu0
      %1737 = vmatprep.mubr.bf16.mxu0 %v992
      %1738 = vmatmul.mubr.bf16.gmra.mrb[0].mxu0 %v991
      %v1739 = vpop.f32.mrb[0].mxu0
      %v1740 = vadd.f32 %v487, %v1739
      %v1741 = vpop.f32.mrb[0].mxu0
      %v1742 = vpop.f32.mrb[0].mxu0
      %v1743 = vadd.f32 %v487, %v1742
      %v1744 = vpop.f32.mrb[0].mxu0
      %1745 = vmatprep.mubr.bf16.mxu0 %v1001
      %1746 = vmatmul.mubr.bf16.gmra.mrb[0].mxu0 %v1000
      %v1747 = vpop.f32.mrb[0].mxu0
      %v1748 = vadd.f32 %v487, %v1747
      %v1749 = vpop.f32.mrb[0].mxu0
      %v1750 = vpop.f32.mrb[0].mxu0
      %v1751 = vadd.f32 %v487, %v1750
      %v1752 = vpop.f32.mrb[0].mxu0
      %1753 = vmatprep.mubr.bf16.mxu0 %v1010
      %1754 = vmatmul.mubr.bf16.gmra.mrb[0].mxu0 %v1009
      %v1755 = vpop.f32.mrb[0].mxu0
      %v1756 = vadd.f32 %v487, %v1755
      %v1757 = vpop.f32.mrb[0].mxu0
      %v1758 = vpop.f32.mrb[0].mxu0
      %v1759 = vadd.f32 %v487, %v1758
      %v1760 = vpop.f32.mrb[0].mxu0
      %1761 = vmatprep.mubr.bf16.mxu0 %v1019
      %1762 = vmatmul.mubr.bf16.gmra.mrb[0].mxu0 %v1018
      %v1763 = vpop.f32.mrb[0].mxu0
      %v1764 = vadd.f32 %v487, %v1763
      %v1765 = vpop.f32.mrb[0].mxu0
      %v1766 = vpop.f32.mrb[0].mxu0
      %v1767 = vadd.f32 %v487, %v1766
      %v1768 = vpop.f32.mrb[0].mxu0
      %1769 = vmatprep.mubr.bf16.mxu0 %v1028
      %1770 = vmatmul.mubr.bf16.gmra.mrb[0].mxu0 %v1027
      %v1771 = vpop.f32.mrb[0].mxu0
      %v1772 = vadd.f32 %v487, %v1771
      %v1773 = vpop.f32.mrb[0].mxu0
      %v1774 = vpop.f32.mrb[0].mxu0
      %v1775 = vadd.f32 %v487, %v1774
      %v1776 = vpop.f32.mrb[0].mxu0
      %1777 = vmatprep.mubr.bf16.mxu0 %v1037
      %1778 = vmatmul.mubr.bf16.gmra.mrb[0].mxu0 %v1036
      %v1779 = vpop.f32.mrb[0].mxu0
      %v1780 = vadd.f32 %v487, %v1779
      %v1781 = vpop.f32.mrb[0].mxu0
      %v1782 = vpop.f32.mrb[0].mxu0
      %v1783 = vadd.f32 %v487, %v1782
      %v1784 = vpop.f32.mrb[0].mxu0
      %1785 = vmatprep.mubr.bf16.mxu0 %v1046
      %1786 = vmatmul.mubr.bf16.gmra.mrb[0].mxu0 %v1045
      %v1787 = vpop.f32.mrb[0].mxu0
      %v1788 = vadd.f32 %v487, %v1787
      %v1789 = vpop.f32.mrb[0].mxu0
      %v1790 = vpop.f32.mrb[0].mxu0
      %v1791 = vadd.f32 %v487, %v1790
      %v1792 = vpop.f32.mrb[0].mxu0
      %1793 = vmatprep.mubr.bf16.mxu0 %v1055
      %1794 = vmatmul.mubr.bf16.gmra.mrb[0].mxu0 %v1054
      %v1795 = vpop.f32.mrb[0].mxu0
      %v1796 = vadd.f32 %v487, %v1795
      %v1797 = vpop.f32.mrb[0].mxu0
      %v1798 = vpop.f32.mrb[0].mxu0
      %v1799 = vadd.f32 %v487, %v1798
      %v1800 = vpop.f32.mrb[0].mxu0
      %1801 = vmatprep.mubr.bf16.mxu0 %v1064
      %1802 = vmatmul.mubr.bf16.gmra.mrb[0].mxu0 %v1063
      %v1803 = vpop.f32.mrb[0].mxu0
      %v1804 = vadd.f32 %v487, %v1803
      %v1805 = vpop.f32.mrb[0].mxu0
      %v1806 = vpop.f32.mrb[0].mxu0
      %v1807 = vadd.f32 %v487, %v1806
      %v1808 = vpop.f32.mrb[0].mxu0
      %1809 = vmatprep.mubr.bf16.mxu0 %v1073
      %1810 = vmatmul.mubr.bf16.gmra.mrb[0].mxu0 %v1072
      %v1811 = vpop.f32.mrb[0].mxu0
      %v1812 = vadd.f32 %v487, %v1811
      %v1813 = vpop.f32.mrb[0].mxu0
      %v1814 = vpop.f32.mrb[0].mxu0
      %v1815 = vadd.f32 %v487, %v1814
      %v1816 = vpop.f32.mrb[0].mxu0
      %1817 = vdwg.mxu0
      %1818 = vmatprep.subr.bf16.mxu0 0
      %1819 = vmatpush1.bf16.msra.mxu0 %v1529
      %1820 = vmatprep.subr.bf16.mxu0 0
      %1821 = vmatpush1.bf16.msra.mxu0 %v1530
      %1822 = vmatprep.subr.bf16.mxu0 0
      %1823 = vmatpush1.bf16.msra.mxu0 %v1531
      %1824 = vmatprep.subr.bf16.mxu0 0
      %1825 = vmatpush1.bf16.msra.mxu0 %v1532
      %1826 = vmatprep.subr.bf16.mxu0 0
      %1827 = vmatpush1.bf16.msra.mxu0 %v1533
      %1828 = vmatprep.subr.bf16.mxu0 0
      %1829 = vmatpush1.bf16.msra.mxu0 %v1534
      %1830 = vmatprep.subr.bf16.mxu0 0
      %1831 = vmatpush1.bf16.msra.mxu0 %v1535
      %1832 = vmatprep.subr.bf16.mxu0 0
      %1833 = vmatpush1.bf16.msra.mxu0 %v1536
      %1834 = vmatprep.subr.bf16.mxu0 0
      %1835 = vmatpush1.bf16.msra.mxu0 %v1537
      %1836 = vmatprep.subr.bf16.mxu0 0
      %1837 = vmatpush1.bf16.msra.mxu0 %v1538
      %1838 = vmatprep.subr.bf16.mxu0 0
      %1839 = vmatpush1.bf16.msra.mxu0 %v1539
      %1840 = vmatprep.subr.bf16.mxu0 0
      %1841 = vmatpush1.bf16.msra.mxu0 %v1540
      %1842 = vmatprep.subr.bf16.mxu0 0
      %1843 = vmatpush1.bf16.msra.mxu0 %v1541
      %1844 = vmatprep.subr.bf16.mxu0 0
      %1845 = vmatpush1.bf16.msra.mxu0 %v1542
      %1846 = vmatprep.subr.bf16.mxu0 0
      %1847 = vmatpush1.bf16.msra.mxu0 %v1543
      %1848 = vmatprep.subr.bf16.mxu0 0
      %1849 = vmatpush1.bf16.msra.mxu0 %v1544
      %1850 = vmatprep.mubr.bf16.mxu0 %v940
      %1851 = vmatmul.mubr.bf16.gmra.mrb[0].mxu0 %v939
      %v1852 = vpop.f32.mrb[0].mxu0
      %v1853 = vadd.f32 %v1692, %v1852
      %v1854 = vpop.f32.mrb[0].mxu0
      %v1855 = vpop.f32.mrb[0].mxu0
      %v1856 = vadd.f32 %v1695, %v1855
      %v1857 = vpop.f32.mrb[0].mxu0
      %1858 = vmatprep.mubr.bf16.mxu0 %v949
      %1859 = vmatmul.mubr.bf16.gmra.mrb[0].mxu0 %v948
      %v1860 = vpop.f32.mrb[0].mxu0
      %v1861 = vadd.f32 %v1700, %v1860
      %v1862 = vpop.f32.mrb[0].mxu0
      %v1863 = vpop.f32.mrb[0].mxu0
      %v1864 = vadd.f32 %v1703, %v1863
      %v1865 = vpop.f32.mrb[0].mxu0
      %1866 = vmatprep.mubr.bf16.mxu0 %v958
      %1867 = vmatmul.mubr.bf16.gmra.mrb[0].mxu0 %v957
      %v1868 = vpop.f32.mrb[0].mxu0
      %v1869 = vadd.f32 %v1708, %v1868
      %v1870 = vpop.f32.mrb[0].mxu0
      %v1871 = vpop.f32.mrb[0].mxu0
      %v1872 = vadd.f32 %v1711, %v1871
      %v1873 = vpop.f32.mrb[0].mxu0
      %1874 = vmatprep.mubr.bf16.mxu0 %v967
      %1875 = vmatmul.mubr.bf16.gmra.mrb[0].mxu0 %v966
      %v1876 = vpop.f32.mrb[0].mxu0
      %v1877 = vadd.f32 %v1716, %v1876
      %v1878 = vpop.f32.mrb[0].mxu0
      %v1879 = vpop.f32.mrb[0].mxu0
      %v1880 = vadd.f32 %v1719, %v1879
      %v1881 = vpop.f32.mrb[0].mxu0
      %1882 = vmatprep.mubr.bf16.mxu0 %v976
      %1883 = vmatmul.mubr.bf16.gmra.mrb[0].mxu0 %v975
      %v1884 = vpop.f32.mrb[0].mxu0
      %v1885 = vadd.f32 %v1724, %v1884
      %v1886 = vpop.f32.mrb[0].mxu0
      %v1887 = vpop.f32.mrb[0].mxu0
      %v1888 = vadd.f32 %v1727, %v1887
      %v1889 = vpop.f32.mrb[0].mxu0
      %1890 = vmatprep.mubr.bf16.mxu0 %v985
      %1891 = vmatmul.mubr.bf16.gmra.mrb[0].mxu0 %v984
      %v1892 = vpop.f32.mrb[0].mxu0
      %v1893 = vadd.f32 %v1732, %v1892
      %v1894 = vpop.f32.mrb[0].mxu0
      %v1895 = vpop.f32.mrb[0].mxu0
      %v1896 = vadd.f32 %v1735, %v1895
      %v1897 = vpop.f32.mrb[0].mxu0
      %1898 = vmatprep.mubr.bf16.mxu0 %v994
      %1899 = vmatmul.mubr.bf16.gmra.mrb[0].mxu0 %v993
      %v1900 = vpop.f32.mrb[0].mxu0
      %v1901 = vadd.f32 %v1740, %v1900
      %v1902 = vpop.f32.mrb[0].mxu0
      %v1903 = vpop.f32.mrb[0].mxu0
      %v1904 = vadd.f32 %v1743, %v1903
      %v1905 = vpop.f32.mrb[0].mxu0
      %1906 = vmatprep.mubr.bf16.mxu0 %v1003
      %1907 = vmatmul.mubr.bf16.gmra.mrb[0].mxu0 %v1002
      %v1908 = vpop.f32.mrb[0].mxu0
      %v1909 = vadd.f32 %v1748, %v1908
      %v1910 = vpop.f32.mrb[0].mxu0
      %v1911 = vpop.f32.mrb[0].mxu0
      %v1912 = vadd.f32 %v1751, %v1911
      %v1913 = vpop.f32.mrb[0].mxu0
      %1914 = vmatprep.mubr.bf16.mxu0 %v1012
      %1915 = vmatmul.mubr.bf16.gmra.mrb[0].mxu0 %v1011
      %v1916 = vpop.f32.mrb[0].mxu0
      %v1917 = vadd.f32 %v1756, %v1916
      %v1918 = vpop.f32.mrb[0].mxu0
      %v1919 = vpop.f32.mrb[0].mxu0
      %v1920 = vadd.f32 %v1759, %v1919
      %v1921 = vpop.f32.mrb[0].mxu0
      %1922 = vmatprep.mubr.bf16.mxu0 %v1021
      %1923 = vmatmul.mubr.bf16.gmra.mrb[0].mxu0 %v1020
      %v1924 = vpop.f32.mrb[0].mxu0
      %v1925 = vadd.f32 %v1764, %v1924
      %v1926 = vpop.f32.mrb[0].mxu0
      %v1927 = vpop.f32.mrb[0].mxu0
      %v1928 = vadd.f32 %v1767, %v1927
      %v1929 = vpop.f32.mrb[0].mxu0
      %1930 = vmatprep.mubr.bf16.mxu0 %v1030
      %1931 = vmatmul.mubr.bf16.gmra.mrb[0].mxu0 %v1029
      %v1932 = vpop.f32.mrb[0].mxu0
      %v1933 = vadd.f32 %v1772, %v1932
      %v1934 = vpop.f32.mrb[0].mxu0
      %v1935 = vpop.f32.mrb[0].mxu0
      %v1936 = vadd.f32 %v1775, %v1935
      %v1937 = vpop.f32.mrb[0].mxu0
      %1938 = vmatprep.mubr.bf16.mxu0 %v1039
      %1939 = vmatmul.mubr.bf16.gmra.mrb[0].mxu0 %v1038
      %v1940 = vpop.f32.mrb[0].mxu0
      %v1941 = vadd.f32 %v1780, %v1940
      %v1942 = vpop.f32.mrb[0].mxu0
      %v1943 = vpop.f32.mrb[0].mxu0
      %v1944 = vadd.f32 %v1783, %v1943
      %v1945 = vpop.f32.mrb[0].mxu0
      %1946 = vmatprep.mubr.bf16.mxu0 %v1048
      %1947 = vmatmul.mubr.bf16.gmra.mrb[0].mxu0 %v1047
      %v1948 = vpop.f32.mrb[0].mxu0
      %v1949 = vadd.f32 %v1788, %v1948
      %v1950 = vpop.f32.mrb[0].mxu0
      %v1951 = vpop.f32.mrb[0].mxu0
      %v1952 = vadd.f32 %v1791, %v1951
      %v1953 = vpop.f32.mrb[0].mxu0
      %1954 = vmatprep.mubr.bf16.mxu0 %v1057
      %1955 = vmatmul.mubr.bf16.gmra.mrb[0].mxu0 %v1056
      %v1956 = vpop.f32.mrb[0].mxu0
      %v1957 = vadd.f32 %v1796, %v1956
      %v1958 = vpop.f32.mrb[0].mxu0
      %v1959 = vpop.f32.mrb[0].mxu0
      %v1960 = vadd.f32 %v1799, %v1959
      %v1961 = vpop.f32.mrb[0].mxu0
      %1962 = vmatprep.mubr.bf16.mxu0 %v1066
      %1963 = vmatmul.mubr.bf16.gmra.mrb[0].mxu0 %v1065
      %v1964 = vpop.f32.mrb[0].mxu0
      %v1965 = vadd.f32 %v1804, %v1964
      %v1966 = vpop.f32.mrb[0].mxu0
      %v1967 = vpop.f32.mrb[0].mxu0
      %v1968 = vadd.f32 %v1807, %v1967
      %v1969 = vpop.f32.mrb[0].mxu0
      %1970 = vmatprep.mubr.bf16.mxu0 %v1075
      %1971 = vmatmul.mubr.bf16.gmra.mrb[0].mxu0 %v1074
      %v1972 = vpop.f32.mrb[0].mxu0
      %v1973 = vadd.f32 %v1812, %v1972
      %v1974 = vpop.f32.mrb[0].mxu0
      %v1975 = vpop.f32.mrb[0].mxu0
      %v1976 = vadd.f32 %v1815, %v1975
      %v1977 = vpop.f32.mrb[0].mxu0
      %1978 = vdwg.mxu0
      %1979 = vmatprep.subr.bf16.mxu0 0
      %1980 = vmatpush1.bf16.msra.mxu0 %v1545
      %1981 = vmatprep.subr.bf16.mxu0 0
      %1982 = vmatpush1.bf16.msra.mxu0 %v1546
      %1983 = vmatprep.subr.bf16.mxu0 0
      %1984 = vmatpush1.bf16.msra.mxu0 %v1547
      %1985 = vmatprep.subr.bf16.mxu0 0
      %1986 = vmatpush1.bf16.msra.mxu0 %v1548
      %1987 = vmatprep.subr.bf16.mxu0 0
      %1988 = vmatpush1.bf16.msra.mxu0 %v1549
      %1989 = vmatprep.subr.bf16.mxu0 0
      %1990 = vmatpush1.bf16.msra.mxu0 %v1550
      %1991 = vmatprep.subr.bf16.mxu0 0
      %1992 = vmatpush1.bf16.msra.mxu0 %v1551
      %1993 = vmatprep.subr.bf16.mxu0 0
      %1994 = vmatpush1.bf16.msra.mxu0 %v1552
      %1995 = vmatprep.subr.bf16.mxu0 0
      %1996 = vmatpush1.bf16.msra.mxu0 %v1553
      %1997 = vmatprep.subr.bf16.mxu0 0
      %1998 = vmatpush1.bf16.msra.mxu0 %v1554
      %1999 = vmatprep.subr.bf16.mxu0 0
      %2000 = vmatpush1.bf16.msra.mxu0 %v1555
      %2001 = vmatprep.subr.bf16.mxu0 0
      %2002 = vmatpush1.bf16.msra.mxu0 %v1556
      %2003 = vmatprep.subr.bf16.mxu0 0
      %2004 = vmatpush1.bf16.msra.mxu0 %v1557
      %2005 = vmatprep.subr.bf16.mxu0 0
      %2006 = vmatpush1.bf16.msra.mxu0 %v1558
      %2007 = vmatprep.subr.bf16.mxu0 0
      %2008 = vmatpush1.bf16.msra.mxu0 %v1559
      %2009 = vmatprep.subr.bf16.mxu0 0
      %2010 = vmatpush1.bf16.msra.mxu0 %v1560
      %2011 = vmatprep.mubr.bf16.mxu0 %v942
      %2012 = vmatmul.mubr.bf16.gmra.mrb[0].mxu0 %v941
      %v2013 = vpop.f32.mrb[0].mxu0
      %v2014 = vadd.f32 %v1853, %v2013
      %v2015 = vpop.f32.mrb[0].mxu0
      %v2016 = vpop.f32.mrb[0].mxu0
      %v2017 = vadd.f32 %v1856, %v2016
      %v2018 = vpop.f32.mrb[0].mxu0
      %2019 = vmatprep.mubr.bf16.mxu0 %v951
      %2020 = vmatmul.mubr.bf16.gmra.mrb[0].mxu0 %v950
      %v2021 = vpop.f32.mrb[0].mxu0
      %v2022 = vadd.f32 %v1861, %v2021
      %v2023 = vpop.f32.mrb[0].mxu0
      %v2024 = vpop.f32.mrb[0].mxu0
      %v2025 = vadd.f32 %v1864, %v2024
      %v2026 = vpop.f32.mrb[0].mxu0
      %2027 = vmatprep.mubr.bf16.mxu0 %v960
      %2028 = vmatmul.mubr.bf16.gmra.mrb[0].mxu0 %v959
      %v2029 = vpop.f32.mrb[0].mxu0
      %v2030 = vadd.f32 %v1869, %v2029
      %v2031 = vpop.f32.mrb[0].mxu0
      %v2032 = vpop.f32.mrb[0].mxu0
      %v2033 = vadd.f32 %v1872, %v2032
      %v2034 = vpop.f32.mrb[0].mxu0
      %2035 = vmatprep.mubr.bf16.mxu0 %v969
      %2036 = vmatmul.mubr.bf16.gmra.mrb[0].mxu0 %v968
      %v2037 = vpop.f32.mrb[0].mxu0
      %v2038 = vadd.f32 %v1877, %v2037
      %v2039 = vpop.f32.mrb[0].mxu0
      %v2040 = vpop.f32.mrb[0].mxu0
      %v2041 = vadd.f32 %v1880, %v2040
      %v2042 = vpop.f32.mrb[0].mxu0
      %2043 = vmatprep.mubr.bf16.mxu0 %v978
      %2044 = vmatmul.mubr.bf16.gmra.mrb[0].mxu0 %v977
      %v2045 = vpop.f32.mrb[0].mxu0
      %v2046 = vadd.f32 %v1885, %v2045
      %v2047 = vpop.f32.mrb[0].mxu0
      %v2048 = vpop.f32.mrb[0].mxu0
      %v2049 = vadd.f32 %v1888, %v2048
      %v2050 = vpop.f32.mrb[0].mxu0
      %2051 = vmatprep.mubr.bf16.mxu0 %v987
      %2052 = vmatmul.mubr.bf16.gmra.mrb[0].mxu0 %v986
      %v2053 = vpop.f32.mrb[0].mxu0
      %v2054 = vadd.f32 %v1893, %v2053
      %v2055 = vpop.f32.mrb[0].mxu0
      %v2056 = vpop.f32.mrb[0].mxu0
      %v2057 = vadd.f32 %v1896, %v2056
      %v2058 = vpop.f32.mrb[0].mxu0
      %2059 = vmatprep.mubr.bf16.mxu0 %v996
      %2060 = vmatmul.mubr.bf16.gmra.mrb[0].mxu0 %v995
      %v2061 = vpop.f32.mrb[0].mxu0
      %v2062 = vadd.f32 %v1901, %v2061
      %v2063 = vpop.f32.mrb[0].mxu0
      %v2064 = vpop.f32.mrb[0].mxu0
      %v2065 = vadd.f32 %v1904, %v2064
      %v2066 = vpop.f32.mrb[0].mxu0
      %2067 = vmatprep.mubr.bf16.mxu0 %v1005
      %2068 = vmatmul.mubr.bf16.gmra.mrb[0].mxu0 %v1004
      %v2069 = vpop.f32.mrb[0].mxu0
      %v2070 = vadd.f32 %v1909, %v2069
      %v2071 = vpop.f32.mrb[0].mxu0
      %v2072 = vpop.f32.mrb[0].mxu0
      %v2073 = vadd.f32 %v1912, %v2072
      %v2074 = vpop.f32.mrb[0].mxu0
      %2075 = vmatprep.mubr.bf16.mxu0 %v1014
      %2076 = vmatmul.mubr.bf16.gmra.mrb[0].mxu0 %v1013
      %v2077 = vpop.f32.mrb[0].mxu0
      %v2078 = vadd.f32 %v1917, %v2077
      %v2079 = vpop.f32.mrb[0].mxu0
      %v2080 = vpop.f32.mrb[0].mxu0
      %v2081 = vadd.f32 %v1920, %v2080
      %v2082 = vpop.f32.mrb[0].mxu0
      %2083 = vmatprep.mubr.bf16.mxu0 %v1023
      %2084 = vmatmul.mubr.bf16.gmra.mrb[0].mxu0 %v1022
      %v2085 = vpop.f32.mrb[0].mxu0
      %v2086 = vadd.f32 %v1925, %v2085
      %v2087 = vpop.f32.mrb[0].mxu0
      %v2088 = vpop.f32.mrb[0].mxu0
      %v2089 = vadd.f32 %v1928, %v2088
      %v2090 = vpop.f32.mrb[0].mxu0
      %2091 = vmatprep.mubr.bf16.mxu0 %v1032
      %2092 = vmatmul.mubr.bf16.gmra.mrb[0].mxu0 %v1031
      %v2093 = vpop.f32.mrb[0].mxu0
      %v2094 = vadd.f32 %v1933, %v2093
      %v2095 = vpop.f32.mrb[0].mxu0
      %v2096 = vpop.f32.mrb[0].mxu0
      %v2097 = vadd.f32 %v1936, %v2096
      %v2098 = vpop.f32.mrb[0].mxu0
      %2099 = vmatprep.mubr.bf16.mxu0 %v1041
      %2100 = vmatmul.mubr.bf16.gmra.mrb[0].mxu0 %v1040
      %v2101 = vpop.f32.mrb[0].mxu0
      %v2102 = vadd.f32 %v1941, %v2101
      %v2103 = vpop.f32.mrb[0].mxu0
      %v2104 = vpop.f32.mrb[0].mxu0
      %v2105 = vadd.f32 %v1944, %v2104
      %v2106 = vpop.f32.mrb[0].mxu0
      %2107 = vmatprep.mubr.bf16.mxu0 %v1050
      %2108 = vmatmul.mubr.bf16.gmra.mrb[0].mxu0 %v1049
      %v2109 = vpop.f32.mrb[0].mxu0
      %v2110 = vadd.f32 %v1949, %v2109
      %v2111 = vpop.f32.mrb[0].mxu0
      %v2112 = vpop.f32.mrb[0].mxu0
      %v2113 = vadd.f32 %v1952, %v2112
      %v2114 = vpop.f32.mrb[0].mxu0
      %2115 = vmatprep.mubr.bf16.mxu0 %v1059
      %2116 = vmatmul.mubr.bf16.gmra.mrb[0].mxu0 %v1058
      %v2117 = vpop.f32.mrb[0].mxu0
      %v2118 = vadd.f32 %v1957, %v2117
      %v2119 = vpop.f32.mrb[0].mxu0
      %v2120 = vpop.f32.mrb[0].mxu0
      %v2121 = vadd.f32 %v1960, %v2120
      %v2122 = vpop.f32.mrb[0].mxu0
      %2123 = vmatprep.mubr.bf16.mxu0 %v1068
      %2124 = vmatmul.mubr.bf16.gmra.mrb[0].mxu0 %v1067
      %v2125 = vpop.f32.mrb[0].mxu0
      %v2126 = vadd.f32 %v1965, %v2125
      %v2127 = vpop.f32.mrb[0].mxu0
      %v2128 = vpop.f32.mrb[0].mxu0
      %v2129 = vadd.f32 %v1968, %v2128
      %v2130 = vpop.f32.mrb[0].mxu0
      %2131 = vmatprep.mubr.bf16.mxu0 %v1077
      %2132 = vmatmul.mubr.bf16.gmra.mrb[0].mxu0 %v1076
      %v2133 = vpop.f32.mrb[0].mxu0
      %v2134 = vadd.f32 %v1973, %v2133
      %v2135 = vpop.f32.mrb[0].mxu0
      %v2136 = vpop.f32.mrb[0].mxu0
      %v2137 = vadd.f32 %v1976, %v2136
      %v2138 = vpop.f32.mrb[0].mxu0
      %2139 = vdwg.mxu0
      %2140 = vmatprep.subr.bf16.mxu0 0
      %2141 = vmatpush1.bf16.msra.mxu0 %v1561
      %2142 = vmatprep.subr.bf16.mxu0 0
      %2143 = vmatpush1.bf16.msra.mxu0 %v1562
      %2144 = vmatprep.subr.bf16.mxu0 0
      %2145 = vmatpush1.bf16.msra.mxu0 %v1563
      %2146 = vmatprep.subr.bf16.mxu0 0
      %2147 = vmatpush1.bf16.msra.mxu0 %v1564
      %2148 = vmatprep.subr.bf16.mxu0 0
      %2149 = vmatpush1.bf16.msra.mxu0 %v1565
      %2150 = vmatprep.subr.bf16.mxu0 0
      %2151 = vmatpush1.bf16.msra.mxu0 %v1566
      %2152 = vmatprep.subr.bf16.mxu0 0
      %2153 = vmatpush1.bf16.msra.mxu0 %v1567
      %2154 = vmatprep.subr.bf16.mxu0 0
      %2155 = vmatpush1.bf16.msra.mxu0 %v1568
      %2156 = vmatprep.subr.bf16.mxu0 0
      %2157 = vmatpush1.bf16.msra.mxu0 %v1569
      %2158 = vmatprep.subr.bf16.mxu0 0
      %2159 = vmatpush1.bf16.msra.mxu0 %v1570
      %2160 = vmatprep.subr.bf16.mxu0 0
      %2161 = vmatpush1.bf16.msra.mxu0 %v1571
      %2162 = vmatprep.subr.bf16.mxu0 0
      %2163 = vmatpush1.bf16.msra.mxu0 %v1572
      %2164 = vmatprep.subr.bf16.mxu0 0
      %2165 = vmatpush1.bf16.msra.mxu0 %v1573
      %2166 = vmatprep.subr.bf16.mxu0 0
      %2167 = vmatpush1.bf16.msra.mxu0 %v1574
      %2168 = vmatprep.subr.bf16.mxu0 0
      %2169 = vmatpush1.bf16.msra.mxu0 %v1575
      %2170 = vmatprep.subr.bf16.mxu0 0
      %2171 = vmatpush1.bf16.msra.mxu0 %v1576
      %2172 = vmatprep.mubr.bf16.mxu0 %v944
      %2173 = vmatmul.mubr.bf16.gmra.mrb[0].mxu0 %v943
      %v2174 = vpop.f32.mrb[0].mxu0
      %v2175 = vadd.f32 %v2014, %v2174
      %v2176 = vpop.f32.mrb[0].mxu0
      %v2177 = vpop.f32.mrb[0].mxu0
      %v2178 = vadd.f32 %v2017, %v2177
      %v2179 = vpop.f32.mrb[0].mxu0
      %2180 = vmatprep.mubr.bf16.mxu0 %v953
      %2181 = vmatmul.mubr.bf16.gmra.mrb[0].mxu0 %v952
      %v2182 = vpop.f32.mrb[0].mxu0
      %v2183 = vadd.f32 %v2022, %v2182
      %v2184 = vpop.f32.mrb[0].mxu0
      %v2185 = vpop.f32.mrb[0].mxu0
      %v2186 = vadd.f32 %v2025, %v2185
      %v2187 = vpop.f32.mrb[0].mxu0
      %2188 = vmatprep.mubr.bf16.mxu0 %v962
      %2189 = vmatmul.mubr.bf16.gmra.mrb[0].mxu0 %v961
      %v2190 = vpop.f32.mrb[0].mxu0
      %v2191 = vadd.f32 %v2030, %v2190
      %v2192 = vpop.f32.mrb[0].mxu0
      %v2193 = vpop.f32.mrb[0].mxu0
      %v2194 = vadd.f32 %v2033, %v2193
      %v2195 = vpop.f32.mrb[0].mxu0
      %2196 = vmatprep.mubr.bf16.mxu0 %v971
      %2197 = vmatmul.mubr.bf16.gmra.mrb[0].mxu0 %v970
      %v2198 = vpop.f32.mrb[0].mxu0
      %v2199 = vadd.f32 %v2038, %v2198
      %v2200 = vpop.f32.mrb[0].mxu0
      %v2201 = vpop.f32.mrb[0].mxu0
      %v2202 = vadd.f32 %v2041, %v2201
      %v2203 = vpop.f32.mrb[0].mxu0
      %2204 = vmatprep.mubr.bf16.mxu0 %v980
      %2205 = vmatmul.mubr.bf16.gmra.mrb[0].mxu0 %v979
      %v2206 = vpop.f32.mrb[0].mxu0
      %v2207 = vadd.f32 %v2046, %v2206
      %v2208 = vpop.f32.mrb[0].mxu0
      %v2209 = vpop.f32.mrb[0].mxu0
      %v2210 = vadd.f32 %v2049, %v2209
      %v2211 = vpop.f32.mrb[0].mxu0
      %2212 = vmatprep.mubr.bf16.mxu0 %v989
      %2213 = vmatmul.mubr.bf16.gmra.mrb[0].mxu0 %v988
      %v2214 = vpop.f32.mrb[0].mxu0
      %v2215 = vadd.f32 %v2054, %v2214
      %v2216 = vpop.f32.mrb[0].mxu0
      %v2217 = vpop.f32.mrb[0].mxu0
      %v2218 = vadd.f32 %v2057, %v2217
      %v2219 = vpop.f32.mrb[0].mxu0
      %2220 = vmatprep.mubr.bf16.mxu0 %v998
      %2221 = vmatmul.mubr.bf16.gmra.mrb[0].mxu0 %v997
      %v2222 = vpop.f32.mrb[0].mxu0
      %v2223 = vadd.f32 %v2062, %v2222
      %v2224 = vpop.f32.mrb[0].mxu0
      %v2225 = vpop.f32.mrb[0].mxu0
      %v2226 = vadd.f32 %v2065, %v2225
      %v2227 = vpop.f32.mrb[0].mxu0
      %2228 = vmatprep.mubr.bf16.mxu0 %v1007
      %2229 = vmatmul.mubr.bf16.gmra.mrb[0].mxu0 %v1006
      %v2230 = vpop.f32.mrb[0].mxu0
      %v2231 = vadd.f32 %v2070, %v2230
      %v2232 = vpop.f32.mrb[0].mxu0
      %v2233 = vpop.f32.mrb[0].mxu0
      %v2234 = vadd.f32 %v2073, %v2233
      %v2235 = vpop.f32.mrb[0].mxu0
      %2236 = vmatprep.mubr.bf16.mxu0 %v1016
      %2237 = vmatmul.mubr.bf16.gmra.mrb[0].mxu0 %v1015
      %v2238 = vpop.f32.mrb[0].mxu0
      %v2239 = vadd.f32 %v2078, %v2238
      %v2240 = vpop.f32.mrb[0].mxu0
      %v2241 = vpop.f32.mrb[0].mxu0
      %v2242 = vadd.f32 %v2081, %v2241
      %v2243 = vpop.f32.mrb[0].mxu0
      %2244 = vmatprep.mubr.bf16.mxu0 %v1025
      %2245 = vmatmul.mubr.bf16.gmra.mrb[0].mxu0 %v1024
      %v2246 = vpop.f32.mrb[0].mxu0
      %v2247 = vadd.f32 %v2086, %v2246
      %v2248 = vpop.f32.mrb[0].mxu0
      %v2249 = vpop.f32.mrb[0].mxu0
      %v2250 = vadd.f32 %v2089, %v2249
      %v2251 = vpop.f32.mrb[0].mxu0
      %2252 = vmatprep.mubr.bf16.mxu0 %v1034
      %2253 = vmatmul.mubr.bf16.gmra.mrb[0].mxu0 %v1033
      %v2254 = vpop.f32.mrb[0].mxu0
      %v2255 = vadd.f32 %v2094, %v2254
      %v2256 = vpop.f32.mrb[0].mxu0
      %v2257 = vpop.f32.mrb[0].mxu0
      %v2258 = vadd.f32 %v2097, %v2257
      %v2259 = vpop.f32.mrb[0].mxu0
      %2260 = vmatprep.mubr.bf16.mxu0 %v1043
      %2261 = vmatmul.mubr.bf16.gmra.mrb[0].mxu0 %v1042
      %v2262 = vpop.f32.mrb[0].mxu0
      %v2263 = vadd.f32 %v2102, %v2262
      %v2264 = vpop.f32.mrb[0].mxu0
      %v2265 = vpop.f32.mrb[0].mxu0
      %v2266 = vadd.f32 %v2105, %v2265
      %v2267 = vpop.f32.mrb[0].mxu0
      %2268 = vmatprep.mubr.bf16.mxu0 %v1052
      %2269 = vmatmul.mubr.bf16.gmra.mrb[0].mxu0 %v1051
      %v2270 = vpop.f32.mrb[0].mxu0
      %v2271 = vadd.f32 %v2110, %v2270
      %v2272 = vpop.f32.mrb[0].mxu0
      %v2273 = vpop.f32.mrb[0].mxu0
      %v2274 = vadd.f32 %v2113, %v2273
      %v2275 = vpop.f32.mrb[0].mxu0
      %2276 = vmatprep.mubr.bf16.mxu0 %v1061
      %2277 = vmatmul.mubr.bf16.gmra.mrb[0].mxu0 %v1060
      %v2278 = vpop.f32.mrb[0].mxu0
      %v2279 = vadd.f32 %v2118, %v2278
      %v2280 = vpop.f32.mrb[0].mxu0
      %v2281 = vpop.f32.mrb[0].mxu0
      %v2282 = vadd.f32 %v2121, %v2281
      %v2283 = vpop.f32.mrb[0].mxu0
      %2284 = vmatprep.mubr.bf16.mxu0 %v1070
      %2285 = vmatmul.mubr.bf16.gmra.mrb[0].mxu0 %v1069
      %v2286 = vpop.f32.mrb[0].mxu0
      %v2287 = vadd.f32 %v2126, %v2286
      %v2288 = vpop.f32.mrb[0].mxu0
      %v2289 = vpop.f32.mrb[0].mxu0
      %v2290 = vadd.f32 %v2129, %v2289
      %v2291 = vpop.f32.mrb[0].mxu0
      %2292 = vmatprep.mubr.bf16.mxu0 %v1079
      %2293 = vmatmul.mubr.bf16.gmra.mrb[0].mxu0 %v1078
      %v2294 = vpop.f32.mrb[0].mxu0
      %v2295 = vadd.f32 %v2134, %v2294
      %v2296 = vpop.f32.mrb[0].mxu0
      %v2297 = vpop.f32.mrb[0].mxu0
      %v2298 = vadd.f32 %v2137, %v2297
      %v2299 = vpop.f32.mrb[0].mxu0
      %2300 = vdwg.mxu0
      %2301 = vmatprep.subr.bf16.mxu0 0
      %2302 = vmatpush1.bf16.msra.mxu0 %v1577
      %2303 = vmatprep.subr.bf16.mxu0 0
      %2304 = vmatpush1.bf16.msra.mxu0 %v1578
      %2305 = vmatprep.subr.bf16.mxu0 0
      %2306 = vmatpush1.bf16.msra.mxu0 %v1579
      %2307 = vmatprep.subr.bf16.mxu0 0
      %2308 = vmatpush1.bf16.msra.mxu0 %v1580
      %2309 = vmatprep.subr.bf16.mxu0 0
      %2310 = vmatpush1.bf16.msra.mxu0 %v1581
      %2311 = vmatprep.subr.bf16.mxu0 0
      %2312 = vmatpush1.bf16.msra.mxu0 %v1582
      %2313 = vmatprep.subr.bf16.mxu0 0
      %2314 = vmatpush1.bf16.msra.mxu0 %v1583
      %2315 = vmatprep.subr.bf16.mxu0 0
      %2316 = vmatpush1.bf16.msra.mxu0 %v1584
      %2317 = vmatprep.subr.bf16.mxu0 0
      %2318 = vmatpush1.bf16.msra.mxu0 0
      %2319 = vmatprep.subr.bf16.mxu0 0
      %2320 = vmatpush1.bf16.msra.mxu0 0
      %2321 = vmatprep.subr.bf16.mxu0 0
      %2322 = vmatpush1.bf16.msra.mxu0 0
      %2323 = vmatprep.subr.bf16.mxu0 0
      %2324 = vmatpush1.bf16.msra.mxu0 0
      %2325 = vmatprep.subr.bf16.mxu0 0
      %2326 = vmatpush1.bf16.msra.mxu0 0
      %2327 = vmatprep.subr.bf16.mxu0 0
      %2328 = vmatpush1.bf16.msra.mxu0 0
      %2329 = vmatprep.subr.bf16.mxu0 0
      %2330 = vmatpush1.bf16.msra.mxu0 0
      %2331 = vmatprep.subr.bf16.mxu0 0
      %2332 = vmatpush1.bf16.msra.mxu0 0
      %2333 = vmatprep.mubr.bf16.mxu0 0
      %2334 = vmatmul.mubr.bf16.gmra.mrb[0].mxu0 %v945
      %v2335 = vpop.f32.mrb[0].mxu0
      %v2336 = vadd.f32 %v2175, %v2335
      %v2337 = vpop.f32.mrb[0].mxu0
      %v2338 = vpop.f32.mrb[0].mxu0
      %v2339 = vadd.f32 %v2178, %v2338
      %v2340 = vpop.f32.mrb[0].mxu0
      %2341 = vmatprep.mubr.bf16.mxu0 0
      %2342 = vmatmul.mubr.bf16.gmra.mrb[0].mxu0 %v954
      %v2343 = vpop.f32.mrb[0].mxu0
      %v2344 = vadd.f32 %v2183, %v2343
      %v2345 = vpop.f32.mrb[0].mxu0
      %v2346 = vpop.f32.mrb[0].mxu0
      %v2347 = vadd.f32 %v2186, %v2346
      %v2348 = vpop.f32.mrb[0].mxu0
      %2349 = vmatprep.mubr.bf16.mxu0 0
      %2350 = vmatmul.mubr.bf16.gmra.mrb[0].mxu0 %v963
      %v2351 = vpop.f32.mrb[0].mxu0
      %v2352 = vadd.f32 %v2191, %v2351
      %v2353 = vpop.f32.mrb[0].mxu0
      %v2354 = vpop.f32.mrb[0].mxu0
      %v2355 = vadd.f32 %v2194, %v2354
      %v2356 = vpop.f32.mrb[0].mxu0
      %2357 = vmatprep.mubr.bf16.mxu0 0
      %2358 = vmatmul.mubr.bf16.gmra.mrb[0].mxu0 %v972
      %v2359 = vpop.f32.mrb[0].mxu0
      %v2360 = vadd.f32 %v2199, %v2359
      %v2361 = vpop.f32.mrb[0].mxu0
      %v2362 = vpop.f32.mrb[0].mxu0
      %v2363 = vadd.f32 %v2202, %v2362
      %v2364 = vpop.f32.mrb[0].mxu0
      %2365 = vmatprep.mubr.bf16.mxu0 0
      %2366 = vmatmul.mubr.bf16.gmra.mrb[0].mxu0 %v981
      %v2367 = vpop.f32.mrb[0].mxu0
      %v2368 = vadd.f32 %v2207, %v2367
      %v2369 = vpop.f32.mrb[0].mxu0
      %v2370 = vpop.f32.mrb[0].mxu0
      %v2371 = vadd.f32 %v2210, %v2370
      %v2372 = vpop.f32.mrb[0].mxu0
      %2373 = vmatprep.mubr.bf16.mxu0 0
      %2374 = vmatmul.mubr.bf16.gmra.mrb[0].mxu0 %v990
      %v2375 = vpop.f32.mrb[0].mxu0
      %v2376 = vadd.f32 %v2215, %v2375
      %v2377 = vpop.f32.mrb[0].mxu0
      %v2378 = vpop.f32.mrb[0].mxu0
      %v2379 = vadd.f32 %v2218, %v2378
      %v2380 = vpop.f32.mrb[0].mxu0
      %2381 = vmatprep.mubr.bf16.mxu0 0
      %2382 = vmatmul.mubr.bf16.gmra.mrb[0].mxu0 %v999
      %v2383 = vpop.f32.mrb[0].mxu0
      %v2384 = vadd.f32 %v2223, %v2383
      %v2385 = vpop.f32.mrb[0].mxu0
      %v2386 = vpop.f32.mrb[0].mxu0
      %v2387 = vadd.f32 %v2226, %v2386
      %v2388 = vpop.f32.mrb[0].mxu0
      %2389 = vmatprep.mubr.bf16.mxu0 0
      %2390 = vmatmul.mubr.bf16.gmra.mrb[0].mxu0 %v1008
      %v2391 = vpop.f32.mrb[0].mxu0
      %v2392 = vadd.f32 %v2231, %v2391
      %v2393 = vpop.f32.mrb[0].mxu0
      %v2394 = vpop.f32.mrb[0].mxu0
      %v2395 = vadd.f32 %v2234, %v2394
      %v2396 = vpop.f32.mrb[0].mxu0
      %2397 = vmatprep.mubr.bf16.mxu0 0
      %2398 = vmatmul.mubr.bf16.gmra.mrb[0].mxu0 %v1017
      %v2399 = vpop.f32.mrb[0].mxu0
      %v2400 = vadd.f32 %v2239, %v2399
      %v2401 = vpop.f32.mrb[0].mxu0
      %v2402 = vpop.f32.mrb[0].mxu0
      %v2403 = vadd.f32 %v2242, %v2402
      %v2404 = vpop.f32.mrb[0].mxu0
      %2405 = vmatprep.mubr.bf16.mxu0 0
      %2406 = vmatmul.mubr.bf16.gmra.mrb[0].mxu0 %v1026
      %v2407 = vpop.f32.mrb[0].mxu0
      %v2408 = vadd.f32 %v2247, %v2407
      %v2409 = vpop.f32.mrb[0].mxu0
      %v2410 = vpop.f32.mrb[0].mxu0
      %v2411 = vadd.f32 %v2250, %v2410
      %v2412 = vpop.f32.mrb[0].mxu0
      %2413 = vmatprep.mubr.bf16.mxu0 0
      %2414 = vmatmul.mubr.bf16.gmra.mrb[0].mxu0 %v1035
      %v2415 = vpop.f32.mrb[0].mxu0
      %v2416 = vadd.f32 %v2255, %v2415
      %v2417 = vpop.f32.mrb[0].mxu0
      %v2418 = vpop.f32.mrb[0].mxu0
      %v2419 = vadd.f32 %v2258, %v2418
      %v2420 = vpop.f32.mrb[0].mxu0
      %2421 = vmatprep.mubr.bf16.mxu0 0
      %2422 = vmatmul.mubr.bf16.gmra.mrb[0].mxu0 %v1044
      %v2423 = vpop.f32.mrb[0].mxu0
      %v2424 = vadd.f32 %v2263, %v2423
      %v2425 = vpop.f32.mrb[0].mxu0
      %v2426 = vpop.f32.mrb[0].mxu0
      %v2427 = vadd.f32 %v2266, %v2426
      %v2428 = vpop.f32.mrb[0].mxu0
      %2429 = vmatprep.mubr.bf16.mxu0 0
      %2430 = vmatmul.mubr.bf16.gmra.mrb[0].mxu0 %v1053
      %v2431 = vpop.f32.mrb[0].mxu0
      %v2432 = vadd.f32 %v2271, %v2431
      %v2433 = vpop.f32.mrb[0].mxu0
      %v2434 = vpop.f32.mrb[0].mxu0
      %v2435 = vadd.f32 %v2274, %v2434
      %v2436 = vpop.f32.mrb[0].mxu0
      %2437 = vmatprep.mubr.bf16.mxu0 0
      %2438 = vmatmul.mubr.bf16.gmra.mrb[0].mxu0 %v1062
      %v2439 = vpop.f32.mrb[0].mxu0
      %v2440 = vadd.f32 %v2279, %v2439
      %v2441 = vpop.f32.mrb[0].mxu0
      %v2442 = vpop.f32.mrb[0].mxu0
      %v2443 = vadd.f32 %v2282, %v2442
      %v2444 = vpop.f32.mrb[0].mxu0
      %2445 = vmatprep.mubr.bf16.mxu0 0
      %2446 = vmatmul.mubr.bf16.gmra.mrb[0].mxu0 %v1071
      %v2447 = vpop.f32.mrb[0].mxu0
      %v2448 = vadd.f32 %v2287, %v2447
      %v2449 = vpop.f32.mrb[0].mxu0
      %v2450 = vpop.f32.mrb[0].mxu0
      %v2451 = vadd.f32 %v2290, %v2450
      %v2452 = vpop.f32.mrb[0].mxu0
      %2453 = vmatprep.mubr.bf16.mxu0 0
      %2454 = vmatmul.mubr.bf16.gmra.mrb[0].mxu0 %v1080
      %v2455 = vpop.f32.mrb[0].mxu0
      %v2456 = vadd.f32 %v2295, %v2455
      %v2457 = vpop.f32.mrb[0].mxu0
      %v2458 = vpop.f32.mrb[0].mxu0
      %v2459 = vadd.f32 %v2298, %v2458
      %v2460 = vpop.f32.mrb[0].mxu0
      %2461 = vdwg.mxu0
      %v2462 = vmax.f32 %v2336, 0.0
      %v2463 = vmax.f32 %v2339, 0.0
      %v2464 = vmax.f32 %v2344, 0.0
      %v2465 = vmax.f32 %v2347, 0.0
      %v2466 = vmax.f32 %v2352, 0.0
      %v2467 = vmax.f32 %v2355, 0.0
      %v2468 = vmax.f32 %v2360, 0.0
      %v2469 = vmax.f32 %v2363, 0.0
      %v2470 = vmax.f32 %v2368, 0.0
      %v2471 = vmax.f32 %v2371, 0.0
      %v2472 = vmax.f32 %v2376, 0.0
      %v2473 = vmax.f32 %v2379, 0.0
      %v2474 = vmax.f32 %v2384, 0.0
      %v2475 = vmax.f32 %v2387, 0.0
      %v2476 = vmax.f32 %v2392, 0.0
      %v2477 = vmax.f32 %v2395, 0.0
      %v2478 = vmax.f32 %v2400, 0.0
      %v2479 = vmax.f32 %v2403, 0.0
      %v2480 = vmax.f32 %v2408, 0.0
      %v2481 = vmax.f32 %v2411, 0.0
      %v2482 = vmax.f32 %v2416, 0.0
      %v2483 = vmax.f32 %v2419, 0.0
      %v2484 = vmax.f32 %v2424, 0.0
      %v2485 = vmax.f32 %v2427, 0.0
      %v2486 = vmax.f32 %v2432, 0.0
      %v2487 = vmax.f32 %v2435, 0.0
      %v2488 = vmax.f32 %v2440, 0.0
      %v2489 = vmax.f32 %v2443, 0.0
      %v2490 = vmax.f32 %v2448, 0.0
      %v2491 = vmax.f32 %v2451, 0.0
      %v2492 = vmax.f32 %v2456, 0.0
      %v2493 = vmax.f32 %v2459, 0.0
      %vm2494 = vcmask 523264
      %2495 = vst.msk [vmem:[%s175] sm:$0xff] %vm2494, %v2462
      %2496 = vst.msk [vmem:[%s175 + $0x8] sm:$0xff] %vm2494, %v2463
      %2497 = vst.msk [vmem:[%s175 + $0x10] sm:$0xff] %vm2494, %v2464
      %2498 = vst.msk [vmem:[%s175 + $0x18] sm:$0xff] %vm2494, %v2465
      %2499 = vst.msk [vmem:[%s175 + $0x20] sm:$0xff] %vm2494, %v2466
      %2500 = vst.msk [vmem:[%s175 + $0x28] sm:$0xff] %vm2494, %v2467
      %2501 = vst.msk [vmem:[%s175 + $0x30] sm:$0xff] %vm2494, %v2468
      %2502 = vst.msk [vmem:[%s175 + $0x38] sm:$0xff] %vm2494, %v2469
      %2503 = vst.msk [vmem:[%s175 + $0x40] sm:$0xff] %vm2494, %v2470
      %2504 = vst.msk [vmem:[%s175 + $0x48] sm:$0xff] %vm2494, %v2471
      %2505 = vst.msk [vmem:[%s175 + $0x50] sm:$0xff] %vm2494, %v2472
      %2506 = vst.msk [vmem:[%s175 + $0x58] sm:$0xff] %vm2494, %v2473
      %2507 = vst.msk [vmem:[%s175 + $0x60] sm:$0xff] %vm2494, %v2474
      %2508 = vst.msk [vmem:[%s175 + $0x68] sm:$0xff] %vm2494, %v2475
      %2509 = vst.msk [vmem:[%s175 + $0x70] sm:$0xff] %vm2494, %v2476
      %2510 = vst.msk [vmem:[%s175 + $0x78] sm:$0xff] %vm2494, %v2477
      %2511 = vst.msk [vmem:[%s175 + $0x80] sm:$0xff] %vm2494, %v2478
      %2512 = vst.msk [vmem:[%s175 + $0x88] sm:$0xff] %vm2494, %v2479
      %2513 = vst.msk [vmem:[%s175 + $0x90] sm:$0xff] %vm2494, %v2480
      %2514 = vst.msk [vmem:[%s175 + $0x98] sm:$0xff] %vm2494, %v2481
      %2515 = vst.msk [vmem:[%s175 + $0xa0] sm:$0xff] %vm2494, %v2482
      %2516 = vst.msk [vmem:[%s175 + $0xa8] sm:$0xff] %vm2494, %v2483
      %2517 = vst.msk [vmem:[%s175 + $0xb0] sm:$0xff] %vm2494, %v2484
      %2518 = vst.msk [vmem:[%s175 + $0xb8] sm:$0xff] %vm2494, %v2485
      %2519 = vst.msk [vmem:[%s175 + $0xc0] sm:$0xff] %vm2494, %v2486
      %2520 = vst.msk [vmem:[%s175 + $0xc8] sm:$0xff] %vm2494, %v2487
      %2521 = vst.msk [vmem:[%s175 + $0xd0] sm:$0xff] %vm2494, %v2488
      %2522 = vst.msk [vmem:[%s175 + $0xd8] sm:$0xff] %vm2494, %v2489
      %2523 = vst.msk [vmem:[%s175 + $0xe0] sm:$0xff] %vm2494, %v2490
      %2524 = vst.msk [vmem:[%s175 + $0xe8] sm:$0xff] %vm2494, %v2491
      %2525 = vst.msk [vmem:[%s175 + $0xf0] sm:$0xff] %vm2494, %v2492
      %2526 = vst.msk [vmem:[%s175 + $0xf8] sm:$0xff] %vm2494, %v2493
      %s2527 = smul.u32 32, %s14
      %p2528 = scmp.lt.s32.totalorder %s2527, 127
      %s2529 = scalar_select %p2528, %s2527, 127
      %s2530 = smul.addr %s2529, 8
      %s2531 = scalar_lea.vmem %s3, %s2530
      // Predicated region
      $region33: #{udanet_forward.11} parent=31 // pred_check
        %p2532 = pneg %p100
      $region34: #{udanet_forward.11} parent=31 // pred_check_branch
        %2534 = sbr.rel (%p2532) target = $region36
      $region35: #{udanet_forward.11} parent=31 // pred_region
        %s2535 = smul.u32 32, %s14
      $region36: #{udanet_forward.11} parent=31 // pred_fallthru
        _
    $region32: #{udanet_forward.11} parent=5 // pred_fallthru
      _
    %p2536 = scmp.le.s32.totalorder 2, %s9
    // Predicated region
    $region37: #{udanet_forward.11} parent=5 // pred_check
      %p2537 = pneg %p2536
    $region38: #{udanet_forward.11} parent=5 // pred_check_branch
      %2539 = sbr.rel (%p2537) target = $region40
    $region39: #{udanet_forward.11} parent=5 // pred_region
      %s2540 = ssub.s32 %s9, 2
      // Predicated region
      $region41: #{udanet_forward.11} parent=39 // pred_check
        %p2541 = pneg %p106
      $region42: #{udanet_forward.11} parent=39 // pred_check_branch
        %2543 = sbr.rel (%p2541) target = $region44
      $region43: #{udanet_forward.11} parent=39 // pred_region
        %s2544 = smul.u32 32, %s15
        %p2545 = scmp.lt.s32.totalorder %s2544, 127
        %s2546 = scalar_select %p2545, %s2544, 127
        %s2547 = smul.addr %s2546, 8
        %s2548 = scalar_lea.vmem %s3, %s2547
      $region44: #{udanet_forward.11} parent=39 // pred_fallthru
        _
    $region40: #{udanet_forward.11} parent=5 // pred_fallthru
      _
  $region6: #{udanet_forward.11} parent=0 // loop_footer
    %s13 = sadd.s32 1, %s9
  $region7: #{udanet_forward.11} parent=0 // loop_footer_branch
    %8 = sbr.rel target = $region3
  $region8: #{udanet_forward.11} parent=0 // loop_exit
    _

// kernel: udanet_forward.12
$region0: #{udanet_forward.12}
  #allocation0 [shape = 'u32[]', space=smem, size = 0x4, offset = 0x4, fixed_abs, tag = 'smem constant byte address 0x4 - core index']
  #allocation1 [shape = 'u32[144,128]{1,0:T(1,128)}', space=vmem, size = 0x12000, scoped, tag = 'internal scratch']
  #allocation2 [shape = 'f32[1,1]{1,0:T(1,128)S(1)}', space=vmem, size = 0x200, scoped, tag = 'scoped memory for udanet_forward.12']
  %s0 = inlined_call_operand.vmem [shape: f32[4,16384], index: 0, kind: input, shape index: {}]
  %s1 = inlined_call_operand.vmem [shape: f32[1,16384], index: 1, kind: input, shape index: {}]
  %s2 = inlined_call_operand.<no memory space> [shape: f32[1,1], index: 2, kind: input, shape index: {}]
  %s3 = inlined_call_operand.vmem [shape: f32[4,1], index: 3, kind: output, shape index: {}]
  %s4 = sld [smem:[#allocation0]]
  $region53: #{udanet_forward.12} parent=0
    _
  %s6 = ssub.s32 1, %s4
  %s7 = scalar_select 0, %s6, %s4
  %v8 = vstv %s2
  %9 = vst [vmem:[#allocation2] sm:$0x1] %v8
  loop: start=0, step=1, limit=4
  $region2: #{udanet_forward.12} parent=0 // loop_pre_header
    _
  $region3: #{udanet_forward.12} parent=0 // loop_header
    %s11 = sphi 0, %s15
    %p12 = scmp.ge.s32.totalorder %s11, 4
    %s21 = sphi 0, %s23
    %s24 = sphi 0, %s21
    %s25 = sphi 0, %s24
    %s41 = sphi 0, %s25
    %s47 = sphi 0, %s49
    %s50 = sphi 0, %s47
    %s51 = sphi 0, %s50
    %s67 = sphi 0, %s51
    %s71 = sphi 0, %s71
    %s73 = sphi 0, %s71
    %s74 = sphi 0, %s73
    %s88 = sphi 0, %s74
    %s92 = sphi 0, %s92
    %s94 = sphi 0, %s92
    %s95 = sphi 0, %s94
    %s109 = sphi 0, %s95
  $region4: #{udanet_forward.12} parent=0 // loop_header_branch
    %14 = sbr.rel (%p12) target = $region8
  $region5: #{udanet_forward.12} parent=0 // loop_body
    %s16 = ssub.s32 %s11, 1
    %s17 = ssub.s32 %s11, 2
    %s18 = sadd.s32 %s11, 1
    %s19 = ssub.s32 %s11, %s18
    %p20 = scmp.eq.s32.totalorder %s19, 0
    %s22 = sadd.s32 %s21, 1
    %s23 = scalar_select %p20, %s21, %s22
    %p26 = pneg %p20
    %p27 = scmp.eq.s32.totalorder %s11, 1
    %p28 = por %p26, %p27
    %p29 = scmp.ne.s32.totalorder %s21, %s24
    %p30 = scmp.eq.s32.totalorder %s11, 0
    %p31 = por %p29, %p30
    %p32 = scmp.ne.s32.totalorder %s21, %s24
    %p33 = scmp.eq.s32.totalorder %s16, 1
    %p34 = por %p32, %p33
    %p35 = scmp.ne.s32.totalorder %s24, %s25
    %p36 = scmp.eq.s32.totalorder %s16, 0
    %p37 = por %p35, %p36
    %p38 = scmp.ne.s32.totalorder %s24, %s25
    %p39 = scmp.eq.s32.totalorder %s17, 1
    %p40 = por %p38, %p39
    %p42 = scmp.ne.s32.totalorder %s25, %s41
    %p43 = scmp.eq.s32.totalorder %s17, 0
    %p44 = por %p42, %p43
    %s45 = ssub.s32 %s11, %s18
    %p46 = scmp.eq.s32.totalorder %s45, 0
    %s48 = sadd.s32 %s47, 1
    %s49 = scalar_select %p46, %s47, %s48
    %p52 = pneg %p46
    %p53 = scmp.eq.s32.totalorder %s11, 1
    %p54 = por %p52, %p53
    %p55 = scmp.ne.s32.totalorder %s47, %s50
    %p56 = scmp.eq.s32.totalorder %s11, 0
    %p57 = por %p55, %p56
    %p58 = scmp.ne.s32.totalorder %s47, %s50
    %p59 = scmp.eq.s32.totalorder %s16, 1
    %p60 = por %p58, %p59
    %p61 = scmp.ne.s32.totalorder %s50, %s51
    %p62 = scmp.eq.s32.totalorder %s16, 0
    %p63 = por %p61, %p62
    %p64 = scmp.ne.s32.totalorder %s50, %s51
    %p65 = scmp.eq.s32.totalorder %s17, 1
    %p66 = por %p64, %p65
    %p68 = scmp.ne.s32.totalorder %s51, %s67
    %p69 = scmp.eq.s32.totalorder %s17, 0
    %p70 = por %p68, %p69
    %s72 = sadd.s32 %s71, 1
    %p75 = scmp.eq.s32.totalorder %s11, 1
    %p76 = scmp.ne.s32.totalorder %s71, %s73
    %p77 = scmp.eq.s32.totalorder %s11, 0
    %p78 = por %p76, %p77
    %p79 = scmp.ne.s32.totalorder %s71, %s73
    %p80 = scmp.eq.s32.totalorder %s16, 1
    %p81 = por %p79, %p80
    %p82 = scmp.ne.s32.totalorder %s73, %s74
    %p83 = scmp.eq.s32.totalorder %s16, 0
    %p84 = por %p82, %p83
    %p85 = scmp.ne.s32.totalorder %s73, %s74
    %p86 = scmp.eq.s32.totalorder %s17, 1
    %p87 = por %p85, %p86
    %p89 = scmp.ne.s32.totalorder %s74, %s88
    %p90 = scmp.eq.s32.totalorder %s17, 0
    %p91 = por %p89, %p90
    %s93 = sadd.s32 %s92, 1
    %p96 = scmp.eq.s32.totalorder %s11, 1
    %p97 = scmp.ne.s32.totalorder %s92, %s94
    %p98 = scmp.eq.s32.totalorder %s11, 0
    %p99 = por %p97, %p98
    %p100 = scmp.ne.s32.totalorder %s92, %s94
    %p101 = scmp.eq.s32.totalorder %s16, 1
    %p102 = por %p100, %p101
    %p103 = scmp.ne.s32.totalorder %s94, %s95
    %p104 = scmp.eq.s32.totalorder %s16, 0
    %p105 = por %p103, %p104
    %p106 = scmp.ne.s32.totalorder %s94, %s95
    %p107 = scmp.eq.s32.totalorder %s17, 1
    %p108 = por %p106, %p107
    %p110 = scmp.ne.s32.totalorder %s95, %s109
    %p111 = scmp.eq.s32.totalorder %s17, 0
    %p112 = por %p110, %p111
    %p113 = scmp.le.s32.totalorder 1, %s11
    %p114 = scmp.lt.s32.totalorder %s11, 3
    %p115 = pnand %p113, %p114
    %p116 = pneg %p115
    // Predicated region
    $region9: #{udanet_forward.12} parent=5 // pred_check
      _
    $region10: #{udanet_forward.12} parent=5 // pred_check_branch
      %118 = sbr.rel (%p115) target = $region12
    $region11: #{udanet_forward.12} parent=5 // pred_region
      %s119 = ssub.s32 %s11, 1
      // Predicated region
      $region13: #{udanet_forward.12} parent=11 // pred_check
        %p120 = pneg %p84
      $region14: #{udanet_forward.12} parent=11 // pred_check_branch
        %122 = sbr.rel (%p120) target = $region16
      $region15: #{udanet_forward.12} parent=11 // pred_region
        _
      $region16: #{udanet_forward.12} parent=11 // pred_fallthru
        _
    $region12: #{udanet_forward.12} parent=5 // pred_fallthru
      _
    %p123 = scmp.lt.s32.totalorder %s11, 2
    // Predicated region
    $region17: #{udanet_forward.12} parent=5 // pred_check
      %p124 = pneg %p123
    $region18: #{udanet_forward.12} parent=5 // pred_check_branch
      %126 = sbr.rel (%p124) target = $region20
    $region19: #{udanet_forward.12} parent=5 // pred_region
      // Predicated region
      $region21: #{udanet_forward.12} parent=19 // pred_check
        %p127 = pneg %p31
      $region22: #{udanet_forward.12} parent=19 // pred_check_branch
        %129 = sbr.rel (%p127) target = $region24
      $region23: #{udanet_forward.12} parent=19 // pred_region
        %s130 = smul.u32 64, %s11
        %p131 = scmp.lt.s32.totalorder %s130, 127
        %s132 = scalar_select %p131, %s130, 127
        %s133 = smul.addr %s132, 4
        %s134 = scalar_lea.vmem %s0, %s133
        %s135 = smul.u32 64, %s11
      $region24: #{udanet_forward.12} parent=19 // pred_fallthru
        _
      // Predicated region
      $region25: #{udanet_forward.12} parent=19 // pred_check
        %p136 = pneg %p57
      $region26: #{udanet_forward.12} parent=19 // pred_check_branch
        %138 = sbr.rel (%p136) target = $region28
      $region27: #{udanet_forward.12} parent=19 // pred_region
        %s139 = smul.u32 64, %s11
        %p140 = scmp.lt.s32.totalorder %s139, 127
        %s141 = scalar_select %p140, %s139, 127
        %s142 = scalar_lea.vmem %s1, %s141
        %s143 = smul.u32 64, %s11
      $region28: #{udanet_forward.12} parent=19 // pred_fallthru
        _
    $region20: #{udanet_forward.12} parent=5 // pred_fallthru
      _
    %p144 = scmp.le.s32.totalorder 1, %s11
    %p145 = scmp.lt.s32.totalorder %s11, 3
    %p146 = pnand %p144, %p145
    %p147 = pneg %p146
    // Predicated region
    $region29: #{udanet_forward.12} parent=5 // pred_check
      _
    $region30: #{udanet_forward.12} parent=5 // pred_check_branch
      %149 = sbr.rel (%p146) target = $region32
    $region31: #{udanet_forward.12} parent=5 // pred_region
      %s150 = ssub.s32 %s11, 1
      %s151 = smul.u32 64, %s16
      %p152 = scmp.lt.s32.totalorder %s151, 127
      %s153 = scalar_select %p152, %s151, 127
      %s154 = smul.addr %s153, 4
      %s155 = scalar_lea.vmem %s0, %s154
      %p156 = pneg %p37
      %p157 = pneg %p34
      %s158 = smul.u32 64, %s16
      %p159 = scmp.lt.s32.totalorder %s158, 127
      %s160 = scalar_select %p159, %s158, 127
      %s161 = scalar_lea.vmem %s1, %s160
      %p162 = pneg %p63
      %p163 = pneg %p60
      %p164 = pneg %p84
      %p165 = pneg %p81
      %p166 = pneg %p105
      %p167 = pneg %p102
      %s168 = smul.u32 64, %s16
      %p169 = scmp.lt.s32.totalorder %s168, 127
      %s170 = scalar_select %p169, %s168, 127
      %s171 = smul.addr %s170, 4
      %s172 = scalar_lea.vmem %s0, %s171
      %s173 = smul.u32 64, %s16
      %s174 = smul.u32 64, %s16
      %p175 = scmp.lt.s32.totalorder %s174, 127
      %s176 = scalar_select %p175, %s174, 127
      %s177 = scalar_lea.vmem %s1, %s176
      %s178 = smul.u32 64, %s16
      %p179 = scmp.eq.s32.totalorder %s16, 0
      // Predicated region
      $region33: #{udanet_forward.12} parent=31 // pred_check
        %p180 = pneg %p179
      $region34: #{udanet_forward.12} parent=31 // pred_check_branch
        %182 = sbr.rel (%p180) target = $region36
      $region35: #{udanet_forward.12} parent=31 // pred_region
        %vm183 = vcmask 3072
        %184 = vst.msk [vmem:[%s3] sm:$0xf] %vm183, 0.0
      $region36: #{udanet_forward.12} parent=31 // pred_fallthru
        _
      %v185 = vld [vmem:[%s3] sm:$0xf]
      %v186 = vld [vmem:[%s172] sm:$0xff]
      %v187 = vld [vmem:[%s172 + $0x8] sm:$0xff]
      %v188 = vld [vmem:[%s172 + $0x10] sm:$0xff]
      %v189 = vld [vmem:[%s172 + $0x18] sm:$0xff]
      %v190 = vld [vmem:[%s172 + $0x20] sm:$0xff]
      %v191 = vld [vmem:[%s172 + $0x28] sm:$0xff]
      %v192 = vld [vmem:[%s172 + $0x30] sm:$0xff]
      %v193 = vld [vmem:[%s172 + $0x38] sm:$0xff]
      %v194 = vld [vmem:[%s172 + $0x40] sm:$0xff]
      %v195 = vld [vmem:[%s172 + $0x48] sm:$0xff]
      %v196 = vld [vmem:[%s172 + $0x50] sm:$0xff]
      %v197 = vld [vmem:[%s172 + $0x58] sm:$0xff]
      %v198 = vld [vmem:[%s172 + $0x60] sm:$0xff]
      %v199 = vld [vmem:[%s172 + $0x68] sm:$0xff]
      %v200 = vld [vmem:[%s172 + $0x70] sm:$0xff]
      %v201 = vld [vmem:[%s172 + $0x78] sm:$0xff]
      %v202 = vld [vmem:[%s172 + $0x80] sm:$0xff]
      %v203 = vld [vmem:[%s172 + $0x88] sm:$0xff]
      %v204 = vld [vmem:[%s172 + $0x90] sm:$0xff]
      %v205 = vld [vmem:[%s172 + $0x98] sm:$0xff]
      %v206 = vld [vmem:[%s172 + $0xa0] sm:$0xff]
      %v207 = vld [vmem:[%s172 + $0xa8] sm:$0xff]
      %v208 = vld [vmem:[%s172 + $0xb0] sm:$0xff]
      %v209 = vld [vmem:[%s172 + $0xb8] sm:$0xff]
      %v210 = vld [vmem:[%s172 + $0xc0] sm:$0xff]
      %v211 = vld [vmem:[%s172 + $0xc8] sm:$0xff]
      %v212 = vld [vmem:[%s172 + $0xd0] sm:$0xff]
      %v213 = vld [vmem:[%s172 + $0xd8] sm:$0xff]
      %v214 = vld [vmem:[%s172 + $0xe0] sm:$0xff]
      %v215 = vld [vmem:[%s172 + $0xe8] sm:$0xff]
      %v216 = vld [vmem:[%s172 + $0xf0] sm:$0xff]
      %v217 = vld [vmem:[%s172 + $0xf8] sm:$0xff]
      %v218 = vld [vmem:[%s177] sm:$0xff]
      %v219 = vld [vmem:[%s177 + $0x8] sm:$0xff]
      %v220 = vld [vmem:[%s177 + $0x10] sm:$0xff]
      %v221 = vld [vmem:[%s177 + $0x18] sm:$0xff]
      %v222 = vld [vmem:[%s177 + $0x20] sm:$0xff]
      %v223 = vld [vmem:[%s177 + $0x28] sm:$0xff]
      %v224 = vld [vmem:[%s177 + $0x30] sm:$0xff]
      %v225 = vld [vmem:[%s177 + $0x38] sm:$0xff]
      %v234 = vlaneseq
      %v235 = vshrl.u32 %v234, 7
      %v236 = vsub.s32 0, %v235
      %v237 = vrot.slane %v218, %v236
      %v238 = vlaneseq
      %v239 = vshrl.u32 %v238, 7
      %v240 = vsub.s32 1, %v239
      %v241 = vrot.slane %v218, %v240
      %v242 = vlaneseq
      %v243 = vshrl.u32 %v242, 7
      %v244 = vsub.s32 2, %v243
      %v245 = vrot.slane %v218, %v244
      %v246 = vlaneseq
      %v247 = vshrl.u32 %v246, 7
      %v248 = vsub.s32 3, %v247
      %v249 = vrot.slane %v218, %v248
      %v250 = vlaneseq
      %v251 = vshrl.u32 %v250, 7
      %v252 = vsub.s32 4, %v251
      %v253 = vrot.slane %v218, %v252
      %v254 = vlaneseq
      %v255 = vshrl.u32 %v254, 7
      %v256 = vsub.s32 5, %v255
      %v257 = vrot.slane %v218, %v256
      %v258 = vlaneseq
      %v259 = vshrl.u32 %v258, 7
      %v260 = vsub.s32 6, %v259
      %v261 = vrot.slane %v218, %v260
      %v262 = vlaneseq
      %v263 = vshrl.u32 %v262, 7
      %v264 = vsub.s32 7, %v263
      %v265 = vrot.slane %v218, %v264
      %v266 = vlaneseq
      %v267 = vshrl.u32 %v266, 7
      %v268 = vsub.s32 0, %v267
      %v269 = vrot.slane %v219, %v268
      %v270 = vlaneseq
      %v271 = vshrl.u32 %v270, 7
      %v272 = vsub.s32 1, %v271
      %v273 = vrot.slane %v219, %v272
      %v274 = vlaneseq
      %v275 = vshrl.u32 %v274, 7
      %v276 = vsub.s32 2, %v275
      %v277 = vrot.slane %v219, %v276
      %v278 = vlaneseq
      %v279 = vshrl.u32 %v278, 7
      %v280 = vsub.s32 3, %v279
      %v281 = vrot.slane %v219, %v280
      %v282 = vlaneseq
      %v283 = vshrl.u32 %v282, 7
      %v284 = vsub.s32 4, %v283
      %v285 = vrot.slane %v219, %v284
      %v286 = vlaneseq
      %v287 = vshrl.u32 %v286, 7
      %v288 = vsub.s32 5, %v287
      %v289 = vrot.slane %v219, %v288
      %v290 = vlaneseq
      %v291 = vshrl.u32 %v290, 7
      %v292 = vsub.s32 6, %v291
      %v293 = vrot.slane %v219, %v292
      %v294 = vlaneseq
      %v295 = vshrl.u32 %v294, 7
      %v296 = vsub.s32 7, %v295
      %v297 = vrot.slane %v219, %v296
      %v298 = vlaneseq
      %v299 = vshrl.u32 %v298, 7
      %v300 = vsub.s32 0, %v299
      %v301 = vrot.slane %v220, %v300
      %v302 = vlaneseq
      %v303 = vshrl.u32 %v302, 7
      %v304 = vsub.s32 1, %v303
      %v305 = vrot.slane %v220, %v304
      %v306 = vlaneseq
      %v307 = vshrl.u32 %v306, 7
      %v308 = vsub.s32 2, %v307
      %v309 = vrot.slane %v220, %v308
      %v310 = vlaneseq
      %v311 = vshrl.u32 %v310, 7
      %v312 = vsub.s32 3, %v311
      %v313 = vrot.slane %v220, %v312
      %v314 = vlaneseq
      %v315 = vshrl.u32 %v314, 7
      %v316 = vsub.s32 4, %v315
      %v317 = vrot.slane %v220, %v316
      %v318 = vlaneseq
      %v319 = vshrl.u32 %v318, 7
      %v320 = vsub.s32 5, %v319
      %v321 = vrot.slane %v220, %v320
      %v322 = vlaneseq
      %v323 = vshrl.u32 %v322, 7
      %v324 = vsub.s32 6, %v323
      %v325 = vrot.slane %v220, %v324
      %v326 = vlaneseq
      %v327 = vshrl.u32 %v326, 7
      %v328 = vsub.s32 7, %v327
      %v329 = vrot.slane %v220, %v328
      %v330 = vlaneseq
      %v331 = vshrl.u32 %v330, 7
      %v332 = vsub.s32 0, %v331
      %v333 = vrot.slane %v221, %v332
      %v334 = vlaneseq
      %v335 = vshrl.u32 %v334, 7
      %v336 = vsub.s32 1, %v335
      %v337 = vrot.slane %v221, %v336
      %v338 = vlaneseq
      %v339 = vshrl.u32 %v338, 7
      %v340 = vsub.s32 2, %v339
      %v341 = vrot.slane %v221, %v340
      %v342 = vlaneseq
      %v343 = vshrl.u32 %v342, 7
      %v344 = vsub.s32 3, %v343
      %v345 = vrot.slane %v221, %v344
      %v346 = vlaneseq
      %v347 = vshrl.u32 %v346, 7
      %v348 = vsub.s32 4, %v347
      %v349 = vrot.slane %v221, %v348
      %v350 = vlaneseq
      %v351 = vshrl.u32 %v350, 7
      %v352 = vsub.s32 5, %v351
      %v353 = vrot.slane %v221, %v352
      %v354 = vlaneseq
      %v355 = vshrl.u32 %v354, 7
      %v356 = vsub.s32 6, %v355
      %v357 = vrot.slane %v221, %v356
      %v358 = vlaneseq
      %v359 = vshrl.u32 %v358, 7
      %v360 = vsub.s32 7, %v359
      %v361 = vrot.slane %v221, %v360
      %v362 = vlaneseq
      %v363 = vshrl.u32 %v362, 7
      %v364 = vsub.s32 0, %v363
      %v365 = vrot.slane %v222, %v364
      %v366 = vlaneseq
      %v367 = vshrl.u32 %v366, 7
      %v368 = vsub.s32 1, %v367
      %v369 = vrot.slane %v222, %v368
      %v370 = vlaneseq
      %v371 = vshrl.u32 %v370, 7
      %v372 = vsub.s32 2, %v371
      %v373 = vrot.slane %v222, %v372
      %v374 = vlaneseq
      %v375 = vshrl.u32 %v374, 7
      %v376 = vsub.s32 3, %v375
      %v377 = vrot.slane %v222, %v376
      %v378 = vlaneseq
      %v379 = vshrl.u32 %v378, 7
      %v380 = vsub.s32 4, %v379
      %v381 = vrot.slane %v222, %v380
      %v382 = vlaneseq
      %v383 = vshrl.u32 %v382, 7
      %v384 = vsub.s32 5, %v383
      %v385 = vrot.slane %v222, %v384
      %v386 = vlaneseq
      %v387 = vshrl.u32 %v386, 7
      %v388 = vsub.s32 6, %v387
      %v389 = vrot.slane %v222, %v388
      %v390 = vlaneseq
      %v391 = vshrl.u32 %v390, 7
      %v392 = vsub.s32 7, %v391
      %v393 = vrot.slane %v222, %v392
      %v394 = vlaneseq
      %v395 = vshrl.u32 %v394, 7
      %v396 = vsub.s32 0, %v395
      %v397 = vrot.slane %v223, %v396
      %v398 = vlaneseq
      %v399 = vshrl.u32 %v398, 7
      %v400 = vsub.s32 1, %v399
      %v401 = vrot.slane %v223, %v400
      %v402 = vlaneseq
      %v403 = vshrl.u32 %v402, 7
      %v404 = vsub.s32 2, %v403
      %v405 = vrot.slane %v223, %v404
      %v406 = vlaneseq
      %v407 = vshrl.u32 %v406, 7
      %v408 = vsub.s32 3, %v407
      %v409 = vrot.slane %v223, %v408
      %v410 = vlaneseq
      %v411 = vshrl.u32 %v410, 7
      %v412 = vsub.s32 4, %v411
      %v413 = vrot.slane %v223, %v412
      %v414 = vlaneseq
      %v415 = vshrl.u32 %v414, 7
      %v416 = vsub.s32 5, %v415
      %v417 = vrot.slane %v223, %v416
      %v418 = vlaneseq
      %v419 = vshrl.u32 %v418, 7
      %v420 = vsub.s32 6, %v419
      %v421 = vrot.slane %v223, %v420
      %v422 = vlaneseq
      %v423 = vshrl.u32 %v422, 7
      %v424 = vsub.s32 7, %v423
      %v425 = vrot.slane %v223, %v424
      %v426 = vlaneseq
      %v427 = vshrl.u32 %v426, 7
      %v428 = vsub.s32 0, %v427
      %v429 = vrot.slane %v224, %v428
      %v430 = vlaneseq
      %v431 = vshrl.u32 %v430, 7
      %v432 = vsub.s32 1, %v431
      %v433 = vrot.slane %v224, %v432
      %v434 = vlaneseq
      %v435 = vshrl.u32 %v434, 7
      %v436 = vsub.s32 2, %v435
      %v437 = vrot.slane %v224, %v436
      %v438 = vlaneseq
      %v439 = vshrl.u32 %v438, 7
      %v440 = vsub.s32 3, %v439
      %v441 = vrot.slane %v224, %v440
      %v442 = vlaneseq
      %v443 = vshrl.u32 %v442, 7
      %v444 = vsub.s32 4, %v443
      %v445 = vrot.slane %v224, %v444
      %v446 = vlaneseq
      %v447 = vshrl.u32 %v446, 7
      %v448 = vsub.s32 5, %v447
      %v449 = vrot.slane %v224, %v448
      %v450 = vlaneseq
      %v451 = vshrl.u32 %v450, 7
      %v452 = vsub.s32 6, %v451
      %v453 = vrot.slane %v224, %v452
      %v454 = vlaneseq
      %v455 = vshrl.u32 %v454, 7
      %v456 = vsub.s32 7, %v455
      %v457 = vrot.slane %v224, %v456
      %v458 = vlaneseq
      %v459 = vshrl.u32 %v458, 7
      %v460 = vsub.s32 0, %v459
      %v461 = vrot.slane %v225, %v460
      %v462 = vlaneseq
      %v463 = vshrl.u32 %v462, 7
      %v464 = vsub.s32 1, %v463
      %v465 = vrot.slane %v225, %v464
      %v466 = vlaneseq
      %v467 = vshrl.u32 %v466, 7
      %v468 = vsub.s32 2, %v467
      %v469 = vrot.slane %v225, %v468
      %v470 = vlaneseq
      %v471 = vshrl.u32 %v470, 7
      %v472 = vsub.s32 3, %v471
      %v473 = vrot.slane %v225, %v472
      %v474 = vlaneseq
      %v475 = vshrl.u32 %v474, 7
      %v476 = vsub.s32 4, %v475
      %v477 = vrot.slane %v225, %v476
      %v478 = vlaneseq
      %v479 = vshrl.u32 %v478, 7
      %v480 = vsub.s32 5, %v479
      %v481 = vrot.slane %v225, %v480
      %v482 = vlaneseq
      %v483 = vshrl.u32 %v482, 7
      %v484 = vsub.s32 6, %v483
      %v485 = vrot.slane %v225, %v484
      %v486 = vlaneseq
      %v487 = vshrl.u32 %v486, 7
      %v488 = vsub.s32 7, %v487
      %v489 = vrot.slane %v225, %v488
      %v490 = vcombine.low %v237, %v241
      %v491 = vcombine.low %v245, %v249
      %v492 = vcombine.low %v253, %v257
      %v493 = vcombine.low %v261, %v265
      %v494 = vcombine.low %v269, %v273
      %v495 = vcombine.low %v277, %v281
      %v496 = vcombine.low %v285, %v289
      %v497 = vcombine.low %v293, %v297
      %v498 = vcombine.low %v301, %v305
      %v499 = vcombine.low %v309, %v313
      %v500 = vcombine.low %v317, %v321
      %v501 = vcombine.low %v325, %v329
      %v502 = vcombine.low %v333, %v337
      %v503 = vcombine.low %v341, %v345
      %v504 = vcombine.low %v349, %v353
      %v505 = vcombine.low %v357, %v361
      %v506 = vcombine.low %v365, %v369
      %v507 = vcombine.low %v373, %v377
      %v508 = vcombine.low %v381, %v385
      %v509 = vcombine.low %v389, %v393
      %v510 = vcombine.low %v397, %v401
      %v511 = vcombine.low %v405, %v409
      %v512 = vcombine.low %v413, %v417
      %v513 = vcombine.low %v421, %v425
      %v514 = vcombine.low %v429, %v433
      %v515 = vcombine.low %v437, %v441
      %v516 = vcombine.low %v445, %v449
      %v517 = vcombine.low %v453, %v457
      %v518 = vcombine.low %v461, %v465
      %v519 = vcombine.low %v469, %v473
      %v520 = vcombine.low %v477, %v481
      %v521 = vcombine.low %v485, %v489
      %v554 = vmul.f32 %v186, %v490
      %v555 = vmul.f32 %v187, %v491
      %v556 = vmul.f32 %v188, %v492
      %v557 = vmul.f32 %v189, %v493
      %v558 = vmul.f32 %v190, %v494
      %v559 = vmul.f32 %v191, %v495
      %v560 = vmul.f32 %v192, %v496
      %v561 = vmul.f32 %v193, %v497
      %v562 = vmul.f32 %v194, %v498
      %v563 = vmul.f32 %v195, %v499
      %v564 = vmul.f32 %v196, %v500
      %v565 = vmul.f32 %v197, %v501
      %v566 = vmul.f32 %v198, %v502
      %v567 = vmul.f32 %v199, %v503
      %v568 = vmul.f32 %v200, %v504
      %v569 = vmul.f32 %v201, %v505
      %v570 = vmul.f32 %v202, %v506
      %v571 = vmul.f32 %v203, %v507
      %v572 = vmul.f32 %v204, %v508
      %v573 = vmul.f32 %v205, %v509
      %v574 = vmul.f32 %v206, %v510
      %v575 = vmul.f32 %v207, %v511
      %v576 = vmul.f32 %v208, %v512
      %v577 = vmul.f32 %v209, %v513
      %v578 = vmul.f32 %v210, %v514
      %v579 = vmul.f32 %v211, %v515
      %v580 = vmul.f32 %v212, %v516
      %v581 = vmul.f32 %v213, %v517
      %v582 = vmul.f32 %v214, %v518
      %v583 = vmul.f32 %v215, %v519
      %v584 = vmul.f32 %v216, %v520
      %v585 = vmul.f32 %v217, %v521
      %v618 = vcombine.high %v554, %v554
      %v619 = vcombine.high %v555, %v555
      %v620 = vcombine.high %v556, %v556
      %v621 = vcombine.high %v557, %v557
      %v622 = vcombine.high %v558, %v558
      %v623 = vcombine.high %v559, %v559
      %v624 = vcombine.high %v560, %v560
      %v625 = vcombine.high %v561, %v561
      %v626 = vcombine.high %v562, %v562
      %v627 = vcombine.high %v563, %v563
      %v628 = vcombine.high %v564, %v564
      %v629 = vcombine.high %v565, %v565
      %v630 = vcombine.high %v566, %v566
      %v631 = vcombine.high %v567, %v567
      %v632 = vcombine.high %v568, %v568
      %v633 = vcombine.high %v569, %v569
      %v634 = vcombine.high %v570, %v570
      %v635 = vcombine.high %v571, %v571
      %v636 = vcombine.high %v572, %v572
      %v637 = vcombine.high %v573, %v573
      %v638 = vcombine.high %v574, %v574
      %v639 = vcombine.high %v575, %v575
      %v640 = vcombine.high %v576, %v576
      %v641 = vcombine.high %v577, %v577
      %v642 = vcombine.high %v578, %v578
      %v643 = vcombine.high %v579, %v579
      %v644 = vcombine.high %v580, %v580
      %v645 = vcombine.high %v581, %v581
      %v646 = vcombine.high %v582, %v582
      %v647 = vcombine.high %v583, %v583
      %v648 = vcombine.high %v584, %v584
      %v649 = vcombine.high %v585, %v585
      %vm682 = vcmask 1043456
      %v683 = vsel %vm682, %v554, 0.0
      %v684 = vsel %vm682, %v618, 0.0
      %v685 = vadd.f32 %v683, %v684
      %v686 = vsel %vm682, %v555, 0.0
      %v687 = vadd.f32 %v685, %v686
      %v688 = vsel %vm682, %v619, 0.0
      %v689 = vadd.f32 %v687, %v688
      %v690 = vsel %vm682, %v556, 0.0
      %v691 = vadd.f32 %v689, %v690
      %v692 = vsel %vm682, %v620, 0.0
      %v693 = vadd.f32 %v691, %v692
      %v694 = vsel %vm682, %v557, 0.0
      %v695 = vadd.f32 %v693, %v694
      %v696 = vsel %vm682, %v621, 0.0
      %v697 = vadd.f32 %v695, %v696
      %v698 = vsel %vm682, %v558, 0.0
      %v699 = vadd.f32 %v697, %v698
      %v700 = vsel %vm682, %v622, 0.0
      %v701 = vadd.f32 %v699, %v700
      %v702 = vsel %vm682, %v559, 0.0
      %v703 = vadd.f32 %v701, %v702
      %v704 = vsel %vm682, %v623, 0.0
      %v705 = vadd.f32 %v703, %v704
      %v706 = vsel %vm682, %v560, 0.0
      %v707 = vadd.f32 %v705, %v706
      %v708 = vsel %vm682, %v624, 0.0
      %v709 = vadd.f32 %v707, %v708
      %v710 = vsel %vm682, %v561, 0.0
      %v711 = vadd.f32 %v709, %v710
      %v712 = vsel %vm682, %v625, 0.0
      %v713 = vadd.f32 %v711, %v712
      %v714 = vsel %vm682, %v562, 0.0
      %v715 = vadd.f32 %v713, %v714
      %v716 = vsel %vm682, %v626, 0.0
      %v717 = vadd.f32 %v715, %v716
      %v718 = vsel %vm682, %v563, 0.0
      %v719 = vadd.f32 %v717, %v718
      %v720 = vsel %vm682, %v627, 0.0
      %v721 = vadd.f32 %v719, %v720
      %v722 = vsel %vm682, %v564, 0.0
      %v723 = vadd.f32 %v721, %v722
      %v724 = vsel %vm682, %v628, 0.0
      %v725 = vadd.f32 %v723, %v724
      %v726 = vsel %vm682, %v565, 0.0
      %v727 = vadd.f32 %v725, %v726
      %v728 = vsel %vm682, %v629, 0.0
      %v729 = vadd.f32 %v727, %v728
      %v730 = vsel %vm682, %v566, 0.0
      %v731 = vadd.f32 %v729, %v730
      %v732 = vsel %vm682, %v630, 0.0
      %v733 = vadd.f32 %v731, %v732
      %v734 = vsel %vm682, %v567, 0.0
      %v735 = vadd.f32 %v733, %v734
      %v736 = vsel %vm682, %v631, 0.0
      %v737 = vadd.f32 %v735, %v736
      %v738 = vsel %vm682, %v568, 0.0
      %v739 = vadd.f32 %v737, %v738
      %v740 = vsel %vm682, %v632, 0.0
      %v741 = vadd.f32 %v739, %v740
      %v742 = vsel %vm682, %v569, 0.0
      %v743 = vadd.f32 %v741, %v742
      %v744 = vsel %vm682, %v633, 0.0
      %v745 = vadd.f32 %v743, %v744
      %v746 = vsel %vm682, %v570, 0.0
      %v747 = vadd.f32 %v745, %v746
      %v748 = vsel %vm682, %v634, 0.0
      %v749 = vadd.f32 %v747, %v748
      %v750 = vsel %vm682, %v571, 0.0
      %v751 = vadd.f32 %v749, %v750
      %v752 = vsel %vm682, %v635, 0.0
      %v753 = vadd.f32 %v751, %v752
      %v754 = vsel %vm682, %v572, 0.0
      %v755 = vadd.f32 %v753, %v754
      %v756 = vsel %vm682, %v636, 0.0
      %v757 = vadd.f32 %v755, %v756
      %v758 = vsel %vm682, %v573, 0.0
      %v759 = vadd.f32 %v757, %v758
      %v760 = vsel %vm682, %v637, 0.0
      %v761 = vadd.f32 %v759, %v760
      %v762 = vsel %vm682, %v574, 0.0
      %v763 = vadd.f32 %v761, %v762
      %v764 = vsel %vm682, %v638, 0.0
      %v765 = vadd.f32 %v763, %v764
      %v766 = vsel %vm682, %v575, 0.0
      %v767 = vadd.f32 %v765, %v766
      %v768 = vsel %vm682, %v639, 0.0
      %v769 = vadd.f32 %v767, %v768
      %v770 = vsel %vm682, %v576, 0.0
      %v771 = vadd.f32 %v769, %v770
      %v772 = vsel %vm682, %v640, 0.0
      %v773 = vadd.f32 %v771, %v772
      %v774 = vsel %vm682, %v577, 0.0
      %v775 = vadd.f32 %v773, %v774
      %v776 = vsel %vm682, %v641, 0.0
      %v777 = vadd.f32 %v775, %v776
      %v778 = vsel %vm682, %v578, 0.0
      %v779 = vadd.f32 %v777, %v778
      %v780 = vsel %vm682, %v642, 0.0
      %v781 = vadd.f32 %v779, %v780
      %v782 = vsel %vm682, %v579, 0.0
      %v783 = vadd.f32 %v781, %v782
      %v784 = vsel %vm682, %v643, 0.0
      %v785 = vadd.f32 %v783, %v784
      %v786 = vsel %vm682, %v580, 0.0
      %v787 = vadd.f32 %v785, %v786
      %v788 = vsel %vm682, %v644, 0.0
      %v789 = vadd.f32 %v787, %v788
      %v790 = vsel %vm682, %v581, 0.0
      %v791 = vadd.f32 %v789, %v790
      %v792 = vsel %vm682, %v645, 0.0
      %v793 = vadd.f32 %v791, %v792
      %v794 = vsel %vm682, %v582, 0.0
      %v795 = vadd.f32 %v793, %v794
      %v796 = vsel %vm682, %v646, 0.0
      %v797 = vadd.f32 %v795, %v796
      %v798 = vsel %vm682, %v583, 0.0
      %v799 = vadd.f32 %v797, %v798
      %v800 = vsel %vm682, %v647, 0.0
      %v801 = vadd.f32 %v799, %v800
      %v802 = vsel %vm682, %v584, 0.0
      %v803 = vadd.f32 %v801, %v802
      %v804 = vsel %vm682, %v648, 0.0
      %v805 = vadd.f32 %v803, %v804
      %v806 = vsel %vm682, %v585, 0.0
      %v807 = vadd.f32 %v805, %v806
      %v808 = vsel %vm682, %v649, 0.0
      %v809 = vadd.f32 %v807, %v808
      %810 = vadd.xlane.f32.xlu0 %v809
      %v811 = vpop.xlane.xlu0 %810
      %v812 = vadd.f32 %v185, %v811
      %vm813 = vcmask 3072
      %814 = vst.msk [vmem:[%s3] sm:$0xf] %vm813, %v812
      %p815 = scmp.eq.s32.totalorder %s16, 1
      // Predicated region
      $region37: #{udanet_forward.12} parent=31 // pred_check
        %p816 = pneg %p815
      $region38: #{udanet_forward.12} parent=31 // pred_check_branch
        %818 = sbr.rel (%p816) target = $region40
      $region39: #{udanet_forward.12} parent=31 // pred_region
        %v819 = vld [vmem:[%s3] sm:$0xf]
        %v820 = vld [vmem:[#allocation2] sm:$0x1]
        %v822 = vlaneseq
        %v823 = vshrl.u32 %v822, 7
        %v824 = vsub.s32 0, %v823
        %v825 = vrot.slane %v820, %v824
        %v827 = vadd.f32 %v819, %v825
        %828 = vst.msk [vmem:[%s3] sm:$0xf] %vm813, %v827
      $region40: #{udanet_forward.12} parent=31 // pred_fallthru
        _
      // Predicated region
      $region41: #{udanet_forward.12} parent=31 // pred_check
        %p829 = pneg %p102
      $region42: #{udanet_forward.12} parent=31 // pred_check_branch
        %831 = sbr.rel (%p829) target = $region44
      $region43: #{udanet_forward.12} parent=31 // pred_region
        _
      $region44: #{udanet_forward.12} parent=31 // pred_fallthru
        _
      // Predicated region
      $region45: #{udanet_forward.12} parent=31 // pred_check
        %p832 = pneg %p102
      $region46: #{udanet_forward.12} parent=31 // pred_check_branch
        %834 = sbr.rel (%p832) target = $region48
      $region47: #{udanet_forward.12} parent=31 // pred_region
        _
      $region48: #{udanet_forward.12} parent=31 // pred_fallthru
        _
    $region32: #{udanet_forward.12} parent=5 // pred_fallthru
      _
    %p835 = scmp.le.s32.totalorder 2, %s11
    // Predicated region
    $region49: #{udanet_forward.12} parent=5 // pred_check
      %p836 = pneg %p835
    $region50: #{udanet_forward.12} parent=5 // pred_check_branch
      %838 = sbr.rel (%p836) target = $region52
    $region51: #{udanet_forward.12} parent=5 // pred_region
      %s839 = ssub.s32 %s11, 2
    $region52: #{udanet_forward.12} parent=5 // pred_fallthru
      _
  $region6: #{udanet_forward.12} parent=0 // loop_footer
    %s15 = sadd.s32 1, %s11
  $region7: #{udanet_forward.12} parent=0 // loop_footer_branch
    %10 = sbr.rel target = $region3
  $region8: #{udanet_forward.12} parent=0 // loop_exit
    _

// kernel: udanet_forward.13
$region0: #{udanet_forward.13}
  #allocation0 [shape = 'u32[]', space=smem, size = 0x4, offset = 0x4, fixed_abs, tag = 'smem constant byte address 0x4 - core index']
  #allocation1 [shape = 'u32[144,128]{1,0:T(1,128)}', space=vmem, size = 0x12000, scoped, tag = 'internal scratch']
  %s0 = inlined_call_operand.vmem [shape: bf16[512,27], index: 0, kind: input, shape index: {}]
  %s1 = inlined_call_operand.vmem [shape: bf16[27,4], index: 1, kind: input, shape index: {}]
  %s2 = inlined_call_operand.vmem [shape: f32[1,4], index: 2, kind: input, shape index: {}]
  %s3 = inlined_call_operand.vmem [shape: f32[512,4], index: 3, kind: output, shape index: {}]
  %s4 = sld [smem:[#allocation0]]
  $region45: #{udanet_forward.13} parent=0
    _
  %s6 = ssub.s32 1, %s4
  %s7 = scalar_select 0, %s6, %s4
  loop: start=0, step=1, limit=4
  $region2: #{udanet_forward.13} parent=0 // loop_pre_header
    _
  $region3: #{udanet_forward.13} parent=0 // loop_header
    %s9 = sphi 0, %s13
    %p10 = scmp.ge.s32.totalorder %s9, 4
    %s19 = sphi 0, %s21
    %s22 = sphi 0, %s19
    %s23 = sphi 0, %s22
    %s39 = sphi 0, %s23
    %s43 = sphi 0, %s43
    %s45 = sphi 0, %s43
    %s46 = sphi 0, %s45
    %s60 = sphi 0, %s46
    %s64 = sphi 0, %s64
    %s66 = sphi 0, %s64
    %s67 = sphi 0, %s66
    %s81 = sphi 0, %s67
    %s87 = sphi 0, %s89
    %s90 = sphi 0, %s87
    %s91 = sphi 0, %s90
    %s107 = sphi 0, %s91
  $region4: #{udanet_forward.13} parent=0 // loop_header_branch
    %12 = sbr.rel (%p10) target = $region8
  $region5: #{udanet_forward.13} parent=0 // loop_body
    %s14 = ssub.s32 %s9, 1
    %s15 = ssub.s32 %s9, 2
    %s16 = sadd.s32 %s9, 1
    %s17 = ssub.s32 %s9, %s16
    %p18 = scmp.eq.s32.totalorder %s17, 0
    %s20 = sadd.s32 %s19, 1
    %s21 = scalar_select %p18, %s19, %s20
    %p24 = pneg %p18
    %p25 = scmp.eq.s32.totalorder %s9, 1
    %p26 = por %p24, %p25
    %p27 = scmp.ne.s32.totalorder %s19, %s22
    %p28 = scmp.eq.s32.totalorder %s9, 0
    %p29 = por %p27, %p28
    %p30 = scmp.ne.s32.totalorder %s19, %s22
    %p31 = scmp.eq.s32.totalorder %s14, 1
    %p32 = por %p30, %p31
    %p33 = scmp.ne.s32.totalorder %s22, %s23
    %p34 = scmp.eq.s32.totalorder %s14, 0
    %p35 = por %p33, %p34
    %p36 = scmp.ne.s32.totalorder %s22, %s23
    %p37 = scmp.eq.s32.totalorder %s15, 1
    %p38 = por %p36, %p37
    %p40 = scmp.ne.s32.totalorder %s23, %s39
    %p41 = scmp.eq.s32.totalorder %s15, 0
    %p42 = por %p40, %p41
    %s44 = sadd.s32 %s43, 1
    %p47 = scmp.eq.s32.totalorder %s9, 1
    %p48 = scmp.ne.s32.totalorder %s43, %s45
    %p49 = scmp.eq.s32.totalorder %s9, 0
    %p50 = por %p48, %p49
    %p51 = scmp.ne.s32.totalorder %s43, %s45
    %p52 = scmp.eq.s32.totalorder %s14, 1
    %p53 = por %p51, %p52
    %p54 = scmp.ne.s32.totalorder %s45, %s46
    %p55 = scmp.eq.s32.totalorder %s14, 0
    %p56 = por %p54, %p55
    %p57 = scmp.ne.s32.totalorder %s45, %s46
    %p58 = scmp.eq.s32.totalorder %s15, 1
    %p59 = por %p57, %p58
    %p61 = scmp.ne.s32.totalorder %s46, %s60
    %p62 = scmp.eq.s32.totalorder %s15, 0
    %p63 = por %p61, %p62
    %s65 = sadd.s32 %s64, 1
    %p68 = scmp.eq.s32.totalorder %s9, 1
    %p69 = scmp.ne.s32.totalorder %s64, %s66
    %p70 = scmp.eq.s32.totalorder %s9, 0
    %p71 = por %p69, %p70
    %p72 = scmp.ne.s32.totalorder %s64, %s66
    %p73 = scmp.eq.s32.totalorder %s14, 1
    %p74 = por %p72, %p73
    %p75 = scmp.ne.s32.totalorder %s66, %s67
    %p76 = scmp.eq.s32.totalorder %s14, 0
    %p77 = por %p75, %p76
    %p78 = scmp.ne.s32.totalorder %s66, %s67
    %p79 = scmp.eq.s32.totalorder %s15, 1
    %p80 = por %p78, %p79
    %p82 = scmp.ne.s32.totalorder %s67, %s81
    %p83 = scmp.eq.s32.totalorder %s15, 0
    %p84 = por %p82, %p83
    %s85 = ssub.s32 %s9, %s16
    %p86 = scmp.eq.s32.totalorder %s85, 0
    %s88 = sadd.s32 %s87, 1
    %s89 = scalar_select %p86, %s87, %s88
    %p92 = pneg %p86
    %p93 = scmp.eq.s32.totalorder %s9, 1
    %p94 = por %p92, %p93
    %p95 = scmp.ne.s32.totalorder %s87, %s90
    %p96 = scmp.eq.s32.totalorder %s9, 0
    %p97 = por %p95, %p96
    %p98 = scmp.ne.s32.totalorder %s87, %s90
    %p99 = scmp.eq.s32.totalorder %s14, 1
    %p100 = por %p98, %p99
    %p101 = scmp.ne.s32.totalorder %s90, %s91
    %p102 = scmp.eq.s32.totalorder %s14, 0
    %p103 = por %p101, %p102
    %p104 = scmp.ne.s32.totalorder %s90, %s91
    %p105 = scmp.eq.s32.totalorder %s15, 1
    %p106 = por %p104, %p105
    %p108 = scmp.ne.s32.totalorder %s91, %s107
    %p109 = scmp.eq.s32.totalorder %s15, 0
    %p110 = por %p108, %p109
    %p111 = scmp.le.s32.totalorder 1, %s9
    %p112 = scmp.lt.s32.totalorder %s9, 3
    %p113 = pnand %p111, %p112
    %p114 = pneg %p113
    // Predicated region
    $region9: #{udanet_forward.13} parent=5 // pred_check
      _
    $region10: #{udanet_forward.13} parent=5 // pred_check_branch
      %116 = sbr.rel (%p113) target = $region12
    $region11: #{udanet_forward.13} parent=5 // pred_region
      %s117 = ssub.s32 %s9, 1
      // Predicated region
      $region13: #{udanet_forward.13} parent=11 // pred_check
        %p118 = pneg %p56
      $region14: #{udanet_forward.13} parent=11 // pred_check_branch
        %120 = sbr.rel (%p118) target = $region16
      $region15: #{udanet_forward.13} parent=11 // pred_region
        _
      $region16: #{udanet_forward.13} parent=11 // pred_fallthru
        _
      // Predicated region
      $region17: #{udanet_forward.13} parent=11 // pred_check
        %p121 = pneg %p77
      $region18: #{udanet_forward.13} parent=11 // pred_check_branch
        %123 = sbr.rel (%p121) target = $region20
      $region19: #{udanet_forward.13} parent=11 // pred_region
        _
      $region20: #{udanet_forward.13} parent=11 // pred_fallthru
        _
    $region12: #{udanet_forward.13} parent=5 // pred_fallthru
      _
    %p124 = scmp.lt.s32.totalorder %s9, 2
    // Predicated region
    $region21: #{udanet_forward.13} parent=5 // pred_check
      %p125 = pneg %p124
    $region22: #{udanet_forward.13} parent=5 // pred_check_branch
      %127 = sbr.rel (%p125) target = $region24
    $region23: #{udanet_forward.13} parent=5 // pred_region
      // Predicated region
      $region25: #{udanet_forward.13} parent=23 // pred_check
        %p128 = pneg %p29
      $region26: #{udanet_forward.13} parent=23 // pred_check_branch
        %130 = sbr.rel (%p128) target = $region28
      $region27: #{udanet_forward.13} parent=23 // pred_region
        %s131 = smul.u32 32, %s9
        %p132 = scmp.lt.s32.totalorder %s131, 63
        %s133 = scalar_select %p132, %s131, 63
        %s134 = smul.addr %s133, 4
        %s135 = scalar_lea.vmem %s0, %s134
        %s136 = smul.u32 32, %s9
      $region28: #{udanet_forward.13} parent=23 // pred_fallthru
        _
    $region24: #{udanet_forward.13} parent=5 // pred_fallthru
      _
    %p137 = scmp.le.s32.totalorder 1, %s9
    %p138 = scmp.lt.s32.totalorder %s9, 3
    %p139 = pnand %p137, %p138
    %p140 = pneg %p139
    // Predicated region
    $region29: #{udanet_forward.13} parent=5 // pred_check
      _
    $region30: #{udanet_forward.13} parent=5 // pred_check_branch
      %142 = sbr.rel (%p139) target = $region32
    $region31: #{udanet_forward.13} parent=5 // pred_region
      %s143 = ssub.s32 %s9, 1
      %s144 = smul.u32 32, %s14
      %p145 = scmp.lt.s32.totalorder %s144, 63
      %s146 = scalar_select %p145, %s144, 63
      %s147 = smul.addr %s146, 4
      %s148 = scalar_lea.vmem %s0, %s147
      %p149 = pneg %p35
      %p150 = pneg %p32
      %p151 = pneg %p56
      %p152 = pneg %p53
      %p153 = pneg %p77
      %p154 = pneg %p74
      %p155 = pneg %p103
      %p156 = pneg %p100
      %s157 = smul.u32 32, %s14
      %p158 = scmp.lt.s32.totalorder %s157, 63
      %s159 = scalar_select %p158, %s157, 63
      %s160 = smul.addr %s159, 8
      %s161 = scalar_lea.vmem %s3, %s160
      %s162 = smul.u32 32, %s14
      %p163 = scmp.lt.s32.totalorder %s162, 63
      %s164 = scalar_select %p163, %s162, 63
      %s165 = smul.addr %s164, 4
      %s166 = scalar_lea.vmem %s0, %s165
      %s167 = smul.u32 32, %s14
      %s168 = smul.u32 32, %s14
      %p169 = scmp.lt.s32.totalorder %s168, 63
      %s170 = scalar_select %p169, %s168, 63
      %s171 = smul.addr %s170, 8
      %s172 = scalar_lea.vmem %s3, %s171
      %s173 = smul.u32 32, %s14
      %v175 = vld [vmem:[%s166] sm:$0xf]
      %v176 = vld [vmem:[%s166 + $0x4] sm:$0xf]
      %v177 = vld [vmem:[%s166 + $0x8] sm:$0xf]
      %v178 = vld [vmem:[%s166 + $0xc] sm:$0xf]
      %v179 = vld [vmem:[%s166 + $0x10] sm:$0xf]
      %v180 = vld [vmem:[%s166 + $0x14] sm:$0xf]
      %v181 = vld [vmem:[%s166 + $0x18] sm:$0xf]
      %v182 = vld [vmem:[%s166 + $0x1c] sm:$0xf]
      %v183 = vld [vmem:[%s166 + $0x20] sm:$0xf]
      %v184 = vld [vmem:[%s166 + $0x24] sm:$0xf]
      %v185 = vld [vmem:[%s166 + $0x28] sm:$0xf]
      %v186 = vld [vmem:[%s166 + $0x2c] sm:$0xf]
      %v187 = vld [vmem:[%s166 + $0x30] sm:$0xf]
      %v188 = vld [vmem:[%s166 + $0x34] sm:$0xf]
      %v189 = vld [vmem:[%s166 + $0x38] sm:$0xf]
      %v190 = vld [vmem:[%s166 + $0x3c] sm:$0xf]
      %v191 = vld [vmem:[%s166 + $0x40] sm:$0xf]
      %v192 = vld [vmem:[%s166 + $0x44] sm:$0xf]
      %v193 = vld [vmem:[%s166 + $0x48] sm:$0xf]
      %v194 = vld [vmem:[%s166 + $0x4c] sm:$0xf]
      %v195 = vld [vmem:[%s166 + $0x50] sm:$0xf]
      %v196 = vld [vmem:[%s166 + $0x54] sm:$0xf]
      %v197 = vld [vmem:[%s166 + $0x58] sm:$0xf]
      %v198 = vld [vmem:[%s166 + $0x5c] sm:$0xf]
      %v199 = vld [vmem:[%s166 + $0x60] sm:$0xf]
      %v200 = vld [vmem:[%s166 + $0x64] sm:$0xf]
      %v201 = vld [vmem:[%s166 + $0x68] sm:$0xf]
      %v202 = vld [vmem:[%s166 + $0x6c] sm:$0xf]
      %v203 = vld [vmem:[%s166 + $0x70] sm:$0xf]
      %v204 = vld [vmem:[%s166 + $0x74] sm:$0xf]
      %v205 = vld [vmem:[%s166 + $0x78] sm:$0xf]
      %v206 = vld [vmem:[%s166 + $0x7c] sm:$0xf]
      %v207 = vld [vmem:[%s1] sm:$0xf]
      %v208 = vld [vmem:[%s1 + $0x4] sm:$0xf]
      %v209 = vld [vmem:[%s1 + $0x8] sm:$0xf]
      %v210 = vld [vmem:[%s1 + $0xc] sm:$0x3]
      %v211 = vld [vmem:[%s2] sm:$0x1]
      %v213 = vlaneseq
      %v214 = vshrl.u32 %v213, 7
      %v215 = vsub.s32 0, %v214
      %v216 = vrot.slane %v211, %v215
      %v250 = vunpack.c.l.b16 %v175
      %v251 = vunpack.c.l.b16 %v176
      %v252 = vunpack.c.l.b16 %v177
      %v253 = vunpack.c.l.b16 %v178
      %v254 = vunpack.c.l.b16 %v179
      %v255 = vunpack.c.l.b16 %v180
      %v256 = vunpack.c.l.b16 %v181
      %v257 = vunpack.c.l.b16 %v182
      %v258 = vunpack.c.l.b16 %v183
      %v259 = vunpack.c.l.b16 %v184
      %v260 = vunpack.c.l.b16 %v185
      %v261 = vunpack.c.l.b16 %v186
      %v262 = vunpack.c.l.b16 %v187
      %v263 = vunpack.c.l.b16 %v188
      %v264 = vunpack.c.l.b16 %v189
      %v265 = vunpack.c.l.b16 %v190
      %v266 = vunpack.c.l.b16 %v191
      %v267 = vunpack.c.l.b16 %v192
      %v268 = vunpack.c.l.b16 %v193
      %v269 = vunpack.c.l.b16 %v194
      %v270 = vunpack.c.l.b16 %v195
      %v271 = vunpack.c.l.b16 %v196
      %v272 = vunpack.c.l.b16 %v197
      %v273 = vunpack.c.l.b16 %v198
      %v274 = vunpack.c.l.b16 %v199
      %v275 = vunpack.c.l.b16 %v200
      %v276 = vunpack.c.l.b16 %v201
      %v277 = vunpack.c.l.b16 %v202
      %v278 = vunpack.c.l.b16 %v203
      %v279 = vunpack.c.l.b16 %v204
      %v280 = vunpack.c.l.b16 %v205
      %v281 = vunpack.c.l.b16 %v206
      %v282 = vpack.c.b16 %v251, %v250
      %v283 = vpack.c.b16 %v253, %v252
      %v284 = vpack.c.b16 %v255, %v254
      %v285 = vpack.c.b16 %v257, %v256
      %v286 = vpack.c.b16 %v259, %v258
      %v287 = vpack.c.b16 %v261, %v260
      %v288 = vpack.c.b16 %v263, %v262
      %v289 = vpack.c.b16 %v265, %v264
      %v290 = vpack.c.b16 %v267, %v266
      %v291 = vpack.c.b16 %v269, %v268
      %v292 = vpack.c.b16 %v271, %v270
      %v293 = vpack.c.b16 %v273, %v272
      %v294 = vpack.c.b16 %v275, %v274
      %v295 = vpack.c.b16 %v277, %v276
      %v296 = vpack.c.b16 %v279, %v278
      %v297 = vpack.c.b16 %v281, %v280
      %v302 = vunpack.c.l.b16 %v207
      %v303 = vunpack.c.l.b16 %v208
      %v304 = vunpack.c.l.b16 %v209
      %v305 = vunpack.c.l.b16 %v210
      %v306 = vpack.c.b16 %v303, %v302
      %v307 = vpack.c.b16 %v305, %v304
      %vm309 = vcmask 220160
      %v311 = vsel %vm309, %v282, 0
      %v314 = vsel %vm309, %v283, 0
      %v317 = vsel %vm309, %v284, 0
      %v320 = vsel %vm309, %v285, 0
      %v323 = vsel %vm309, %v286, 0
      %v326 = vsel %vm309, %v287, 0
      %v329 = vsel %vm309, %v288, 0
      %v332 = vsel %vm309, %v289, 0
      %v335 = vsel %vm309, %v290, 0
      %v338 = vsel %vm309, %v291, 0
      %v341 = vsel %vm309, %v292, 0
      %v344 = vsel %vm309, %v293, 0
      %v347 = vsel %vm309, %v294, 0
      %v350 = vsel %vm309, %v295, 0
      %v353 = vsel %vm309, %v296, 0
      %v356 = vsel %vm309, %v297, 0
      %vm358 = vcmask 1044480
      %vm359 = vcmask 1045504
      %v360 = vsel %vm358, 4294967295, 65535
      %v361 = vsel %vm359, %v360, 0
      %v363 = vand.u32 %v307, %v361
      %365 = vmatprep.subr.bf16.mxu0 0
      %366 = vmatpush1.bf16.msra.mxu0 %v306
      %367 = vmatprep.subr.bf16.mxu0 0
      %368 = vmatpush1.bf16.msra.mxu0 %v363
      %369 = vmatprep.subr.bf16.mxu0 0
      %370 = vmatpush1.bf16.msra.mxu0 0
      %371 = vmatprep.subr.bf16.mxu0 0
      %372 = vmatpush1.bf16.msra.mxu0 0
      %373 = vmatprep.subr.bf16.mxu0 0
      %374 = vmatpush1.bf16.msra.mxu0 0
      %375 = vmatprep.subr.bf16.mxu0 0
      %376 = vmatpush1.bf16.msra.mxu0 0
      %377 = vmatprep.subr.bf16.mxu0 0
      %378 = vmatpush1.bf16.msra.mxu0 0
      %379 = vmatprep.subr.bf16.mxu0 0
      %380 = vmatpush1.bf16.msra.mxu0 0
      %381 = vmatprep.subr.bf16.mxu0 0
      %382 = vmatpush1.bf16.msra.mxu0 0
      %383 = vmatprep.subr.bf16.mxu0 0
      %384 = vmatpush1.bf16.msra.mxu0 0
      %385 = vmatprep.subr.bf16.mxu0 0
      %386 = vmatpush1.bf16.msra.mxu0 0
      %387 = vmatprep.subr.bf16.mxu0 0
      %388 = vmatpush1.bf16.msra.mxu0 0
      %389 = vmatprep.subr.bf16.mxu0 0
      %390 = vmatpush1.bf16.msra.mxu0 0
      %391 = vmatprep.subr.bf16.mxu0 0
      %392 = vmatpush1.bf16.msra.mxu0 0
      %393 = vmatprep.subr.bf16.mxu0 0
      %394 = vmatpush1.bf16.msra.mxu0 0
      %395 = vmatprep.subr.bf16.mxu0 0
      %396 = vmatpush1.bf16.msra.mxu0 0
      %397 = vmatprep.mubr.bf16.mxu0 0
      %398 = vmatmul.mubr.bf16.gmra.mrb[0].mxu0 %v311
      %v399 = vpop.f32.mrb[0].mxu0
      %v400 = vadd.f32 %v216, %v399
      %v401 = vpop.f32.mrb[0].mxu0
      %v402 = vpop.f32.mrb[0].mxu0
      %v403 = vadd.f32 %v216, %v402
      %v404 = vpop.f32.mrb[0].mxu0
      %405 = vmatprep.mubr.bf16.mxu0 0
      %406 = vmatmul.mubr.bf16.gmra.mrb[0].mxu0 %v314
      %v407 = vpop.f32.mrb[0].mxu0
      %v408 = vadd.f32 %v216, %v407
      %v409 = vpop.f32.mrb[0].mxu0
      %v410 = vpop.f32.mrb[0].mxu0
      %v411 = vadd.f32 %v216, %v410
      %v412 = vpop.f32.mrb[0].mxu0
      %413 = vmatprep.mubr.bf16.mxu0 0
      %414 = vmatmul.mubr.bf16.gmra.mrb[0].mxu0 %v317
      %v415 = vpop.f32.mrb[0].mxu0
      %v416 = vadd.f32 %v216, %v415
      %v417 = vpop.f32.mrb[0].mxu0
      %v418 = vpop.f32.mrb[0].mxu0
      %v419 = vadd.f32 %v216, %v418
      %v420 = vpop.f32.mrb[0].mxu0
      %421 = vmatprep.mubr.bf16.mxu0 0
      %422 = vmatmul.mubr.bf16.gmra.mrb[0].mxu0 %v320
      %v423 = vpop.f32.mrb[0].mxu0
      %v424 = vadd.f32 %v216, %v423
      %v425 = vpop.f32.mrb[0].mxu0
      %v426 = vpop.f32.mrb[0].mxu0
      %v427 = vadd.f32 %v216, %v426
      %v428 = vpop.f32.mrb[0].mxu0
      %429 = vmatprep.mubr.bf16.mxu0 0
      %430 = vmatmul.mubr.bf16.gmra.mrb[0].mxu0 %v323
      %v431 = vpop.f32.mrb[0].mxu0
      %v432 = vadd.f32 %v216, %v431
      %v433 = vpop.f32.mrb[0].mxu0
      %v434 = vpop.f32.mrb[0].mxu0
      %v435 = vadd.f32 %v216, %v434
      %v436 = vpop.f32.mrb[0].mxu0
      %437 = vmatprep.mubr.bf16.mxu0 0
      %438 = vmatmul.mubr.bf16.gmra.mrb[0].mxu0 %v326
      %v439 = vpop.f32.mrb[0].mxu0
      %v440 = vadd.f32 %v216, %v439
      %v441 = vpop.f32.mrb[0].mxu0
      %v442 = vpop.f32.mrb[0].mxu0
      %v443 = vadd.f32 %v216, %v442
      %v444 = vpop.f32.mrb[0].mxu0
      %445 = vmatprep.mubr.bf16.mxu0 0
      %446 = vmatmul.mubr.bf16.gmra.mrb[0].mxu0 %v329
      %v447 = vpop.f32.mrb[0].mxu0
      %v448 = vadd.f32 %v216, %v447
      %v449 = vpop.f32.mrb[0].mxu0
      %v450 = vpop.f32.mrb[0].mxu0
      %v451 = vadd.f32 %v216, %v450
      %v452 = vpop.f32.mrb[0].mxu0
      %453 = vmatprep.mubr.bf16.mxu0 0
      %454 = vmatmul.mubr.bf16.gmra.mrb[0].mxu0 %v332
      %v455 = vpop.f32.mrb[0].mxu0
      %v456 = vadd.f32 %v216, %v455
      %v457 = vpop.f32.mrb[0].mxu0
      %v458 = vpop.f32.mrb[0].mxu0
      %v459 = vadd.f32 %v216, %v458
      %v460 = vpop.f32.mrb[0].mxu0
      %461 = vmatprep.mubr.bf16.mxu0 0
      %462 = vmatmul.mubr.bf16.gmra.mrb[0].mxu0 %v335
      %v463 = vpop.f32.mrb[0].mxu0
      %v464 = vadd.f32 %v216, %v463
      %v465 = vpop.f32.mrb[0].mxu0
      %v466 = vpop.f32.mrb[0].mxu0
      %v467 = vadd.f32 %v216, %v466
      %v468 = vpop.f32.mrb[0].mxu0
      %469 = vmatprep.mubr.bf16.mxu0 0
      %470 = vmatmul.mubr.bf16.gmra.mrb[0].mxu0 %v338
      %v471 = vpop.f32.mrb[0].mxu0
      %v472 = vadd.f32 %v216, %v471
      %v473 = vpop.f32.mrb[0].mxu0
      %v474 = vpop.f32.mrb[0].mxu0
      %v475 = vadd.f32 %v216, %v474
      %v476 = vpop.f32.mrb[0].mxu0
      %477 = vmatprep.mubr.bf16.mxu0 0
      %478 = vmatmul.mubr.bf16.gmra.mrb[0].mxu0 %v341
      %v479 = vpop.f32.mrb[0].mxu0
      %v480 = vadd.f32 %v216, %v479
      %v481 = vpop.f32.mrb[0].mxu0
      %v482 = vpop.f32.mrb[0].mxu0
      %v483 = vadd.f32 %v216, %v482
      %v484 = vpop.f32.mrb[0].mxu0
      %485 = vmatprep.mubr.bf16.mxu0 0
      %486 = vmatmul.mubr.bf16.gmra.mrb[0].mxu0 %v344
      %v487 = vpop.f32.mrb[0].mxu0
      %v488 = vadd.f32 %v216, %v487
      %v489 = vpop.f32.mrb[0].mxu0
      %v490 = vpop.f32.mrb[0].mxu0
      %v491 = vadd.f32 %v216, %v490
      %v492 = vpop.f32.mrb[0].mxu0
      %493 = vmatprep.mubr.bf16.mxu0 0
      %494 = vmatmul.mubr.bf16.gmra.mrb[0].mxu0 %v347
      %v495 = vpop.f32.mrb[0].mxu0
      %v496 = vadd.f32 %v216, %v495
      %v497 = vpop.f32.mrb[0].mxu0
      %v498 = vpop.f32.mrb[0].mxu0
      %v499 = vadd.f32 %v216, %v498
      %v500 = vpop.f32.mrb[0].mxu0
      %501 = vmatprep.mubr.bf16.mxu0 0
      %502 = vmatmul.mubr.bf16.gmra.mrb[0].mxu0 %v350
      %v503 = vpop.f32.mrb[0].mxu0
      %v504 = vadd.f32 %v216, %v503
      %v505 = vpop.f32.mrb[0].mxu0
      %v506 = vpop.f32.mrb[0].mxu0
      %v507 = vadd.f32 %v216, %v506
      %v508 = vpop.f32.mrb[0].mxu0
      %509 = vmatprep.mubr.bf16.mxu0 0
      %510 = vmatmul.mubr.bf16.gmra.mrb[0].mxu0 %v353
      %v511 = vpop.f32.mrb[0].mxu0
      %v512 = vadd.f32 %v216, %v511
      %v513 = vpop.f32.mrb[0].mxu0
      %v514 = vpop.f32.mrb[0].mxu0
      %v515 = vadd.f32 %v216, %v514
      %v516 = vpop.f32.mrb[0].mxu0
      %517 = vmatprep.mubr.bf16.mxu0 0
      %518 = vmatmul.mubr.bf16.gmra.mrb[0].mxu0 %v356
      %v519 = vpop.f32.mrb[0].mxu0
      %v520 = vadd.f32 %v216, %v519
      %v521 = vpop.f32.mrb[0].mxu0
      %v522 = vpop.f32.mrb[0].mxu0
      %v523 = vadd.f32 %v216, %v522
      %v524 = vpop.f32.mrb[0].mxu0
      %525 = vdwg.mxu0
      %vm526 = vcmask 31744
      %527 = vst.msk [vmem:[%s172] sm:$0xff] %vm526, %v400
      %528 = vst.msk [vmem:[%s172 + $0x8] sm:$0xff] %vm526, %v403
      %529 = vst.msk [vmem:[%s172 + $0x10] sm:$0xff] %vm526, %v408
      %530 = vst.msk [vmem:[%s172 + $0x18] sm:$0xff] %vm526, %v411
      %531 = vst.msk [vmem:[%s172 + $0x20] sm:$0xff] %vm526, %v416
      %532 = vst.msk [vmem:[%s172 + $0x28] sm:$0xff] %vm526, %v419
      %533 = vst.msk [vmem:[%s172 + $0x30] sm:$0xff] %vm526, %v424
      %534 = vst.msk [vmem:[%s172 + $0x38] sm:$0xff] %vm526, %v427
      %535 = vst.msk [vmem:[%s172 + $0x40] sm:$0xff] %vm526, %v432
      %536 = vst.msk [vmem:[%s172 + $0x48] sm:$0xff] %vm526, %v435
      %537 = vst.msk [vmem:[%s172 + $0x50] sm:$0xff] %vm526, %v440
      %538 = vst.msk [vmem:[%s172 + $0x58] sm:$0xff] %vm526, %v443
      %539 = vst.msk [vmem:[%s172 + $0x60] sm:$0xff] %vm526, %v448
      %540 = vst.msk [vmem:[%s172 + $0x68] sm:$0xff] %vm526, %v451
      %541 = vst.msk [vmem:[%s172 + $0x70] sm:$0xff] %vm526, %v456
      %542 = vst.msk [vmem:[%s172 + $0x78] sm:$0xff] %vm526, %v459
      %543 = vst.msk [vmem:[%s172 + $0x80] sm:$0xff] %vm526, %v464
      %544 = vst.msk [vmem:[%s172 + $0x88] sm:$0xff] %vm526, %v467
      %545 = vst.msk [vmem:[%s172 + $0x90] sm:$0xff] %vm526, %v472
      %546 = vst.msk [vmem:[%s172 + $0x98] sm:$0xff] %vm526, %v475
      %547 = vst.msk [vmem:[%s172 + $0xa0] sm:$0xff] %vm526, %v480
      %548 = vst.msk [vmem:[%s172 + $0xa8] sm:$0xff] %vm526, %v483
      %549 = vst.msk [vmem:[%s172 + $0xb0] sm:$0xff] %vm526, %v488
      %550 = vst.msk [vmem:[%s172 + $0xb8] sm:$0xff] %vm526, %v491
      %551 = vst.msk [vmem:[%s172 + $0xc0] sm:$0xff] %vm526, %v496
      %552 = vst.msk [vmem:[%s172 + $0xc8] sm:$0xff] %vm526, %v499
      %553 = vst.msk [vmem:[%s172 + $0xd0] sm:$0xff] %vm526, %v504
      %554 = vst.msk [vmem:[%s172 + $0xd8] sm:$0xff] %vm526, %v507
      %555 = vst.msk [vmem:[%s172 + $0xe0] sm:$0xff] %vm526, %v512
      %556 = vst.msk [vmem:[%s172 + $0xe8] sm:$0xff] %vm526, %v515
      %557 = vst.msk [vmem:[%s172 + $0xf0] sm:$0xff] %vm526, %v520
      %558 = vst.msk [vmem:[%s172 + $0xf8] sm:$0xff] %vm526, %v523
      %s559 = smul.u32 32, %s14
      %p560 = scmp.lt.s32.totalorder %s559, 63
      %s561 = scalar_select %p560, %s559, 63
      %s562 = smul.addr %s561, 8
      %s563 = scalar_lea.vmem %s3, %s562
      // Predicated region
      $region33: #{udanet_forward.13} parent=31 // pred_check
        %p564 = pneg %p100
      $region34: #{udanet_forward.13} parent=31 // pred_check_branch
        %566 = sbr.rel (%p564) target = $region36
      $region35: #{udanet_forward.13} parent=31 // pred_region
        %s567 = smul.u32 32, %s14
      $region36: #{udanet_forward.13} parent=31 // pred_fallthru
        _
    $region32: #{udanet_forward.13} parent=5 // pred_fallthru
      _
    %p568 = scmp.le.s32.totalorder 2, %s9
    // Predicated region
    $region37: #{udanet_forward.13} parent=5 // pred_check
      %p569 = pneg %p568
    $region38: #{udanet_forward.13} parent=5 // pred_check_branch
      %571 = sbr.rel (%p569) target = $region40
    $region39: #{udanet_forward.13} parent=5 // pred_region
      %s572 = ssub.s32 %s9, 2
      // Predicated region
      $region41: #{udanet_forward.13} parent=39 // pred_check
        %p573 = pneg %p106
      $region42: #{udanet_forward.13} parent=39 // pred_check_branch
        %575 = sbr.rel (%p573) target = $region44
      $region43: #{udanet_forward.13} parent=39 // pred_region
        %s576 = smul.u32 32, %s15
        %p577 = scmp.lt.s32.totalorder %s576, 63
        %s578 = scalar_select %p577, %s576, 63
        %s579 = smul.addr %s578, 8
        %s580 = scalar_lea.vmem %s3, %s579
      $region44: #{udanet_forward.13} parent=39 // pred_fallthru
        _
    $region40: #{udanet_forward.13} parent=5 // pred_fallthru
      _
  $region6: #{udanet_forward.13} parent=0 // loop_footer
    %s13 = sadd.s32 1, %s9
  $region7: #{udanet_forward.13} parent=0 // loop_footer_branch
    %8 = sbr.rel target = $region3
  $region8: #{udanet_forward.13} parent=0 // loop_exit
    _

</llo_original>
